<compile_context>
chip_gen: v6e
topology: v6e:2x2x1
jax: 0.10.0
libtpu: 0.0.40
codegen_flags: <defaults>
</compile_context>

<pallas_src>
import functools

import jax
import jax.numpy as jnp
from jax import lax
from jax.experimental import pallas as pl
from jax.experimental.pallas import tpu as pltpu


def _round_up(x, m):
    return (x + m - 1) // m * m


_TN256_CACHE = None


def _prefer_tn256():
    """tn=256 matches the 2x256^2 MXU on v6e/v7x; v5* MXUs are 128x128."""
    global _TN256_CACHE
    if _TN256_CACHE is None:
        try:
            kind = jax.devices()[0].device_kind.lower()
        except Exception:
            kind = ""
        _TN256_CACHE = ("v5" not in kind)
    return _TN256_CACHE


def _block_spec(shape, index_map, buffered=None):
    """BlockSpec helper; optionally requests deeper input pipelining."""
    if buffered is not None:
        try:
            return pl.BlockSpec(shape, index_map,
                                pipeline_mode=pl.Buffered(buffered))
        except (TypeError, AttributeError):
            pass
    return pl.BlockSpec(shape, index_map)


# ----------------------------------------------------------------------------
# Pallas kernel: tiled  out = act(patches @ W [+ shift])
#   patches (Mp, Kp) bf16, W (Kp, Np) bf16, shift (1, Np) f32 (optional)
#   grid = (Mp//tm, Np//tn, Kp//tk); f32 accumulator only when Kp//tk > 1.
# ----------------------------------------------------------------------------
def _mm_kernel(*refs, post_act, has_shift, multi_k):
    if multi_k:
        refs, acc_ref = refs[:-1], refs[-1]
    if has_shift:
        p_ref, w_ref, shift_ref, o_ref = refs
    else:
        (p_ref, w_ref, o_ref), shift_ref = refs, None

    def epilogue(y):                                  # y is f32, in registers
        if shift_ref is not None:
            y = y + shift_ref[...]                    # eval-mode BN shift
        if post_act == "leaky":
            y = jnp.maximum(y, 0.2 * y)               # LeakyReLU(0.2), 2 VPU ops
        elif post_act == "relu":
            y = jnp.maximum(y, 0.0)
        elif post_act == "tanh":
            y = jnp.tanh(y)                           # EUP
        o_ref[...] = y.astype(o_ref.dtype)            # down-cast only at store

    part = jnp.dot(p_ref[...], w_ref[...],
                   preferred_element_type=jnp.float32)  # bf16 MXU, f32 result

    if not multi_k:
        epilogue(part)                                # fast path: no acc VMEM RMW
    else:
        @pl.when(pl.program_id(2) == 0)
        def _init():
            acc_ref[...] = jnp.zeros_like(acc_ref)

        acc_ref[...] += part

        @pl.when(pl.program_id(2) == pl.num_programs(2) - 1)
        def _finalize():
            epilogue(acc_ref[...])


def fused_matmul(patches, w_mat, shift, post_act, out_dtype):
    """patches (M, K) bf16, w_mat (K, N) bf16, shift None or (1, N) f32."""
    M, K = patches.shape
    Nc = w_mat.shape[-1]
    has_shift = shift is not None

    # ---- N (lane) tiling: never pad small channel counts up to 128 ---------
    if Nc < 128:
        Np, tn = Nc, Nc                       # full-dim block; masked stores OK
    else:
        Np = _round_up(Nc, 128)
        tn = 256 if (Np % 256 == 0 and _prefer_tn256()) else 128

    # ---- K (contraction): single step (no accumulator) whenever possible ---
    if K <= 1024:
        Kp, tk = K, K
    else:
        Kp = _round_up(K, 128)
        base = Kp // 128
        d = 1
        for cand in range(min(base, 8), 0, -1):       # tk up to 1024
            if base % cand == 0:
                d = cand
                break
        tk = 128 * d
    nk = Kp // tk
    multi_k = nk > 1

    # ---- M (sublane) tiling: big tiles amortize per-grid-step overhead -----
    out_bytes = jnp.dtype(out_dtype).itemsize
    tm = min(2048, _round_up(M, 16))

    def _vmem_est(tm_):
        b = 3 * tm_ * tk * 2                  # patches (up to 3 buffers)
        b += 2 * tk * tn * 2                  # weights (double-buffered)
        b += 2 * tm_ * tn * out_bytes         # output  (double-buffered)
        if multi_k:
            b += tm_ * tn * 4                 # f32 accumulator scratch
        if has_shift:
            b += 2 * tn * 4
        return b

    while tm > 16 and _vmem_est(tm) > 20 * 2 ** 20:
        tm = max(16, _round_up(tm // 2, 16))
    Mp = _round_up(M, tm)

    if (Mp, Kp) != (M, K):
        patches = jnp.pad(patches, ((0, Mp - M), (0, Kp - K)))
    if (Kp, Np) != (K, Nc):
        w_mat = jnp.pad(w_mat, ((0, Kp - K), (0, Np - Nc)))
    if has_shift and Np != Nc:
        shift = jnp.pad(shift, ((0, 0), (0, Np - Nc)))

    grid = (Mp // tm, Np // tn, nk)
    buffered = 3 if (Mp // tm) * nk >= 3 else None

    in_specs = [
        _block_spec((tm, tk), lambda i, j, k: (i, k), buffered=buffered),
        pl.BlockSpec((tk, tn), lambda i, j, k: (k, j)),
    ]
    args = [patches, w_mat]
    if has_shift:
        in_specs.append(pl.BlockSpec((1, tn), lambda i, j, k: (0, j)))
        args.append(shift)

    scratch = [pltpu.VMEM((tm, tn), jnp.float32)] if multi_k else []
    vmem_limit = int(min(32 * 2 ** 20, max(8 * 2 ** 20,
                                           _vmem_est(tm) + 8 * 2 ** 20)))

    kern = functools.partial(_mm_kernel, post_act=post_act,
                             has_shift=has_shift, multi_k=multi_k)
    out = pl.pallas_call(
        kern,
        out_shape=jax.ShapeDtypeStruct((Mp, Np), out_dtype),
        grid_spec=pltpu.PrefetchScalarGridSpec(
            num_scalar_prefetch=0,
            grid=grid,
            in_specs=in_specs,
            out_specs=pl.BlockSpec((tm, tn), lambda i, j, k: (i, j)),
            scratch_shapes=scratch,
        ),
        compiler_params=pltpu.CompilerParams(
            dimension_semantics=("parallel", "parallel", "arbitrary"),
            vmem_limit_bytes=vmem_limit),
    )(*args)

    if (Mp, Np) != (M, Nc):
        out = out[:M, :Nc]
    return out


# ----------------------------------------------------------------------------
# JAX glue: im2col, conv / conv-transpose wrappers
# ----------------------------------------------------------------------------
def _im2col(xpad, k, stride):
    """xpad: already-padded NHWC -> ((N*Ho*Wo, k*k*C) ordered (dh,dw,c), dims)."""
    N, H, W, C = xpad.shape
    Ho = (H - k) // stride + 1
    Wo = (W - k) // stride + 1
    cols = []
    for dh in range(k):
        for dw in range(k):
            cols.append(xpad[:, dh:dh + stride * Ho:stride,
                             dw:dw + stride * Wo:stride, :])
    p = jnp.stack(cols, axis=3)                       # (N, Ho, Wo, k*k, C)
    return p.reshape(N * Ho * Wo, k * k * C), (N, Ho, Wo)


def conv2d_fused(x, w_mat, shift, post_act, out_dtype):
    """Conv2d(k=4,s=2,p=1,bias=False) + BN affine + activation, fully fused.
    x NHWC; w_mat (16*Cin, Cout) bf16 with BN scale folded into its columns."""
    Cout = w_mat.shape[-1]
    xp = jnp.pad(x, ((0, 0), (1, 1), (1, 1), (0, 0)))
    patches, (N, Ho, Wo) = _im2col(xp, 4, 2)
    out = fused_matmul(patches.astype(jnp.bfloat16), w_mat, shift,
                       post_act, out_dtype)
    return out.reshape(N, Ho, Wo, Cout)


def conv_transpose2d_fused(x, w_mat, shift, post_act, out_dtype):
    """ConvTranspose2d(k=4,s=2,p=1,bias=False) via stride-2 sub-filters packed
    along the matmul N dim: shared 3x3-window patches (9*Cin) x (4*Cout)."""
    N, H, W, _ = x.shape
    Cout = w_mat.shape[-1] // 4
    xp = jnp.pad(x, ((0, 0), (1, 1), (1, 1), (0, 0)))          # (N,H+2,W+2,Cin)
    patches, _ = _im2col(xp, 3, 1)                             # (N*H*W, 9*Cin)
    out = fused_matmul(patches.astype(jnp.bfloat16), w_mat, shift,
                       post_act, out_dtype)                    # (N*H*W, 4*Cout)
    out = out.reshape(N, H, W, 2, 2, Cout)                     # (.., py, px, c)
    out = jnp.transpose(out, (0, 1, 3, 2, 4, 5)).reshape(N, 2 * H, 2 * W, Cout)
    return out


# ----------------------------------------------------------------------------
# Model construction (mirrors EncoderDecoderGenerator.__init__, eval mode)
# ----------------------------------------------------------------------------
def build_config(input_nc, output_nc, num_downs, ngf):
    assert num_downs >= 6, "num_downs must be >= 6 (as in the reference module)"
    layers = []  # (kind, cin, cout, has_bn)
    layers.append(("conv", input_nc, ngf, False))
    for i in range(num_downs - 5):
        layers.append(("conv", ngf * 2 ** i, ngf * 2 ** (i + 1), True))
    c = ngf * 2 ** (num_downs - 5)
    layers += [("conv", c, c, True)] * 3
    layers += [("conv", c, c, False)]
    layers += [("convT", c, c, True)] * 4             # Dropout = identity (eval)
    for i in reversed(range(num_downs - 5)):
        layers.append(("convT", ngf * 2 ** (i + 1), ngf * 2 ** i, True))
    layers.append(("convT", ngf, output_nc, False))

    # Every later Conv is preceded by LeakyReLU(0.2), every ConvT by ReLU; the
    # final layer is followed by Tanh.  Fuse layer i+1's input activation as
    # layer i's post-activation (no skip connections -> mathematically equal).
    pre = ["none"] + ["leaky" if kind == "conv" else "relu"
                      for (kind, *_r) in layers[1:]]
    cfg = []
    for idx, (kind, cin, cout, has_bn) in enumerate(layers):
        post = pre[idx + 1] if idx + 1 < len(layers) else "tanh"
        cfg.append((kind, cin, cout, has_bn, post))
    return cfg


def init_params(key, cfg):
    eps = 1e-5
    params = []
    for idx, (kind, cin, cout, has_bn, _post) in enumerate(cfg):
        k = jax.random.fold_in(key, idx)
        if kind == "conv":     # PyTorch Conv2d weight layout (Cout,Cin,kH,kW)
            w = 0.02 * jax.random.normal(k, (cout, cin, 4, 4), jnp.float32)
        else:                  # PyTorch ConvTranspose2d layout (Cin,Cout,kH,kW)
            w = 0.02 * jax.random.normal(k, (cin, cout, 4, 4), jnp.float32)

        # eval-mode BN, fresh stats: gamma=1, beta=0, mean=0, var=1
        scale = (1.0 / (1.0 + eps) ** 0.5) if has_bn else 1.0

        if kind == "conv":
            # (Cout,Cin,4,4) -> (16*Cin, Cout), row order (kh,kw,ci)
            w_mat = jnp.transpose(w, (2, 3, 1, 0)).reshape(16 * cin, cout)
            w_mat = (w_mat * scale).astype(jnp.bfloat16)
            n_packed = cout
        else:
            # Shared 3x3-window / parity-packed sub-filters.
            # Parity (py,px), window tap (ry,rx)=(py+dh,px+dw) uses kernel tap
            # (ky,kx) = (3-py-2*dh, 3-px-2*dw); unused taps stay zero.
            w9 = jnp.zeros((3, 3, cin, 2, 2, cout), jnp.float32)
            for py in range(2):
                for px in range(2):
                    for dh in range(2):
                        for dw in range(2):
                            w9 = w9.at[py + dh, px + dw, :, py, px, :].set(
                                w[:, :, 3 - py - 2 * dh, 3 - px - 2 * dw])
            w_mat = (w9.reshape(9 * cin, 4 * cout) * scale).astype(jnp.bfloat16)
            n_packed = 4 * cout

        shift = jnp.zeros((1, n_packed), jnp.float32) if has_bn else None
        params.append({"w_mat": w_mat, "shift": shift, "w_f32": w})
    return params


def make_forward(cfg):
    n_layers = len(cfg)

    @jax.jit
    def forward(x_nchw, params):
        x = jnp.transpose(x_nchw, (0, 2, 3, 1))       # NCHW -> NHWC
        for idx, (p, (kind, _ci, _co, _bn, post)) in enumerate(zip(params, cfg)):
            out_dtype = jnp.float32 if idx == n_layers - 1 else jnp.bfloat16
            if kind == "conv":
                x = conv2d_fused(x, p["w_mat"], p["shift"], post, out_dtype)
            else:
                x = conv_transpose2d_fused(x, p["w_mat"], p["shift"], post,
                                           out_dtype)
        return jnp.transpose(x, (0, 3, 1, 2))         # NHWC -> NCHW
    return forward


# ----------------------------------------------------------------------------
# Pure lax-conv reference in the ORIGINAL Sequential ordering
# (pre-activation -> conv/convT -> eval BN; trailing Tanh), with the same bf16
# rounding points as the kernel path so the comparison is tight.
# ----------------------------------------------------------------------------
def reference_forward(x_nchw, params, cfg):
    f32, bf16 = jnp.float32, jnp.bfloat16
    bn_scale = 1.0 / (1.0 + 1e-5) ** 0.5
    x = x_nchw
    for idx, (p, (kind, _ci, _co, has_bn, _post)) in enumerate(zip(params, cfg)):
        if idx > 0:                                   # pre-activation
            x = jnp.maximum(x, 0.2 * x) if kind == "conv" else jnp.maximum(x, 0.0)
        scale = bn_scale if has_bn else 1.0
        w_bf = (p["w_f32"] * scale).astype(bf16).astype(f32)
        x_bf = x.astype(bf16).astype(f32)
        if kind == "conv":
            x = lax.conv_general_dilated(
                x_bf, w_bf, (2, 2), ((1, 1), (1, 1)),
                dimension_numbers=("NCHW", "OIHW", "NCHW"),
                precision=lax.Precision.HIGHEST)
        else:   # ConvTranspose2d(4,2,1) == lhs-dilated conv with flipped kernel
            w_c = jnp.transpose(w_bf, (1, 0, 2, 3))[:, :, ::-1, ::-1]
            x = lax.conv_general_dilated(
                x_bf, w_c, (1, 1), ((2, 2), (2, 2)), lhs_dilation=(2, 2),
                dimension_numbers=("NCHW", "OIHW", "NCHW"),
                precision=lax.Precision.HIGHEST)
    return jnp.tanh(x)


# ----------------------------------------------------------------------------
if __name__ == "__main__":
    key = jax.random.PRNGKey(0)

    # num_downs=6 => 64x64 input reaches 1x1 at the bottleneck
    N, input_nc, output_nc, H = 2, 3, 3, 64
    num_downs, ngf = 6, 8

    cfg = build_config(input_nc, output_nc, num_downs, ngf)
    params = init_params(jax.random.fold_in(key, 1), cfg)
    x = jax.random.normal(jax.random.fold_in(key, 2), (N, input_nc, H, H),
                          jnp.float32)

    forward = make_forward(cfg)
    y = jax.block_until_ready(forward(x, params))

    assert y.shape == (N, output_nc, H, H), y.shape
    assert y.dtype == jnp.float32
    assert bool(jnp.all(jnp.isfinite(y)))
    assert bool(jnp.all(jnp.abs(y) <= 1.0 + 1e-6))    # tanh output range

    # Value-level reference check (catches conv / convT-parity tap mistakes).
    y_ref = jax.block_until_ready(
        jax.jit(lambda xx, pp: reference_forward(xx, pp, cfg))(x, params))
    num = float(jnp.linalg.norm((y - y_ref).ravel()))
    den = float(jnp.linalg.norm(y_ref.ravel())) + 1e-30
    rel = num / den
    assert rel < 1e-2, f"relative L2 error vs lax reference too large: {rel}"

    print("KERNEL_OK")
</pallas_src>

<mosaic_0001>
module attributes {stable_mosaic.version = 11 : i64} {
  func.func @_mm_kernel(%arg0: i32, %arg1: i32, %arg2: i32, %arg3: memref<2048x48xbf16, #tpu.memory_space<vmem>>, %arg4: memref<48x8xbf16, #tpu.memory_space<vmem>>, %arg5: memref<2048x8xbf16, #tpu.memory_space<vmem>>) attributes {dimension_semantics = [#tpu.dimension_semantics<parallel>, #tpu.dimension_semantics<parallel>, #tpu.dimension_semantics<arbitrary>], iteration_bounds = array<i64: 1, 1, 1>, scalar_prefetch = 0 : i64, scratch_operands = 0 : i64, tpu.core_type = #tpu.core_type<tc>, window_params = [{transform_indices = @transform_0, window_bounds = array<i64: 2048, 48>}, {transform_indices = @transform_1, window_bounds = array<i64: 48, 8>}, {transform_indices = @transform_2, window_bounds = array<i64: 2048, 8>}]} {
    %c0 = arith.constant 0 : index
    %c0_0 = arith.constant 0 : index
    %0 = vector.load %arg3[%c0, %c0_0] : memref<2048x48xbf16, #tpu.memory_space<vmem>>, vector<2048x48xbf16>
    %c0_1 = arith.constant 0 : index
    %c0_2 = arith.constant 0 : index
    %1 = vector.load %arg4[%c0_1, %c0_2] : memref<48x8xbf16, #tpu.memory_space<vmem>>, vector<48x8xbf16>
    %cst = arith.constant dense<0.000000e+00> : vector<2048x8xf32>
    %2 = tpu.matmul %0, %1, %cst {dimension_numbers = #tpu.dot_dimension_numbers<[1], [0], [0], [1], [0, 0, 1, 1], [], []>} : vector<2048x48xbf16>, vector<48x8xbf16>, vector<2048x8xf32> -> vector<2048x8xf32>
    %cst_3 = arith.constant 2.000000e-01 : f32
    %3 = vector.broadcast %cst_3 : f32 to vector<2048x8xf32>
    %4 = arith.mulf %3, %2 : vector<2048x8xf32>
    %5 = arith.maximumf %2, %4 : vector<2048x8xf32>
    %6 = arith.truncf %5 : vector<2048x8xf32> to vector<2048x8xbf16>
    %c0_4 = arith.constant 0 : index
    %c0_5 = arith.constant 0 : index
    %7 = vector.load %arg5[%c0_4, %c0_5] : memref<2048x8xbf16, #tpu.memory_space<vmem>>, vector<2048x8xbf16>
    tpu.vector_store %arg5[%c0_4, %c0_5], %6 {strides = array<i32>} : memref<2048x8xbf16, #tpu.memory_space<vmem>>, vector<2048x8xbf16>,
    return
  }
  func.func @transform_0(%arg0: i32, %arg1: i32, %arg2: i32) -> (i32, i32) {
    %c0_i32 = arith.constant 0 : i32
    return %arg0, %arg2 : i32, i32
  }
  func.func @transform_1(%arg0: i32, %arg1: i32, %arg2: i32) -> (i32, i32) {
    %c0_i32 = arith.constant 0 : i32
    return %arg2, %arg1 : i32, i32
  }
  func.func @transform_2(%arg0: i32, %arg1: i32, %arg2: i32) -> (i32, i32) {
    %c0_i32 = arith.constant 0 : i32
    return %arg0, %arg1 : i32, i32
  }
}

module attributes {stable_mosaic.version = 11 : i64} {
  func.func @_mm_kernel(%arg0: i32, %arg1: i32, %arg2: i32, %arg3: memref<512x128xbf16, #tpu.memory_space<vmem>>, %arg4: memref<128x16xbf16, #tpu.memory_space<vmem>>, %arg5: memref<1x16xf32, #tpu.memory_space<vmem>>, %arg6: memref<512x16xbf16, #tpu.memory_space<vmem>>) attributes {dimension_semantics = [#tpu.dimension_semantics<parallel>, #tpu.dimension_semantics<parallel>, #tpu.dimension_semantics<arbitrary>], iteration_bounds = array<i64: 1, 1, 1>, scalar_prefetch = 0 : i64, scratch_operands = 0 : i64, tpu.core_type = #tpu.core_type<tc>, window_params = [{transform_indices = @transform_0, window_bounds = array<i64: 512, 128>}, {transform_indices = @transform_1, window_bounds = array<i64: 128, 16>}, {transform_indices = @transform_2, window_bounds = array<i64: 1, 16>}, {transform_indices = @transform_3, window_bounds = array<i64: 512, 16>}]} {
    %c0 = arith.constant 0 : index
    %c0_0 = arith.constant 0 : index
    %0 = vector.load %arg3[%c0, %c0_0] : memref<512x128xbf16, #tpu.memory_space<vmem>>, vector<512x128xbf16>
    %c0_1 = arith.constant 0 : index
    %c0_2 = arith.constant 0 : index
    %1 = vector.load %arg4[%c0_1, %c0_2] : memref<128x16xbf16, #tpu.memory_space<vmem>>, vector<128x16xbf16>
    %cst = arith.constant dense<0.000000e+00> : vector<512x16xf32>
    %2 = tpu.matmul %0, %1, %cst {dimension_numbers = #tpu.dot_dimension_numbers<[1], [0], [0], [1], [0, 0, 1, 1], [], []>} : vector<512x128xbf16>, vector<128x16xbf16>, vector<512x16xf32> -> vector<512x16xf32>
    %c0_3 = arith.constant 0 : index
    %c0_4 = arith.constant 0 : index
    %3 = vector.load %arg5[%c0_3, %c0_4] : memref<1x16xf32, #tpu.memory_space<vmem>>, vector<1x16xf32>
    %4 = vector.broadcast %3 : vector<1x16xf32> to vector<512x16xf32>
    %5 = arith.addf %2, %4 : vector<512x16xf32>
    %cst_5 = arith.constant 2.000000e-01 : f32
    %6 = vector.broadcast %cst_5 : f32 to vector<512x16xf32>
    %7 = arith.mulf %6, %5 : vector<512x16xf32>
    %8 = arith.maximumf %5, %7 : vector<512x16xf32>
    %9 = arith.truncf %8 : vector<512x16xf32> to vector<512x16xbf16>
    %c0_6 = arith.constant 0 : index
    %c0_7 = arith.constant 0 : index
    %10 = vector.load %arg6[%c0_6, %c0_7] : memref<512x16xbf16, #tpu.memory_space<vmem>>, vector<512x16xbf16>
    tpu.vector_store %arg6[%c0_6, %c0_7], %9 {strides = array<i32>} : memref<512x16xbf16, #tpu.memory_space<vmem>>, vector<512x16xbf16>,
    return
  }
  func.func @transform_0(%arg0: i32, %arg1: i32, %arg2: i32) -> (i32, i32) {
    %c0_i32 = arith.constant 0 : i32
    return %arg0, %arg2 : i32, i32
  }
  func.func @transform_1(%arg0: i32, %arg1: i32, %arg2: i32) -> (i32, i32) {
    %c0_i32 = arith.constant 0 : i32
    return %arg2, %arg1 : i32, i32
  }
  func.func @transform_2(%arg0: i32, %arg1: i32, %arg2: i32) -> (i32, i32) {
    %c0_i32 = arith.constant 0 : i32
    %c0_i32_0 = arith.constant 0 : i32
    return %c0_i32, %arg1 : i32, i32
  }
  func.func @transform_3(%arg0: i32, %arg1: i32, %arg2: i32) -> (i32, i32) {
    %c0_i32 = arith.constant 0 : i32
    return %arg0, %arg1 : i32, i32
  }
}

module attributes {stable_mosaic.version = 11 : i64} {
  func.func @_mm_kernel(%arg0: i32, %arg1: i32, %arg2: i32, %arg3: memref<128x256xbf16, #tpu.memory_space<vmem>>, %arg4: memref<256x16xbf16, #tpu.memory_space<vmem>>, %arg5: memref<1x16xf32, #tpu.memory_space<vmem>>, %arg6: memref<128x16xbf16, #tpu.memory_space<vmem>>) attributes {dimension_semantics = [#tpu.dimension_semantics<parallel>, #tpu.dimension_semantics<parallel>, #tpu.dimension_semantics<arbitrary>], iteration_bounds = array<i64: 1, 1, 1>, scalar_prefetch = 0 : i64, scratch_operands = 0 : i64, tpu.core_type = #tpu.core_type<tc>, window_params = [{transform_indices = @transform_0, window_bounds = array<i64: 128, 256>}, {transform_indices = @transform_1, window_bounds = array<i64: 256, 16>}, {transform_indices = @transform_2, window_bounds = array<i64: 1, 16>}, {transform_indices = @transform_3, window_bounds = array<i64: 128, 16>}]} {
    %c0 = arith.constant 0 : index
    %c0_0 = arith.constant 0 : index
    %0 = vector.load %arg3[%c0, %c0_0] : memref<128x256xbf16, #tpu.memory_space<vmem>>, vector<128x256xbf16>
    %c0_1 = arith.constant 0 : index
    %c0_2 = arith.constant 0 : index
    %1 = vector.load %arg4[%c0_1, %c0_2] : memref<256x16xbf16, #tpu.memory_space<vmem>>, vector<256x16xbf16>
    %cst = arith.constant dense<0.000000e+00> : vector<128x16xf32>
    %2 = tpu.matmul %0, %1, %cst {dimension_numbers = #tpu.dot_dimension_numbers<[1], [0], [0], [1], [0, 0, 1, 1], [], []>} : vector<128x256xbf16>, vector<256x16xbf16>, vector<128x16xf32> -> vector<128x16xf32>
    %c0_3 = arith.constant 0 : index
    %c0_4 = arith.constant 0 : index
    %3 = vector.load %arg5[%c0_3, %c0_4] : memref<1x16xf32, #tpu.memory_space<vmem>>, vector<1x16xf32>
    %4 = vector.broadcast %3 : vector<1x16xf32> to vector<128x16xf32>
    %5 = arith.addf %2, %4 : vector<128x16xf32>
    %cst_5 = arith.constant 2.000000e-01 : f32
    %6 = vector.broadcast %cst_5 : f32 to vector<128x16xf32>
    %7 = arith.mulf %6, %5 : vector<128x16xf32>
    %8 = arith.maximumf %5, %7 : vector<128x16xf32>
    %9 = arith.truncf %8 : vector<128x16xf32> to vector<128x16xbf16>
    %c0_6 = arith.constant 0 : index
    %c0_7 = arith.constant 0 : index
    %10 = vector.load %arg6[%c0_6, %c0_7] : memref<128x16xbf16, #tpu.memory_space<vmem>>, vector<128x16xbf16>
    tpu.vector_store %arg6[%c0_6, %c0_7], %9 {strides = array<i32>} : memref<128x16xbf16, #tpu.memory_space<vmem>>, vector<128x16xbf16>,
    return
  }
  func.func @transform_0(%arg0: i32, %arg1: i32, %arg2: i32) -> (i32, i32) {
    %c0_i32 = arith.constant 0 : i32
    return %arg0, %arg2 : i32, i32
  }
  func.func @transform_1(%arg0: i32, %arg1: i32, %arg2: i32) -> (i32, i32) {
    %c0_i32 = arith.constant 0 : i32
    return %arg2, %arg1 : i32, i32
  }
  func.func @transform_2(%arg0: i32, %arg1: i32, %arg2: i32) -> (i32, i32) {
    %c0_i32 = arith.constant 0 : i32
    %c0_i32_0 = arith.constant 0 : i32
    return %c0_i32, %arg1 : i32, i32
  }
  func.func @transform_3(%arg0: i32, %arg1: i32, %arg2: i32) -> (i32, i32) {
    %c0_i32 = arith.constant 0 : i32
    return %arg0, %arg1 : i32, i32
  }
}

module attributes {stable_mosaic.version = 11 : i64} {
  func.func @_mm_kernel(%arg0: i32, %arg1: i32, %arg2: i32, %arg3: memref<32x256xbf16, #tpu.memory_space<vmem>>, %arg4: memref<256x16xbf16, #tpu.memory_space<vmem>>, %arg5: memref<1x16xf32, #tpu.memory_space<vmem>>, %arg6: memref<32x16xbf16, #tpu.memory_space<vmem>>) attributes {dimension_semantics = [#tpu.dimension_semantics<parallel>, #tpu.dimension_semantics<parallel>, #tpu.dimension_semantics<arbitrary>], iteration_bounds = array<i64: 1, 1, 1>, scalar_prefetch = 0 : i64, scratch_operands = 0 : i64, tpu.core_type = #tpu.core_type<tc>, window_params = [{transform_indices = @transform_0, window_bounds = array<i64: 32, 256>}, {transform_indices = @transform_1, window_bounds = array<i64: 256, 16>}, {transform_indices = @transform_2, window_bounds = array<i64: 1, 16>}, {transform_indices = @transform_3, window_bounds = array<i64: 32, 16>}]} {
    %c0 = arith.constant 0 : index
    %c0_0 = arith.constant 0 : index
    %0 = vector.load %arg3[%c0, %c0_0] : memref<32x256xbf16, #tpu.memory_space<vmem>>, vector<32x256xbf16>
    %c0_1 = arith.constant 0 : index
    %c0_2 = arith.constant 0 : index
    %1 = vector.load %arg4[%c0_1, %c0_2] : memref<256x16xbf16, #tpu.memory_space<vmem>>, vector<256x16xbf16>
    %cst = arith.constant dense<0.000000e+00> : vector<32x16xf32>
    %2 = tpu.matmul %0, %1, %cst {dimension_numbers = #tpu.dot_dimension_numbers<[1], [0], [0], [1], [0, 0, 1, 1], [], []>} : vector<32x256xbf16>, vector<256x16xbf16>, vector<32x16xf32> -> vector<32x16xf32>
    %c0_3 = arith.constant 0 : index
    %c0_4 = arith.constant 0 : index
    %3 = vector.load %arg5[%c0_3, %c0_4] : memref<1x16xf32, #tpu.memory_space<vmem>>, vector<1x16xf32>
    %4 = vector.broadcast %3 : vector<1x16xf32> to vector<32x16xf32>
    %5 = arith.addf %2, %4 : vector<32x16xf32>
    %cst_5 = arith.constant 2.000000e-01 : f32
    %6 = vector.broadcast %cst_5 : f32 to vector<32x16xf32>
    %7 = arith.mulf %6, %5 : vector<32x16xf32>
    %8 = arith.maximumf %5, %7 : vector<32x16xf32>
    %9 = arith.truncf %8 : vector<32x16xf32> to vector<32x16xbf16>
    %c0_6 = arith.constant 0 : index
    %c0_7 = arith.constant 0 : index
    %10 = vector.load %arg6[%c0_6, %c0_7] : memref<32x16xbf16, #tpu.memory_space<vmem>>, vector<32x16xbf16>
    tpu.vector_store %arg6[%c0_6, %c0_7], %9 {strides = array<i32>} : memref<32x16xbf16, #tpu.memory_space<vmem>>, vector<32x16xbf16>,
    return
  }
  func.func @transform_0(%arg0: i32, %arg1: i32, %arg2: i32) -> (i32, i32) {
    %c0_i32 = arith.constant 0 : i32
    return %arg0, %arg2 : i32, i32
  }
  func.func @transform_1(%arg0: i32, %arg1: i32, %arg2: i32) -> (i32, i32) {
    %c0_i32 = arith.constant 0 : i32
    return %arg2, %arg1 : i32, i32
  }
  func.func @transform_2(%arg0: i32, %arg1: i32, %arg2: i32) -> (i32, i32) {
    %c0_i32 = arith.constant 0 : i32
    %c0_i32_0 = arith.constant 0 : i32
    return %c0_i32, %arg1 : i32, i32
  }
  func.func @transform_3(%arg0: i32, %arg1: i32, %arg2: i32) -> (i32, i32) {
    %c0_i32 = arith.constant 0 : i32
    return %arg0, %arg1 : i32, i32
  }
}

module attributes {stable_mosaic.version = 11 : i64} {
  func.func @_mm_kernel(%arg0: i32, %arg1: i32, %arg2: i32, %arg3: memref<16x256xbf16, #tpu.memory_space<vmem>>, %arg4: memref<256x16xbf16, #tpu.memory_space<vmem>>, %arg5: memref<1x16xf32, #tpu.memory_space<vmem>>, %arg6: memref<16x16xbf16, #tpu.memory_space<vmem>>) attributes {dimension_semantics = [#tpu.dimension_semantics<parallel>, #tpu.dimension_semantics<parallel>, #tpu.dimension_semantics<arbitrary>], iteration_bounds = array<i64: 1, 1, 1>, scalar_prefetch = 0 : i64, scratch_operands = 0 : i64, tpu.core_type = #tpu.core_type<tc>, window_params = [{transform_indices = @transform_0, window_bounds = array<i64: 16, 256>}, {transform_indices = @transform_1, window_bounds = array<i64: 256, 16>}, {transform_indices = @transform_2, window_bounds = array<i64: 1, 16>}, {transform_indices = @transform_3, window_bounds = array<i64: 16, 16>}]} {
    %c0 = arith.constant 0 : index
    %c0_0 = arith.constant 0 : index
    %0 = vector.load %arg3[%c0, %c0_0] : memref<16x256xbf16, #tpu.memory_space<vmem>>, vector<16x256xbf16>
    %c0_1 = arith.constant 0 : index
    %c0_2 = arith.constant 0 : index
    %1 = vector.load %arg4[%c0_1, %c0_2] : memref<256x16xbf16, #tpu.memory_space<vmem>>, vector<256x16xbf16>
    %cst = arith.constant dense<0.000000e+00> : vector<16x16xf32>
    %2 = tpu.matmul %0, %1, %cst {dimension_numbers = #tpu.dot_dimension_numbers<[1], [0], [0], [1], [0, 0, 1, 1], [], []>} : vector<16x256xbf16>, vector<256x16xbf16>, vector<16x16xf32> -> vector<16x16xf32>
    %c0_3 = arith.constant 0 : index
    %c0_4 = arith.constant 0 : index
    %3 = vector.load %arg5[%c0_3, %c0_4] : memref<1x16xf32, #tpu.memory_space<vmem>>, vector<1x16xf32>
    %4 = vector.broadcast %3 : vector<1x16xf32> to vector<16x16xf32>
    %5 = arith.addf %2, %4 : vector<16x16xf32>
    %cst_5 = arith.constant 2.000000e-01 : f32
    %6 = vector.broadcast %cst_5 : f32 to vector<16x16xf32>
    %7 = arith.mulf %6, %5 : vector<16x16xf32>
    %8 = arith.maximumf %5, %7 : vector<16x16xf32>
    %9 = arith.truncf %8 : vector<16x16xf32> to vector<16x16xbf16>
    %c0_6 = arith.constant 0 : index
    %c0_7 = arith.constant 0 : index
    %10 = vector.load %arg6[%c0_6, %c0_7] : memref<16x16xbf16, #tpu.memory_space<vmem>>, vector<16x16xbf16>
    tpu.vector_store %arg6[%c0_6, %c0_7], %9 {strides = array<i32>} : memref<16x16xbf16, #tpu.memory_space<vmem>>, vector<16x16xbf16>,
    return
  }
  func.func @transform_0(%arg0: i32, %arg1: i32, %arg2: i32) -> (i32, i32) {
    %c0_i32 = arith.constant 0 : i32
    return %arg0, %arg2 : i32, i32
  }
  func.func @transform_1(%arg0: i32, %arg1: i32, %arg2: i32) -> (i32, i32) {
    %c0_i32 = arith.constant 0 : i32
    return %arg2, %arg1 : i32, i32
  }
  func.func @transform_2(%arg0: i32, %arg1: i32, %arg2: i32) -> (i32, i32) {
    %c0_i32 = arith.constant 0 : i32
    %c0_i32_0 = arith.constant 0 : i32
    return %c0_i32, %arg1 : i32, i32
  }
  func.func @transform_3(%arg0: i32, %arg1: i32, %arg2: i32) -> (i32, i32) {
    %c0_i32 = arith.constant 0 : i32
    return %arg0, %arg1 : i32, i32
  }
}

module attributes {stable_mosaic.version = 11 : i64} {
  func.func @_mm_kernel(%arg0: i32, %arg1: i32, %arg2: i32, %arg3: memref<16x256xbf16, #tpu.memory_space<vmem>>, %arg4: memref<256x16xbf16, #tpu.memory_space<vmem>>, %arg5: memref<16x16xbf16, #tpu.memory_space<vmem>>) attributes {dimension_semantics = [#tpu.dimension_semantics<parallel>, #tpu.dimension_semantics<parallel>, #tpu.dimension_semantics<arbitrary>], iteration_bounds = array<i64: 1, 1, 1>, scalar_prefetch = 0 : i64, scratch_operands = 0 : i64, tpu.core_type = #tpu.core_type<tc>, window_params = [{transform_indices = @transform_0, window_bounds = array<i64: 16, 256>}, {transform_indices = @transform_1, window_bounds = array<i64: 256, 16>}, {transform_indices = @transform_2, window_bounds = array<i64: 16, 16>}]} {
    %c0 = arith.constant 0 : index
    %c0_0 = arith.constant 0 : index
    %0 = vector.load %arg3[%c0, %c0_0] : memref<16x256xbf16, #tpu.memory_space<vmem>>, vector<16x256xbf16>
    %c0_1 = arith.constant 0 : index
    %c0_2 = arith.constant 0 : index
    %1 = vector.load %arg4[%c0_1, %c0_2] : memref<256x16xbf16, #tpu.memory_space<vmem>>, vector<256x16xbf16>
    %cst = arith.constant dense<0.000000e+00> : vector<16x16xf32>
    %2 = tpu.matmul %0, %1, %cst {dimension_numbers = #tpu.dot_dimension_numbers<[1], [0], [0], [1], [0, 0, 1, 1], [], []>} : vector<16x256xbf16>, vector<256x16xbf16>, vector<16x16xf32> -> vector<16x16xf32>
    %cst_3 = arith.constant 0.000000e+00 : f32
    %3 = vector.broadcast %cst_3 : f32 to vector<16x16xf32>
    %4 = arith.maximumf %2, %3 : vector<16x16xf32>
    %5 = arith.truncf %4 : vector<16x16xf32> to vector<16x16xbf16>
    %c0_4 = arith.constant 0 : index
    %c0_5 = arith.constant 0 : index
    %6 = vector.load %arg5[%c0_4, %c0_5] : memref<16x16xbf16, #tpu.memory_space<vmem>>, vector<16x16xbf16>
    tpu.vector_store %arg5[%c0_4, %c0_5], %5 {strides = array<i32>} : memref<16x16xbf16, #tpu.memory_space<vmem>>, vector<16x16xbf16>,
    return
  }
  func.func @transform_0(%arg0: i32, %arg1: i32, %arg2: i32) -> (i32, i32) {
    %c0_i32 = arith.constant 0 : i32
    return %arg0, %arg2 : i32, i32
  }
  func.func @transform_1(%arg0: i32, %arg1: i32, %arg2: i32) -> (i32, i32) {
    %c0_i32 = arith.constant 0 : i32
    return %arg2, %arg1 : i32, i32
  }
  func.func @transform_2(%arg0: i32, %arg1: i32, %arg2: i32) -> (i32, i32) {
    %c0_i32 = arith.constant 0 : i32
    return %arg0, %arg1 : i32, i32
  }
}

module attributes {stable_mosaic.version = 11 : i64} {
  func.func @_mm_kernel(%arg0: i32, %arg1: i32, %arg2: i32, %arg3: memref<16x144xbf16, #tpu.memory_space<vmem>>, %arg4: memref<144x64xbf16, #tpu.memory_space<vmem>>, %arg5: memref<1x64xf32, #tpu.memory_space<vmem>>, %arg6: memref<16x64xbf16, #tpu.memory_space<vmem>>) attributes {dimension_semantics = [#tpu.dimension_semantics<parallel>, #tpu.dimension_semantics<parallel>, #tpu.dimension_semantics<arbitrary>], iteration_bounds = array<i64: 1, 1, 1>, scalar_prefetch = 0 : i64, scratch_operands = 0 : i64, tpu.core_type = #tpu.core_type<tc>, window_params = [{transform_indices = @transform_0, window_bounds = array<i64: 16, 144>}, {transform_indices = @transform_1, window_bounds = array<i64: 144, 64>}, {transform_indices = @transform_2, window_bounds = array<i64: 1, 64>}, {transform_indices = @transform_3, window_bounds = array<i64: 16, 64>}]} {
    %c0 = arith.constant 0 : index
    %c0_0 = arith.constant 0 : index
    %0 = vector.load %arg3[%c0, %c0_0] : memref<16x144xbf16, #tpu.memory_space<vmem>>, vector<16x144xbf16>
    %c0_1 = arith.constant 0 : index
    %c0_2 = arith.constant 0 : index
    %1 = vector.load %arg4[%c0_1, %c0_2] : memref<144x64xbf16, #tpu.memory_space<vmem>>, vector<144x64xbf16>
    %cst = arith.constant dense<0.000000e+00> : vector<16x64xf32>
    %2 = tpu.matmul %0, %1, %cst {dimension_numbers = #tpu.dot_dimension_numbers<[1], [0], [0], [1], [0, 0, 1, 1], [], []>} : vector<16x144xbf16>, vector<144x64xbf16>, vector<16x64xf32> -> vector<16x64xf32>
    %c0_3 = arith.constant 0 : index
    %c0_4 = arith.constant 0 : index
    %3 = vector.load %arg5[%c0_3, %c0_4] : memref<1x64xf32, #tpu.memory_space<vmem>>, vector<1x64xf32>
    %4 = vector.broadcast %3 : vector<1x64xf32> to vector<16x64xf32>
    %5 = arith.addf %2, %4 : vector<16x64xf32>
    %cst_5 = arith.constant 0.000000e+00 : f32
    %6 = vector.broadcast %cst_5 : f32 to vector<16x64xf32>
    %7 = arith.maximumf %5, %6 : vector<16x64xf32>
    %8 = arith.truncf %7 : vector<16x64xf32> to vector<16x64xbf16>
    %c0_6 = arith.constant 0 : index
    %c0_7 = arith.constant 0 : index
    %9 = vector.load %arg6[%c0_6, %c0_7] : memref<16x64xbf16, #tpu.memory_space<vmem>>, vector<16x64xbf16>
    tpu.vector_store %arg6[%c0_6, %c0_7], %8 {strides = array<i32>} : memref<16x64xbf16, #tpu.memory_space<vmem>>, vector<16x64xbf16>,
    return
  }
  func.func @transform_0(%arg0: i32, %arg1: i32, %arg2: i32) -> (i32, i32) {
    %c0_i32 = arith.constant 0 : i32
    return %arg0, %arg2 : i32, i32
  }
  func.func @transform_1(%arg0: i32, %arg1: i32, %arg2: i32) -> (i32, i32) {
    %c0_i32 = arith.constant 0 : i32
    return %arg2, %arg1 : i32, i32
  }
  func.func @transform_2(%arg0: i32, %arg1: i32, %arg2: i32) -> (i32, i32) {
    %c0_i32 = arith.constant 0 : i32
    %c0_i32_0 = arith.constant 0 : i32
    return %c0_i32, %arg1 : i32, i32
  }
  func.func @transform_3(%arg0: i32, %arg1: i32, %arg2: i32) -> (i32, i32) {
    %c0_i32 = arith.constant 0 : i32
    return %arg0, %arg1 : i32, i32
  }
}

module attributes {stable_mosaic.version = 11 : i64} {
  func.func @_mm_kernel(%arg0: i32, %arg1: i32, %arg2: i32, %arg3: memref<32x144xbf16, #tpu.memory_space<vmem>>, %arg4: memref<144x64xbf16, #tpu.memory_space<vmem>>, %arg5: memref<1x64xf32, #tpu.memory_space<vmem>>, %arg6: memref<32x64xbf16, #tpu.memory_space<vmem>>) attributes {dimension_semantics = [#tpu.dimension_semantics<parallel>, #tpu.dimension_semantics<parallel>, #tpu.dimension_semantics<arbitrary>], iteration_bounds = array<i64: 1, 1, 1>, scalar_prefetch = 0 : i64, scratch_operands = 0 : i64, tpu.core_type = #tpu.core_type<tc>, window_params = [{transform_indices = @transform_0, window_bounds = array<i64: 32, 144>}, {transform_indices = @transform_1, window_bounds = array<i64: 144, 64>}, {transform_indices = @transform_2, window_bounds = array<i64: 1, 64>}, {transform_indices = @transform_3, window_bounds = array<i64: 32, 64>}]} {
    %c0 = arith.constant 0 : index
    %c0_0 = arith.constant 0 : index
    %0 = vector.load %arg3[%c0, %c0_0] : memref<32x144xbf16, #tpu.memory_space<vmem>>, vector<32x144xbf16>
    %c0_1 = arith.constant 0 : index
    %c0_2 = arith.constant 0 : index
    %1 = vector.load %arg4[%c0_1, %c0_2] : memref<144x64xbf16, #tpu.memory_space<vmem>>, vector<144x64xbf16>
    %cst = arith.constant dense<0.000000e+00> : vector<32x64xf32>
    %2 = tpu.matmul %0, %1, %cst {dimension_numbers = #tpu.dot_dimension_numbers<[1], [0], [0], [1], [0, 0, 1, 1], [], []>} : vector<32x144xbf16>, vector<144x64xbf16>, vector<32x64xf32> -> vector<32x64xf32>
    %c0_3 = arith.constant 0 : index
    %c0_4 = arith.constant 0 : index
    %3 = vector.load %arg5[%c0_3, %c0_4] : memref<1x64xf32, #tpu.memory_space<vmem>>, vector<1x64xf32>
    %4 = vector.broadcast %3 : vector<1x64xf32> to vector<32x64xf32>
    %5 = arith.addf %2, %4 : vector<32x64xf32>
    %cst_5 = arith.constant 0.000000e+00 : f32
    %6 = vector.broadcast %cst_5 : f32 to vector<32x64xf32>
    %7 = arith.maximumf %5, %6 : vector<32x64xf32>
    %8 = arith.truncf %7 : vector<32x64xf32> to vector<32x64xbf16>
    %c0_6 = arith.constant 0 : index
    %c0_7 = arith.constant 0 : index
    %9 = vector.load %arg6[%c0_6, %c0_7] : memref<32x64xbf16, #tpu.memory_space<vmem>>, vector<32x64xbf16>
    tpu.vector_store %arg6[%c0_6, %c0_7], %8 {strides = array<i32>} : memref<32x64xbf16, #tpu.memory_space<vmem>>, vector<32x64xbf16>,
    return
  }
  func.func @transform_0(%arg0: i32, %arg1: i32, %arg2: i32) -> (i32, i32) {
    %c0_i32 = arith.constant 0 : i32
    return %arg0, %arg2 : i32, i32
  }
  func.func @transform_1(%arg0: i32, %arg1: i32, %arg2: i32) -> (i32, i32) {
    %c0_i32 = arith.constant 0 : i32
    return %arg2, %arg1 : i32, i32
  }
  func.func @transform_2(%arg0: i32, %arg1: i32, %arg2: i32) -> (i32, i32) {
    %c0_i32 = arith.constant 0 : i32
    %c0_i32_0 = arith.constant 0 : i32
    return %c0_i32, %arg1 : i32, i32
  }
  func.func @transform_3(%arg0: i32, %arg1: i32, %arg2: i32) -> (i32, i32) {
    %c0_i32 = arith.constant 0 : i32
    return %arg0, %arg1 : i32, i32
  }
}

module attributes {stable_mosaic.version = 11 : i64} {
  func.func @_mm_kernel(%arg0: i32, %arg1: i32, %arg2: i32, %arg3: memref<128x144xbf16, #tpu.memory_space<vmem>>, %arg4: memref<144x64xbf16, #tpu.memory_space<vmem>>, %arg5: memref<1x64xf32, #tpu.memory_space<vmem>>, %arg6: memref<128x64xbf16, #tpu.memory_space<vmem>>) attributes {dimension_semantics = [#tpu.dimension_semantics<parallel>, #tpu.dimension_semantics<parallel>, #tpu.dimension_semantics<arbitrary>], iteration_bounds = array<i64: 1, 1, 1>, scalar_prefetch = 0 : i64, scratch_operands = 0 : i64, tpu.core_type = #tpu.core_type<tc>, window_params = [{transform_indices = @transform_0, window_bounds = array<i64: 128, 144>}, {transform_indices = @transform_1, window_bounds = array<i64: 144, 64>}, {transform_indices = @transform_2, window_bounds = array<i64: 1, 64>}, {transform_indices = @transform_3, window_bounds = array<i64: 128, 64>}]} {
    %c0 = arith.constant 0 : index
    %c0_0 = arith.constant 0 : index
    %0 = vector.load %arg3[%c0, %c0_0] : memref<128x144xbf16, #tpu.memory_space<vmem>>, vector<128x144xbf16>
    %c0_1 = arith.constant 0 : index
    %c0_2 = arith.constant 0 : index
    %1 = vector.load %arg4[%c0_1, %c0_2] : memref<144x64xbf16, #tpu.memory_space<vmem>>, vector<144x64xbf16>
    %cst = arith.constant dense<0.000000e+00> : vector<128x64xf32>
    %2 = tpu.matmul %0, %1, %cst {dimension_numbers = #tpu.dot_dimension_numbers<[1], [0], [0], [1], [0, 0, 1, 1], [], []>} : vector<128x144xbf16>, vector<144x64xbf16>, vector<128x64xf32> -> vector<128x64xf32>
    %c0_3 = arith.constant 0 : index
    %c0_4 = arith.constant 0 : index
    %3 = vector.load %arg5[%c0_3, %c0_4] : memref<1x64xf32, #tpu.memory_space<vmem>>, vector<1x64xf32>
    %4 = vector.broadcast %3 : vector<1x64xf32> to vector<128x64xf32>
    %5 = arith.addf %2, %4 : vector<128x64xf32>
    %cst_5 = arith.constant 0.000000e+00 : f32
    %6 = vector.broadcast %cst_5 : f32 to vector<128x64xf32>
    %7 = arith.maximumf %5, %6 : vector<128x64xf32>
    %8 = arith.truncf %7 : vector<128x64xf32> to vector<128x64xbf16>
    %c0_6 = arith.constant 0 : index
    %c0_7 = arith.constant 0 : index
    %9 = vector.load %arg6[%c0_6, %c0_7] : memref<128x64xbf16, #tpu.memory_space<vmem>>, vector<128x64xbf16>
    tpu.vector_store %arg6[%c0_6, %c0_7], %8 {strides = array<i32>} : memref<128x64xbf16, #tpu.memory_space<vmem>>, vector<128x64xbf16>,
    return
  }
  func.func @transform_0(%arg0: i32, %arg1: i32, %arg2: i32) -> (i32, i32) {
    %c0_i32 = arith.constant 0 : i32
    return %arg0, %arg2 : i32, i32
  }
  func.func @transform_1(%arg0: i32, %arg1: i32, %arg2: i32) -> (i32, i32) {
    %c0_i32 = arith.constant 0 : i32
    return %arg2, %arg1 : i32, i32
  }
  func.func @transform_2(%arg0: i32, %arg1: i32, %arg2: i32) -> (i32, i32) {
    %c0_i32 = arith.constant 0 : i32
    %c0_i32_0 = arith.constant 0 : i32
    return %c0_i32, %arg1 : i32, i32
  }
  func.func @transform_3(%arg0: i32, %arg1: i32, %arg2: i32) -> (i32, i32) {
    %c0_i32 = arith.constant 0 : i32
    return %arg0, %arg1 : i32, i32
  }
}

module attributes {stable_mosaic.version = 11 : i64} {
  func.func @_mm_kernel(%arg0: i32, %arg1: i32, %arg2: i32, %arg3: memref<512x144xbf16, #tpu.memory_space<vmem>>, %arg4: memref<144x32xbf16, #tpu.memory_space<vmem>>, %arg5: memref<1x32xf32, #tpu.memory_space<vmem>>, %arg6: memref<512x32xbf16, #tpu.memory_space<vmem>>) attributes {dimension_semantics = [#tpu.dimension_semantics<parallel>, #tpu.dimension_semantics<parallel>, #tpu.dimension_semantics<arbitrary>], iteration_bounds = array<i64: 1, 1, 1>, scalar_prefetch = 0 : i64, scratch_operands = 0 : i64, tpu.core_type = #tpu.core_type<tc>, window_params = [{transform_indices = @transform_0, window_bounds = array<i64: 512, 144>}, {transform_indices = @transform_1, window_bounds = array<i64: 144, 32>}, {transform_indices = @transform_2, window_bounds = array<i64: 1, 32>}, {transform_indices = @transform_3, window_bounds = array<i64: 512, 32>}]} {
    %c0 = arith.constant 0 : index
    %c0_0 = arith.constant 0 : index
    %0 = vector.load %arg3[%c0, %c0_0] : memref<512x144xbf16, #tpu.memory_space<vmem>>, vector<512x144xbf16>
    %c0_1 = arith.constant 0 : index
    %c0_2 = arith.constant 0 : index
    %1 = vector.load %arg4[%c0_1, %c0_2] : memref<144x32xbf16, #tpu.memory_space<vmem>>, vector<144x32xbf16>
    %cst = arith.constant dense<0.000000e+00> : vector<512x32xf32>
    %2 = tpu.matmul %0, %1, %cst {dimension_numbers = #tpu.dot_dimension_numbers<[1], [0], [0], [1], [0, 0, 1, 1], [], []>} : vector<512x144xbf16>, vector<144x32xbf16>, vector<512x32xf32> -> vector<512x32xf32>
    %c0_3 = arith.constant 0 : index
    %c0_4 = arith.constant 0 : index
    %3 = vector.load %arg5[%c0_3, %c0_4] : memref<1x32xf32, #tpu.memory_space<vmem>>, vector<1x32xf32>
    %4 = vector.broadcast %3 : vector<1x32xf32> to vector<512x32xf32>
    %5 = arith.addf %2, %4 : vector<512x32xf32>
    %cst_5 = arith.constant 0.000000e+00 : f32
    %6 = vector.broadcast %cst_5 : f32 to vector<512x32xf32>
    %7 = arith.maximumf %5, %6 : vector<512x32xf32>
    %8 = arith.truncf %7 : vector<512x32xf32> to vector<512x32xbf16>
    %c0_6 = arith.constant 0 : index
    %c0_7 = arith.constant 0 : index
    %9 = vector.load %arg6[%c0_6, %c0_7] : memref<512x32xbf16, #tpu.memory_space<vmem>>, vector<512x32xbf16>
    tpu.vector_store %arg6[%c0_6, %c0_7], %8 {strides = array<i32>} : memref<512x32xbf16, #tpu.memory_space<vmem>>, vector<512x32xbf16>,
    return
  }
  func.func @transform_0(%arg0: i32, %arg1: i32, %arg2: i32) -> (i32, i32) {
    %c0_i32 = arith.constant 0 : i32
    return %arg0, %arg2 : i32, i32
  }
  func.func @transform_1(%arg0: i32, %arg1: i32, %arg2: i32) -> (i32, i32) {
    %c0_i32 = arith.constant 0 : i32
    return %arg2, %arg1 : i32, i32
  }
  func.func @transform_2(%arg0: i32, %arg1: i32, %arg2: i32) -> (i32, i32) {
    %c0_i32 = arith.constant 0 : i32
    %c0_i32_0 = arith.constant 0 : i32
    return %c0_i32, %arg1 : i32, i32
  }
  func.func @transform_3(%arg0: i32, %arg1: i32, %arg2: i32) -> (i32, i32) {
    %c0_i32 = arith.constant 0 : i32
    return %arg0, %arg1 : i32, i32
  }
}

module attributes {stable_mosaic.version = 11 : i64} {
  func.func @_mm_kernel(%arg0: i32, %arg1: i32, %arg2: i32, %arg3: memref<2048x72xbf16, #tpu.memory_space<vmem>>, %arg4: memref<72x12xbf16, #tpu.memory_space<vmem>>, %arg5: memref<2048x12xf32, #tpu.memory_space<vmem>>) attributes {dimension_semantics = [#tpu.dimension_semantics<parallel>, #tpu.dimension_semantics<parallel>, #tpu.dimension_semantics<arbitrary>], iteration_bounds = array<i64: 1, 1, 1>, scalar_prefetch = 0 : i64, scratch_operands = 0 : i64, tpu.core_type = #tpu.core_type<tc>, window_params = [{transform_indices = @transform_0, window_bounds = array<i64: 2048, 72>}, {transform_indices = @transform_1, window_bounds = array<i64: 72, 12>}, {transform_indices = @transform_2, window_bounds = array<i64: 2048, 12>}]} {
    %c0 = arith.constant 0 : index
    %c0_0 = arith.constant 0 : index
    %0 = vector.load %arg3[%c0, %c0_0] : memref<2048x72xbf16, #tpu.memory_space<vmem>>, vector<2048x72xbf16>
    %c0_1 = arith.constant 0 : index
    %c0_2 = arith.constant 0 : index
    %1 = vector.load %arg4[%c0_1, %c0_2] : memref<72x12xbf16, #tpu.memory_space<vmem>>, vector<72x12xbf16>
    %cst = arith.constant dense<0.000000e+00> : vector<2048x12xf32>
    %2 = tpu.matmul %0, %1, %cst {dimension_numbers = #tpu.dot_dimension_numbers<[1], [0], [0], [1], [0, 0, 1, 1], [], []>} : vector<2048x72xbf16>, vector<72x12xbf16>, vector<2048x12xf32> -> vector<2048x12xf32>
    %3 = math.tanh %2 : vector<2048x12xf32>
    %c0_3 = arith.constant 0 : index
    %c0_4 = arith.constant 0 : index
    %4 = vector.load %arg5[%c0_3, %c0_4] : memref<2048x12xf32, #tpu.memory_space<vmem>>, vector<2048x12xf32>
    tpu.vector_store %arg5[%c0_3, %c0_4], %3 {strides = array<i32>} : memref<2048x12xf32, #tpu.memory_space<vmem>>, vector<2048x12xf32>,
    return
  }
  func.func @transform_0(%arg0: i32, %arg1: i32, %arg2: i32) -> (i32, i32) {
    %c0_i32 = arith.constant 0 : i32
    return %arg0, %arg2 : i32, i32
  }
  func.func @transform_1(%arg0: i32, %arg1: i32, %arg2: i32) -> (i32, i32) {
    %c0_i32 = arith.constant 0 : i32
    return %arg2, %arg1 : i32, i32
  }
  func.func @transform_2(%arg0: i32, %arg1: i32, %arg2: i32) -> (i32, i32) {
    %c0_i32 = arith.constant 0 : i32
    return %arg0, %arg1 : i32, i32
  }
}

</mosaic_0001>

<llo_original>
// kernel: forward.12
$region0: #{forward.12}
  #allocation0 [shape = 'u32[]', space=smem, size = 0x4, offset = 0x4, fixed_abs, tag = 'smem constant byte address 0x4 - core index']
  #allocation1 [shape = 'u32[144,128]{1,0:T(1,128)}', space=vmem, size = 0x12000, scoped, tag = 'internal scratch']
  %s0 = inlined_call_operand.vmem [shape: bf16[2048,48], index: 0, kind: input, shape index: {}]
  %s1 = inlined_call_operand.vmem [shape: bf16[48,8], index: 1, kind: input, shape index: {}]
  %s2 = inlined_call_operand.vmem [shape: bf16[2048,8], index: 2, kind: output, shape index: {}]
  %s3 = sld [smem:[#allocation0]]
  $region18: #{forward.12} parent=0
    _
  %s5 = ssub.s32 1, %s3
  %s6 = scalar_select 0, %s5, %s3
  // Predicated region
  $region2: #{forward.12} parent=0 // pred_check
    _
  $region3: #{forward.12} parent=0 // pred_check_branch
    %8 = sbr.rel (0) target = $region5
  $region4: #{forward.12} parent=0 // pred_region
    _
  $region5: #{forward.12} parent=0 // pred_fallthru
    _
  // Predicated region
  $region6: #{forward.12} parent=0 // pred_check
    _
  $region7: #{forward.12} parent=0 // pred_check_branch
    %10 = sbr.rel (0) target = $region9
  $region8: #{forward.12} parent=0 // pred_region
    _
  $region9: #{forward.12} parent=0 // pred_fallthru
    _
  %v12 = vld [vmem:[%s0] sm:$0xf]
  %v13 = vld [vmem:[%s0 + $0x4] sm:$0xf]
  %v14 = vld [vmem:[%s0 + $0x8] sm:$0xf]
  %v15 = vld [vmem:[%s0 + $0xc] sm:$0xf]
  %v16 = vld [vmem:[%s0 + $0x10] sm:$0xf]
  %v17 = vld [vmem:[%s0 + $0x14] sm:$0xf]
  %v18 = vld [vmem:[%s0 + $0x18] sm:$0xf]
  %v19 = vld [vmem:[%s0 + $0x1c] sm:$0xf]
  %v20 = vld [vmem:[%s0 + $0x20] sm:$0xf]
  %v21 = vld [vmem:[%s0 + $0x24] sm:$0xf]
  %v22 = vld [vmem:[%s0 + $0x28] sm:$0xf]
  %v23 = vld [vmem:[%s0 + $0x2c] sm:$0xf]
  %v24 = vld [vmem:[%s0 + $0x30] sm:$0xf]
  %v25 = vld [vmem:[%s0 + $0x34] sm:$0xf]
  %v26 = vld [vmem:[%s0 + $0x38] sm:$0xf]
  %v27 = vld [vmem:[%s0 + $0x3c] sm:$0xf]
  %v28 = vld [vmem:[%s0 + $0x40] sm:$0xf]
  %v29 = vld [vmem:[%s0 + $0x44] sm:$0xf]
  %v30 = vld [vmem:[%s0 + $0x48] sm:$0xf]
  %v31 = vld [vmem:[%s0 + $0x4c] sm:$0xf]
  %v32 = vld [vmem:[%s0 + $0x50] sm:$0xf]
  %v33 = vld [vmem:[%s0 + $0x54] sm:$0xf]
  %v34 = vld [vmem:[%s0 + $0x58] sm:$0xf]
  %v35 = vld [vmem:[%s0 + $0x5c] sm:$0xf]
  %v36 = vld [vmem:[%s0 + $0x60] sm:$0xf]
  %v37 = vld [vmem:[%s0 + $0x64] sm:$0xf]
  %v38 = vld [vmem:[%s0 + $0x68] sm:$0xf]
  %v39 = vld [vmem:[%s0 + $0x6c] sm:$0xf]
  %v40 = vld [vmem:[%s0 + $0x70] sm:$0xf]
  %v41 = vld [vmem:[%s0 + $0x74] sm:$0xf]
  %v42 = vld [vmem:[%s0 + $0x78] sm:$0xf]
  %v43 = vld [vmem:[%s0 + $0x7c] sm:$0xf]
  %v44 = vld [vmem:[%s0 + $0x80] sm:$0xf]
  %v45 = vld [vmem:[%s0 + $0x84] sm:$0xf]
  %v46 = vld [vmem:[%s0 + $0x88] sm:$0xf]
  %v47 = vld [vmem:[%s0 + $0x8c] sm:$0xf]
  %v48 = vld [vmem:[%s0 + $0x90] sm:$0xf]
  %v49 = vld [vmem:[%s0 + $0x94] sm:$0xf]
  %v50 = vld [vmem:[%s0 + $0x98] sm:$0xf]
  %v51 = vld [vmem:[%s0 + $0x9c] sm:$0xf]
  %v52 = vld [vmem:[%s0 + $0xa0] sm:$0xf]
  %v53 = vld [vmem:[%s0 + $0xa4] sm:$0xf]
  %v54 = vld [vmem:[%s0 + $0xa8] sm:$0xf]
  %v55 = vld [vmem:[%s0 + $0xac] sm:$0xf]
  %v56 = vld [vmem:[%s0 + $0xb0] sm:$0xf]
  %v57 = vld [vmem:[%s0 + $0xb4] sm:$0xf]
  %v58 = vld [vmem:[%s0 + $0xb8] sm:$0xf]
  %v59 = vld [vmem:[%s0 + $0xbc] sm:$0xf]
  %v60 = vld [vmem:[%s0 + $0xc0] sm:$0xf]
  %v61 = vld [vmem:[%s0 + $0xc4] sm:$0xf]
  %v62 = vld [vmem:[%s0 + $0xc8] sm:$0xf]
  %v63 = vld [vmem:[%s0 + $0xcc] sm:$0xf]
  %v64 = vld [vmem:[%s0 + $0xd0] sm:$0xf]
  %v65 = vld [vmem:[%s0 + $0xd4] sm:$0xf]
  %v66 = vld [vmem:[%s0 + $0xd8] sm:$0xf]
  %v67 = vld [vmem:[%s0 + $0xdc] sm:$0xf]
  %v68 = vld [vmem:[%s0 + $0xe0] sm:$0xf]
  %v69 = vld [vmem:[%s0 + $0xe4] sm:$0xf]
  %v70 = vld [vmem:[%s0 + $0xe8] sm:$0xf]
  %v71 = vld [vmem:[%s0 + $0xec] sm:$0xf]
  %v72 = vld [vmem:[%s0 + $0xf0] sm:$0xf]
  %v73 = vld [vmem:[%s0 + $0xf4] sm:$0xf]
  %v74 = vld [vmem:[%s0 + $0xf8] sm:$0xf]
  %v75 = vld [vmem:[%s0 + $0xfc] sm:$0xf]
  %v76 = vld [vmem:[%s0 + $0x100] sm:$0xf]
  %v77 = vld [vmem:[%s0 + $0x104] sm:$0xf]
  %v78 = vld [vmem:[%s0 + $0x108] sm:$0xf]
  %v79 = vld [vmem:[%s0 + $0x10c] sm:$0xf]
  %v80 = vld [vmem:[%s0 + $0x110] sm:$0xf]
  %v81 = vld [vmem:[%s0 + $0x114] sm:$0xf]
  %v82 = vld [vmem:[%s0 + $0x118] sm:$0xf]
  %v83 = vld [vmem:[%s0 + $0x11c] sm:$0xf]
  %v84 = vld [vmem:[%s0 + $0x120] sm:$0xf]
  %v85 = vld [vmem:[%s0 + $0x124] sm:$0xf]
  %v86 = vld [vmem:[%s0 + $0x128] sm:$0xf]
  %v87 = vld [vmem:[%s0 + $0x12c] sm:$0xf]
  %v88 = vld [vmem:[%s0 + $0x130] sm:$0xf]
  %v89 = vld [vmem:[%s0 + $0x134] sm:$0xf]
  %v90 = vld [vmem:[%s0 + $0x138] sm:$0xf]
  %v91 = vld [vmem:[%s0 + $0x13c] sm:$0xf]
  %v92 = vld [vmem:[%s0 + $0x140] sm:$0xf]
  %v93 = vld [vmem:[%s0 + $0x144] sm:$0xf]
  %v94 = vld [vmem:[%s0 + $0x148] sm:$0xf]
  %v95 = vld [vmem:[%s0 + $0x14c] sm:$0xf]
  %v96 = vld [vmem:[%s0 + $0x150] sm:$0xf]
  %v97 = vld [vmem:[%s0 + $0x154] sm:$0xf]
  %v98 = vld [vmem:[%s0 + $0x158] sm:$0xf]
  %v99 = vld [vmem:[%s0 + $0x15c] sm:$0xf]
  %v100 = vld [vmem:[%s0 + $0x160] sm:$0xf]
  %v101 = vld [vmem:[%s0 + $0x164] sm:$0xf]
  %v102 = vld [vmem:[%s0 + $0x168] sm:$0xf]
  %v103 = vld [vmem:[%s0 + $0x16c] sm:$0xf]
  %v104 = vld [vmem:[%s0 + $0x170] sm:$0xf]
  %v105 = vld [vmem:[%s0 + $0x174] sm:$0xf]
  %v106 = vld [vmem:[%s0 + $0x178] sm:$0xf]
  %v107 = vld [vmem:[%s0 + $0x17c] sm:$0xf]
  %v108 = vld [vmem:[%s0 + $0x180] sm:$0xf]
  %v109 = vld [vmem:[%s0 + $0x184] sm:$0xf]
  %v110 = vld [vmem:[%s0 + $0x188] sm:$0xf]
  %v111 = vld [vmem:[%s0 + $0x18c] sm:$0xf]
  %v112 = vld [vmem:[%s0 + $0x190] sm:$0xf]
  %v113 = vld [vmem:[%s0 + $0x194] sm:$0xf]
  %v114 = vld [vmem:[%s0 + $0x198] sm:$0xf]
  %v115 = vld [vmem:[%s0 + $0x19c] sm:$0xf]
  %v116 = vld [vmem:[%s0 + $0x1a0] sm:$0xf]
  %v117 = vld [vmem:[%s0 + $0x1a4] sm:$0xf]
  %v118 = vld [vmem:[%s0 + $0x1a8] sm:$0xf]
  %v119 = vld [vmem:[%s0 + $0x1ac] sm:$0xf]
  %v120 = vld [vmem:[%s0 + $0x1b0] sm:$0xf]
  %v121 = vld [vmem:[%s0 + $0x1b4] sm:$0xf]
  %v122 = vld [vmem:[%s0 + $0x1b8] sm:$0xf]
  %v123 = vld [vmem:[%s0 + $0x1bc] sm:$0xf]
  %v124 = vld [vmem:[%s0 + $0x1c0] sm:$0xf]
  %v125 = vld [vmem:[%s0 + $0x1c4] sm:$0xf]
  %v126 = vld [vmem:[%s0 + $0x1c8] sm:$0xf]
  %v127 = vld [vmem:[%s0 + $0x1cc] sm:$0xf]
  %v128 = vld [vmem:[%s0 + $0x1d0] sm:$0xf]
  %v129 = vld [vmem:[%s0 + $0x1d4] sm:$0xf]
  %v130 = vld [vmem:[%s0 + $0x1d8] sm:$0xf]
  %v131 = vld [vmem:[%s0 + $0x1dc] sm:$0xf]
  %v132 = vld [vmem:[%s0 + $0x1e0] sm:$0xf]
  %v133 = vld [vmem:[%s0 + $0x1e4] sm:$0xf]
  %v134 = vld [vmem:[%s0 + $0x1e8] sm:$0xf]
  %v135 = vld [vmem:[%s0 + $0x1ec] sm:$0xf]
  %v136 = vld [vmem:[%s0 + $0x1f0] sm:$0xf]
  %v137 = vld [vmem:[%s0 + $0x1f4] sm:$0xf]
  %v138 = vld [vmem:[%s0 + $0x1f8] sm:$0xf]
  %v139 = vld [vmem:[%s0 + $0x1fc] sm:$0xf]
  %v140 = vld [vmem:[%s0 + $0x200] sm:$0xf]
  %v141 = vld [vmem:[%s0 + $0x204] sm:$0xf]
  %v142 = vld [vmem:[%s0 + $0x208] sm:$0xf]
  %v143 = vld [vmem:[%s0 + $0x20c] sm:$0xf]
  %v144 = vld [vmem:[%s0 + $0x210] sm:$0xf]
  %v145 = vld [vmem:[%s0 + $0x214] sm:$0xf]
  %v146 = vld [vmem:[%s0 + $0x218] sm:$0xf]
  %v147 = vld [vmem:[%s0 + $0x21c] sm:$0xf]
  %v148 = vld [vmem:[%s0 + $0x220] sm:$0xf]
  %v149 = vld [vmem:[%s0 + $0x224] sm:$0xf]
  %v150 = vld [vmem:[%s0 + $0x228] sm:$0xf]
  %v151 = vld [vmem:[%s0 + $0x22c] sm:$0xf]
  %v152 = vld [vmem:[%s0 + $0x230] sm:$0xf]
  %v153 = vld [vmem:[%s0 + $0x234] sm:$0xf]
  %v154 = vld [vmem:[%s0 + $0x238] sm:$0xf]
  %v155 = vld [vmem:[%s0 + $0x23c] sm:$0xf]
  %v156 = vld [vmem:[%s0 + $0x240] sm:$0xf]
  %v157 = vld [vmem:[%s0 + $0x244] sm:$0xf]
  %v158 = vld [vmem:[%s0 + $0x248] sm:$0xf]
  %v159 = vld [vmem:[%s0 + $0x24c] sm:$0xf]
  %v160 = vld [vmem:[%s0 + $0x250] sm:$0xf]
  %v161 = vld [vmem:[%s0 + $0x254] sm:$0xf]
  %v162 = vld [vmem:[%s0 + $0x258] sm:$0xf]
  %v163 = vld [vmem:[%s0 + $0x25c] sm:$0xf]
  %v164 = vld [vmem:[%s0 + $0x260] sm:$0xf]
  %v165 = vld [vmem:[%s0 + $0x264] sm:$0xf]
  %v166 = vld [vmem:[%s0 + $0x268] sm:$0xf]
  %v167 = vld [vmem:[%s0 + $0x26c] sm:$0xf]
  %v168 = vld [vmem:[%s0 + $0x270] sm:$0xf]
  %v169 = vld [vmem:[%s0 + $0x274] sm:$0xf]
  %v170 = vld [vmem:[%s0 + $0x278] sm:$0xf]
  %v171 = vld [vmem:[%s0 + $0x27c] sm:$0xf]
  %v172 = vld [vmem:[%s0 + $0x280] sm:$0xf]
  %v173 = vld [vmem:[%s0 + $0x284] sm:$0xf]
  %v174 = vld [vmem:[%s0 + $0x288] sm:$0xf]
  %v175 = vld [vmem:[%s0 + $0x28c] sm:$0xf]
  %v176 = vld [vmem:[%s0 + $0x290] sm:$0xf]
  %v177 = vld [vmem:[%s0 + $0x294] sm:$0xf]
  %v178 = vld [vmem:[%s0 + $0x298] sm:$0xf]
  %v179 = vld [vmem:[%s0 + $0x29c] sm:$0xf]
  %v180 = vld [vmem:[%s0 + $0x2a0] sm:$0xf]
  %v181 = vld [vmem:[%s0 + $0x2a4] sm:$0xf]
  %v182 = vld [vmem:[%s0 + $0x2a8] sm:$0xf]
  %v183 = vld [vmem:[%s0 + $0x2ac] sm:$0xf]
  %v184 = vld [vmem:[%s0 + $0x2b0] sm:$0xf]
  %v185 = vld [vmem:[%s0 + $0x2b4] sm:$0xf]
  %v186 = vld [vmem:[%s0 + $0x2b8] sm:$0xf]
  %v187 = vld [vmem:[%s0 + $0x2bc] sm:$0xf]
  %v188 = vld [vmem:[%s0 + $0x2c0] sm:$0xf]
  %v189 = vld [vmem:[%s0 + $0x2c4] sm:$0xf]
  %v190 = vld [vmem:[%s0 + $0x2c8] sm:$0xf]
  %v191 = vld [vmem:[%s0 + $0x2cc] sm:$0xf]
  %v192 = vld [vmem:[%s0 + $0x2d0] sm:$0xf]
  %v193 = vld [vmem:[%s0 + $0x2d4] sm:$0xf]
  %v194 = vld [vmem:[%s0 + $0x2d8] sm:$0xf]
  %v195 = vld [vmem:[%s0 + $0x2dc] sm:$0xf]
  %v196 = vld [vmem:[%s0 + $0x2e0] sm:$0xf]
  %v197 = vld [vmem:[%s0 + $0x2e4] sm:$0xf]
  %v198 = vld [vmem:[%s0 + $0x2e8] sm:$0xf]
  %v199 = vld [vmem:[%s0 + $0x2ec] sm:$0xf]
  %v200 = vld [vmem:[%s0 + $0x2f0] sm:$0xf]
  %v201 = vld [vmem:[%s0 + $0x2f4] sm:$0xf]
  %v202 = vld [vmem:[%s0 + $0x2f8] sm:$0xf]
  %v203 = vld [vmem:[%s0 + $0x2fc] sm:$0xf]
  %v204 = vld [vmem:[%s0 + $0x300] sm:$0xf]
  %v205 = vld [vmem:[%s0 + $0x304] sm:$0xf]
  %v206 = vld [vmem:[%s0 + $0x308] sm:$0xf]
  %v207 = vld [vmem:[%s0 + $0x30c] sm:$0xf]
  %v208 = vld [vmem:[%s0 + $0x310] sm:$0xf]
  %v209 = vld [vmem:[%s0 + $0x314] sm:$0xf]
  %v210 = vld [vmem:[%s0 + $0x318] sm:$0xf]
  %v211 = vld [vmem:[%s0 + $0x31c] sm:$0xf]
  %v212 = vld [vmem:[%s0 + $0x320] sm:$0xf]
  %v213 = vld [vmem:[%s0 + $0x324] sm:$0xf]
  %v214 = vld [vmem:[%s0 + $0x328] sm:$0xf]
  %v215 = vld [vmem:[%s0 + $0x32c] sm:$0xf]
  %v216 = vld [vmem:[%s0 + $0x330] sm:$0xf]
  %v217 = vld [vmem:[%s0 + $0x334] sm:$0xf]
  %v218 = vld [vmem:[%s0 + $0x338] sm:$0xf]
  %v219 = vld [vmem:[%s0 + $0x33c] sm:$0xf]
  %v220 = vld [vmem:[%s0 + $0x340] sm:$0xf]
  %v221 = vld [vmem:[%s0 + $0x344] sm:$0xf]
  %v222 = vld [vmem:[%s0 + $0x348] sm:$0xf]
  %v223 = vld [vmem:[%s0 + $0x34c] sm:$0xf]
  %v224 = vld [vmem:[%s0 + $0x350] sm:$0xf]
  %v225 = vld [vmem:[%s0 + $0x354] sm:$0xf]
  %v226 = vld [vmem:[%s0 + $0x358] sm:$0xf]
  %v227 = vld [vmem:[%s0 + $0x35c] sm:$0xf]
  %v228 = vld [vmem:[%s0 + $0x360] sm:$0xf]
  %v229 = vld [vmem:[%s0 + $0x364] sm:$0xf]
  %v230 = vld [vmem:[%s0 + $0x368] sm:$0xf]
  %v231 = vld [vmem:[%s0 + $0x36c] sm:$0xf]
  %v232 = vld [vmem:[%s0 + $0x370] sm:$0xf]
  %v233 = vld [vmem:[%s0 + $0x374] sm:$0xf]
  %v234 = vld [vmem:[%s0 + $0x378] sm:$0xf]
  %v235 = vld [vmem:[%s0 + $0x37c] sm:$0xf]
  %v236 = vld [vmem:[%s0 + $0x380] sm:$0xf]
  %v237 = vld [vmem:[%s0 + $0x384] sm:$0xf]
  %v238 = vld [vmem:[%s0 + $0x388] sm:$0xf]
  %v239 = vld [vmem:[%s0 + $0x38c] sm:$0xf]
  %v240 = vld [vmem:[%s0 + $0x390] sm:$0xf]
  %v241 = vld [vmem:[%s0 + $0x394] sm:$0xf]
  %v242 = vld [vmem:[%s0 + $0x398] sm:$0xf]
  %v243 = vld [vmem:[%s0 + $0x39c] sm:$0xf]
  %v244 = vld [vmem:[%s0 + $0x3a0] sm:$0xf]
  %v245 = vld [vmem:[%s0 + $0x3a4] sm:$0xf]
  %v246 = vld [vmem:[%s0 + $0x3a8] sm:$0xf]
  %v247 = vld [vmem:[%s0 + $0x3ac] sm:$0xf]
  %v248 = vld [vmem:[%s0 + $0x3b0] sm:$0xf]
  %v249 = vld [vmem:[%s0 + $0x3b4] sm:$0xf]
  %v250 = vld [vmem:[%s0 + $0x3b8] sm:$0xf]
  %v251 = vld [vmem:[%s0 + $0x3bc] sm:$0xf]
  %v252 = vld [vmem:[%s0 + $0x3c0] sm:$0xf]
  %v253 = vld [vmem:[%s0 + $0x3c4] sm:$0xf]
  %v254 = vld [vmem:[%s0 + $0x3c8] sm:$0xf]
  %v255 = vld [vmem:[%s0 + $0x3cc] sm:$0xf]
  %v256 = vld [vmem:[%s0 + $0x3d0] sm:$0xf]
  %v257 = vld [vmem:[%s0 + $0x3d4] sm:$0xf]
  %v258 = vld [vmem:[%s0 + $0x3d8] sm:$0xf]
  %v259 = vld [vmem:[%s0 + $0x3dc] sm:$0xf]
  %v260 = vld [vmem:[%s0 + $0x3e0] sm:$0xf]
  %v261 = vld [vmem:[%s0 + $0x3e4] sm:$0xf]
  %v262 = vld [vmem:[%s0 + $0x3e8] sm:$0xf]
  %v263 = vld [vmem:[%s0 + $0x3ec] sm:$0xf]
  %v264 = vld [vmem:[%s0 + $0x3f0] sm:$0xf]
  %v265 = vld [vmem:[%s0 + $0x3f4] sm:$0xf]
  %v266 = vld [vmem:[%s0 + $0x3f8] sm:$0xf]
  %v267 = vld [vmem:[%s0 + $0x3fc] sm:$0xf]
  %v268 = vld [vmem:[%s1] sm:$0xf]
  %v269 = vld [vmem:[%s1 + $0x4] sm:$0xf]
  %v270 = vld [vmem:[%s1 + $0x8] sm:$0xf]
  %v271 = vld [vmem:[%s1 + $0xc] sm:$0xf]
  %v272 = vld [vmem:[%s1 + $0x10] sm:$0xf]
  %v273 = vld [vmem:[%s1 + $0x14] sm:$0xf]
  %v530 = vunpack.c.l.b16 %v12
  %v531 = vunpack.c.l.b16 %v13
  %v532 = vunpack.c.l.b16 %v14
  %v533 = vunpack.c.l.b16 %v15
  %v534 = vunpack.c.l.b16 %v16
  %v535 = vunpack.c.l.b16 %v17
  %v536 = vunpack.c.l.b16 %v18
  %v537 = vunpack.c.l.b16 %v19
  %v538 = vunpack.c.l.b16 %v20
  %v539 = vunpack.c.l.b16 %v21
  %v540 = vunpack.c.l.b16 %v22
  %v541 = vunpack.c.l.b16 %v23
  %v542 = vunpack.c.l.b16 %v24
  %v543 = vunpack.c.l.b16 %v25
  %v544 = vunpack.c.l.b16 %v26
  %v545 = vunpack.c.l.b16 %v27
  %v546 = vunpack.c.l.b16 %v28
  %v547 = vunpack.c.l.b16 %v29
  %v548 = vunpack.c.l.b16 %v30
  %v549 = vunpack.c.l.b16 %v31
  %v550 = vunpack.c.l.b16 %v32
  %v551 = vunpack.c.l.b16 %v33
  %v552 = vunpack.c.l.b16 %v34
  %v553 = vunpack.c.l.b16 %v35
  %v554 = vunpack.c.l.b16 %v36
  %v555 = vunpack.c.l.b16 %v37
  %v556 = vunpack.c.l.b16 %v38
  %v557 = vunpack.c.l.b16 %v39
  %v558 = vunpack.c.l.b16 %v40
  %v559 = vunpack.c.l.b16 %v41
  %v560 = vunpack.c.l.b16 %v42
  %v561 = vunpack.c.l.b16 %v43
  %v562 = vunpack.c.l.b16 %v44
  %v563 = vunpack.c.l.b16 %v45
  %v564 = vunpack.c.l.b16 %v46
  %v565 = vunpack.c.l.b16 %v47
  %v566 = vunpack.c.l.b16 %v48
  %v567 = vunpack.c.l.b16 %v49
  %v568 = vunpack.c.l.b16 %v50
  %v569 = vunpack.c.l.b16 %v51
  %v570 = vunpack.c.l.b16 %v52
  %v571 = vunpack.c.l.b16 %v53
  %v572 = vunpack.c.l.b16 %v54
  %v573 = vunpack.c.l.b16 %v55
  %v574 = vunpack.c.l.b16 %v56
  %v575 = vunpack.c.l.b16 %v57
  %v576 = vunpack.c.l.b16 %v58
  %v577 = vunpack.c.l.b16 %v59
  %v578 = vunpack.c.l.b16 %v60
  %v579 = vunpack.c.l.b16 %v61
  %v580 = vunpack.c.l.b16 %v62
  %v581 = vunpack.c.l.b16 %v63
  %v582 = vunpack.c.l.b16 %v64
  %v583 = vunpack.c.l.b16 %v65
  %v584 = vunpack.c.l.b16 %v66
  %v585 = vunpack.c.l.b16 %v67
  %v586 = vunpack.c.l.b16 %v68
  %v587 = vunpack.c.l.b16 %v69
  %v588 = vunpack.c.l.b16 %v70
  %v589 = vunpack.c.l.b16 %v71
  %v590 = vunpack.c.l.b16 %v72
  %v591 = vunpack.c.l.b16 %v73
  %v592 = vunpack.c.l.b16 %v74
  %v593 = vunpack.c.l.b16 %v75
  %v594 = vunpack.c.l.b16 %v76
  %v595 = vunpack.c.l.b16 %v77
  %v596 = vunpack.c.l.b16 %v78
  %v597 = vunpack.c.l.b16 %v79
  %v598 = vunpack.c.l.b16 %v80
  %v599 = vunpack.c.l.b16 %v81
  %v600 = vunpack.c.l.b16 %v82
  %v601 = vunpack.c.l.b16 %v83
  %v602 = vunpack.c.l.b16 %v84
  %v603 = vunpack.c.l.b16 %v85
  %v604 = vunpack.c.l.b16 %v86
  %v605 = vunpack.c.l.b16 %v87
  %v606 = vunpack.c.l.b16 %v88
  %v607 = vunpack.c.l.b16 %v89
  %v608 = vunpack.c.l.b16 %v90
  %v609 = vunpack.c.l.b16 %v91
  %v610 = vunpack.c.l.b16 %v92
  %v611 = vunpack.c.l.b16 %v93
  %v612 = vunpack.c.l.b16 %v94
  %v613 = vunpack.c.l.b16 %v95
  %v614 = vunpack.c.l.b16 %v96
  %v615 = vunpack.c.l.b16 %v97
  %v616 = vunpack.c.l.b16 %v98
  %v617 = vunpack.c.l.b16 %v99
  %v618 = vunpack.c.l.b16 %v100
  %v619 = vunpack.c.l.b16 %v101
  %v620 = vunpack.c.l.b16 %v102
  %v621 = vunpack.c.l.b16 %v103
  %v622 = vunpack.c.l.b16 %v104
  %v623 = vunpack.c.l.b16 %v105
  %v624 = vunpack.c.l.b16 %v106
  %v625 = vunpack.c.l.b16 %v107
  %v626 = vunpack.c.l.b16 %v108
  %v627 = vunpack.c.l.b16 %v109
  %v628 = vunpack.c.l.b16 %v110
  %v629 = vunpack.c.l.b16 %v111
  %v630 = vunpack.c.l.b16 %v112
  %v631 = vunpack.c.l.b16 %v113
  %v632 = vunpack.c.l.b16 %v114
  %v633 = vunpack.c.l.b16 %v115
  %v634 = vunpack.c.l.b16 %v116
  %v635 = vunpack.c.l.b16 %v117
  %v636 = vunpack.c.l.b16 %v118
  %v637 = vunpack.c.l.b16 %v119
  %v638 = vunpack.c.l.b16 %v120
  %v639 = vunpack.c.l.b16 %v121
  %v640 = vunpack.c.l.b16 %v122
  %v641 = vunpack.c.l.b16 %v123
  %v642 = vunpack.c.l.b16 %v124
  %v643 = vunpack.c.l.b16 %v125
  %v644 = vunpack.c.l.b16 %v126
  %v645 = vunpack.c.l.b16 %v127
  %v646 = vunpack.c.l.b16 %v128
  %v647 = vunpack.c.l.b16 %v129
  %v648 = vunpack.c.l.b16 %v130
  %v649 = vunpack.c.l.b16 %v131
  %v650 = vunpack.c.l.b16 %v132
  %v651 = vunpack.c.l.b16 %v133
  %v652 = vunpack.c.l.b16 %v134
  %v653 = vunpack.c.l.b16 %v135
  %v654 = vunpack.c.l.b16 %v136
  %v655 = vunpack.c.l.b16 %v137
  %v656 = vunpack.c.l.b16 %v138
  %v657 = vunpack.c.l.b16 %v139
  %v658 = vunpack.c.l.b16 %v140
  %v659 = vunpack.c.l.b16 %v141
  %v660 = vunpack.c.l.b16 %v142
  %v661 = vunpack.c.l.b16 %v143
  %v662 = vunpack.c.l.b16 %v144
  %v663 = vunpack.c.l.b16 %v145
  %v664 = vunpack.c.l.b16 %v146
  %v665 = vunpack.c.l.b16 %v147
  %v666 = vunpack.c.l.b16 %v148
  %v667 = vunpack.c.l.b16 %v149
  %v668 = vunpack.c.l.b16 %v150
  %v669 = vunpack.c.l.b16 %v151
  %v670 = vunpack.c.l.b16 %v152
  %v671 = vunpack.c.l.b16 %v153
  %v672 = vunpack.c.l.b16 %v154
  %v673 = vunpack.c.l.b16 %v155
  %v674 = vunpack.c.l.b16 %v156
  %v675 = vunpack.c.l.b16 %v157
  %v676 = vunpack.c.l.b16 %v158
  %v677 = vunpack.c.l.b16 %v159
  %v678 = vunpack.c.l.b16 %v160
  %v679 = vunpack.c.l.b16 %v161
  %v680 = vunpack.c.l.b16 %v162
  %v681 = vunpack.c.l.b16 %v163
  %v682 = vunpack.c.l.b16 %v164
  %v683 = vunpack.c.l.b16 %v165
  %v684 = vunpack.c.l.b16 %v166
  %v685 = vunpack.c.l.b16 %v167
  %v686 = vunpack.c.l.b16 %v168
  %v687 = vunpack.c.l.b16 %v169
  %v688 = vunpack.c.l.b16 %v170
  %v689 = vunpack.c.l.b16 %v171
  %v690 = vunpack.c.l.b16 %v172
  %v691 = vunpack.c.l.b16 %v173
  %v692 = vunpack.c.l.b16 %v174
  %v693 = vunpack.c.l.b16 %v175
  %v694 = vunpack.c.l.b16 %v176
  %v695 = vunpack.c.l.b16 %v177
  %v696 = vunpack.c.l.b16 %v178
  %v697 = vunpack.c.l.b16 %v179
  %v698 = vunpack.c.l.b16 %v180
  %v699 = vunpack.c.l.b16 %v181
  %v700 = vunpack.c.l.b16 %v182
  %v701 = vunpack.c.l.b16 %v183
  %v702 = vunpack.c.l.b16 %v184
  %v703 = vunpack.c.l.b16 %v185
  %v704 = vunpack.c.l.b16 %v186
  %v705 = vunpack.c.l.b16 %v187
  %v706 = vunpack.c.l.b16 %v188
  %v707 = vunpack.c.l.b16 %v189
  %v708 = vunpack.c.l.b16 %v190
  %v709 = vunpack.c.l.b16 %v191
  %v710 = vunpack.c.l.b16 %v192
  %v711 = vunpack.c.l.b16 %v193
  %v712 = vunpack.c.l.b16 %v194
  %v713 = vunpack.c.l.b16 %v195
  %v714 = vunpack.c.l.b16 %v196
  %v715 = vunpack.c.l.b16 %v197
  %v716 = vunpack.c.l.b16 %v198
  %v717 = vunpack.c.l.b16 %v199
  %v718 = vunpack.c.l.b16 %v200
  %v719 = vunpack.c.l.b16 %v201
  %v720 = vunpack.c.l.b16 %v202
  %v721 = vunpack.c.l.b16 %v203
  %v722 = vunpack.c.l.b16 %v204
  %v723 = vunpack.c.l.b16 %v205
  %v724 = vunpack.c.l.b16 %v206
  %v725 = vunpack.c.l.b16 %v207
  %v726 = vunpack.c.l.b16 %v208
  %v727 = vunpack.c.l.b16 %v209
  %v728 = vunpack.c.l.b16 %v210
  %v729 = vunpack.c.l.b16 %v211
  %v730 = vunpack.c.l.b16 %v212
  %v731 = vunpack.c.l.b16 %v213
  %v732 = vunpack.c.l.b16 %v214
  %v733 = vunpack.c.l.b16 %v215
  %v734 = vunpack.c.l.b16 %v216
  %v735 = vunpack.c.l.b16 %v217
  %v736 = vunpack.c.l.b16 %v218
  %v737 = vunpack.c.l.b16 %v219
  %v738 = vunpack.c.l.b16 %v220
  %v739 = vunpack.c.l.b16 %v221
  %v740 = vunpack.c.l.b16 %v222
  %v741 = vunpack.c.l.b16 %v223
  %v742 = vunpack.c.l.b16 %v224
  %v743 = vunpack.c.l.b16 %v225
  %v744 = vunpack.c.l.b16 %v226
  %v745 = vunpack.c.l.b16 %v227
  %v746 = vunpack.c.l.b16 %v228
  %v747 = vunpack.c.l.b16 %v229
  %v748 = vunpack.c.l.b16 %v230
  %v749 = vunpack.c.l.b16 %v231
  %v750 = vunpack.c.l.b16 %v232
  %v751 = vunpack.c.l.b16 %v233
  %v752 = vunpack.c.l.b16 %v234
  %v753 = vunpack.c.l.b16 %v235
  %v754 = vunpack.c.l.b16 %v236
  %v755 = vunpack.c.l.b16 %v237
  %v756 = vunpack.c.l.b16 %v238
  %v757 = vunpack.c.l.b16 %v239
  %v758 = vunpack.c.l.b16 %v240
  %v759 = vunpack.c.l.b16 %v241
  %v760 = vunpack.c.l.b16 %v242
  %v761 = vunpack.c.l.b16 %v243
  %v762 = vunpack.c.l.b16 %v244
  %v763 = vunpack.c.l.b16 %v245
  %v764 = vunpack.c.l.b16 %v246
  %v765 = vunpack.c.l.b16 %v247
  %v766 = vunpack.c.l.b16 %v248
  %v767 = vunpack.c.l.b16 %v249
  %v768 = vunpack.c.l.b16 %v250
  %v769 = vunpack.c.l.b16 %v251
  %v770 = vunpack.c.l.b16 %v252
  %v771 = vunpack.c.l.b16 %v253
  %v772 = vunpack.c.l.b16 %v254
  %v773 = vunpack.c.l.b16 %v255
  %v774 = vunpack.c.l.b16 %v256
  %v775 = vunpack.c.l.b16 %v257
  %v776 = vunpack.c.l.b16 %v258
  %v777 = vunpack.c.l.b16 %v259
  %v778 = vunpack.c.l.b16 %v260
  %v779 = vunpack.c.l.b16 %v261
  %v780 = vunpack.c.l.b16 %v262
  %v781 = vunpack.c.l.b16 %v263
  %v782 = vunpack.c.l.b16 %v264
  %v783 = vunpack.c.l.b16 %v265
  %v784 = vunpack.c.l.b16 %v266
  %v785 = vunpack.c.l.b16 %v267
  %v786 = vpack.c.b16 %v531, %v530
  %v787 = vpack.c.b16 %v533, %v532
  %v788 = vpack.c.b16 %v535, %v534
  %v789 = vpack.c.b16 %v537, %v536
  %v790 = vpack.c.b16 %v539, %v538
  %v791 = vpack.c.b16 %v541, %v540
  %v792 = vpack.c.b16 %v543, %v542
  %v793 = vpack.c.b16 %v545, %v544
  %v794 = vpack.c.b16 %v547, %v546
  %v795 = vpack.c.b16 %v549, %v548
  %v796 = vpack.c.b16 %v551, %v550
  %v797 = vpack.c.b16 %v553, %v552
  %v798 = vpack.c.b16 %v555, %v554
  %v799 = vpack.c.b16 %v557, %v556
  %v800 = vpack.c.b16 %v559, %v558
  %v801 = vpack.c.b16 %v561, %v560
  %v802 = vpack.c.b16 %v563, %v562
  %v803 = vpack.c.b16 %v565, %v564
  %v804 = vpack.c.b16 %v567, %v566
  %v805 = vpack.c.b16 %v569, %v568
  %v806 = vpack.c.b16 %v571, %v570
  %v807 = vpack.c.b16 %v573, %v572
  %v808 = vpack.c.b16 %v575, %v574
  %v809 = vpack.c.b16 %v577, %v576
  %v810 = vpack.c.b16 %v579, %v578
  %v811 = vpack.c.b16 %v581, %v580
  %v812 = vpack.c.b16 %v583, %v582
  %v813 = vpack.c.b16 %v585, %v584
  %v814 = vpack.c.b16 %v587, %v586
  %v815 = vpack.c.b16 %v589, %v588
  %v816 = vpack.c.b16 %v591, %v590
  %v817 = vpack.c.b16 %v593, %v592
  %v818 = vpack.c.b16 %v595, %v594
  %v819 = vpack.c.b16 %v597, %v596
  %v820 = vpack.c.b16 %v599, %v598
  %v821 = vpack.c.b16 %v601, %v600
  %v822 = vpack.c.b16 %v603, %v602
  %v823 = vpack.c.b16 %v605, %v604
  %v824 = vpack.c.b16 %v607, %v606
  %v825 = vpack.c.b16 %v609, %v608
  %v826 = vpack.c.b16 %v611, %v610
  %v827 = vpack.c.b16 %v613, %v612
  %v828 = vpack.c.b16 %v615, %v614
  %v829 = vpack.c.b16 %v617, %v616
  %v830 = vpack.c.b16 %v619, %v618
  %v831 = vpack.c.b16 %v621, %v620
  %v832 = vpack.c.b16 %v623, %v622
  %v833 = vpack.c.b16 %v625, %v624
  %v834 = vpack.c.b16 %v627, %v626
  %v835 = vpack.c.b16 %v629, %v628
  %v836 = vpack.c.b16 %v631, %v630
  %v837 = vpack.c.b16 %v633, %v632
  %v838 = vpack.c.b16 %v635, %v634
  %v839 = vpack.c.b16 %v637, %v636
  %v840 = vpack.c.b16 %v639, %v638
  %v841 = vpack.c.b16 %v641, %v640
  %v842 = vpack.c.b16 %v643, %v642
  %v843 = vpack.c.b16 %v645, %v644
  %v844 = vpack.c.b16 %v647, %v646
  %v845 = vpack.c.b16 %v649, %v648
  %v846 = vpack.c.b16 %v651, %v650
  %v847 = vpack.c.b16 %v653, %v652
  %v848 = vpack.c.b16 %v655, %v654
  %v849 = vpack.c.b16 %v657, %v656
  %v850 = vpack.c.b16 %v659, %v658
  %v851 = vpack.c.b16 %v661, %v660
  %v852 = vpack.c.b16 %v663, %v662
  %v853 = vpack.c.b16 %v665, %v664
  %v854 = vpack.c.b16 %v667, %v666
  %v855 = vpack.c.b16 %v669, %v668
  %v856 = vpack.c.b16 %v671, %v670
  %v857 = vpack.c.b16 %v673, %v672
  %v858 = vpack.c.b16 %v675, %v674
  %v859 = vpack.c.b16 %v677, %v676
  %v860 = vpack.c.b16 %v679, %v678
  %v861 = vpack.c.b16 %v681, %v680
  %v862 = vpack.c.b16 %v683, %v682
  %v863 = vpack.c.b16 %v685, %v684
  %v864 = vpack.c.b16 %v687, %v686
  %v865 = vpack.c.b16 %v689, %v688
  %v866 = vpack.c.b16 %v691, %v690
  %v867 = vpack.c.b16 %v693, %v692
  %v868 = vpack.c.b16 %v695, %v694
  %v869 = vpack.c.b16 %v697, %v696
  %v870 = vpack.c.b16 %v699, %v698
  %v871 = vpack.c.b16 %v701, %v700
  %v872 = vpack.c.b16 %v703, %v702
  %v873 = vpack.c.b16 %v705, %v704
  %v874 = vpack.c.b16 %v707, %v706
  %v875 = vpack.c.b16 %v709, %v708
  %v876 = vpack.c.b16 %v711, %v710
  %v877 = vpack.c.b16 %v713, %v712
  %v878 = vpack.c.b16 %v715, %v714
  %v879 = vpack.c.b16 %v717, %v716
  %v880 = vpack.c.b16 %v719, %v718
  %v881 = vpack.c.b16 %v721, %v720
  %v882 = vpack.c.b16 %v723, %v722
  %v883 = vpack.c.b16 %v725, %v724
  %v884 = vpack.c.b16 %v727, %v726
  %v885 = vpack.c.b16 %v729, %v728
  %v886 = vpack.c.b16 %v731, %v730
  %v887 = vpack.c.b16 %v733, %v732
  %v888 = vpack.c.b16 %v735, %v734
  %v889 = vpack.c.b16 %v737, %v736
  %v890 = vpack.c.b16 %v739, %v738
  %v891 = vpack.c.b16 %v741, %v740
  %v892 = vpack.c.b16 %v743, %v742
  %v893 = vpack.c.b16 %v745, %v744
  %v894 = vpack.c.b16 %v747, %v746
  %v895 = vpack.c.b16 %v749, %v748
  %v896 = vpack.c.b16 %v751, %v750
  %v897 = vpack.c.b16 %v753, %v752
  %v898 = vpack.c.b16 %v755, %v754
  %v899 = vpack.c.b16 %v757, %v756
  %v900 = vpack.c.b16 %v759, %v758
  %v901 = vpack.c.b16 %v761, %v760
  %v902 = vpack.c.b16 %v763, %v762
  %v903 = vpack.c.b16 %v765, %v764
  %v904 = vpack.c.b16 %v767, %v766
  %v905 = vpack.c.b16 %v769, %v768
  %v906 = vpack.c.b16 %v771, %v770
  %v907 = vpack.c.b16 %v773, %v772
  %v908 = vpack.c.b16 %v775, %v774
  %v909 = vpack.c.b16 %v777, %v776
  %v910 = vpack.c.b16 %v779, %v778
  %v911 = vpack.c.b16 %v781, %v780
  %v912 = vpack.c.b16 %v783, %v782
  %v913 = vpack.c.b16 %v785, %v784
  %v920 = vunpack.c.l.b16 %v268
  %v921 = vunpack.c.l.b16 %v269
  %v922 = vunpack.c.l.b16 %v270
  %v923 = vunpack.c.l.b16 %v271
  %v924 = vunpack.c.l.b16 %v272
  %v925 = vunpack.c.l.b16 %v273
  %v926 = vpack.c.b16 %v921, %v920
  %v927 = vpack.c.b16 %v923, %v922
  %v928 = vpack.c.b16 %v925, %v924
  %vm932 = vcmask 392192
  %v934 = vsel %vm932, %v786, 0
  %v937 = vsel %vm932, %v787, 0
  %v940 = vsel %vm932, %v788, 0
  %v943 = vsel %vm932, %v789, 0
  %v946 = vsel %vm932, %v790, 0
  %v949 = vsel %vm932, %v791, 0
  %v952 = vsel %vm932, %v792, 0
  %v955 = vsel %vm932, %v793, 0
  %v958 = vsel %vm932, %v794, 0
  %v961 = vsel %vm932, %v795, 0
  %v964 = vsel %vm932, %v796, 0
  %v967 = vsel %vm932, %v797, 0
  %v970 = vsel %vm932, %v798, 0
  %v973 = vsel %vm932, %v799, 0
  %v976 = vsel %vm932, %v800, 0
  %v979 = vsel %vm932, %v801, 0
  %v982 = vsel %vm932, %v802, 0
  %v985 = vsel %vm932, %v803, 0
  %v988 = vsel %vm932, %v804, 0
  %v991 = vsel %vm932, %v805, 0
  %v994 = vsel %vm932, %v806, 0
  %v997 = vsel %vm932, %v807, 0
  %v1000 = vsel %vm932, %v808, 0
  %v1003 = vsel %vm932, %v809, 0
  %v1006 = vsel %vm932, %v810, 0
  %v1009 = vsel %vm932, %v811, 0
  %v1012 = vsel %vm932, %v812, 0
  %v1015 = vsel %vm932, %v813, 0
  %v1018 = vsel %vm932, %v814, 0
  %v1021 = vsel %vm932, %v815, 0
  %v1024 = vsel %vm932, %v816, 0
  %v1027 = vsel %vm932, %v817, 0
  %v1030 = vsel %vm932, %v818, 0
  %v1033 = vsel %vm932, %v819, 0
  %v1036 = vsel %vm932, %v820, 0
  %v1039 = vsel %vm932, %v821, 0
  %v1042 = vsel %vm932, %v822, 0
  %v1045 = vsel %vm932, %v823, 0
  %v1048 = vsel %vm932, %v824, 0
  %v1051 = vsel %vm932, %v825, 0
  %v1054 = vsel %vm932, %v826, 0
  %v1057 = vsel %vm932, %v827, 0
  %v1060 = vsel %vm932, %v828, 0
  %v1063 = vsel %vm932, %v829, 0
  %v1066 = vsel %vm932, %v830, 0
  %v1069 = vsel %vm932, %v831, 0
  %v1072 = vsel %vm932, %v832, 0
  %v1075 = vsel %vm932, %v833, 0
  %v1078 = vsel %vm932, %v834, 0
  %v1081 = vsel %vm932, %v835, 0
  %v1084 = vsel %vm932, %v836, 0
  %v1087 = vsel %vm932, %v837, 0
  %v1090 = vsel %vm932, %v838, 0
  %v1093 = vsel %vm932, %v839, 0
  %v1096 = vsel %vm932, %v840, 0
  %v1099 = vsel %vm932, %v841, 0
  %v1102 = vsel %vm932, %v842, 0
  %v1105 = vsel %vm932, %v843, 0
  %v1108 = vsel %vm932, %v844, 0
  %v1111 = vsel %vm932, %v845, 0
  %v1114 = vsel %vm932, %v846, 0
  %v1117 = vsel %vm932, %v847, 0
  %v1120 = vsel %vm932, %v848, 0
  %v1123 = vsel %vm932, %v849, 0
  %v1126 = vsel %vm932, %v850, 0
  %v1129 = vsel %vm932, %v851, 0
  %v1132 = vsel %vm932, %v852, 0
  %v1135 = vsel %vm932, %v853, 0
  %v1138 = vsel %vm932, %v854, 0
  %v1141 = vsel %vm932, %v855, 0
  %v1144 = vsel %vm932, %v856, 0
  %v1147 = vsel %vm932, %v857, 0
  %v1150 = vsel %vm932, %v858, 0
  %v1153 = vsel %vm932, %v859, 0
  %v1156 = vsel %vm932, %v860, 0
  %v1159 = vsel %vm932, %v861, 0
  %v1162 = vsel %vm932, %v862, 0
  %v1165 = vsel %vm932, %v863, 0
  %v1168 = vsel %vm932, %v864, 0
  %v1171 = vsel %vm932, %v865, 0
  %v1174 = vsel %vm932, %v866, 0
  %v1177 = vsel %vm932, %v867, 0
  %v1180 = vsel %vm932, %v868, 0
  %v1183 = vsel %vm932, %v869, 0
  %v1186 = vsel %vm932, %v870, 0
  %v1189 = vsel %vm932, %v871, 0
  %v1192 = vsel %vm932, %v872, 0
  %v1195 = vsel %vm932, %v873, 0
  %v1198 = vsel %vm932, %v874, 0
  %v1201 = vsel %vm932, %v875, 0
  %v1204 = vsel %vm932, %v876, 0
  %v1207 = vsel %vm932, %v877, 0
  %v1210 = vsel %vm932, %v878, 0
  %v1213 = vsel %vm932, %v879, 0
  %v1216 = vsel %vm932, %v880, 0
  %v1219 = vsel %vm932, %v881, 0
  %v1222 = vsel %vm932, %v882, 0
  %v1225 = vsel %vm932, %v883, 0
  %v1228 = vsel %vm932, %v884, 0
  %v1231 = vsel %vm932, %v885, 0
  %v1234 = vsel %vm932, %v886, 0
  %v1237 = vsel %vm932, %v887, 0
  %v1240 = vsel %vm932, %v888, 0
  %v1243 = vsel %vm932, %v889, 0
  %v1246 = vsel %vm932, %v890, 0
  %v1249 = vsel %vm932, %v891, 0
  %v1252 = vsel %vm932, %v892, 0
  %v1255 = vsel %vm932, %v893, 0
  %v1258 = vsel %vm932, %v894, 0
  %v1261 = vsel %vm932, %v895, 0
  %v1264 = vsel %vm932, %v896, 0
  %v1267 = vsel %vm932, %v897, 0
  %v1270 = vsel %vm932, %v898, 0
  %v1273 = vsel %vm932, %v899, 0
  %v1276 = vsel %vm932, %v900, 0
  %v1279 = vsel %vm932, %v901, 0
  %v1282 = vsel %vm932, %v902, 0
  %v1285 = vsel %vm932, %v903, 0
  %v1288 = vsel %vm932, %v904, 0
  %v1291 = vsel %vm932, %v905, 0
  %v1294 = vsel %vm932, %v906, 0
  %v1297 = vsel %vm932, %v907, 0
  %v1300 = vsel %vm932, %v908, 0
  %v1303 = vsel %vm932, %v909, 0
  %v1306 = vsel %vm932, %v910, 0
  %v1309 = vsel %vm932, %v911, 0
  %v1312 = vsel %vm932, %v912, 0
  %v1315 = vsel %vm932, %v913, 0
  %1317 = vmatprep.subr.bf16.mxu0 0
  %1318 = vmatpush1.bf16.msra.mxu0 0
  %1319 = vmatprep.subr.bf16.mxu0 0
  %1320 = vmatpush1.bf16.msra.mxu0 0
  %1321 = vmatprep.subr.bf16.mxu0 0
  %1322 = vmatpush1.bf16.msra.mxu0 0
  %1323 = vmatprep.subr.bf16.mxu0 0
  %1324 = vmatpush1.bf16.msra.mxu0 0
  %1325 = vmatprep.subr.bf16.mxu0 0
  %1326 = vmatpush1.bf16.msra.mxu0 0
  %1327 = vmatprep.subr.bf16.mxu0 0
  %1328 = vmatpush1.bf16.msra.mxu0 %v928
  %1329 = vmatprep.subr.bf16.mxu0 0
  %1330 = vmatpush1.bf16.msra.mxu0 %v927
  %1331 = vmatprep.subr.bf16.mxu0 0
  %1332 = vmatpush1.bf16.msra.mxu0 %v926
  %1333 = vmatprep.subr.bf16.mxu0 0
  %1334 = vmatpush2.bf16.msra.mxu0 0
  %1335 = vmatprep.subr.bf16.mxu0 0
  %1336 = vmatpush2.bf16.msra.mxu0 0
  %1337 = vmatprep.subr.bf16.mxu0 0
  %1338 = vmatpush2.bf16.msra.mxu0 0
  %1339 = vmatprep.subr.bf16.mxu0 0
  %1340 = vmatpush2.bf16.msra.mxu0 0
  %1341 = vmatprep.subr.bf16.mxu0 0
  %1342 = vmatpush2.bf16.msra.mxu0 0
  %1343 = vmatprep.subr.bf16.mxu0 0
  %1344 = vmatpush2.bf16.msra.mxu0 0
  %1345 = vmatprep.subr.bf16.mxu0 0
  %1346 = vmatpush2.bf16.msra.mxu0 0
  %1347 = vmatprep.subr.bf16.mxu0 0
  %1348 = vmatpush2.bf16.msra.mxu0 0
  %1349 = vmatprep.mubr.bf16.mxu0 0
  %1350 = vmatmul.mubr.bf16.gmra.mxu0 %v934
  %v1351 = vpop.f32.mrf.mxu0
  %v1352 = vadd.f32 0.0, %v1351
  %v1353 = vpop.f32.mrf.mxu0
  %v1354 = vpop.f32.mrf.mxu0
  %v1355 = vadd.f32 0.0, %v1354
  %v1356 = vpop.f32.mrf.mxu0
  %1357 = vmatprep.mubr.bf16.mxu0 0
  %1358 = vmatmul.mubr.bf16.gmra.mxu0 %v937
  %v1359 = vpop.f32.mrf.mxu0
  %v1360 = vadd.f32 0.0, %v1359
  %v1361 = vpop.f32.mrf.mxu0
  %v1362 = vpop.f32.mrf.mxu0
  %v1363 = vadd.f32 0.0, %v1362
  %v1364 = vpop.f32.mrf.mxu0
  %1365 = vmatprep.mubr.bf16.mxu0 0
  %1366 = vmatmul.mubr.bf16.gmra.mxu0 %v940
  %v1367 = vpop.f32.mrf.mxu0
  %v1368 = vadd.f32 0.0, %v1367
  %v1369 = vpop.f32.mrf.mxu0
  %v1370 = vpop.f32.mrf.mxu0
  %v1371 = vadd.f32 0.0, %v1370
  %v1372 = vpop.f32.mrf.mxu0
  %1373 = vmatprep.mubr.bf16.mxu0 0
  %1374 = vmatmul.mubr.bf16.gmra.mxu0 %v943
  %v1375 = vpop.f32.mrf.mxu0
  %v1376 = vadd.f32 0.0, %v1375
  %v1377 = vpop.f32.mrf.mxu0
  %v1378 = vpop.f32.mrf.mxu0
  %v1379 = vadd.f32 0.0, %v1378
  %v1380 = vpop.f32.mrf.mxu0
  %1381 = vmatprep.mubr.bf16.mxu0 0
  %1382 = vmatmul.mubr.bf16.gmra.mxu0 %v946
  %v1383 = vpop.f32.mrf.mxu0
  %v1384 = vadd.f32 0.0, %v1383
  %v1385 = vpop.f32.mrf.mxu0
  %v1386 = vpop.f32.mrf.mxu0
  %v1387 = vadd.f32 0.0, %v1386
  %v1388 = vpop.f32.mrf.mxu0
  %1389 = vmatprep.mubr.bf16.mxu0 0
  %1390 = vmatmul.mubr.bf16.gmra.mxu0 %v949
  %v1391 = vpop.f32.mrf.mxu0
  %v1392 = vadd.f32 0.0, %v1391
  %v1393 = vpop.f32.mrf.mxu0
  %v1394 = vpop.f32.mrf.mxu0
  %v1395 = vadd.f32 0.0, %v1394
  %v1396 = vpop.f32.mrf.mxu0
  %1397 = vmatprep.mubr.bf16.mxu0 0
  %1398 = vmatmul.mubr.bf16.gmra.mxu0 %v952
  %v1399 = vpop.f32.mrf.mxu0
  %v1400 = vadd.f32 0.0, %v1399
  %v1401 = vpop.f32.mrf.mxu0
  %v1402 = vpop.f32.mrf.mxu0
  %v1403 = vadd.f32 0.0, %v1402
  %v1404 = vpop.f32.mrf.mxu0
  %1405 = vmatprep.mubr.bf16.mxu0 0
  %1406 = vmatmul.mubr.bf16.gmra.mxu0 %v955
  %v1407 = vpop.f32.mrf.mxu0
  %v1408 = vadd.f32 0.0, %v1407
  %v1409 = vpop.f32.mrf.mxu0
  %v1410 = vpop.f32.mrf.mxu0
  %v1411 = vadd.f32 0.0, %v1410
  %v1412 = vpop.f32.mrf.mxu0
  %1413 = vmatprep.mubr.bf16.mxu0 0
  %1414 = vmatmul.mubr.bf16.gmra.mxu0 %v958
  %v1415 = vpop.f32.mrf.mxu0
  %v1416 = vadd.f32 0.0, %v1415
  %v1417 = vpop.f32.mrf.mxu0
  %v1418 = vpop.f32.mrf.mxu0
  %v1419 = vadd.f32 0.0, %v1418
  %v1420 = vpop.f32.mrf.mxu0
  %1421 = vmatprep.mubr.bf16.mxu0 0
  %1422 = vmatmul.mubr.bf16.gmra.mxu0 %v961
  %v1423 = vpop.f32.mrf.mxu0
  %v1424 = vadd.f32 0.0, %v1423
  %v1425 = vpop.f32.mrf.mxu0
  %v1426 = vpop.f32.mrf.mxu0
  %v1427 = vadd.f32 0.0, %v1426
  %v1428 = vpop.f32.mrf.mxu0
  %1429 = vmatprep.mubr.bf16.mxu0 0
  %1430 = vmatmul.mubr.bf16.gmra.mxu0 %v964
  %v1431 = vpop.f32.mrf.mxu0
  %v1432 = vadd.f32 0.0, %v1431
  %v1433 = vpop.f32.mrf.mxu0
  %v1434 = vpop.f32.mrf.mxu0
  %v1435 = vadd.f32 0.0, %v1434
  %v1436 = vpop.f32.mrf.mxu0
  %1437 = vmatprep.mubr.bf16.mxu0 0
  %1438 = vmatmul.mubr.bf16.gmra.mxu0 %v967
  %v1439 = vpop.f32.mrf.mxu0
  %v1440 = vadd.f32 0.0, %v1439
  %v1441 = vpop.f32.mrf.mxu0
  %v1442 = vpop.f32.mrf.mxu0
  %v1443 = vadd.f32 0.0, %v1442
  %v1444 = vpop.f32.mrf.mxu0
  %1445 = vmatprep.mubr.bf16.mxu0 0
  %1446 = vmatmul.mubr.bf16.gmra.mxu0 %v970
  %v1447 = vpop.f32.mrf.mxu0
  %v1448 = vadd.f32 0.0, %v1447
  %v1449 = vpop.f32.mrf.mxu0
  %v1450 = vpop.f32.mrf.mxu0
  %v1451 = vadd.f32 0.0, %v1450
  %v1452 = vpop.f32.mrf.mxu0
  %1453 = vmatprep.mubr.bf16.mxu0 0
  %1454 = vmatmul.mubr.bf16.gmra.mxu0 %v973
  %v1455 = vpop.f32.mrf.mxu0
  %v1456 = vadd.f32 0.0, %v1455
  %v1457 = vpop.f32.mrf.mxu0
  %v1458 = vpop.f32.mrf.mxu0
  %v1459 = vadd.f32 0.0, %v1458
  %v1460 = vpop.f32.mrf.mxu0
  %1461 = vmatprep.mubr.bf16.mxu0 0
  %1462 = vmatmul.mubr.bf16.gmra.mxu0 %v976
  %v1463 = vpop.f32.mrf.mxu0
  %v1464 = vadd.f32 0.0, %v1463
  %v1465 = vpop.f32.mrf.mxu0
  %v1466 = vpop.f32.mrf.mxu0
  %v1467 = vadd.f32 0.0, %v1466
  %v1468 = vpop.f32.mrf.mxu0
  %1469 = vmatprep.mubr.bf16.mxu0 0
  %1470 = vmatmul.mubr.bf16.gmra.mxu0 %v979
  %v1471 = vpop.f32.mrf.mxu0
  %v1472 = vadd.f32 0.0, %v1471
  %v1473 = vpop.f32.mrf.mxu0
  %v1474 = vpop.f32.mrf.mxu0
  %v1475 = vadd.f32 0.0, %v1474
  %v1476 = vpop.f32.mrf.mxu0
  %1477 = vmatprep.mubr.bf16.mxu0 0
  %1478 = vmatmul.mubr.bf16.gmra.mxu0 %v982
  %v1479 = vpop.f32.mrf.mxu0
  %v1480 = vadd.f32 0.0, %v1479
  %v1481 = vpop.f32.mrf.mxu0
  %v1482 = vpop.f32.mrf.mxu0
  %v1483 = vadd.f32 0.0, %v1482
  %v1484 = vpop.f32.mrf.mxu0
  %1485 = vmatprep.mubr.bf16.mxu0 0
  %1486 = vmatmul.mubr.bf16.gmra.mxu0 %v985
  %v1487 = vpop.f32.mrf.mxu0
  %v1488 = vadd.f32 0.0, %v1487
  %v1489 = vpop.f32.mrf.mxu0
  %v1490 = vpop.f32.mrf.mxu0
  %v1491 = vadd.f32 0.0, %v1490
  %v1492 = vpop.f32.mrf.mxu0
  %1493 = vmatprep.mubr.bf16.mxu0 0
  %1494 = vmatmul.mubr.bf16.gmra.mxu0 %v988
  %v1495 = vpop.f32.mrf.mxu0
  %v1496 = vadd.f32 0.0, %v1495
  %v1497 = vpop.f32.mrf.mxu0
  %v1498 = vpop.f32.mrf.mxu0
  %v1499 = vadd.f32 0.0, %v1498
  %v1500 = vpop.f32.mrf.mxu0
  %1501 = vmatprep.mubr.bf16.mxu0 0
  %1502 = vmatmul.mubr.bf16.gmra.mxu0 %v991
  %v1503 = vpop.f32.mrf.mxu0
  %v1504 = vadd.f32 0.0, %v1503
  %v1505 = vpop.f32.mrf.mxu0
  %v1506 = vpop.f32.mrf.mxu0
  %v1507 = vadd.f32 0.0, %v1506
  %v1508 = vpop.f32.mrf.mxu0
  %1509 = vmatprep.mubr.bf16.mxu0 0
  %1510 = vmatmul.mubr.bf16.gmra.mxu0 %v994
  %v1511 = vpop.f32.mrf.mxu0
  %v1512 = vadd.f32 0.0, %v1511
  %v1513 = vpop.f32.mrf.mxu0
  %v1514 = vpop.f32.mrf.mxu0
  %v1515 = vadd.f32 0.0, %v1514
  %v1516 = vpop.f32.mrf.mxu0
  %1517 = vmatprep.mubr.bf16.mxu0 0
  %1518 = vmatmul.mubr.bf16.gmra.mxu0 %v997
  %v1519 = vpop.f32.mrf.mxu0
  %v1520 = vadd.f32 0.0, %v1519
  %v1521 = vpop.f32.mrf.mxu0
  %v1522 = vpop.f32.mrf.mxu0
  %v1523 = vadd.f32 0.0, %v1522
  %v1524 = vpop.f32.mrf.mxu0
  %1525 = vmatprep.mubr.bf16.mxu0 0
  %1526 = vmatmul.mubr.bf16.gmra.mxu0 %v1000
  %v1527 = vpop.f32.mrf.mxu0
  %v1528 = vadd.f32 0.0, %v1527
  %v1529 = vpop.f32.mrf.mxu0
  %v1530 = vpop.f32.mrf.mxu0
  %v1531 = vadd.f32 0.0, %v1530
  %v1532 = vpop.f32.mrf.mxu0
  %1533 = vmatprep.mubr.bf16.mxu0 0
  %1534 = vmatmul.mubr.bf16.gmra.mxu0 %v1003
  %v1535 = vpop.f32.mrf.mxu0
  %v1536 = vadd.f32 0.0, %v1535
  %v1537 = vpop.f32.mrf.mxu0
  %v1538 = vpop.f32.mrf.mxu0
  %v1539 = vadd.f32 0.0, %v1538
  %v1540 = vpop.f32.mrf.mxu0
  %1541 = vmatprep.mubr.bf16.mxu0 0
  %1542 = vmatmul.mubr.bf16.gmra.mxu0 %v1006
  %v1543 = vpop.f32.mrf.mxu0
  %v1544 = vadd.f32 0.0, %v1543
  %v1545 = vpop.f32.mrf.mxu0
  %v1546 = vpop.f32.mrf.mxu0
  %v1547 = vadd.f32 0.0, %v1546
  %v1548 = vpop.f32.mrf.mxu0
  %1549 = vmatprep.mubr.bf16.mxu0 0
  %1550 = vmatmul.mubr.bf16.gmra.mxu0 %v1009
  %v1551 = vpop.f32.mrf.mxu0
  %v1552 = vadd.f32 0.0, %v1551
  %v1553 = vpop.f32.mrf.mxu0
  %v1554 = vpop.f32.mrf.mxu0
  %v1555 = vadd.f32 0.0, %v1554
  %v1556 = vpop.f32.mrf.mxu0
  %1557 = vmatprep.mubr.bf16.mxu0 0
  %1558 = vmatmul.mubr.bf16.gmra.mxu0 %v1012
  %v1559 = vpop.f32.mrf.mxu0
  %v1560 = vadd.f32 0.0, %v1559
  %v1561 = vpop.f32.mrf.mxu0
  %v1562 = vpop.f32.mrf.mxu0
  %v1563 = vadd.f32 0.0, %v1562
  %v1564 = vpop.f32.mrf.mxu0
  %1565 = vmatprep.mubr.bf16.mxu0 0
  %1566 = vmatmul.mubr.bf16.gmra.mxu0 %v1015
  %v1567 = vpop.f32.mrf.mxu0
  %v1568 = vadd.f32 0.0, %v1567
  %v1569 = vpop.f32.mrf.mxu0
  %v1570 = vpop.f32.mrf.mxu0
  %v1571 = vadd.f32 0.0, %v1570
  %v1572 = vpop.f32.mrf.mxu0
  %1573 = vmatprep.mubr.bf16.mxu0 0
  %1574 = vmatmul.mubr.bf16.gmra.mxu0 %v1018
  %v1575 = vpop.f32.mrf.mxu0
  %v1576 = vadd.f32 0.0, %v1575
  %v1577 = vpop.f32.mrf.mxu0
  %v1578 = vpop.f32.mrf.mxu0
  %v1579 = vadd.f32 0.0, %v1578
  %v1580 = vpop.f32.mrf.mxu0
  %1581 = vmatprep.mubr.bf16.mxu0 0
  %1582 = vmatmul.mubr.bf16.gmra.mxu0 %v1021
  %v1583 = vpop.f32.mrf.mxu0
  %v1584 = vadd.f32 0.0, %v1583
  %v1585 = vpop.f32.mrf.mxu0
  %v1586 = vpop.f32.mrf.mxu0
  %v1587 = vadd.f32 0.0, %v1586
  %v1588 = vpop.f32.mrf.mxu0
  %1589 = vmatprep.mubr.bf16.mxu0 0
  %1590 = vmatmul.mubr.bf16.gmra.mxu0 %v1024
  %v1591 = vpop.f32.mrf.mxu0
  %v1592 = vadd.f32 0.0, %v1591
  %v1593 = vpop.f32.mrf.mxu0
  %v1594 = vpop.f32.mrf.mxu0
  %v1595 = vadd.f32 0.0, %v1594
  %v1596 = vpop.f32.mrf.mxu0
  %1597 = vmatprep.mubr.bf16.mxu0 0
  %1598 = vmatmul.mubr.bf16.gmra.mxu0 %v1027
  %v1599 = vpop.f32.mrf.mxu0
  %v1600 = vadd.f32 0.0, %v1599
  %v1601 = vpop.f32.mrf.mxu0
  %v1602 = vpop.f32.mrf.mxu0
  %v1603 = vadd.f32 0.0, %v1602
  %v1604 = vpop.f32.mrf.mxu0
  %1605 = vmatprep.mubr.bf16.mxu0 0
  %1606 = vmatmul.mubr.bf16.gmra.mxu0 %v1030
  %v1607 = vpop.f32.mrf.mxu0
  %v1608 = vadd.f32 0.0, %v1607
  %v1609 = vpop.f32.mrf.mxu0
  %v1610 = vpop.f32.mrf.mxu0
  %v1611 = vadd.f32 0.0, %v1610
  %v1612 = vpop.f32.mrf.mxu0
  %1613 = vmatprep.mubr.bf16.mxu0 0
  %1614 = vmatmul.mubr.bf16.gmra.mxu0 %v1033
  %v1615 = vpop.f32.mrf.mxu0
  %v1616 = vadd.f32 0.0, %v1615
  %v1617 = vpop.f32.mrf.mxu0
  %v1618 = vpop.f32.mrf.mxu0
  %v1619 = vadd.f32 0.0, %v1618
  %v1620 = vpop.f32.mrf.mxu0
  %1621 = vmatprep.mubr.bf16.mxu0 0
  %1622 = vmatmul.mubr.bf16.gmra.mxu0 %v1036
  %v1623 = vpop.f32.mrf.mxu0
  %v1624 = vadd.f32 0.0, %v1623
  %v1625 = vpop.f32.mrf.mxu0
  %v1626 = vpop.f32.mrf.mxu0
  %v1627 = vadd.f32 0.0, %v1626
  %v1628 = vpop.f32.mrf.mxu0
  %1629 = vmatprep.mubr.bf16.mxu0 0
  %1630 = vmatmul.mubr.bf16.gmra.mxu0 %v1039
  %v1631 = vpop.f32.mrf.mxu0
  %v1632 = vadd.f32 0.0, %v1631
  %v1633 = vpop.f32.mrf.mxu0
  %v1634 = vpop.f32.mrf.mxu0
  %v1635 = vadd.f32 0.0, %v1634
  %v1636 = vpop.f32.mrf.mxu0
  %1637 = vmatprep.mubr.bf16.mxu0 0
  %1638 = vmatmul.mubr.bf16.gmra.mxu0 %v1042
  %v1639 = vpop.f32.mrf.mxu0
  %v1640 = vadd.f32 0.0, %v1639
  %v1641 = vpop.f32.mrf.mxu0
  %v1642 = vpop.f32.mrf.mxu0
  %v1643 = vadd.f32 0.0, %v1642
  %v1644 = vpop.f32.mrf.mxu0
  %1645 = vmatprep.mubr.bf16.mxu0 0
  %1646 = vmatmul.mubr.bf16.gmra.mxu0 %v1045
  %v1647 = vpop.f32.mrf.mxu0
  %v1648 = vadd.f32 0.0, %v1647
  %v1649 = vpop.f32.mrf.mxu0
  %v1650 = vpop.f32.mrf.mxu0
  %v1651 = vadd.f32 0.0, %v1650
  %v1652 = vpop.f32.mrf.mxu0
  %1653 = vmatprep.mubr.bf16.mxu0 0
  %1654 = vmatmul.mubr.bf16.gmra.mxu0 %v1048
  %v1655 = vpop.f32.mrf.mxu0
  %v1656 = vadd.f32 0.0, %v1655
  %v1657 = vpop.f32.mrf.mxu0
  %v1658 = vpop.f32.mrf.mxu0
  %v1659 = vadd.f32 0.0, %v1658
  %v1660 = vpop.f32.mrf.mxu0
  %1661 = vmatprep.mubr.bf16.mxu0 0
  %1662 = vmatmul.mubr.bf16.gmra.mxu0 %v1051
  %v1663 = vpop.f32.mrf.mxu0
  %v1664 = vadd.f32 0.0, %v1663
  %v1665 = vpop.f32.mrf.mxu0
  %v1666 = vpop.f32.mrf.mxu0
  %v1667 = vadd.f32 0.0, %v1666
  %v1668 = vpop.f32.mrf.mxu0
  %1669 = vmatprep.mubr.bf16.mxu0 0
  %1670 = vmatmul.mubr.bf16.gmra.mxu0 %v1054
  %v1671 = vpop.f32.mrf.mxu0
  %v1672 = vadd.f32 0.0, %v1671
  %v1673 = vpop.f32.mrf.mxu0
  %v1674 = vpop.f32.mrf.mxu0
  %v1675 = vadd.f32 0.0, %v1674
  %v1676 = vpop.f32.mrf.mxu0
  %1677 = vmatprep.mubr.bf16.mxu0 0
  %1678 = vmatmul.mubr.bf16.gmra.mxu0 %v1057
  %v1679 = vpop.f32.mrf.mxu0
  %v1680 = vadd.f32 0.0, %v1679
  %v1681 = vpop.f32.mrf.mxu0
  %v1682 = vpop.f32.mrf.mxu0
  %v1683 = vadd.f32 0.0, %v1682
  %v1684 = vpop.f32.mrf.mxu0
  %1685 = vmatprep.mubr.bf16.mxu0 0
  %1686 = vmatmul.mubr.bf16.gmra.mxu0 %v1060
  %v1687 = vpop.f32.mrf.mxu0
  %v1688 = vadd.f32 0.0, %v1687
  %v1689 = vpop.f32.mrf.mxu0
  %v1690 = vpop.f32.mrf.mxu0
  %v1691 = vadd.f32 0.0, %v1690
  %v1692 = vpop.f32.mrf.mxu0
  %1693 = vmatprep.mubr.bf16.mxu0 0
  %1694 = vmatmul.mubr.bf16.gmra.mxu0 %v1063
  %v1695 = vpop.f32.mrf.mxu0
  %v1696 = vadd.f32 0.0, %v1695
  %v1697 = vpop.f32.mrf.mxu0
  %v1698 = vpop.f32.mrf.mxu0
  %v1699 = vadd.f32 0.0, %v1698
  %v1700 = vpop.f32.mrf.mxu0
  %1701 = vmatprep.mubr.bf16.mxu0 0
  %1702 = vmatmul.mubr.bf16.gmra.mxu0 %v1066
  %v1703 = vpop.f32.mrf.mxu0
  %v1704 = vadd.f32 0.0, %v1703
  %v1705 = vpop.f32.mrf.mxu0
  %v1706 = vpop.f32.mrf.mxu0
  %v1707 = vadd.f32 0.0, %v1706
  %v1708 = vpop.f32.mrf.mxu0
  %1709 = vmatprep.mubr.bf16.mxu0 0
  %1710 = vmatmul.mubr.bf16.gmra.mxu0 %v1069
  %v1711 = vpop.f32.mrf.mxu0
  %v1712 = vadd.f32 0.0, %v1711
  %v1713 = vpop.f32.mrf.mxu0
  %v1714 = vpop.f32.mrf.mxu0
  %v1715 = vadd.f32 0.0, %v1714
  %v1716 = vpop.f32.mrf.mxu0
  %1717 = vmatprep.mubr.bf16.mxu0 0
  %1718 = vmatmul.mubr.bf16.gmra.mxu0 %v1072
  %v1719 = vpop.f32.mrf.mxu0
  %v1720 = vadd.f32 0.0, %v1719
  %v1721 = vpop.f32.mrf.mxu0
  %v1722 = vpop.f32.mrf.mxu0
  %v1723 = vadd.f32 0.0, %v1722
  %v1724 = vpop.f32.mrf.mxu0
  %1725 = vmatprep.mubr.bf16.mxu0 0
  %1726 = vmatmul.mubr.bf16.gmra.mxu0 %v1075
  %v1727 = vpop.f32.mrf.mxu0
  %v1728 = vadd.f32 0.0, %v1727
  %v1729 = vpop.f32.mrf.mxu0
  %v1730 = vpop.f32.mrf.mxu0
  %v1731 = vadd.f32 0.0, %v1730
  %v1732 = vpop.f32.mrf.mxu0
  %1733 = vmatprep.mubr.bf16.mxu0 0
  %1734 = vmatmul.mubr.bf16.gmra.mxu0 %v1078
  %v1735 = vpop.f32.mrf.mxu0
  %v1736 = vadd.f32 0.0, %v1735
  %v1737 = vpop.f32.mrf.mxu0
  %v1738 = vpop.f32.mrf.mxu0
  %v1739 = vadd.f32 0.0, %v1738
  %v1740 = vpop.f32.mrf.mxu0
  %1741 = vmatprep.mubr.bf16.mxu0 0
  %1742 = vmatmul.mubr.bf16.gmra.mxu0 %v1081
  %v1743 = vpop.f32.mrf.mxu0
  %v1744 = vadd.f32 0.0, %v1743
  %v1745 = vpop.f32.mrf.mxu0
  %v1746 = vpop.f32.mrf.mxu0
  %v1747 = vadd.f32 0.0, %v1746
  %v1748 = vpop.f32.mrf.mxu0
  %1749 = vmatprep.mubr.bf16.mxu0 0
  %1750 = vmatmul.mubr.bf16.gmra.mxu0 %v1084
  %v1751 = vpop.f32.mrf.mxu0
  %v1752 = vadd.f32 0.0, %v1751
  %v1753 = vpop.f32.mrf.mxu0
  %v1754 = vpop.f32.mrf.mxu0
  %v1755 = vadd.f32 0.0, %v1754
  %v1756 = vpop.f32.mrf.mxu0
  %1757 = vmatprep.mubr.bf16.mxu0 0
  %1758 = vmatmul.mubr.bf16.gmra.mxu0 %v1087
  %v1759 = vpop.f32.mrf.mxu0
  %v1760 = vadd.f32 0.0, %v1759
  %v1761 = vpop.f32.mrf.mxu0
  %v1762 = vpop.f32.mrf.mxu0
  %v1763 = vadd.f32 0.0, %v1762
  %v1764 = vpop.f32.mrf.mxu0
  %1765 = vmatprep.mubr.bf16.mxu0 0
  %1766 = vmatmul.mubr.bf16.gmra.mxu0 %v1090
  %v1767 = vpop.f32.mrf.mxu0
  %v1768 = vadd.f32 0.0, %v1767
  %v1769 = vpop.f32.mrf.mxu0
  %v1770 = vpop.f32.mrf.mxu0
  %v1771 = vadd.f32 0.0, %v1770
  %v1772 = vpop.f32.mrf.mxu0
  %1773 = vmatprep.mubr.bf16.mxu0 0
  %1774 = vmatmul.mubr.bf16.gmra.mxu0 %v1093
  %v1775 = vpop.f32.mrf.mxu0
  %v1776 = vadd.f32 0.0, %v1775
  %v1777 = vpop.f32.mrf.mxu0
  %v1778 = vpop.f32.mrf.mxu0
  %v1779 = vadd.f32 0.0, %v1778
  %v1780 = vpop.f32.mrf.mxu0
  %1781 = vmatprep.mubr.bf16.mxu0 0
  %1782 = vmatmul.mubr.bf16.gmra.mxu0 %v1096
  %v1783 = vpop.f32.mrf.mxu0
  %v1784 = vadd.f32 0.0, %v1783
  %v1785 = vpop.f32.mrf.mxu0
  %v1786 = vpop.f32.mrf.mxu0
  %v1787 = vadd.f32 0.0, %v1786
  %v1788 = vpop.f32.mrf.mxu0
  %1789 = vmatprep.mubr.bf16.mxu0 0
  %1790 = vmatmul.mubr.bf16.gmra.mxu0 %v1099
  %v1791 = vpop.f32.mrf.mxu0
  %v1792 = vadd.f32 0.0, %v1791
  %v1793 = vpop.f32.mrf.mxu0
  %v1794 = vpop.f32.mrf.mxu0
  %v1795 = vadd.f32 0.0, %v1794
  %v1796 = vpop.f32.mrf.mxu0
  %1797 = vmatprep.mubr.bf16.mxu0 0
  %1798 = vmatmul.mubr.bf16.gmra.mxu0 %v1102
  %v1799 = vpop.f32.mrf.mxu0
  %v1800 = vadd.f32 0.0, %v1799
  %v1801 = vpop.f32.mrf.mxu0
  %v1802 = vpop.f32.mrf.mxu0
  %v1803 = vadd.f32 0.0, %v1802
  %v1804 = vpop.f32.mrf.mxu0
  %1805 = vmatprep.mubr.bf16.mxu0 0
  %1806 = vmatmul.mubr.bf16.gmra.mxu0 %v1105
  %v1807 = vpop.f32.mrf.mxu0
  %v1808 = vadd.f32 0.0, %v1807
  %v1809 = vpop.f32.mrf.mxu0
  %v1810 = vpop.f32.mrf.mxu0
  %v1811 = vadd.f32 0.0, %v1810
  %v1812 = vpop.f32.mrf.mxu0
  %1813 = vmatprep.mubr.bf16.mxu0 0
  %1814 = vmatmul.mubr.bf16.gmra.mxu0 %v1108
  %v1815 = vpop.f32.mrf.mxu0
  %v1816 = vadd.f32 0.0, %v1815
  %v1817 = vpop.f32.mrf.mxu0
  %v1818 = vpop.f32.mrf.mxu0
  %v1819 = vadd.f32 0.0, %v1818
  %v1820 = vpop.f32.mrf.mxu0
  %1821 = vmatprep.mubr.bf16.mxu0 0
  %1822 = vmatmul.mubr.bf16.gmra.mxu0 %v1111
  %v1823 = vpop.f32.mrf.mxu0
  %v1824 = vadd.f32 0.0, %v1823
  %v1825 = vpop.f32.mrf.mxu0
  %v1826 = vpop.f32.mrf.mxu0
  %v1827 = vadd.f32 0.0, %v1826
  %v1828 = vpop.f32.mrf.mxu0
  %1829 = vmatprep.mubr.bf16.mxu0 0
  %1830 = vmatmul.mubr.bf16.gmra.mxu0 %v1114
  %v1831 = vpop.f32.mrf.mxu0
  %v1832 = vadd.f32 0.0, %v1831
  %v1833 = vpop.f32.mrf.mxu0
  %v1834 = vpop.f32.mrf.mxu0
  %v1835 = vadd.f32 0.0, %v1834
  %v1836 = vpop.f32.mrf.mxu0
  %1837 = vmatprep.mubr.bf16.mxu0 0
  %1838 = vmatmul.mubr.bf16.gmra.mxu0 %v1117
  %v1839 = vpop.f32.mrf.mxu0
  %v1840 = vadd.f32 0.0, %v1839
  %v1841 = vpop.f32.mrf.mxu0
  %v1842 = vpop.f32.mrf.mxu0
  %v1843 = vadd.f32 0.0, %v1842
  %v1844 = vpop.f32.mrf.mxu0
  %1845 = vmatprep.mubr.bf16.mxu0 0
  %1846 = vmatmul.mubr.bf16.gmra.mxu0 %v1120
  %v1847 = vpop.f32.mrf.mxu0
  %v1848 = vadd.f32 0.0, %v1847
  %v1849 = vpop.f32.mrf.mxu0
  %v1850 = vpop.f32.mrf.mxu0
  %v1851 = vadd.f32 0.0, %v1850
  %v1852 = vpop.f32.mrf.mxu0
  %1853 = vmatprep.mubr.bf16.mxu0 0
  %1854 = vmatmul.mubr.bf16.gmra.mxu0 %v1123
  %v1855 = vpop.f32.mrf.mxu0
  %v1856 = vadd.f32 0.0, %v1855
  %v1857 = vpop.f32.mrf.mxu0
  %v1858 = vpop.f32.mrf.mxu0
  %v1859 = vadd.f32 0.0, %v1858
  %v1860 = vpop.f32.mrf.mxu0
  %1861 = vmatprep.mubr.bf16.mxu0 0
  %1862 = vmatmul.mubr.bf16.gmra.mxu0 %v1126
  %v1863 = vpop.f32.mrf.mxu0
  %v1864 = vadd.f32 0.0, %v1863
  %v1865 = vpop.f32.mrf.mxu0
  %v1866 = vpop.f32.mrf.mxu0
  %v1867 = vadd.f32 0.0, %v1866
  %v1868 = vpop.f32.mrf.mxu0
  %1869 = vmatprep.mubr.bf16.mxu0 0
  %1870 = vmatmul.mubr.bf16.gmra.mxu0 %v1129
  %v1871 = vpop.f32.mrf.mxu0
  %v1872 = vadd.f32 0.0, %v1871
  %v1873 = vpop.f32.mrf.mxu0
  %v1874 = vpop.f32.mrf.mxu0
  %v1875 = vadd.f32 0.0, %v1874
  %v1876 = vpop.f32.mrf.mxu0
  %1877 = vmatprep.mubr.bf16.mxu0 0
  %1878 = vmatmul.mubr.bf16.gmra.mxu0 %v1132
  %v1879 = vpop.f32.mrf.mxu0
  %v1880 = vadd.f32 0.0, %v1879
  %v1881 = vpop.f32.mrf.mxu0
  %v1882 = vpop.f32.mrf.mxu0
  %v1883 = vadd.f32 0.0, %v1882
  %v1884 = vpop.f32.mrf.mxu0
  %1885 = vmatprep.mubr.bf16.mxu0 0
  %1886 = vmatmul.mubr.bf16.gmra.mxu0 %v1135
  %v1887 = vpop.f32.mrf.mxu0
  %v1888 = vadd.f32 0.0, %v1887
  %v1889 = vpop.f32.mrf.mxu0
  %v1890 = vpop.f32.mrf.mxu0
  %v1891 = vadd.f32 0.0, %v1890
  %v1892 = vpop.f32.mrf.mxu0
  %1893 = vmatprep.mubr.bf16.mxu0 0
  %1894 = vmatmul.mubr.bf16.gmra.mxu0 %v1138
  %v1895 = vpop.f32.mrf.mxu0
  %v1896 = vadd.f32 0.0, %v1895
  %v1897 = vpop.f32.mrf.mxu0
  %v1898 = vpop.f32.mrf.mxu0
  %v1899 = vadd.f32 0.0, %v1898
  %v1900 = vpop.f32.mrf.mxu0
  %1901 = vmatprep.mubr.bf16.mxu0 0
  %1902 = vmatmul.mubr.bf16.gmra.mxu0 %v1141
  %v1903 = vpop.f32.mrf.mxu0
  %v1904 = vadd.f32 0.0, %v1903
  %v1905 = vpop.f32.mrf.mxu0
  %v1906 = vpop.f32.mrf.mxu0
  %v1907 = vadd.f32 0.0, %v1906
  %v1908 = vpop.f32.mrf.mxu0
  %1909 = vmatprep.mubr.bf16.mxu0 0
  %1910 = vmatmul.mubr.bf16.gmra.mxu0 %v1144
  %v1911 = vpop.f32.mrf.mxu0
  %v1912 = vadd.f32 0.0, %v1911
  %v1913 = vpop.f32.mrf.mxu0
  %v1914 = vpop.f32.mrf.mxu0
  %v1915 = vadd.f32 0.0, %v1914
  %v1916 = vpop.f32.mrf.mxu0
  %1917 = vmatprep.mubr.bf16.mxu0 0
  %1918 = vmatmul.mubr.bf16.gmra.mxu0 %v1147
  %v1919 = vpop.f32.mrf.mxu0
  %v1920 = vadd.f32 0.0, %v1919
  %v1921 = vpop.f32.mrf.mxu0
  %v1922 = vpop.f32.mrf.mxu0
  %v1923 = vadd.f32 0.0, %v1922
  %v1924 = vpop.f32.mrf.mxu0
  %1925 = vmatprep.mubr.bf16.mxu0 0
  %1926 = vmatmul.mubr.bf16.gmra.mxu0 %v1150
  %v1927 = vpop.f32.mrf.mxu0
  %v1928 = vadd.f32 0.0, %v1927
  %v1929 = vpop.f32.mrf.mxu0
  %v1930 = vpop.f32.mrf.mxu0
  %v1931 = vadd.f32 0.0, %v1930
  %v1932 = vpop.f32.mrf.mxu0
  %1933 = vmatprep.mubr.bf16.mxu0 0
  %1934 = vmatmul.mubr.bf16.gmra.mxu0 %v1153
  %v1935 = vpop.f32.mrf.mxu0
  %v1936 = vadd.f32 0.0, %v1935
  %v1937 = vpop.f32.mrf.mxu0
  %v1938 = vpop.f32.mrf.mxu0
  %v1939 = vadd.f32 0.0, %v1938
  %v1940 = vpop.f32.mrf.mxu0
  %1941 = vmatprep.mubr.bf16.mxu0 0
  %1942 = vmatmul.mubr.bf16.gmra.mxu0 %v1156
  %v1943 = vpop.f32.mrf.mxu0
  %v1944 = vadd.f32 0.0, %v1943
  %v1945 = vpop.f32.mrf.mxu0
  %v1946 = vpop.f32.mrf.mxu0
  %v1947 = vadd.f32 0.0, %v1946
  %v1948 = vpop.f32.mrf.mxu0
  %1949 = vmatprep.mubr.bf16.mxu0 0
  %1950 = vmatmul.mubr.bf16.gmra.mxu0 %v1159
  %v1951 = vpop.f32.mrf.mxu0
  %v1952 = vadd.f32 0.0, %v1951
  %v1953 = vpop.f32.mrf.mxu0
  %v1954 = vpop.f32.mrf.mxu0
  %v1955 = vadd.f32 0.0, %v1954
  %v1956 = vpop.f32.mrf.mxu0
  %1957 = vmatprep.mubr.bf16.mxu0 0
  %1958 = vmatmul.mubr.bf16.gmra.mxu0 %v1162
  %v1959 = vpop.f32.mrf.mxu0
  %v1960 = vadd.f32 0.0, %v1959
  %v1961 = vpop.f32.mrf.mxu0
  %v1962 = vpop.f32.mrf.mxu0
  %v1963 = vadd.f32 0.0, %v1962
  %v1964 = vpop.f32.mrf.mxu0
  %1965 = vmatprep.mubr.bf16.mxu0 0
  %1966 = vmatmul.mubr.bf16.gmra.mxu0 %v1165
  %v1967 = vpop.f32.mrf.mxu0
  %v1968 = vadd.f32 0.0, %v1967
  %v1969 = vpop.f32.mrf.mxu0
  %v1970 = vpop.f32.mrf.mxu0
  %v1971 = vadd.f32 0.0, %v1970
  %v1972 = vpop.f32.mrf.mxu0
  %1973 = vmatprep.mubr.bf16.mxu0 0
  %1974 = vmatmul.mubr.bf16.gmra.mxu0 %v1168
  %v1975 = vpop.f32.mrf.mxu0
  %v1976 = vadd.f32 0.0, %v1975
  %v1977 = vpop.f32.mrf.mxu0
  %v1978 = vpop.f32.mrf.mxu0
  %v1979 = vadd.f32 0.0, %v1978
  %v1980 = vpop.f32.mrf.mxu0
  %1981 = vmatprep.mubr.bf16.mxu0 0
  %1982 = vmatmul.mubr.bf16.gmra.mxu0 %v1171
  %v1983 = vpop.f32.mrf.mxu0
  %v1984 = vadd.f32 0.0, %v1983
  %v1985 = vpop.f32.mrf.mxu0
  %v1986 = vpop.f32.mrf.mxu0
  %v1987 = vadd.f32 0.0, %v1986
  %v1988 = vpop.f32.mrf.mxu0
  %1989 = vmatprep.mubr.bf16.mxu0 0
  %1990 = vmatmul.mubr.bf16.gmra.mxu0 %v1174
  %v1991 = vpop.f32.mrf.mxu0
  %v1992 = vadd.f32 0.0, %v1991
  %v1993 = vpop.f32.mrf.mxu0
  %v1994 = vpop.f32.mrf.mxu0
  %v1995 = vadd.f32 0.0, %v1994
  %v1996 = vpop.f32.mrf.mxu0
  %1997 = vmatprep.mubr.bf16.mxu0 0
  %1998 = vmatmul.mubr.bf16.gmra.mxu0 %v1177
  %v1999 = vpop.f32.mrf.mxu0
  %v2000 = vadd.f32 0.0, %v1999
  %v2001 = vpop.f32.mrf.mxu0
  %v2002 = vpop.f32.mrf.mxu0
  %v2003 = vadd.f32 0.0, %v2002
  %v2004 = vpop.f32.mrf.mxu0
  %2005 = vmatprep.mubr.bf16.mxu0 0
  %2006 = vmatmul.mubr.bf16.gmra.mxu0 %v1180
  %v2007 = vpop.f32.mrf.mxu0
  %v2008 = vadd.f32 0.0, %v2007
  %v2009 = vpop.f32.mrf.mxu0
  %v2010 = vpop.f32.mrf.mxu0
  %v2011 = vadd.f32 0.0, %v2010
  %v2012 = vpop.f32.mrf.mxu0
  %2013 = vmatprep.mubr.bf16.mxu0 0
  %2014 = vmatmul.mubr.bf16.gmra.mxu0 %v1183
  %v2015 = vpop.f32.mrf.mxu0
  %v2016 = vadd.f32 0.0, %v2015
  %v2017 = vpop.f32.mrf.mxu0
  %v2018 = vpop.f32.mrf.mxu0
  %v2019 = vadd.f32 0.0, %v2018
  %v2020 = vpop.f32.mrf.mxu0
  %2021 = vmatprep.mubr.bf16.mxu0 0
  %2022 = vmatmul.mubr.bf16.gmra.mxu0 %v1186
  %v2023 = vpop.f32.mrf.mxu0
  %v2024 = vadd.f32 0.0, %v2023
  %v2025 = vpop.f32.mrf.mxu0
  %v2026 = vpop.f32.mrf.mxu0
  %v2027 = vadd.f32 0.0, %v2026
  %v2028 = vpop.f32.mrf.mxu0
  %2029 = vmatprep.mubr.bf16.mxu0 0
  %2030 = vmatmul.mubr.bf16.gmra.mxu0 %v1189
  %v2031 = vpop.f32.mrf.mxu0
  %v2032 = vadd.f32 0.0, %v2031
  %v2033 = vpop.f32.mrf.mxu0
  %v2034 = vpop.f32.mrf.mxu0
  %v2035 = vadd.f32 0.0, %v2034
  %v2036 = vpop.f32.mrf.mxu0
  %2037 = vmatprep.mubr.bf16.mxu0 0
  %2038 = vmatmul.mubr.bf16.gmra.mxu0 %v1192
  %v2039 = vpop.f32.mrf.mxu0
  %v2040 = vadd.f32 0.0, %v2039
  %v2041 = vpop.f32.mrf.mxu0
  %v2042 = vpop.f32.mrf.mxu0
  %v2043 = vadd.f32 0.0, %v2042
  %v2044 = vpop.f32.mrf.mxu0
  %2045 = vmatprep.mubr.bf16.mxu0 0
  %2046 = vmatmul.mubr.bf16.gmra.mxu0 %v1195
  %v2047 = vpop.f32.mrf.mxu0
  %v2048 = vadd.f32 0.0, %v2047
  %v2049 = vpop.f32.mrf.mxu0
  %v2050 = vpop.f32.mrf.mxu0
  %v2051 = vadd.f32 0.0, %v2050
  %v2052 = vpop.f32.mrf.mxu0
  %2053 = vmatprep.mubr.bf16.mxu0 0
  %2054 = vmatmul.mubr.bf16.gmra.mxu0 %v1198
  %v2055 = vpop.f32.mrf.mxu0
  %v2056 = vadd.f32 0.0, %v2055
  %v2057 = vpop.f32.mrf.mxu0
  %v2058 = vpop.f32.mrf.mxu0
  %v2059 = vadd.f32 0.0, %v2058
  %v2060 = vpop.f32.mrf.mxu0
  %2061 = vmatprep.mubr.bf16.mxu0 0
  %2062 = vmatmul.mubr.bf16.gmra.mxu0 %v1201
  %v2063 = vpop.f32.mrf.mxu0
  %v2064 = vadd.f32 0.0, %v2063
  %v2065 = vpop.f32.mrf.mxu0
  %v2066 = vpop.f32.mrf.mxu0
  %v2067 = vadd.f32 0.0, %v2066
  %v2068 = vpop.f32.mrf.mxu0
  %2069 = vmatprep.mubr.bf16.mxu0 0
  %2070 = vmatmul.mubr.bf16.gmra.mxu0 %v1204
  %v2071 = vpop.f32.mrf.mxu0
  %v2072 = vadd.f32 0.0, %v2071
  %v2073 = vpop.f32.mrf.mxu0
  %v2074 = vpop.f32.mrf.mxu0
  %v2075 = vadd.f32 0.0, %v2074
  %v2076 = vpop.f32.mrf.mxu0
  %2077 = vmatprep.mubr.bf16.mxu0 0
  %2078 = vmatmul.mubr.bf16.gmra.mxu0 %v1207
  %v2079 = vpop.f32.mrf.mxu0
  %v2080 = vadd.f32 0.0, %v2079
  %v2081 = vpop.f32.mrf.mxu0
  %v2082 = vpop.f32.mrf.mxu0
  %v2083 = vadd.f32 0.0, %v2082
  %v2084 = vpop.f32.mrf.mxu0
  %2085 = vmatprep.mubr.bf16.mxu0 0
  %2086 = vmatmul.mubr.bf16.gmra.mxu0 %v1210
  %v2087 = vpop.f32.mrf.mxu0
  %v2088 = vadd.f32 0.0, %v2087
  %v2089 = vpop.f32.mrf.mxu0
  %v2090 = vpop.f32.mrf.mxu0
  %v2091 = vadd.f32 0.0, %v2090
  %v2092 = vpop.f32.mrf.mxu0
  %2093 = vmatprep.mubr.bf16.mxu0 0
  %2094 = vmatmul.mubr.bf16.gmra.mxu0 %v1213
  %v2095 = vpop.f32.mrf.mxu0
  %v2096 = vadd.f32 0.0, %v2095
  %v2097 = vpop.f32.mrf.mxu0
  %v2098 = vpop.f32.mrf.mxu0
  %v2099 = vadd.f32 0.0, %v2098
  %v2100 = vpop.f32.mrf.mxu0
  %2101 = vmatprep.mubr.bf16.mxu0 0
  %2102 = vmatmul.mubr.bf16.gmra.mxu0 %v1216
  %v2103 = vpop.f32.mrf.mxu0
  %v2104 = vadd.f32 0.0, %v2103
  %v2105 = vpop.f32.mrf.mxu0
  %v2106 = vpop.f32.mrf.mxu0
  %v2107 = vadd.f32 0.0, %v2106
  %v2108 = vpop.f32.mrf.mxu0
  %2109 = vmatprep.mubr.bf16.mxu0 0
  %2110 = vmatmul.mubr.bf16.gmra.mxu0 %v1219
  %v2111 = vpop.f32.mrf.mxu0
  %v2112 = vadd.f32 0.0, %v2111
  %v2113 = vpop.f32.mrf.mxu0
  %v2114 = vpop.f32.mrf.mxu0
  %v2115 = vadd.f32 0.0, %v2114
  %v2116 = vpop.f32.mrf.mxu0
  %2117 = vmatprep.mubr.bf16.mxu0 0
  %2118 = vmatmul.mubr.bf16.gmra.mxu0 %v1222
  %v2119 = vpop.f32.mrf.mxu0
  %v2120 = vadd.f32 0.0, %v2119
  %v2121 = vpop.f32.mrf.mxu0
  %v2122 = vpop.f32.mrf.mxu0
  %v2123 = vadd.f32 0.0, %v2122
  %v2124 = vpop.f32.mrf.mxu0
  %2125 = vmatprep.mubr.bf16.mxu0 0
  %2126 = vmatmul.mubr.bf16.gmra.mxu0 %v1225
  %v2127 = vpop.f32.mrf.mxu0
  %v2128 = vadd.f32 0.0, %v2127
  %v2129 = vpop.f32.mrf.mxu0
  %v2130 = vpop.f32.mrf.mxu0
  %v2131 = vadd.f32 0.0, %v2130
  %v2132 = vpop.f32.mrf.mxu0
  %2133 = vmatprep.mubr.bf16.mxu0 0
  %2134 = vmatmul.mubr.bf16.gmra.mxu0 %v1228
  %v2135 = vpop.f32.mrf.mxu0
  %v2136 = vadd.f32 0.0, %v2135
  %v2137 = vpop.f32.mrf.mxu0
  %v2138 = vpop.f32.mrf.mxu0
  %v2139 = vadd.f32 0.0, %v2138
  %v2140 = vpop.f32.mrf.mxu0
  %2141 = vmatprep.mubr.bf16.mxu0 0
  %2142 = vmatmul.mubr.bf16.gmra.mxu0 %v1231
  %v2143 = vpop.f32.mrf.mxu0
  %v2144 = vadd.f32 0.0, %v2143
  %v2145 = vpop.f32.mrf.mxu0
  %v2146 = vpop.f32.mrf.mxu0
  %v2147 = vadd.f32 0.0, %v2146
  %v2148 = vpop.f32.mrf.mxu0
  %2149 = vmatprep.mubr.bf16.mxu0 0
  %2150 = vmatmul.mubr.bf16.gmra.mxu0 %v1234
  %v2151 = vpop.f32.mrf.mxu0
  %v2152 = vadd.f32 0.0, %v2151
  %v2153 = vpop.f32.mrf.mxu0
  %v2154 = vpop.f32.mrf.mxu0
  %v2155 = vadd.f32 0.0, %v2154
  %v2156 = vpop.f32.mrf.mxu0
  %2157 = vmatprep.mubr.bf16.mxu0 0
  %2158 = vmatmul.mubr.bf16.gmra.mxu0 %v1237
  %v2159 = vpop.f32.mrf.mxu0
  %v2160 = vadd.f32 0.0, %v2159
  %v2161 = vpop.f32.mrf.mxu0
  %v2162 = vpop.f32.mrf.mxu0
  %v2163 = vadd.f32 0.0, %v2162
  %v2164 = vpop.f32.mrf.mxu0
  %2165 = vmatprep.mubr.bf16.mxu0 0
  %2166 = vmatmul.mubr.bf16.gmra.mxu0 %v1240
  %v2167 = vpop.f32.mrf.mxu0
  %v2168 = vadd.f32 0.0, %v2167
  %v2169 = vpop.f32.mrf.mxu0
  %v2170 = vpop.f32.mrf.mxu0
  %v2171 = vadd.f32 0.0, %v2170
  %v2172 = vpop.f32.mrf.mxu0
  %2173 = vmatprep.mubr.bf16.mxu0 0
  %2174 = vmatmul.mubr.bf16.gmra.mxu0 %v1243
  %v2175 = vpop.f32.mrf.mxu0
  %v2176 = vadd.f32 0.0, %v2175
  %v2177 = vpop.f32.mrf.mxu0
  %v2178 = vpop.f32.mrf.mxu0
  %v2179 = vadd.f32 0.0, %v2178
  %v2180 = vpop.f32.mrf.mxu0
  %2181 = vmatprep.mubr.bf16.mxu0 0
  %2182 = vmatmul.mubr.bf16.gmra.mxu0 %v1246
  %v2183 = vpop.f32.mrf.mxu0
  %v2184 = vadd.f32 0.0, %v2183
  %v2185 = vpop.f32.mrf.mxu0
  %v2186 = vpop.f32.mrf.mxu0
  %v2187 = vadd.f32 0.0, %v2186
  %v2188 = vpop.f32.mrf.mxu0
  %2189 = vmatprep.mubr.bf16.mxu0 0
  %2190 = vmatmul.mubr.bf16.gmra.mxu0 %v1249
  %v2191 = vpop.f32.mrf.mxu0
  %v2192 = vadd.f32 0.0, %v2191
  %v2193 = vpop.f32.mrf.mxu0
  %v2194 = vpop.f32.mrf.mxu0
  %v2195 = vadd.f32 0.0, %v2194
  %v2196 = vpop.f32.mrf.mxu0
  %2197 = vmatprep.mubr.bf16.mxu0 0
  %2198 = vmatmul.mubr.bf16.gmra.mxu0 %v1252
  %v2199 = vpop.f32.mrf.mxu0
  %v2200 = vadd.f32 0.0, %v2199
  %v2201 = vpop.f32.mrf.mxu0
  %v2202 = vpop.f32.mrf.mxu0
  %v2203 = vadd.f32 0.0, %v2202
  %v2204 = vpop.f32.mrf.mxu0
  %2205 = vmatprep.mubr.bf16.mxu0 0
  %2206 = vmatmul.mubr.bf16.gmra.mxu0 %v1255
  %v2207 = vpop.f32.mrf.mxu0
  %v2208 = vadd.f32 0.0, %v2207
  %v2209 = vpop.f32.mrf.mxu0
  %v2210 = vpop.f32.mrf.mxu0
  %v2211 = vadd.f32 0.0, %v2210
  %v2212 = vpop.f32.mrf.mxu0
  %2213 = vmatprep.mubr.bf16.mxu0 0
  %2214 = vmatmul.mubr.bf16.gmra.mxu0 %v1258
  %v2215 = vpop.f32.mrf.mxu0
  %v2216 = vadd.f32 0.0, %v2215
  %v2217 = vpop.f32.mrf.mxu0
  %v2218 = vpop.f32.mrf.mxu0
  %v2219 = vadd.f32 0.0, %v2218
  %v2220 = vpop.f32.mrf.mxu0
  %2221 = vmatprep.mubr.bf16.mxu0 0
  %2222 = vmatmul.mubr.bf16.gmra.mxu0 %v1261
  %v2223 = vpop.f32.mrf.mxu0
  %v2224 = vadd.f32 0.0, %v2223
  %v2225 = vpop.f32.mrf.mxu0
  %v2226 = vpop.f32.mrf.mxu0
  %v2227 = vadd.f32 0.0, %v2226
  %v2228 = vpop.f32.mrf.mxu0
  %2229 = vmatprep.mubr.bf16.mxu0 0
  %2230 = vmatmul.mubr.bf16.gmra.mxu0 %v1264
  %v2231 = vpop.f32.mrf.mxu0
  %v2232 = vadd.f32 0.0, %v2231
  %v2233 = vpop.f32.mrf.mxu0
  %v2234 = vpop.f32.mrf.mxu0
  %v2235 = vadd.f32 0.0, %v2234
  %v2236 = vpop.f32.mrf.mxu0
  %2237 = vmatprep.mubr.bf16.mxu0 0
  %2238 = vmatmul.mubr.bf16.gmra.mxu0 %v1267
  %v2239 = vpop.f32.mrf.mxu0
  %v2240 = vadd.f32 0.0, %v2239
  %v2241 = vpop.f32.mrf.mxu0
  %v2242 = vpop.f32.mrf.mxu0
  %v2243 = vadd.f32 0.0, %v2242
  %v2244 = vpop.f32.mrf.mxu0
  %2245 = vmatprep.mubr.bf16.mxu0 0
  %2246 = vmatmul.mubr.bf16.gmra.mxu0 %v1270
  %v2247 = vpop.f32.mrf.mxu0
  %v2248 = vadd.f32 0.0, %v2247
  %v2249 = vpop.f32.mrf.mxu0
  %v2250 = vpop.f32.mrf.mxu0
  %v2251 = vadd.f32 0.0, %v2250
  %v2252 = vpop.f32.mrf.mxu0
  %2253 = vmatprep.mubr.bf16.mxu0 0
  %2254 = vmatmul.mubr.bf16.gmra.mxu0 %v1273
  %v2255 = vpop.f32.mrf.mxu0
  %v2256 = vadd.f32 0.0, %v2255
  %v2257 = vpop.f32.mrf.mxu0
  %v2258 = vpop.f32.mrf.mxu0
  %v2259 = vadd.f32 0.0, %v2258
  %v2260 = vpop.f32.mrf.mxu0
  %2261 = vmatprep.mubr.bf16.mxu0 0
  %2262 = vmatmul.mubr.bf16.gmra.mxu0 %v1276
  %v2263 = vpop.f32.mrf.mxu0
  %v2264 = vadd.f32 0.0, %v2263
  %v2265 = vpop.f32.mrf.mxu0
  %v2266 = vpop.f32.mrf.mxu0
  %v2267 = vadd.f32 0.0, %v2266
  %v2268 = vpop.f32.mrf.mxu0
  %2269 = vmatprep.mubr.bf16.mxu0 0
  %2270 = vmatmul.mubr.bf16.gmra.mxu0 %v1279
  %v2271 = vpop.f32.mrf.mxu0
  %v2272 = vadd.f32 0.0, %v2271
  %v2273 = vpop.f32.mrf.mxu0
  %v2274 = vpop.f32.mrf.mxu0
  %v2275 = vadd.f32 0.0, %v2274
  %v2276 = vpop.f32.mrf.mxu0
  %2277 = vmatprep.mubr.bf16.mxu0 0
  %2278 = vmatmul.mubr.bf16.gmra.mxu0 %v1282
  %v2279 = vpop.f32.mrf.mxu0
  %v2280 = vadd.f32 0.0, %v2279
  %v2281 = vpop.f32.mrf.mxu0
  %v2282 = vpop.f32.mrf.mxu0
  %v2283 = vadd.f32 0.0, %v2282
  %v2284 = vpop.f32.mrf.mxu0
  %2285 = vmatprep.mubr.bf16.mxu0 0
  %2286 = vmatmul.mubr.bf16.gmra.mxu0 %v1285
  %v2287 = vpop.f32.mrf.mxu0
  %v2288 = vadd.f32 0.0, %v2287
  %v2289 = vpop.f32.mrf.mxu0
  %v2290 = vpop.f32.mrf.mxu0
  %v2291 = vadd.f32 0.0, %v2290
  %v2292 = vpop.f32.mrf.mxu0
  %2293 = vmatprep.mubr.bf16.mxu0 0
  %2294 = vmatmul.mubr.bf16.gmra.mxu0 %v1288
  %v2295 = vpop.f32.mrf.mxu0
  %v2296 = vadd.f32 0.0, %v2295
  %v2297 = vpop.f32.mrf.mxu0
  %v2298 = vpop.f32.mrf.mxu0
  %v2299 = vadd.f32 0.0, %v2298
  %v2300 = vpop.f32.mrf.mxu0
  %2301 = vmatprep.mubr.bf16.mxu0 0
  %2302 = vmatmul.mubr.bf16.gmra.mxu0 %v1291
  %v2303 = vpop.f32.mrf.mxu0
  %v2304 = vadd.f32 0.0, %v2303
  %v2305 = vpop.f32.mrf.mxu0
  %v2306 = vpop.f32.mrf.mxu0
  %v2307 = vadd.f32 0.0, %v2306
  %v2308 = vpop.f32.mrf.mxu0
  %2309 = vmatprep.mubr.bf16.mxu0 0
  %2310 = vmatmul.mubr.bf16.gmra.mxu0 %v1294
  %v2311 = vpop.f32.mrf.mxu0
  %v2312 = vadd.f32 0.0, %v2311
  %v2313 = vpop.f32.mrf.mxu0
  %v2314 = vpop.f32.mrf.mxu0
  %v2315 = vadd.f32 0.0, %v2314
  %v2316 = vpop.f32.mrf.mxu0
  %2317 = vmatprep.mubr.bf16.mxu0 0
  %2318 = vmatmul.mubr.bf16.gmra.mxu0 %v1297
  %v2319 = vpop.f32.mrf.mxu0
  %v2320 = vadd.f32 0.0, %v2319
  %v2321 = vpop.f32.mrf.mxu0
  %v2322 = vpop.f32.mrf.mxu0
  %v2323 = vadd.f32 0.0, %v2322
  %v2324 = vpop.f32.mrf.mxu0
  %2325 = vmatprep.mubr.bf16.mxu0 0
  %2326 = vmatmul.mubr.bf16.gmra.mxu0 %v1300
  %v2327 = vpop.f32.mrf.mxu0
  %v2328 = vadd.f32 0.0, %v2327
  %v2329 = vpop.f32.mrf.mxu0
  %v2330 = vpop.f32.mrf.mxu0
  %v2331 = vadd.f32 0.0, %v2330
  %v2332 = vpop.f32.mrf.mxu0
  %2333 = vmatprep.mubr.bf16.mxu0 0
  %2334 = vmatmul.mubr.bf16.gmra.mxu0 %v1303
  %v2335 = vpop.f32.mrf.mxu0
  %v2336 = vadd.f32 0.0, %v2335
  %v2337 = vpop.f32.mrf.mxu0
  %v2338 = vpop.f32.mrf.mxu0
  %v2339 = vadd.f32 0.0, %v2338
  %v2340 = vpop.f32.mrf.mxu0
  %2341 = vmatprep.mubr.bf16.mxu0 0
  %2342 = vmatmul.mubr.bf16.gmra.mxu0 %v1306
  %v2343 = vpop.f32.mrf.mxu0
  %v2344 = vadd.f32 0.0, %v2343
  %v2345 = vpop.f32.mrf.mxu0
  %v2346 = vpop.f32.mrf.mxu0
  %v2347 = vadd.f32 0.0, %v2346
  %v2348 = vpop.f32.mrf.mxu0
  %2349 = vmatprep.mubr.bf16.mxu0 0
  %2350 = vmatmul.mubr.bf16.gmra.mxu0 %v1309
  %v2351 = vpop.f32.mrf.mxu0
  %v2352 = vadd.f32 0.0, %v2351
  %v2353 = vpop.f32.mrf.mxu0
  %v2354 = vpop.f32.mrf.mxu0
  %v2355 = vadd.f32 0.0, %v2354
  %v2356 = vpop.f32.mrf.mxu0
  %2357 = vmatprep.mubr.bf16.mxu0 0
  %2358 = vmatmul.mubr.bf16.gmra.mxu0 %v1312
  %v2359 = vpop.f32.mrf.mxu0
  %v2360 = vadd.f32 0.0, %v2359
  %v2361 = vpop.f32.mrf.mxu0
  %v2362 = vpop.f32.mrf.mxu0
  %v2363 = vadd.f32 0.0, %v2362
  %v2364 = vpop.f32.mrf.mxu0
  %2365 = vmatprep.mubr.bf16.mxu0 0
  %2366 = vmatmul.mubr.bf16.gmra.mxu0 %v1315
  %v2367 = vpop.f32.mrf.mxu0
  %v2368 = vadd.f32 0.0, %v2367
  %v2369 = vpop.f32.mrf.mxu0
  %v2370 = vpop.f32.mrf.mxu0
  %v2371 = vadd.f32 0.0, %v2370
  %v2372 = vpop.f32.mrf.mxu0
  %2373 = vdwg.mxu0
  %v2374 = vmul.f32 %v1352, 0.2
  %v2375 = vmul.f32 %v1355, 0.2
  %v2376 = vmul.f32 %v1360, 0.2
  %v2377 = vmul.f32 %v1363, 0.2
  %v2378 = vmul.f32 %v1368, 0.2
  %v2379 = vmul.f32 %v1371, 0.2
  %v2380 = vmul.f32 %v1376, 0.2
  %v2381 = vmul.f32 %v1379, 0.2
  %v2382 = vmul.f32 %v1384, 0.2
  %v2383 = vmul.f32 %v1387, 0.2
  %v2384 = vmul.f32 %v1392, 0.2
  %v2385 = vmul.f32 %v1395, 0.2
  %v2386 = vmul.f32 %v1400, 0.2
  %v2387 = vmul.f32 %v1403, 0.2
  %v2388 = vmul.f32 %v1408, 0.2
  %v2389 = vmul.f32 %v1411, 0.2
  %v2390 = vmul.f32 %v1416, 0.2
  %v2391 = vmul.f32 %v1419, 0.2
  %v2392 = vmul.f32 %v1424, 0.2
  %v2393 = vmul.f32 %v1427, 0.2
  %v2394 = vmul.f32 %v1432, 0.2
  %v2395 = vmul.f32 %v1435, 0.2
  %v2396 = vmul.f32 %v1440, 0.2
  %v2397 = vmul.f32 %v1443, 0.2
  %v2398 = vmul.f32 %v1448, 0.2
  %v2399 = vmul.f32 %v1451, 0.2
  %v2400 = vmul.f32 %v1456, 0.2
  %v2401 = vmul.f32 %v1459, 0.2
  %v2402 = vmul.f32 %v1464, 0.2
  %v2403 = vmul.f32 %v1467, 0.2
  %v2404 = vmul.f32 %v1472, 0.2
  %v2405 = vmul.f32 %v1475, 0.2
  %v2406 = vmul.f32 %v1480, 0.2
  %v2407 = vmul.f32 %v1483, 0.2
  %v2408 = vmul.f32 %v1488, 0.2
  %v2409 = vmul.f32 %v1491, 0.2
  %v2410 = vmul.f32 %v1496, 0.2
  %v2411 = vmul.f32 %v1499, 0.2
  %v2412 = vmul.f32 %v1504, 0.2
  %v2413 = vmul.f32 %v1507, 0.2
  %v2414 = vmul.f32 %v1512, 0.2
  %v2415 = vmul.f32 %v1515, 0.2
  %v2416 = vmul.f32 %v1520, 0.2
  %v2417 = vmul.f32 %v1523, 0.2
  %v2418 = vmul.f32 %v1528, 0.2
  %v2419 = vmul.f32 %v1531, 0.2
  %v2420 = vmul.f32 %v1536, 0.2
  %v2421 = vmul.f32 %v1539, 0.2
  %v2422 = vmul.f32 %v1544, 0.2
  %v2423 = vmul.f32 %v1547, 0.2
  %v2424 = vmul.f32 %v1552, 0.2
  %v2425 = vmul.f32 %v1555, 0.2
  %v2426 = vmul.f32 %v1560, 0.2
  %v2427 = vmul.f32 %v1563, 0.2
  %v2428 = vmul.f32 %v1568, 0.2
  %v2429 = vmul.f32 %v1571, 0.2
  %v2430 = vmul.f32 %v1576, 0.2
  %v2431 = vmul.f32 %v1579, 0.2
  %v2432 = vmul.f32 %v1584, 0.2
  %v2433 = vmul.f32 %v1587, 0.2
  %v2434 = vmul.f32 %v1592, 0.2
  %v2435 = vmul.f32 %v1595, 0.2
  %v2436 = vmul.f32 %v1600, 0.2
  %v2437 = vmul.f32 %v1603, 0.2
  %v2438 = vmul.f32 %v1608, 0.2
  %v2439 = vmul.f32 %v1611, 0.2
  %v2440 = vmul.f32 %v1616, 0.2
  %v2441 = vmul.f32 %v1619, 0.2
  %v2442 = vmul.f32 %v1624, 0.2
  %v2443 = vmul.f32 %v1627, 0.2
  %v2444 = vmul.f32 %v1632, 0.2
  %v2445 = vmul.f32 %v1635, 0.2
  %v2446 = vmul.f32 %v1640, 0.2
  %v2447 = vmul.f32 %v1643, 0.2
  %v2448 = vmul.f32 %v1648, 0.2
  %v2449 = vmul.f32 %v1651, 0.2
  %v2450 = vmul.f32 %v1656, 0.2
  %v2451 = vmul.f32 %v1659, 0.2
  %v2452 = vmul.f32 %v1664, 0.2
  %v2453 = vmul.f32 %v1667, 0.2
  %v2454 = vmul.f32 %v1672, 0.2
  %v2455 = vmul.f32 %v1675, 0.2
  %v2456 = vmul.f32 %v1680, 0.2
  %v2457 = vmul.f32 %v1683, 0.2
  %v2458 = vmul.f32 %v1688, 0.2
  %v2459 = vmul.f32 %v1691, 0.2
  %v2460 = vmul.f32 %v1696, 0.2
  %v2461 = vmul.f32 %v1699, 0.2
  %v2462 = vmul.f32 %v1704, 0.2
  %v2463 = vmul.f32 %v1707, 0.2
  %v2464 = vmul.f32 %v1712, 0.2
  %v2465 = vmul.f32 %v1715, 0.2
  %v2466 = vmul.f32 %v1720, 0.2
  %v2467 = vmul.f32 %v1723, 0.2
  %v2468 = vmul.f32 %v1728, 0.2
  %v2469 = vmul.f32 %v1731, 0.2
  %v2470 = vmul.f32 %v1736, 0.2
  %v2471 = vmul.f32 %v1739, 0.2
  %v2472 = vmul.f32 %v1744, 0.2
  %v2473 = vmul.f32 %v1747, 0.2
  %v2474 = vmul.f32 %v1752, 0.2
  %v2475 = vmul.f32 %v1755, 0.2
  %v2476 = vmul.f32 %v1760, 0.2
  %v2477 = vmul.f32 %v1763, 0.2
  %v2478 = vmul.f32 %v1768, 0.2
  %v2479 = vmul.f32 %v1771, 0.2
  %v2480 = vmul.f32 %v1776, 0.2
  %v2481 = vmul.f32 %v1779, 0.2
  %v2482 = vmul.f32 %v1784, 0.2
  %v2483 = vmul.f32 %v1787, 0.2
  %v2484 = vmul.f32 %v1792, 0.2
  %v2485 = vmul.f32 %v1795, 0.2
  %v2486 = vmul.f32 %v1800, 0.2
  %v2487 = vmul.f32 %v1803, 0.2
  %v2488 = vmul.f32 %v1808, 0.2
  %v2489 = vmul.f32 %v1811, 0.2
  %v2490 = vmul.f32 %v1816, 0.2
  %v2491 = vmul.f32 %v1819, 0.2
  %v2492 = vmul.f32 %v1824, 0.2
  %v2493 = vmul.f32 %v1827, 0.2
  %v2494 = vmul.f32 %v1832, 0.2
  %v2495 = vmul.f32 %v1835, 0.2
  %v2496 = vmul.f32 %v1840, 0.2
  %v2497 = vmul.f32 %v1843, 0.2
  %v2498 = vmul.f32 %v1848, 0.2
  %v2499 = vmul.f32 %v1851, 0.2
  %v2500 = vmul.f32 %v1856, 0.2
  %v2501 = vmul.f32 %v1859, 0.2
  %v2502 = vmul.f32 %v1864, 0.2
  %v2503 = vmul.f32 %v1867, 0.2
  %v2504 = vmul.f32 %v1872, 0.2
  %v2505 = vmul.f32 %v1875, 0.2
  %v2506 = vmul.f32 %v1880, 0.2
  %v2507 = vmul.f32 %v1883, 0.2
  %v2508 = vmul.f32 %v1888, 0.2
  %v2509 = vmul.f32 %v1891, 0.2
  %v2510 = vmul.f32 %v1896, 0.2
  %v2511 = vmul.f32 %v1899, 0.2
  %v2512 = vmul.f32 %v1904, 0.2
  %v2513 = vmul.f32 %v1907, 0.2
  %v2514 = vmul.f32 %v1912, 0.2
  %v2515 = vmul.f32 %v1915, 0.2
  %v2516 = vmul.f32 %v1920, 0.2
  %v2517 = vmul.f32 %v1923, 0.2
  %v2518 = vmul.f32 %v1928, 0.2
  %v2519 = vmul.f32 %v1931, 0.2
  %v2520 = vmul.f32 %v1936, 0.2
  %v2521 = vmul.f32 %v1939, 0.2
  %v2522 = vmul.f32 %v1944, 0.2
  %v2523 = vmul.f32 %v1947, 0.2
  %v2524 = vmul.f32 %v1952, 0.2
  %v2525 = vmul.f32 %v1955, 0.2
  %v2526 = vmul.f32 %v1960, 0.2
  %v2527 = vmul.f32 %v1963, 0.2
  %v2528 = vmul.f32 %v1968, 0.2
  %v2529 = vmul.f32 %v1971, 0.2
  %v2530 = vmul.f32 %v1976, 0.2
  %v2531 = vmul.f32 %v1979, 0.2
  %v2532 = vmul.f32 %v1984, 0.2
  %v2533 = vmul.f32 %v1987, 0.2
  %v2534 = vmul.f32 %v1992, 0.2
  %v2535 = vmul.f32 %v1995, 0.2
  %v2536 = vmul.f32 %v2000, 0.2
  %v2537 = vmul.f32 %v2003, 0.2
  %v2538 = vmul.f32 %v2008, 0.2
  %v2539 = vmul.f32 %v2011, 0.2
  %v2540 = vmul.f32 %v2016, 0.2
  %v2541 = vmul.f32 %v2019, 0.2
  %v2542 = vmul.f32 %v2024, 0.2
  %v2543 = vmul.f32 %v2027, 0.2
  %v2544 = vmul.f32 %v2032, 0.2
  %v2545 = vmul.f32 %v2035, 0.2
  %v2546 = vmul.f32 %v2040, 0.2
  %v2547 = vmul.f32 %v2043, 0.2
  %v2548 = vmul.f32 %v2048, 0.2
  %v2549 = vmul.f32 %v2051, 0.2
  %v2550 = vmul.f32 %v2056, 0.2
  %v2551 = vmul.f32 %v2059, 0.2
  %v2552 = vmul.f32 %v2064, 0.2
  %v2553 = vmul.f32 %v2067, 0.2
  %v2554 = vmul.f32 %v2072, 0.2
  %v2555 = vmul.f32 %v2075, 0.2
  %v2556 = vmul.f32 %v2080, 0.2
  %v2557 = vmul.f32 %v2083, 0.2
  %v2558 = vmul.f32 %v2088, 0.2
  %v2559 = vmul.f32 %v2091, 0.2
  %v2560 = vmul.f32 %v2096, 0.2
  %v2561 = vmul.f32 %v2099, 0.2
  %v2562 = vmul.f32 %v2104, 0.2
  %v2563 = vmul.f32 %v2107, 0.2
  %v2564 = vmul.f32 %v2112, 0.2
  %v2565 = vmul.f32 %v2115, 0.2
  %v2566 = vmul.f32 %v2120, 0.2
  %v2567 = vmul.f32 %v2123, 0.2
  %v2568 = vmul.f32 %v2128, 0.2
  %v2569 = vmul.f32 %v2131, 0.2
  %v2570 = vmul.f32 %v2136, 0.2
  %v2571 = vmul.f32 %v2139, 0.2
  %v2572 = vmul.f32 %v2144, 0.2
  %v2573 = vmul.f32 %v2147, 0.2
  %v2574 = vmul.f32 %v2152, 0.2
  %v2575 = vmul.f32 %v2155, 0.2
  %v2576 = vmul.f32 %v2160, 0.2
  %v2577 = vmul.f32 %v2163, 0.2
  %v2578 = vmul.f32 %v2168, 0.2
  %v2579 = vmul.f32 %v2171, 0.2
  %v2580 = vmul.f32 %v2176, 0.2
  %v2581 = vmul.f32 %v2179, 0.2
  %v2582 = vmul.f32 %v2184, 0.2
  %v2583 = vmul.f32 %v2187, 0.2
  %v2584 = vmul.f32 %v2192, 0.2
  %v2585 = vmul.f32 %v2195, 0.2
  %v2586 = vmul.f32 %v2200, 0.2
  %v2587 = vmul.f32 %v2203, 0.2
  %v2588 = vmul.f32 %v2208, 0.2
  %v2589 = vmul.f32 %v2211, 0.2
  %v2590 = vmul.f32 %v2216, 0.2
  %v2591 = vmul.f32 %v2219, 0.2
  %v2592 = vmul.f32 %v2224, 0.2
  %v2593 = vmul.f32 %v2227, 0.2
  %v2594 = vmul.f32 %v2232, 0.2
  %v2595 = vmul.f32 %v2235, 0.2
  %v2596 = vmul.f32 %v2240, 0.2
  %v2597 = vmul.f32 %v2243, 0.2
  %v2598 = vmul.f32 %v2248, 0.2
  %v2599 = vmul.f32 %v2251, 0.2
  %v2600 = vmul.f32 %v2256, 0.2
  %v2601 = vmul.f32 %v2259, 0.2
  %v2602 = vmul.f32 %v2264, 0.2
  %v2603 = vmul.f32 %v2267, 0.2
  %v2604 = vmul.f32 %v2272, 0.2
  %v2605 = vmul.f32 %v2275, 0.2
  %v2606 = vmul.f32 %v2280, 0.2
  %v2607 = vmul.f32 %v2283, 0.2
  %v2608 = vmul.f32 %v2288, 0.2
  %v2609 = vmul.f32 %v2291, 0.2
  %v2610 = vmul.f32 %v2296, 0.2
  %v2611 = vmul.f32 %v2299, 0.2
  %v2612 = vmul.f32 %v2304, 0.2
  %v2613 = vmul.f32 %v2307, 0.2
  %v2614 = vmul.f32 %v2312, 0.2
  %v2615 = vmul.f32 %v2315, 0.2
  %v2616 = vmul.f32 %v2320, 0.2
  %v2617 = vmul.f32 %v2323, 0.2
  %v2618 = vmul.f32 %v2328, 0.2
  %v2619 = vmul.f32 %v2331, 0.2
  %v2620 = vmul.f32 %v2336, 0.2
  %v2621 = vmul.f32 %v2339, 0.2
  %v2622 = vmul.f32 %v2344, 0.2
  %v2623 = vmul.f32 %v2347, 0.2
  %v2624 = vmul.f32 %v2352, 0.2
  %v2625 = vmul.f32 %v2355, 0.2
  %v2626 = vmul.f32 %v2360, 0.2
  %v2627 = vmul.f32 %v2363, 0.2
  %v2628 = vmul.f32 %v2368, 0.2
  %v2629 = vmul.f32 %v2371, 0.2
  %v2630 = vmax.f32 %v1352, %v2374
  %v2631 = vmax.f32 %v1355, %v2375
  %v2632 = vmax.f32 %v1360, %v2376
  %v2633 = vmax.f32 %v1363, %v2377
  %v2634 = vmax.f32 %v1368, %v2378
  %v2635 = vmax.f32 %v1371, %v2379
  %v2636 = vmax.f32 %v1376, %v2380
  %v2637 = vmax.f32 %v1379, %v2381
  %v2638 = vmax.f32 %v1384, %v2382
  %v2639 = vmax.f32 %v1387, %v2383
  %v2640 = vmax.f32 %v1392, %v2384
  %v2641 = vmax.f32 %v1395, %v2385
  %v2642 = vmax.f32 %v1400, %v2386
  %v2643 = vmax.f32 %v1403, %v2387
  %v2644 = vmax.f32 %v1408, %v2388
  %v2645 = vmax.f32 %v1411, %v2389
  %v2646 = vmax.f32 %v1416, %v2390
  %v2647 = vmax.f32 %v1419, %v2391
  %v2648 = vmax.f32 %v1424, %v2392
  %v2649 = vmax.f32 %v1427, %v2393
  %v2650 = vmax.f32 %v1432, %v2394
  %v2651 = vmax.f32 %v1435, %v2395
  %v2652 = vmax.f32 %v1440, %v2396
  %v2653 = vmax.f32 %v1443, %v2397
  %v2654 = vmax.f32 %v1448, %v2398
  %v2655 = vmax.f32 %v1451, %v2399
  %v2656 = vmax.f32 %v1456, %v2400
  %v2657 = vmax.f32 %v1459, %v2401
  %v2658 = vmax.f32 %v1464, %v2402
  %v2659 = vmax.f32 %v1467, %v2403
  %v2660 = vmax.f32 %v1472, %v2404
  %v2661 = vmax.f32 %v1475, %v2405
  %v2662 = vmax.f32 %v1480, %v2406
  %v2663 = vmax.f32 %v1483, %v2407
  %v2664 = vmax.f32 %v1488, %v2408
  %v2665 = vmax.f32 %v1491, %v2409
  %v2666 = vmax.f32 %v1496, %v2410
  %v2667 = vmax.f32 %v1499, %v2411
  %v2668 = vmax.f32 %v1504, %v2412
  %v2669 = vmax.f32 %v1507, %v2413
  %v2670 = vmax.f32 %v1512, %v2414
  %v2671 = vmax.f32 %v1515, %v2415
  %v2672 = vmax.f32 %v1520, %v2416
  %v2673 = vmax.f32 %v1523, %v2417
  %v2674 = vmax.f32 %v1528, %v2418
  %v2675 = vmax.f32 %v1531, %v2419
  %v2676 = vmax.f32 %v1536, %v2420
  %v2677 = vmax.f32 %v1539, %v2421
  %v2678 = vmax.f32 %v1544, %v2422
  %v2679 = vmax.f32 %v1547, %v2423
  %v2680 = vmax.f32 %v1552, %v2424
  %v2681 = vmax.f32 %v1555, %v2425
  %v2682 = vmax.f32 %v1560, %v2426
  %v2683 = vmax.f32 %v1563, %v2427
  %v2684 = vmax.f32 %v1568, %v2428
  %v2685 = vmax.f32 %v1571, %v2429
  %v2686 = vmax.f32 %v1576, %v2430
  %v2687 = vmax.f32 %v1579, %v2431
  %v2688 = vmax.f32 %v1584, %v2432
  %v2689 = vmax.f32 %v1587, %v2433
  %v2690 = vmax.f32 %v1592, %v2434
  %v2691 = vmax.f32 %v1595, %v2435
  %v2692 = vmax.f32 %v1600, %v2436
  %v2693 = vmax.f32 %v1603, %v2437
  %v2694 = vmax.f32 %v1608, %v2438
  %v2695 = vmax.f32 %v1611, %v2439
  %v2696 = vmax.f32 %v1616, %v2440
  %v2697 = vmax.f32 %v1619, %v2441
  %v2698 = vmax.f32 %v1624, %v2442
  %v2699 = vmax.f32 %v1627, %v2443
  %v2700 = vmax.f32 %v1632, %v2444
  %v2701 = vmax.f32 %v1635, %v2445
  %v2702 = vmax.f32 %v1640, %v2446
  %v2703 = vmax.f32 %v1643, %v2447
  %v2704 = vmax.f32 %v1648, %v2448
  %v2705 = vmax.f32 %v1651, %v2449
  %v2706 = vmax.f32 %v1656, %v2450
  %v2707 = vmax.f32 %v1659, %v2451
  %v2708 = vmax.f32 %v1664, %v2452
  %v2709 = vmax.f32 %v1667, %v2453
  %v2710 = vmax.f32 %v1672, %v2454
  %v2711 = vmax.f32 %v1675, %v2455
  %v2712 = vmax.f32 %v1680, %v2456
  %v2713 = vmax.f32 %v1683, %v2457
  %v2714 = vmax.f32 %v1688, %v2458
  %v2715 = vmax.f32 %v1691, %v2459
  %v2716 = vmax.f32 %v1696, %v2460
  %v2717 = vmax.f32 %v1699, %v2461
  %v2718 = vmax.f32 %v1704, %v2462
  %v2719 = vmax.f32 %v1707, %v2463
  %v2720 = vmax.f32 %v1712, %v2464
  %v2721 = vmax.f32 %v1715, %v2465
  %v2722 = vmax.f32 %v1720, %v2466
  %v2723 = vmax.f32 %v1723, %v2467
  %v2724 = vmax.f32 %v1728, %v2468
  %v2725 = vmax.f32 %v1731, %v2469
  %v2726 = vmax.f32 %v1736, %v2470
  %v2727 = vmax.f32 %v1739, %v2471
  %v2728 = vmax.f32 %v1744, %v2472
  %v2729 = vmax.f32 %v1747, %v2473
  %v2730 = vmax.f32 %v1752, %v2474
  %v2731 = vmax.f32 %v1755, %v2475
  %v2732 = vmax.f32 %v1760, %v2476
  %v2733 = vmax.f32 %v1763, %v2477
  %v2734 = vmax.f32 %v1768, %v2478
  %v2735 = vmax.f32 %v1771, %v2479
  %v2736 = vmax.f32 %v1776, %v2480
  %v2737 = vmax.f32 %v1779, %v2481
  %v2738 = vmax.f32 %v1784, %v2482
  %v2739 = vmax.f32 %v1787, %v2483
  %v2740 = vmax.f32 %v1792, %v2484
  %v2741 = vmax.f32 %v1795, %v2485
  %v2742 = vmax.f32 %v1800, %v2486
  %v2743 = vmax.f32 %v1803, %v2487
  %v2744 = vmax.f32 %v1808, %v2488
  %v2745 = vmax.f32 %v1811, %v2489
  %v2746 = vmax.f32 %v1816, %v2490
  %v2747 = vmax.f32 %v1819, %v2491
  %v2748 = vmax.f32 %v1824, %v2492
  %v2749 = vmax.f32 %v1827, %v2493
  %v2750 = vmax.f32 %v1832, %v2494
  %v2751 = vmax.f32 %v1835, %v2495
  %v2752 = vmax.f32 %v1840, %v2496
  %v2753 = vmax.f32 %v1843, %v2497
  %v2754 = vmax.f32 %v1848, %v2498
  %v2755 = vmax.f32 %v1851, %v2499
  %v2756 = vmax.f32 %v1856, %v2500
  %v2757 = vmax.f32 %v1859, %v2501
  %v2758 = vmax.f32 %v1864, %v2502
  %v2759 = vmax.f32 %v1867, %v2503
  %v2760 = vmax.f32 %v1872, %v2504
  %v2761 = vmax.f32 %v1875, %v2505
  %v2762 = vmax.f32 %v1880, %v2506
  %v2763 = vmax.f32 %v1883, %v2507
  %v2764 = vmax.f32 %v1888, %v2508
  %v2765 = vmax.f32 %v1891, %v2509
  %v2766 = vmax.f32 %v1896, %v2510
  %v2767 = vmax.f32 %v1899, %v2511
  %v2768 = vmax.f32 %v1904, %v2512
  %v2769 = vmax.f32 %v1907, %v2513
  %v2770 = vmax.f32 %v1912, %v2514
  %v2771 = vmax.f32 %v1915, %v2515
  %v2772 = vmax.f32 %v1920, %v2516
  %v2773 = vmax.f32 %v1923, %v2517
  %v2774 = vmax.f32 %v1928, %v2518
  %v2775 = vmax.f32 %v1931, %v2519
  %v2776 = vmax.f32 %v1936, %v2520
  %v2777 = vmax.f32 %v1939, %v2521
  %v2778 = vmax.f32 %v1944, %v2522
  %v2779 = vmax.f32 %v1947, %v2523
  %v2780 = vmax.f32 %v1952, %v2524
  %v2781 = vmax.f32 %v1955, %v2525
  %v2782 = vmax.f32 %v1960, %v2526
  %v2783 = vmax.f32 %v1963, %v2527
  %v2784 = vmax.f32 %v1968, %v2528
  %v2785 = vmax.f32 %v1971, %v2529
  %v2786 = vmax.f32 %v1976, %v2530
  %v2787 = vmax.f32 %v1979, %v2531
  %v2788 = vmax.f32 %v1984, %v2532
  %v2789 = vmax.f32 %v1987, %v2533
  %v2790 = vmax.f32 %v1992, %v2534
  %v2791 = vmax.f32 %v1995, %v2535
  %v2792 = vmax.f32 %v2000, %v2536
  %v2793 = vmax.f32 %v2003, %v2537
  %v2794 = vmax.f32 %v2008, %v2538
  %v2795 = vmax.f32 %v2011, %v2539
  %v2796 = vmax.f32 %v2016, %v2540
  %v2797 = vmax.f32 %v2019, %v2541
  %v2798 = vmax.f32 %v2024, %v2542
  %v2799 = vmax.f32 %v2027, %v2543
  %v2800 = vmax.f32 %v2032, %v2544
  %v2801 = vmax.f32 %v2035, %v2545
  %v2802 = vmax.f32 %v2040, %v2546
  %v2803 = vmax.f32 %v2043, %v2547
  %v2804 = vmax.f32 %v2048, %v2548
  %v2805 = vmax.f32 %v2051, %v2549
  %v2806 = vmax.f32 %v2056, %v2550
  %v2807 = vmax.f32 %v2059, %v2551
  %v2808 = vmax.f32 %v2064, %v2552
  %v2809 = vmax.f32 %v2067, %v2553
  %v2810 = vmax.f32 %v2072, %v2554
  %v2811 = vmax.f32 %v2075, %v2555
  %v2812 = vmax.f32 %v2080, %v2556
  %v2813 = vmax.f32 %v2083, %v2557
  %v2814 = vmax.f32 %v2088, %v2558
  %v2815 = vmax.f32 %v2091, %v2559
  %v2816 = vmax.f32 %v2096, %v2560
  %v2817 = vmax.f32 %v2099, %v2561
  %v2818 = vmax.f32 %v2104, %v2562
  %v2819 = vmax.f32 %v2107, %v2563
  %v2820 = vmax.f32 %v2112, %v2564
  %v2821 = vmax.f32 %v2115, %v2565
  %v2822 = vmax.f32 %v2120, %v2566
  %v2823 = vmax.f32 %v2123, %v2567
  %v2824 = vmax.f32 %v2128, %v2568
  %v2825 = vmax.f32 %v2131, %v2569
  %v2826 = vmax.f32 %v2136, %v2570
  %v2827 = vmax.f32 %v2139, %v2571
  %v2828 = vmax.f32 %v2144, %v2572
  %v2829 = vmax.f32 %v2147, %v2573
  %v2830 = vmax.f32 %v2152, %v2574
  %v2831 = vmax.f32 %v2155, %v2575
  %v2832 = vmax.f32 %v2160, %v2576
  %v2833 = vmax.f32 %v2163, %v2577
  %v2834 = vmax.f32 %v2168, %v2578
  %v2835 = vmax.f32 %v2171, %v2579
  %v2836 = vmax.f32 %v2176, %v2580
  %v2837 = vmax.f32 %v2179, %v2581
  %v2838 = vmax.f32 %v2184, %v2582
  %v2839 = vmax.f32 %v2187, %v2583
  %v2840 = vmax.f32 %v2192, %v2584
  %v2841 = vmax.f32 %v2195, %v2585
  %v2842 = vmax.f32 %v2200, %v2586
  %v2843 = vmax.f32 %v2203, %v2587
  %v2844 = vmax.f32 %v2208, %v2588
  %v2845 = vmax.f32 %v2211, %v2589
  %v2846 = vmax.f32 %v2216, %v2590
  %v2847 = vmax.f32 %v2219, %v2591
  %v2848 = vmax.f32 %v2224, %v2592
  %v2849 = vmax.f32 %v2227, %v2593
  %v2850 = vmax.f32 %v2232, %v2594
  %v2851 = vmax.f32 %v2235, %v2595
  %v2852 = vmax.f32 %v2240, %v2596
  %v2853 = vmax.f32 %v2243, %v2597
  %v2854 = vmax.f32 %v2248, %v2598
  %v2855 = vmax.f32 %v2251, %v2599
  %v2856 = vmax.f32 %v2256, %v2600
  %v2857 = vmax.f32 %v2259, %v2601
  %v2858 = vmax.f32 %v2264, %v2602
  %v2859 = vmax.f32 %v2267, %v2603
  %v2860 = vmax.f32 %v2272, %v2604
  %v2861 = vmax.f32 %v2275, %v2605
  %v2862 = vmax.f32 %v2280, %v2606
  %v2863 = vmax.f32 %v2283, %v2607
  %v2864 = vmax.f32 %v2288, %v2608
  %v2865 = vmax.f32 %v2291, %v2609
  %v2866 = vmax.f32 %v2296, %v2610
  %v2867 = vmax.f32 %v2299, %v2611
  %v2868 = vmax.f32 %v2304, %v2612
  %v2869 = vmax.f32 %v2307, %v2613
  %v2870 = vmax.f32 %v2312, %v2614
  %v2871 = vmax.f32 %v2315, %v2615
  %v2872 = vmax.f32 %v2320, %v2616
  %v2873 = vmax.f32 %v2323, %v2617
  %v2874 = vmax.f32 %v2328, %v2618
  %v2875 = vmax.f32 %v2331, %v2619
  %v2876 = vmax.f32 %v2336, %v2620
  %v2877 = vmax.f32 %v2339, %v2621
  %v2878 = vmax.f32 %v2344, %v2622
  %v2879 = vmax.f32 %v2347, %v2623
  %v2880 = vmax.f32 %v2352, %v2624
  %v2881 = vmax.f32 %v2355, %v2625
  %v2882 = vmax.f32 %v2360, %v2626
  %v2883 = vmax.f32 %v2363, %v2627
  %v2884 = vmax.f32 %v2368, %v2628
  %v2885 = vmax.f32 %v2371, %v2629
  %v2886 = vpack.c.bf16 %v2631, %v2630
  %v2887 = vpack.c.bf16 %v2633, %v2632
  %v2888 = vpack.c.bf16 %v2635, %v2634
  %v2889 = vpack.c.bf16 %v2637, %v2636
  %v2890 = vpack.c.bf16 %v2639, %v2638
  %v2891 = vpack.c.bf16 %v2641, %v2640
  %v2892 = vpack.c.bf16 %v2643, %v2642
  %v2893 = vpack.c.bf16 %v2645, %v2644
  %v2894 = vpack.c.bf16 %v2647, %v2646
  %v2895 = vpack.c.bf16 %v2649, %v2648
  %v2896 = vpack.c.bf16 %v2651, %v2650
  %v2897 = vpack.c.bf16 %v2653, %v2652
  %v2898 = vpack.c.bf16 %v2655, %v2654
  %v2899 = vpack.c.bf16 %v2657, %v2656
  %v2900 = vpack.c.bf16 %v2659, %v2658
  %v2901 = vpack.c.bf16 %v2661, %v2660
  %v2902 = vpack.c.bf16 %v2663, %v2662
  %v2903 = vpack.c.bf16 %v2665, %v2664
  %v2904 = vpack.c.bf16 %v2667, %v2666
  %v2905 = vpack.c.bf16 %v2669, %v2668
  %v2906 = vpack.c.bf16 %v2671, %v2670
  %v2907 = vpack.c.bf16 %v2673, %v2672
  %v2908 = vpack.c.bf16 %v2675, %v2674
  %v2909 = vpack.c.bf16 %v2677, %v2676
  %v2910 = vpack.c.bf16 %v2679, %v2678
  %v2911 = vpack.c.bf16 %v2681, %v2680
  %v2912 = vpack.c.bf16 %v2683, %v2682
  %v2913 = vpack.c.bf16 %v2685, %v2684
  %v2914 = vpack.c.bf16 %v2687, %v2686
  %v2915 = vpack.c.bf16 %v2689, %v2688
  %v2916 = vpack.c.bf16 %v2691, %v2690
  %v2917 = vpack.c.bf16 %v2693, %v2692
  %v2918 = vpack.c.bf16 %v2695, %v2694
  %v2919 = vpack.c.bf16 %v2697, %v2696
  %v2920 = vpack.c.bf16 %v2699, %v2698
  %v2921 = vpack.c.bf16 %v2701, %v2700
  %v2922 = vpack.c.bf16 %v2703, %v2702
  %v2923 = vpack.c.bf16 %v2705, %v2704
  %v2924 = vpack.c.bf16 %v2707, %v2706
  %v2925 = vpack.c.bf16 %v2709, %v2708
  %v2926 = vpack.c.bf16 %v2711, %v2710
  %v2927 = vpack.c.bf16 %v2713, %v2712
  %v2928 = vpack.c.bf16 %v2715, %v2714
  %v2929 = vpack.c.bf16 %v2717, %v2716
  %v2930 = vpack.c.bf16 %v2719, %v2718
  %v2931 = vpack.c.bf16 %v2721, %v2720
  %v2932 = vpack.c.bf16 %v2723, %v2722
  %v2933 = vpack.c.bf16 %v2725, %v2724
  %v2934 = vpack.c.bf16 %v2727, %v2726
  %v2935 = vpack.c.bf16 %v2729, %v2728
  %v2936 = vpack.c.bf16 %v2731, %v2730
  %v2937 = vpack.c.bf16 %v2733, %v2732
  %v2938 = vpack.c.bf16 %v2735, %v2734
  %v2939 = vpack.c.bf16 %v2737, %v2736
  %v2940 = vpack.c.bf16 %v2739, %v2738
  %v2941 = vpack.c.bf16 %v2741, %v2740
  %v2942 = vpack.c.bf16 %v2743, %v2742
  %v2943 = vpack.c.bf16 %v2745, %v2744
  %v2944 = vpack.c.bf16 %v2747, %v2746
  %v2945 = vpack.c.bf16 %v2749, %v2748
  %v2946 = vpack.c.bf16 %v2751, %v2750
  %v2947 = vpack.c.bf16 %v2753, %v2752
  %v2948 = vpack.c.bf16 %v2755, %v2754
  %v2949 = vpack.c.bf16 %v2757, %v2756
  %v2950 = vpack.c.bf16 %v2759, %v2758
  %v2951 = vpack.c.bf16 %v2761, %v2760
  %v2952 = vpack.c.bf16 %v2763, %v2762
  %v2953 = vpack.c.bf16 %v2765, %v2764
  %v2954 = vpack.c.bf16 %v2767, %v2766
  %v2955 = vpack.c.bf16 %v2769, %v2768
  %v2956 = vpack.c.bf16 %v2771, %v2770
  %v2957 = vpack.c.bf16 %v2773, %v2772
  %v2958 = vpack.c.bf16 %v2775, %v2774
  %v2959 = vpack.c.bf16 %v2777, %v2776
  %v2960 = vpack.c.bf16 %v2779, %v2778
  %v2961 = vpack.c.bf16 %v2781, %v2780
  %v2962 = vpack.c.bf16 %v2783, %v2782
  %v2963 = vpack.c.bf16 %v2785, %v2784
  %v2964 = vpack.c.bf16 %v2787, %v2786
  %v2965 = vpack.c.bf16 %v2789, %v2788
  %v2966 = vpack.c.bf16 %v2791, %v2790
  %v2967 = vpack.c.bf16 %v2793, %v2792
  %v2968 = vpack.c.bf16 %v2795, %v2794
  %v2969 = vpack.c.bf16 %v2797, %v2796
  %v2970 = vpack.c.bf16 %v2799, %v2798
  %v2971 = vpack.c.bf16 %v2801, %v2800
  %v2972 = vpack.c.bf16 %v2803, %v2802
  %v2973 = vpack.c.bf16 %v2805, %v2804
  %v2974 = vpack.c.bf16 %v2807, %v2806
  %v2975 = vpack.c.bf16 %v2809, %v2808
  %v2976 = vpack.c.bf16 %v2811, %v2810
  %v2977 = vpack.c.bf16 %v2813, %v2812
  %v2978 = vpack.c.bf16 %v2815, %v2814
  %v2979 = vpack.c.bf16 %v2817, %v2816
  %v2980 = vpack.c.bf16 %v2819, %v2818
  %v2981 = vpack.c.bf16 %v2821, %v2820
  %v2982 = vpack.c.bf16 %v2823, %v2822
  %v2983 = vpack.c.bf16 %v2825, %v2824
  %v2984 = vpack.c.bf16 %v2827, %v2826
  %v2985 = vpack.c.bf16 %v2829, %v2828
  %v2986 = vpack.c.bf16 %v2831, %v2830
  %v2987 = vpack.c.bf16 %v2833, %v2832
  %v2988 = vpack.c.bf16 %v2835, %v2834
  %v2989 = vpack.c.bf16 %v2837, %v2836
  %v2990 = vpack.c.bf16 %v2839, %v2838
  %v2991 = vpack.c.bf16 %v2841, %v2840
  %v2992 = vpack.c.bf16 %v2843, %v2842
  %v2993 = vpack.c.bf16 %v2845, %v2844
  %v2994 = vpack.c.bf16 %v2847, %v2846
  %v2995 = vpack.c.bf16 %v2849, %v2848
  %v2996 = vpack.c.bf16 %v2851, %v2850
  %v2997 = vpack.c.bf16 %v2853, %v2852
  %v2998 = vpack.c.bf16 %v2855, %v2854
  %v2999 = vpack.c.bf16 %v2857, %v2856
  %v3000 = vpack.c.bf16 %v2859, %v2858
  %v3001 = vpack.c.bf16 %v2861, %v2860
  %v3002 = vpack.c.bf16 %v2863, %v2862
  %v3003 = vpack.c.bf16 %v2865, %v2864
  %v3004 = vpack.c.bf16 %v2867, %v2866
  %v3005 = vpack.c.bf16 %v2869, %v2868
  %v3006 = vpack.c.bf16 %v2871, %v2870
  %v3007 = vpack.c.bf16 %v2873, %v2872
  %v3008 = vpack.c.bf16 %v2875, %v2874
  %v3009 = vpack.c.bf16 %v2877, %v2876
  %v3010 = vpack.c.bf16 %v2879, %v2878
  %v3011 = vpack.c.bf16 %v2881, %v2880
  %v3012 = vpack.c.bf16 %v2883, %v2882
  %v3013 = vpack.c.bf16 %v2885, %v2884
  %v3142 = vunpack.c.l.b16 %v2886
  %v3143 = vunpack.c.h.b16 %v2886
  %v3144 = vunpack.c.l.b16 %v2887
  %v3145 = vunpack.c.h.b16 %v2887
  %v3146 = vunpack.c.l.b16 %v2888
  %v3147 = vunpack.c.h.b16 %v2888
  %v3148 = vunpack.c.l.b16 %v2889
  %v3149 = vunpack.c.h.b16 %v2889
  %v3150 = vunpack.c.l.b16 %v2890
  %v3151 = vunpack.c.h.b16 %v2890
  %v3152 = vunpack.c.l.b16 %v2891
  %v3153 = vunpack.c.h.b16 %v2891
  %v3154 = vunpack.c.l.b16 %v2892
  %v3155 = vunpack.c.h.b16 %v2892
  %v3156 = vunpack.c.l.b16 %v2893
  %v3157 = vunpack.c.h.b16 %v2893
  %v3158 = vunpack.c.l.b16 %v2894
  %v3159 = vunpack.c.h.b16 %v2894
  %v3160 = vunpack.c.l.b16 %v2895
  %v3161 = vunpack.c.h.b16 %v2895
  %v3162 = vunpack.c.l.b16 %v2896
  %v3163 = vunpack.c.h.b16 %v2896
  %v3164 = vunpack.c.l.b16 %v2897
  %v3165 = vunpack.c.h.b16 %v2897
  %v3166 = vunpack.c.l.b16 %v2898
  %v3167 = vunpack.c.h.b16 %v2898
  %v3168 = vunpack.c.l.b16 %v2899
  %v3169 = vunpack.c.h.b16 %v2899
  %v3170 = vunpack.c.l.b16 %v2900
  %v3171 = vunpack.c.h.b16 %v2900
  %v3172 = vunpack.c.l.b16 %v2901
  %v3173 = vunpack.c.h.b16 %v2901
  %v3174 = vunpack.c.l.b16 %v2902
  %v3175 = vunpack.c.h.b16 %v2902
  %v3176 = vunpack.c.l.b16 %v2903
  %v3177 = vunpack.c.h.b16 %v2903
  %v3178 = vunpack.c.l.b16 %v2904
  %v3179 = vunpack.c.h.b16 %v2904
  %v3180 = vunpack.c.l.b16 %v2905
  %v3181 = vunpack.c.h.b16 %v2905
  %v3182 = vunpack.c.l.b16 %v2906
  %v3183 = vunpack.c.h.b16 %v2906
  %v3184 = vunpack.c.l.b16 %v2907
  %v3185 = vunpack.c.h.b16 %v2907
  %v3186 = vunpack.c.l.b16 %v2908
  %v3187 = vunpack.c.h.b16 %v2908
  %v3188 = vunpack.c.l.b16 %v2909
  %v3189 = vunpack.c.h.b16 %v2909
  %v3190 = vunpack.c.l.b16 %v2910
  %v3191 = vunpack.c.h.b16 %v2910
  %v3192 = vunpack.c.l.b16 %v2911
  %v3193 = vunpack.c.h.b16 %v2911
  %v3194 = vunpack.c.l.b16 %v2912
  %v3195 = vunpack.c.h.b16 %v2912
  %v3196 = vunpack.c.l.b16 %v2913
  %v3197 = vunpack.c.h.b16 %v2913
  %v3198 = vunpack.c.l.b16 %v2914
  %v3199 = vunpack.c.h.b16 %v2914
  %v3200 = vunpack.c.l.b16 %v2915
  %v3201 = vunpack.c.h.b16 %v2915
  %v3202 = vunpack.c.l.b16 %v2916
  %v3203 = vunpack.c.h.b16 %v2916
  %v3204 = vunpack.c.l.b16 %v2917
  %v3205 = vunpack.c.h.b16 %v2917
  %v3206 = vunpack.c.l.b16 %v2918
  %v3207 = vunpack.c.h.b16 %v2918
  %v3208 = vunpack.c.l.b16 %v2919
  %v3209 = vunpack.c.h.b16 %v2919
  %v3210 = vunpack.c.l.b16 %v2920
  %v3211 = vunpack.c.h.b16 %v2920
  %v3212 = vunpack.c.l.b16 %v2921
  %v3213 = vunpack.c.h.b16 %v2921
  %v3214 = vunpack.c.l.b16 %v2922
  %v3215 = vunpack.c.h.b16 %v2922
  %v3216 = vunpack.c.l.b16 %v2923
  %v3217 = vunpack.c.h.b16 %v2923
  %v3218 = vunpack.c.l.b16 %v2924
  %v3219 = vunpack.c.h.b16 %v2924
  %v3220 = vunpack.c.l.b16 %v2925
  %v3221 = vunpack.c.h.b16 %v2925
  %v3222 = vunpack.c.l.b16 %v2926
  %v3223 = vunpack.c.h.b16 %v2926
  %v3224 = vunpack.c.l.b16 %v2927
  %v3225 = vunpack.c.h.b16 %v2927
  %v3226 = vunpack.c.l.b16 %v2928
  %v3227 = vunpack.c.h.b16 %v2928
  %v3228 = vunpack.c.l.b16 %v2929
  %v3229 = vunpack.c.h.b16 %v2929
  %v3230 = vunpack.c.l.b16 %v2930
  %v3231 = vunpack.c.h.b16 %v2930
  %v3232 = vunpack.c.l.b16 %v2931
  %v3233 = vunpack.c.h.b16 %v2931
  %v3234 = vunpack.c.l.b16 %v2932
  %v3235 = vunpack.c.h.b16 %v2932
  %v3236 = vunpack.c.l.b16 %v2933
  %v3237 = vunpack.c.h.b16 %v2933
  %v3238 = vunpack.c.l.b16 %v2934
  %v3239 = vunpack.c.h.b16 %v2934
  %v3240 = vunpack.c.l.b16 %v2935
  %v3241 = vunpack.c.h.b16 %v2935
  %v3242 = vunpack.c.l.b16 %v2936
  %v3243 = vunpack.c.h.b16 %v2936
  %v3244 = vunpack.c.l.b16 %v2937
  %v3245 = vunpack.c.h.b16 %v2937
  %v3246 = vunpack.c.l.b16 %v2938
  %v3247 = vunpack.c.h.b16 %v2938
  %v3248 = vunpack.c.l.b16 %v2939
  %v3249 = vunpack.c.h.b16 %v2939
  %v3250 = vunpack.c.l.b16 %v2940
  %v3251 = vunpack.c.h.b16 %v2940
  %v3252 = vunpack.c.l.b16 %v2941
  %v3253 = vunpack.c.h.b16 %v2941
  %v3254 = vunpack.c.l.b16 %v2942
  %v3255 = vunpack.c.h.b16 %v2942
  %v3256 = vunpack.c.l.b16 %v2943
  %v3257 = vunpack.c.h.b16 %v2943
  %v3258 = vunpack.c.l.b16 %v2944
  %v3259 = vunpack.c.h.b16 %v2944
  %v3260 = vunpack.c.l.b16 %v2945
  %v3261 = vunpack.c.h.b16 %v2945
  %v3262 = vunpack.c.l.b16 %v2946
  %v3263 = vunpack.c.h.b16 %v2946
  %v3264 = vunpack.c.l.b16 %v2947
  %v3265 = vunpack.c.h.b16 %v2947
  %v3266 = vunpack.c.l.b16 %v2948
  %v3267 = vunpack.c.h.b16 %v2948
  %v3268 = vunpack.c.l.b16 %v2949
  %v3269 = vunpack.c.h.b16 %v2949
  %v3270 = vunpack.c.l.b16 %v2950
  %v3271 = vunpack.c.h.b16 %v2950
  %v3272 = vunpack.c.l.b16 %v2951
  %v3273 = vunpack.c.h.b16 %v2951
  %v3274 = vunpack.c.l.b16 %v2952
  %v3275 = vunpack.c.h.b16 %v2952
  %v3276 = vunpack.c.l.b16 %v2953
  %v3277 = vunpack.c.h.b16 %v2953
  %v3278 = vunpack.c.l.b16 %v2954
  %v3279 = vunpack.c.h.b16 %v2954
  %v3280 = vunpack.c.l.b16 %v2955
  %v3281 = vunpack.c.h.b16 %v2955
  %v3282 = vunpack.c.l.b16 %v2956
  %v3283 = vunpack.c.h.b16 %v2956
  %v3284 = vunpack.c.l.b16 %v2957
  %v3285 = vunpack.c.h.b16 %v2957
  %v3286 = vunpack.c.l.b16 %v2958
  %v3287 = vunpack.c.h.b16 %v2958
  %v3288 = vunpack.c.l.b16 %v2959
  %v3289 = vunpack.c.h.b16 %v2959
  %v3290 = vunpack.c.l.b16 %v2960
  %v3291 = vunpack.c.h.b16 %v2960
  %v3292 = vunpack.c.l.b16 %v2961
  %v3293 = vunpack.c.h.b16 %v2961
  %v3294 = vunpack.c.l.b16 %v2962
  %v3295 = vunpack.c.h.b16 %v2962
  %v3296 = vunpack.c.l.b16 %v2963
  %v3297 = vunpack.c.h.b16 %v2963
  %v3298 = vunpack.c.l.b16 %v2964
  %v3299 = vunpack.c.h.b16 %v2964
  %v3300 = vunpack.c.l.b16 %v2965
  %v3301 = vunpack.c.h.b16 %v2965
  %v3302 = vunpack.c.l.b16 %v2966
  %v3303 = vunpack.c.h.b16 %v2966
  %v3304 = vunpack.c.l.b16 %v2967
  %v3305 = vunpack.c.h.b16 %v2967
  %v3306 = vunpack.c.l.b16 %v2968
  %v3307 = vunpack.c.h.b16 %v2968
  %v3308 = vunpack.c.l.b16 %v2969
  %v3309 = vunpack.c.h.b16 %v2969
  %v3310 = vunpack.c.l.b16 %v2970
  %v3311 = vunpack.c.h.b16 %v2970
  %v3312 = vunpack.c.l.b16 %v2971
  %v3313 = vunpack.c.h.b16 %v2971
  %v3314 = vunpack.c.l.b16 %v2972
  %v3315 = vunpack.c.h.b16 %v2972
  %v3316 = vunpack.c.l.b16 %v2973
  %v3317 = vunpack.c.h.b16 %v2973
  %v3318 = vunpack.c.l.b16 %v2974
  %v3319 = vunpack.c.h.b16 %v2974
  %v3320 = vunpack.c.l.b16 %v2975
  %v3321 = vunpack.c.h.b16 %v2975
  %v3322 = vunpack.c.l.b16 %v2976
  %v3323 = vunpack.c.h.b16 %v2976
  %v3324 = vunpack.c.l.b16 %v2977
  %v3325 = vunpack.c.h.b16 %v2977
  %v3326 = vunpack.c.l.b16 %v2978
  %v3327 = vunpack.c.h.b16 %v2978
  %v3328 = vunpack.c.l.b16 %v2979
  %v3329 = vunpack.c.h.b16 %v2979
  %v3330 = vunpack.c.l.b16 %v2980
  %v3331 = vunpack.c.h.b16 %v2980
  %v3332 = vunpack.c.l.b16 %v2981
  %v3333 = vunpack.c.h.b16 %v2981
  %v3334 = vunpack.c.l.b16 %v2982
  %v3335 = vunpack.c.h.b16 %v2982
  %v3336 = vunpack.c.l.b16 %v2983
  %v3337 = vunpack.c.h.b16 %v2983
  %v3338 = vunpack.c.l.b16 %v2984
  %v3339 = vunpack.c.h.b16 %v2984
  %v3340 = vunpack.c.l.b16 %v2985
  %v3341 = vunpack.c.h.b16 %v2985
  %v3342 = vunpack.c.l.b16 %v2986
  %v3343 = vunpack.c.h.b16 %v2986
  %v3344 = vunpack.c.l.b16 %v2987
  %v3345 = vunpack.c.h.b16 %v2987
  %v3346 = vunpack.c.l.b16 %v2988
  %v3347 = vunpack.c.h.b16 %v2988
  %v3348 = vunpack.c.l.b16 %v2989
  %v3349 = vunpack.c.h.b16 %v2989
  %v3350 = vunpack.c.l.b16 %v2990
  %v3351 = vunpack.c.h.b16 %v2990
  %v3352 = vunpack.c.l.b16 %v2991
  %v3353 = vunpack.c.h.b16 %v2991
  %v3354 = vunpack.c.l.b16 %v2992
  %v3355 = vunpack.c.h.b16 %v2992
  %v3356 = vunpack.c.l.b16 %v2993
  %v3357 = vunpack.c.h.b16 %v2993
  %v3358 = vunpack.c.l.b16 %v2994
  %v3359 = vunpack.c.h.b16 %v2994
  %v3360 = vunpack.c.l.b16 %v2995
  %v3361 = vunpack.c.h.b16 %v2995
  %v3362 = vunpack.c.l.b16 %v2996
  %v3363 = vunpack.c.h.b16 %v2996
  %v3364 = vunpack.c.l.b16 %v2997
  %v3365 = vunpack.c.h.b16 %v2997
  %v3366 = vunpack.c.l.b16 %v2998
  %v3367 = vunpack.c.h.b16 %v2998
  %v3368 = vunpack.c.l.b16 %v2999
  %v3369 = vunpack.c.h.b16 %v2999
  %v3370 = vunpack.c.l.b16 %v3000
  %v3371 = vunpack.c.h.b16 %v3000
  %v3372 = vunpack.c.l.b16 %v3001
  %v3373 = vunpack.c.h.b16 %v3001
  %v3374 = vunpack.c.l.b16 %v3002
  %v3375 = vunpack.c.h.b16 %v3002
  %v3376 = vunpack.c.l.b16 %v3003
  %v3377 = vunpack.c.h.b16 %v3003
  %v3378 = vunpack.c.l.b16 %v3004
  %v3379 = vunpack.c.h.b16 %v3004
  %v3380 = vunpack.c.l.b16 %v3005
  %v3381 = vunpack.c.h.b16 %v3005
  %v3382 = vunpack.c.l.b16 %v3006
  %v3383 = vunpack.c.h.b16 %v3006
  %v3384 = vunpack.c.l.b16 %v3007
  %v3385 = vunpack.c.h.b16 %v3007
  %v3386 = vunpack.c.l.b16 %v3008
  %v3387 = vunpack.c.h.b16 %v3008
  %v3388 = vunpack.c.l.b16 %v3009
  %v3389 = vunpack.c.h.b16 %v3009
  %v3390 = vunpack.c.l.b16 %v3010
  %v3391 = vunpack.c.h.b16 %v3010
  %v3392 = vunpack.c.l.b16 %v3011
  %v3393 = vunpack.c.h.b16 %v3011
  %v3394 = vunpack.c.l.b16 %v3012
  %v3395 = vunpack.c.h.b16 %v3012
  %v3396 = vunpack.c.l.b16 %v3013
  %v3397 = vunpack.c.h.b16 %v3013
  %v3398 = vpack.c.b16 %v3142, %v3142
  %v3399 = vpack.c.b16 %v3143, %v3143
  %v3400 = vpack.c.b16 %v3144, %v3144
  %v3401 = vpack.c.b16 %v3145, %v3145
  %v3402 = vpack.c.b16 %v3146, %v3146
  %v3403 = vpack.c.b16 %v3147, %v3147
  %v3404 = vpack.c.b16 %v3148, %v3148
  %v3405 = vpack.c.b16 %v3149, %v3149
  %v3406 = vpack.c.b16 %v3150, %v3150
  %v3407 = vpack.c.b16 %v3151, %v3151
  %v3408 = vpack.c.b16 %v3152, %v3152
  %v3409 = vpack.c.b16 %v3153, %v3153
  %v3410 = vpack.c.b16 %v3154, %v3154
  %v3411 = vpack.c.b16 %v3155, %v3155
  %v3412 = vpack.c.b16 %v3156, %v3156
  %v3413 = vpack.c.b16 %v3157, %v3157
  %v3414 = vpack.c.b16 %v3158, %v3158
  %v3415 = vpack.c.b16 %v3159, %v3159
  %v3416 = vpack.c.b16 %v3160, %v3160
  %v3417 = vpack.c.b16 %v3161, %v3161
  %v3418 = vpack.c.b16 %v3162, %v3162
  %v3419 = vpack.c.b16 %v3163, %v3163
  %v3420 = vpack.c.b16 %v3164, %v3164
  %v3421 = vpack.c.b16 %v3165, %v3165
  %v3422 = vpack.c.b16 %v3166, %v3166
  %v3423 = vpack.c.b16 %v3167, %v3167
  %v3424 = vpack.c.b16 %v3168, %v3168
  %v3425 = vpack.c.b16 %v3169, %v3169
  %v3426 = vpack.c.b16 %v3170, %v3170
  %v3427 = vpack.c.b16 %v3171, %v3171
  %v3428 = vpack.c.b16 %v3172, %v3172
  %v3429 = vpack.c.b16 %v3173, %v3173
  %v3430 = vpack.c.b16 %v3174, %v3174
  %v3431 = vpack.c.b16 %v3175, %v3175
  %v3432 = vpack.c.b16 %v3176, %v3176
  %v3433 = vpack.c.b16 %v3177, %v3177
  %v3434 = vpack.c.b16 %v3178, %v3178
  %v3435 = vpack.c.b16 %v3179, %v3179
  %v3436 = vpack.c.b16 %v3180, %v3180
  %v3437 = vpack.c.b16 %v3181, %v3181
  %v3438 = vpack.c.b16 %v3182, %v3182
  %v3439 = vpack.c.b16 %v3183, %v3183
  %v3440 = vpack.c.b16 %v3184, %v3184
  %v3441 = vpack.c.b16 %v3185, %v3185
  %v3442 = vpack.c.b16 %v3186, %v3186
  %v3443 = vpack.c.b16 %v3187, %v3187
  %v3444 = vpack.c.b16 %v3188, %v3188
  %v3445 = vpack.c.b16 %v3189, %v3189
  %v3446 = vpack.c.b16 %v3190, %v3190
  %v3447 = vpack.c.b16 %v3191, %v3191
  %v3448 = vpack.c.b16 %v3192, %v3192
  %v3449 = vpack.c.b16 %v3193, %v3193
  %v3450 = vpack.c.b16 %v3194, %v3194
  %v3451 = vpack.c.b16 %v3195, %v3195
  %v3452 = vpack.c.b16 %v3196, %v3196
  %v3453 = vpack.c.b16 %v3197, %v3197
  %v3454 = vpack.c.b16 %v3198, %v3198
  %v3455 = vpack.c.b16 %v3199, %v3199
  %v3456 = vpack.c.b16 %v3200, %v3200
  %v3457 = vpack.c.b16 %v3201, %v3201
  %v3458 = vpack.c.b16 %v3202, %v3202
  %v3459 = vpack.c.b16 %v3203, %v3203
  %v3460 = vpack.c.b16 %v3204, %v3204
  %v3461 = vpack.c.b16 %v3205, %v3205
  %v3462 = vpack.c.b16 %v3206, %v3206
  %v3463 = vpack.c.b16 %v3207, %v3207
  %v3464 = vpack.c.b16 %v3208, %v3208
  %v3465 = vpack.c.b16 %v3209, %v3209
  %v3466 = vpack.c.b16 %v3210, %v3210
  %v3467 = vpack.c.b16 %v3211, %v3211
  %v3468 = vpack.c.b16 %v3212, %v3212
  %v3469 = vpack.c.b16 %v3213, %v3213
  %v3470 = vpack.c.b16 %v3214, %v3214
  %v3471 = vpack.c.b16 %v3215, %v3215
  %v3472 = vpack.c.b16 %v3216, %v3216
  %v3473 = vpack.c.b16 %v3217, %v3217
  %v3474 = vpack.c.b16 %v3218, %v3218
  %v3475 = vpack.c.b16 %v3219, %v3219
  %v3476 = vpack.c.b16 %v3220, %v3220
  %v3477 = vpack.c.b16 %v3221, %v3221
  %v3478 = vpack.c.b16 %v3222, %v3222
  %v3479 = vpack.c.b16 %v3223, %v3223
  %v3480 = vpack.c.b16 %v3224, %v3224
  %v3481 = vpack.c.b16 %v3225, %v3225
  %v3482 = vpack.c.b16 %v3226, %v3226
  %v3483 = vpack.c.b16 %v3227, %v3227
  %v3484 = vpack.c.b16 %v3228, %v3228
  %v3485 = vpack.c.b16 %v3229, %v3229
  %v3486 = vpack.c.b16 %v3230, %v3230
  %v3487 = vpack.c.b16 %v3231, %v3231
  %v3488 = vpack.c.b16 %v3232, %v3232
  %v3489 = vpack.c.b16 %v3233, %v3233
  %v3490 = vpack.c.b16 %v3234, %v3234
  %v3491 = vpack.c.b16 %v3235, %v3235
  %v3492 = vpack.c.b16 %v3236, %v3236
  %v3493 = vpack.c.b16 %v3237, %v3237
  %v3494 = vpack.c.b16 %v3238, %v3238
  %v3495 = vpack.c.b16 %v3239, %v3239
  %v3496 = vpack.c.b16 %v3240, %v3240
  %v3497 = vpack.c.b16 %v3241, %v3241
  %v3498 = vpack.c.b16 %v3242, %v3242
  %v3499 = vpack.c.b16 %v3243, %v3243
  %v3500 = vpack.c.b16 %v3244, %v3244
  %v3501 = vpack.c.b16 %v3245, %v3245
  %v3502 = vpack.c.b16 %v3246, %v3246
  %v3503 = vpack.c.b16 %v3247, %v3247
  %v3504 = vpack.c.b16 %v3248, %v3248
  %v3505 = vpack.c.b16 %v3249, %v3249
  %v3506 = vpack.c.b16 %v3250, %v3250
  %v3507 = vpack.c.b16 %v3251, %v3251
  %v3508 = vpack.c.b16 %v3252, %v3252
  %v3509 = vpack.c.b16 %v3253, %v3253
  %v3510 = vpack.c.b16 %v3254, %v3254
  %v3511 = vpack.c.b16 %v3255, %v3255
  %v3512 = vpack.c.b16 %v3256, %v3256
  %v3513 = vpack.c.b16 %v3257, %v3257
  %v3514 = vpack.c.b16 %v3258, %v3258
  %v3515 = vpack.c.b16 %v3259, %v3259
  %v3516 = vpack.c.b16 %v3260, %v3260
  %v3517 = vpack.c.b16 %v3261, %v3261
  %v3518 = vpack.c.b16 %v3262, %v3262
  %v3519 = vpack.c.b16 %v3263, %v3263
  %v3520 = vpack.c.b16 %v3264, %v3264
  %v3521 = vpack.c.b16 %v3265, %v3265
  %v3522 = vpack.c.b16 %v3266, %v3266
  %v3523 = vpack.c.b16 %v3267, %v3267
  %v3524 = vpack.c.b16 %v3268, %v3268
  %v3525 = vpack.c.b16 %v3269, %v3269
  %v3526 = vpack.c.b16 %v3270, %v3270
  %v3527 = vpack.c.b16 %v3271, %v3271
  %v3528 = vpack.c.b16 %v3272, %v3272
  %v3529 = vpack.c.b16 %v3273, %v3273
  %v3530 = vpack.c.b16 %v3274, %v3274
  %v3531 = vpack.c.b16 %v3275, %v3275
  %v3532 = vpack.c.b16 %v3276, %v3276
  %v3533 = vpack.c.b16 %v3277, %v3277
  %v3534 = vpack.c.b16 %v3278, %v3278
  %v3535 = vpack.c.b16 %v3279, %v3279
  %v3536 = vpack.c.b16 %v3280, %v3280
  %v3537 = vpack.c.b16 %v3281, %v3281
  %v3538 = vpack.c.b16 %v3282, %v3282
  %v3539 = vpack.c.b16 %v3283, %v3283
  %v3540 = vpack.c.b16 %v3284, %v3284
  %v3541 = vpack.c.b16 %v3285, %v3285
  %v3542 = vpack.c.b16 %v3286, %v3286
  %v3543 = vpack.c.b16 %v3287, %v3287
  %v3544 = vpack.c.b16 %v3288, %v3288
  %v3545 = vpack.c.b16 %v3289, %v3289
  %v3546 = vpack.c.b16 %v3290, %v3290
  %v3547 = vpack.c.b16 %v3291, %v3291
  %v3548 = vpack.c.b16 %v3292, %v3292
  %v3549 = vpack.c.b16 %v3293, %v3293
  %v3550 = vpack.c.b16 %v3294, %v3294
  %v3551 = vpack.c.b16 %v3295, %v3295
  %v3552 = vpack.c.b16 %v3296, %v3296
  %v3553 = vpack.c.b16 %v3297, %v3297
  %v3554 = vpack.c.b16 %v3298, %v3298
  %v3555 = vpack.c.b16 %v3299, %v3299
  %v3556 = vpack.c.b16 %v3300, %v3300
  %v3557 = vpack.c.b16 %v3301, %v3301
  %v3558 = vpack.c.b16 %v3302, %v3302
  %v3559 = vpack.c.b16 %v3303, %v3303
  %v3560 = vpack.c.b16 %v3304, %v3304
  %v3561 = vpack.c.b16 %v3305, %v3305
  %v3562 = vpack.c.b16 %v3306, %v3306
  %v3563 = vpack.c.b16 %v3307, %v3307
  %v3564 = vpack.c.b16 %v3308, %v3308
  %v3565 = vpack.c.b16 %v3309, %v3309
  %v3566 = vpack.c.b16 %v3310, %v3310
  %v3567 = vpack.c.b16 %v3311, %v3311
  %v3568 = vpack.c.b16 %v3312, %v3312
  %v3569 = vpack.c.b16 %v3313, %v3313
  %v3570 = vpack.c.b16 %v3314, %v3314
  %v3571 = vpack.c.b16 %v3315, %v3315
  %v3572 = vpack.c.b16 %v3316, %v3316
  %v3573 = vpack.c.b16 %v3317, %v3317
  %v3574 = vpack.c.b16 %v3318, %v3318
  %v3575 = vpack.c.b16 %v3319, %v3319
  %v3576 = vpack.c.b16 %v3320, %v3320
  %v3577 = vpack.c.b16 %v3321, %v3321
  %v3578 = vpack.c.b16 %v3322, %v3322
  %v3579 = vpack.c.b16 %v3323, %v3323
  %v3580 = vpack.c.b16 %v3324, %v3324
  %v3581 = vpack.c.b16 %v3325, %v3325
  %v3582 = vpack.c.b16 %v3326, %v3326
  %v3583 = vpack.c.b16 %v3327, %v3327
  %v3584 = vpack.c.b16 %v3328, %v3328
  %v3585 = vpack.c.b16 %v3329, %v3329
  %v3586 = vpack.c.b16 %v3330, %v3330
  %v3587 = vpack.c.b16 %v3331, %v3331
  %v3588 = vpack.c.b16 %v3332, %v3332
  %v3589 = vpack.c.b16 %v3333, %v3333
  %v3590 = vpack.c.b16 %v3334, %v3334
  %v3591 = vpack.c.b16 %v3335, %v3335
  %v3592 = vpack.c.b16 %v3336, %v3336
  %v3593 = vpack.c.b16 %v3337, %v3337
  %v3594 = vpack.c.b16 %v3338, %v3338
  %v3595 = vpack.c.b16 %v3339, %v3339
  %v3596 = vpack.c.b16 %v3340, %v3340
  %v3597 = vpack.c.b16 %v3341, %v3341
  %v3598 = vpack.c.b16 %v3342, %v3342
  %v3599 = vpack.c.b16 %v3343, %v3343
  %v3600 = vpack.c.b16 %v3344, %v3344
  %v3601 = vpack.c.b16 %v3345, %v3345
  %v3602 = vpack.c.b16 %v3346, %v3346
  %v3603 = vpack.c.b16 %v3347, %v3347
  %v3604 = vpack.c.b16 %v3348, %v3348
  %v3605 = vpack.c.b16 %v3349, %v3349
  %v3606 = vpack.c.b16 %v3350, %v3350
  %v3607 = vpack.c.b16 %v3351, %v3351
  %v3608 = vpack.c.b16 %v3352, %v3352
  %v3609 = vpack.c.b16 %v3353, %v3353
  %v3610 = vpack.c.b16 %v3354, %v3354
  %v3611 = vpack.c.b16 %v3355, %v3355
  %v3612 = vpack.c.b16 %v3356, %v3356
  %v3613 = vpack.c.b16 %v3357, %v3357
  %v3614 = vpack.c.b16 %v3358, %v3358
  %v3615 = vpack.c.b16 %v3359, %v3359
  %v3616 = vpack.c.b16 %v3360, %v3360
  %v3617 = vpack.c.b16 %v3361, %v3361
  %v3618 = vpack.c.b16 %v3362, %v3362
  %v3619 = vpack.c.b16 %v3363, %v3363
  %v3620 = vpack.c.b16 %v3364, %v3364
  %v3621 = vpack.c.b16 %v3365, %v3365
  %v3622 = vpack.c.b16 %v3366, %v3366
  %v3623 = vpack.c.b16 %v3367, %v3367
  %v3624 = vpack.c.b16 %v3368, %v3368
  %v3625 = vpack.c.b16 %v3369, %v3369
  %v3626 = vpack.c.b16 %v3370, %v3370
  %v3627 = vpack.c.b16 %v3371, %v3371
  %v3628 = vpack.c.b16 %v3372, %v3372
  %v3629 = vpack.c.b16 %v3373, %v3373
  %v3630 = vpack.c.b16 %v3374, %v3374
  %v3631 = vpack.c.b16 %v3375, %v3375
  %v3632 = vpack.c.b16 %v3376, %v3376
  %v3633 = vpack.c.b16 %v3377, %v3377
  %v3634 = vpack.c.b16 %v3378, %v3378
  %v3635 = vpack.c.b16 %v3379, %v3379
  %v3636 = vpack.c.b16 %v3380, %v3380
  %v3637 = vpack.c.b16 %v3381, %v3381
  %v3638 = vpack.c.b16 %v3382, %v3382
  %v3639 = vpack.c.b16 %v3383, %v3383
  %v3640 = vpack.c.b16 %v3384, %v3384
  %v3641 = vpack.c.b16 %v3385, %v3385
  %v3642 = vpack.c.b16 %v3386, %v3386
  %v3643 = vpack.c.b16 %v3387, %v3387
  %v3644 = vpack.c.b16 %v3388, %v3388
  %v3645 = vpack.c.b16 %v3389, %v3389
  %v3646 = vpack.c.b16 %v3390, %v3390
  %v3647 = vpack.c.b16 %v3391, %v3391
  %v3648 = vpack.c.b16 %v3392, %v3392
  %v3649 = vpack.c.b16 %v3393, %v3393
  %v3650 = vpack.c.b16 %v3394, %v3394
  %v3651 = vpack.c.b16 %v3395, %v3395
  %v3652 = vpack.c.b16 %v3396, %v3396
  %v3653 = vpack.c.b16 %v3397, %v3397
  %vm3910 = vcmask 60416
  %3911 = vst.msk [vmem:[%s2] sm:$0xf] %vm3910, %v3398
  %3912 = vst.msk [vmem:[%s2 + $0x4] sm:$0xf] %vm3910, %v3399
  %3913 = vst.msk [vmem:[%s2 + $0x8] sm:$0xf] %vm3910, %v3400
  %3914 = vst.msk [vmem:[%s2 + $0xc] sm:$0xf] %vm3910, %v3401
  %3915 = vst.msk [vmem:[%s2 + $0x10] sm:$0xf] %vm3910, %v3402
  %3916 = vst.msk [vmem:[%s2 + $0x14] sm:$0xf] %vm3910, %v3403
  %3917 = vst.msk [vmem:[%s2 + $0x18] sm:$0xf] %vm3910, %v3404
  %3918 = vst.msk [vmem:[%s2 + $0x1c] sm:$0xf] %vm3910, %v3405
  %3919 = vst.msk [vmem:[%s2 + $0x20] sm:$0xf] %vm3910, %v3406
  %3920 = vst.msk [vmem:[%s2 + $0x24] sm:$0xf] %vm3910, %v3407
  %3921 = vst.msk [vmem:[%s2 + $0x28] sm:$0xf] %vm3910, %v3408
  %3922 = vst.msk [vmem:[%s2 + $0x2c] sm:$0xf] %vm3910, %v3409
  %3923 = vst.msk [vmem:[%s2 + $0x30] sm:$0xf] %vm3910, %v3410
  %3924 = vst.msk [vmem:[%s2 + $0x34] sm:$0xf] %vm3910, %v3411
  %3925 = vst.msk [vmem:[%s2 + $0x38] sm:$0xf] %vm3910, %v3412
  %3926 = vst.msk [vmem:[%s2 + $0x3c] sm:$0xf] %vm3910, %v3413
  %3927 = vst.msk [vmem:[%s2 + $0x40] sm:$0xf] %vm3910, %v3414
  %3928 = vst.msk [vmem:[%s2 + $0x44] sm:$0xf] %vm3910, %v3415
  %3929 = vst.msk [vmem:[%s2 + $0x48] sm:$0xf] %vm3910, %v3416
  %3930 = vst.msk [vmem:[%s2 + $0x4c] sm:$0xf] %vm3910, %v3417
  %3931 = vst.msk [vmem:[%s2 + $0x50] sm:$0xf] %vm3910, %v3418
  %3932 = vst.msk [vmem:[%s2 + $0x54] sm:$0xf] %vm3910, %v3419
  %3933 = vst.msk [vmem:[%s2 + $0x58] sm:$0xf] %vm3910, %v3420
  %3934 = vst.msk [vmem:[%s2 + $0x5c] sm:$0xf] %vm3910, %v3421
  %3935 = vst.msk [vmem:[%s2 + $0x60] sm:$0xf] %vm3910, %v3422
  %3936 = vst.msk [vmem:[%s2 + $0x64] sm:$0xf] %vm3910, %v3423
  %3937 = vst.msk [vmem:[%s2 + $0x68] sm:$0xf] %vm3910, %v3424
  %3938 = vst.msk [vmem:[%s2 + $0x6c] sm:$0xf] %vm3910, %v3425
  %3939 = vst.msk [vmem:[%s2 + $0x70] sm:$0xf] %vm3910, %v3426
  %3940 = vst.msk [vmem:[%s2 + $0x74] sm:$0xf] %vm3910, %v3427
  %3941 = vst.msk [vmem:[%s2 + $0x78] sm:$0xf] %vm3910, %v3428
  %3942 = vst.msk [vmem:[%s2 + $0x7c] sm:$0xf] %vm3910, %v3429
  %3943 = vst.msk [vmem:[%s2 + $0x80] sm:$0xf] %vm3910, %v3430
  %3944 = vst.msk [vmem:[%s2 + $0x84] sm:$0xf] %vm3910, %v3431
  %3945 = vst.msk [vmem:[%s2 + $0x88] sm:$0xf] %vm3910, %v3432
  %3946 = vst.msk [vmem:[%s2 + $0x8c] sm:$0xf] %vm3910, %v3433
  %3947 = vst.msk [vmem:[%s2 + $0x90] sm:$0xf] %vm3910, %v3434
  %3948 = vst.msk [vmem:[%s2 + $0x94] sm:$0xf] %vm3910, %v3435
  %3949 = vst.msk [vmem:[%s2 + $0x98] sm:$0xf] %vm3910, %v3436
  %3950 = vst.msk [vmem:[%s2 + $0x9c] sm:$0xf] %vm3910, %v3437
  %3951 = vst.msk [vmem:[%s2 + $0xa0] sm:$0xf] %vm3910, %v3438
  %3952 = vst.msk [vmem:[%s2 + $0xa4] sm:$0xf] %vm3910, %v3439
  %3953 = vst.msk [vmem:[%s2 + $0xa8] sm:$0xf] %vm3910, %v3440
  %3954 = vst.msk [vmem:[%s2 + $0xac] sm:$0xf] %vm3910, %v3441
  %3955 = vst.msk [vmem:[%s2 + $0xb0] sm:$0xf] %vm3910, %v3442
  %3956 = vst.msk [vmem:[%s2 + $0xb4] sm:$0xf] %vm3910, %v3443
  %3957 = vst.msk [vmem:[%s2 + $0xb8] sm:$0xf] %vm3910, %v3444
  %3958 = vst.msk [vmem:[%s2 + $0xbc] sm:$0xf] %vm3910, %v3445
  %3959 = vst.msk [vmem:[%s2 + $0xc0] sm:$0xf] %vm3910, %v3446
  %3960 = vst.msk [vmem:[%s2 + $0xc4] sm:$0xf] %vm3910, %v3447
  %3961 = vst.msk [vmem:[%s2 + $0xc8] sm:$0xf] %vm3910, %v3448
  %3962 = vst.msk [vmem:[%s2 + $0xcc] sm:$0xf] %vm3910, %v3449
  %3963 = vst.msk [vmem:[%s2 + $0xd0] sm:$0xf] %vm3910, %v3450
  %3964 = vst.msk [vmem:[%s2 + $0xd4] sm:$0xf] %vm3910, %v3451
  %3965 = vst.msk [vmem:[%s2 + $0xd8] sm:$0xf] %vm3910, %v3452
  %3966 = vst.msk [vmem:[%s2 + $0xdc] sm:$0xf] %vm3910, %v3453
  %3967 = vst.msk [vmem:[%s2 + $0xe0] sm:$0xf] %vm3910, %v3454
  %3968 = vst.msk [vmem:[%s2 + $0xe4] sm:$0xf] %vm3910, %v3455
  %3969 = vst.msk [vmem:[%s2 + $0xe8] sm:$0xf] %vm3910, %v3456
  %3970 = vst.msk [vmem:[%s2 + $0xec] sm:$0xf] %vm3910, %v3457
  %3971 = vst.msk [vmem:[%s2 + $0xf0] sm:$0xf] %vm3910, %v3458
  %3972 = vst.msk [vmem:[%s2 + $0xf4] sm:$0xf] %vm3910, %v3459
  %3973 = vst.msk [vmem:[%s2 + $0xf8] sm:$0xf] %vm3910, %v3460
  %3974 = vst.msk [vmem:[%s2 + $0xfc] sm:$0xf] %vm3910, %v3461
  %3975 = vst.msk [vmem:[%s2 + $0x100] sm:$0xf] %vm3910, %v3462
  %3976 = vst.msk [vmem:[%s2 + $0x104] sm:$0xf] %vm3910, %v3463
  %3977 = vst.msk [vmem:[%s2 + $0x108] sm:$0xf] %vm3910, %v3464
  %3978 = vst.msk [vmem:[%s2 + $0x10c] sm:$0xf] %vm3910, %v3465
  %3979 = vst.msk [vmem:[%s2 + $0x110] sm:$0xf] %vm3910, %v3466
  %3980 = vst.msk [vmem:[%s2 + $0x114] sm:$0xf] %vm3910, %v3467
  %3981 = vst.msk [vmem:[%s2 + $0x118] sm:$0xf] %vm3910, %v3468
  %3982 = vst.msk [vmem:[%s2 + $0x11c] sm:$0xf] %vm3910, %v3469
  %3983 = vst.msk [vmem:[%s2 + $0x120] sm:$0xf] %vm3910, %v3470
  %3984 = vst.msk [vmem:[%s2 + $0x124] sm:$0xf] %vm3910, %v3471
  %3985 = vst.msk [vmem:[%s2 + $0x128] sm:$0xf] %vm3910, %v3472
  %3986 = vst.msk [vmem:[%s2 + $0x12c] sm:$0xf] %vm3910, %v3473
  %3987 = vst.msk [vmem:[%s2 + $0x130] sm:$0xf] %vm3910, %v3474
  %3988 = vst.msk [vmem:[%s2 + $0x134] sm:$0xf] %vm3910, %v3475
  %3989 = vst.msk [vmem:[%s2 + $0x138] sm:$0xf] %vm3910, %v3476
  %3990 = vst.msk [vmem:[%s2 + $0x13c] sm:$0xf] %vm3910, %v3477
  %3991 = vst.msk [vmem:[%s2 + $0x140] sm:$0xf] %vm3910, %v3478
  %3992 = vst.msk [vmem:[%s2 + $0x144] sm:$0xf] %vm3910, %v3479
  %3993 = vst.msk [vmem:[%s2 + $0x148] sm:$0xf] %vm3910, %v3480
  %3994 = vst.msk [vmem:[%s2 + $0x14c] sm:$0xf] %vm3910, %v3481
  %3995 = vst.msk [vmem:[%s2 + $0x150] sm:$0xf] %vm3910, %v3482
  %3996 = vst.msk [vmem:[%s2 + $0x154] sm:$0xf] %vm3910, %v3483
  %3997 = vst.msk [vmem:[%s2 + $0x158] sm:$0xf] %vm3910, %v3484
  %3998 = vst.msk [vmem:[%s2 + $0x15c] sm:$0xf] %vm3910, %v3485
  %3999 = vst.msk [vmem:[%s2 + $0x160] sm:$0xf] %vm3910, %v3486
  %4000 = vst.msk [vmem:[%s2 + $0x164] sm:$0xf] %vm3910, %v3487
  %4001 = vst.msk [vmem:[%s2 + $0x168] sm:$0xf] %vm3910, %v3488
  %4002 = vst.msk [vmem:[%s2 + $0x16c] sm:$0xf] %vm3910, %v3489
  %4003 = vst.msk [vmem:[%s2 + $0x170] sm:$0xf] %vm3910, %v3490
  %4004 = vst.msk [vmem:[%s2 + $0x174] sm:$0xf] %vm3910, %v3491
  %4005 = vst.msk [vmem:[%s2 + $0x178] sm:$0xf] %vm3910, %v3492
  %4006 = vst.msk [vmem:[%s2 + $0x17c] sm:$0xf] %vm3910, %v3493
  %4007 = vst.msk [vmem:[%s2 + $0x180] sm:$0xf] %vm3910, %v3494
  %4008 = vst.msk [vmem:[%s2 + $0x184] sm:$0xf] %vm3910, %v3495
  %4009 = vst.msk [vmem:[%s2 + $0x188] sm:$0xf] %vm3910, %v3496
  %4010 = vst.msk [vmem:[%s2 + $0x18c] sm:$0xf] %vm3910, %v3497
  %4011 = vst.msk [vmem:[%s2 + $0x190] sm:$0xf] %vm3910, %v3498
  %4012 = vst.msk [vmem:[%s2 + $0x194] sm:$0xf] %vm3910, %v3499
  %4013 = vst.msk [vmem:[%s2 + $0x198] sm:$0xf] %vm3910, %v3500
  %4014 = vst.msk [vmem:[%s2 + $0x19c] sm:$0xf] %vm3910, %v3501
  %4015 = vst.msk [vmem:[%s2 + $0x1a0] sm:$0xf] %vm3910, %v3502
  %4016 = vst.msk [vmem:[%s2 + $0x1a4] sm:$0xf] %vm3910, %v3503
  %4017 = vst.msk [vmem:[%s2 + $0x1a8] sm:$0xf] %vm3910, %v3504
  %4018 = vst.msk [vmem:[%s2 + $0x1ac] sm:$0xf] %vm3910, %v3505
  %4019 = vst.msk [vmem:[%s2 + $0x1b0] sm:$0xf] %vm3910, %v3506
  %4020 = vst.msk [vmem:[%s2 + $0x1b4] sm:$0xf] %vm3910, %v3507
  %4021 = vst.msk [vmem:[%s2 + $0x1b8] sm:$0xf] %vm3910, %v3508
  %4022 = vst.msk [vmem:[%s2 + $0x1bc] sm:$0xf] %vm3910, %v3509
  %4023 = vst.msk [vmem:[%s2 + $0x1c0] sm:$0xf] %vm3910, %v3510
  %4024 = vst.msk [vmem:[%s2 + $0x1c4] sm:$0xf] %vm3910, %v3511
  %4025 = vst.msk [vmem:[%s2 + $0x1c8] sm:$0xf] %vm3910, %v3512
  %4026 = vst.msk [vmem:[%s2 + $0x1cc] sm:$0xf] %vm3910, %v3513
  %4027 = vst.msk [vmem:[%s2 + $0x1d0] sm:$0xf] %vm3910, %v3514
  %4028 = vst.msk [vmem:[%s2 + $0x1d4] sm:$0xf] %vm3910, %v3515
  %4029 = vst.msk [vmem:[%s2 + $0x1d8] sm:$0xf] %vm3910, %v3516
  %4030 = vst.msk [vmem:[%s2 + $0x1dc] sm:$0xf] %vm3910, %v3517
  %4031 = vst.msk [vmem:[%s2 + $0x1e0] sm:$0xf] %vm3910, %v3518
  %4032 = vst.msk [vmem:[%s2 + $0x1e4] sm:$0xf] %vm3910, %v3519
  %4033 = vst.msk [vmem:[%s2 + $0x1e8] sm:$0xf] %vm3910, %v3520
  %4034 = vst.msk [vmem:[%s2 + $0x1ec] sm:$0xf] %vm3910, %v3521
  %4035 = vst.msk [vmem:[%s2 + $0x1f0] sm:$0xf] %vm3910, %v3522
  %4036 = vst.msk [vmem:[%s2 + $0x1f4] sm:$0xf] %vm3910, %v3523
  %4037 = vst.msk [vmem:[%s2 + $0x1f8] sm:$0xf] %vm3910, %v3524
  %4038 = vst.msk [vmem:[%s2 + $0x1fc] sm:$0xf] %vm3910, %v3525
  %4039 = vst.msk [vmem:[%s2 + $0x200] sm:$0xf] %vm3910, %v3526
  %4040 = vst.msk [vmem:[%s2 + $0x204] sm:$0xf] %vm3910, %v3527
  %4041 = vst.msk [vmem:[%s2 + $0x208] sm:$0xf] %vm3910, %v3528
  %4042 = vst.msk [vmem:[%s2 + $0x20c] sm:$0xf] %vm3910, %v3529
  %4043 = vst.msk [vmem:[%s2 + $0x210] sm:$0xf] %vm3910, %v3530
  %4044 = vst.msk [vmem:[%s2 + $0x214] sm:$0xf] %vm3910, %v3531
  %4045 = vst.msk [vmem:[%s2 + $0x218] sm:$0xf] %vm3910, %v3532
  %4046 = vst.msk [vmem:[%s2 + $0x21c] sm:$0xf] %vm3910, %v3533
  %4047 = vst.msk [vmem:[%s2 + $0x220] sm:$0xf] %vm3910, %v3534
  %4048 = vst.msk [vmem:[%s2 + $0x224] sm:$0xf] %vm3910, %v3535
  %4049 = vst.msk [vmem:[%s2 + $0x228] sm:$0xf] %vm3910, %v3536
  %4050 = vst.msk [vmem:[%s2 + $0x22c] sm:$0xf] %vm3910, %v3537
  %4051 = vst.msk [vmem:[%s2 + $0x230] sm:$0xf] %vm3910, %v3538
  %4052 = vst.msk [vmem:[%s2 + $0x234] sm:$0xf] %vm3910, %v3539
  %4053 = vst.msk [vmem:[%s2 + $0x238] sm:$0xf] %vm3910, %v3540
  %4054 = vst.msk [vmem:[%s2 + $0x23c] sm:$0xf] %vm3910, %v3541
  %4055 = vst.msk [vmem:[%s2 + $0x240] sm:$0xf] %vm3910, %v3542
  %4056 = vst.msk [vmem:[%s2 + $0x244] sm:$0xf] %vm3910, %v3543
  %4057 = vst.msk [vmem:[%s2 + $0x248] sm:$0xf] %vm3910, %v3544
  %4058 = vst.msk [vmem:[%s2 + $0x24c] sm:$0xf] %vm3910, %v3545
  %4059 = vst.msk [vmem:[%s2 + $0x250] sm:$0xf] %vm3910, %v3546
  %4060 = vst.msk [vmem:[%s2 + $0x254] sm:$0xf] %vm3910, %v3547
  %4061 = vst.msk [vmem:[%s2 + $0x258] sm:$0xf] %vm3910, %v3548
  %4062 = vst.msk [vmem:[%s2 + $0x25c] sm:$0xf] %vm3910, %v3549
  %4063 = vst.msk [vmem:[%s2 + $0x260] sm:$0xf] %vm3910, %v3550
  %4064 = vst.msk [vmem:[%s2 + $0x264] sm:$0xf] %vm3910, %v3551
  %4065 = vst.msk [vmem:[%s2 + $0x268] sm:$0xf] %vm3910, %v3552
  %4066 = vst.msk [vmem:[%s2 + $0x26c] sm:$0xf] %vm3910, %v3553
  %4067 = vst.msk [vmem:[%s2 + $0x270] sm:$0xf] %vm3910, %v3554
  %4068 = vst.msk [vmem:[%s2 + $0x274] sm:$0xf] %vm3910, %v3555
  %4069 = vst.msk [vmem:[%s2 + $0x278] sm:$0xf] %vm3910, %v3556
  %4070 = vst.msk [vmem:[%s2 + $0x27c] sm:$0xf] %vm3910, %v3557
  %4071 = vst.msk [vmem:[%s2 + $0x280] sm:$0xf] %vm3910, %v3558
  %4072 = vst.msk [vmem:[%s2 + $0x284] sm:$0xf] %vm3910, %v3559
  %4073 = vst.msk [vmem:[%s2 + $0x288] sm:$0xf] %vm3910, %v3560
  %4074 = vst.msk [vmem:[%s2 + $0x28c] sm:$0xf] %vm3910, %v3561
  %4075 = vst.msk [vmem:[%s2 + $0x290] sm:$0xf] %vm3910, %v3562
  %4076 = vst.msk [vmem:[%s2 + $0x294] sm:$0xf] %vm3910, %v3563
  %4077 = vst.msk [vmem:[%s2 + $0x298] sm:$0xf] %vm3910, %v3564
  %4078 = vst.msk [vmem:[%s2 + $0x29c] sm:$0xf] %vm3910, %v3565
  %4079 = vst.msk [vmem:[%s2 + $0x2a0] sm:$0xf] %vm3910, %v3566
  %4080 = vst.msk [vmem:[%s2 + $0x2a4] sm:$0xf] %vm3910, %v3567
  %4081 = vst.msk [vmem:[%s2 + $0x2a8] sm:$0xf] %vm3910, %v3568
  %4082 = vst.msk [vmem:[%s2 + $0x2ac] sm:$0xf] %vm3910, %v3569
  %4083 = vst.msk [vmem:[%s2 + $0x2b0] sm:$0xf] %vm3910, %v3570
  %4084 = vst.msk [vmem:[%s2 + $0x2b4] sm:$0xf] %vm3910, %v3571
  %4085 = vst.msk [vmem:[%s2 + $0x2b8] sm:$0xf] %vm3910, %v3572
  %4086 = vst.msk [vmem:[%s2 + $0x2bc] sm:$0xf] %vm3910, %v3573
  %4087 = vst.msk [vmem:[%s2 + $0x2c0] sm:$0xf] %vm3910, %v3574
  %4088 = vst.msk [vmem:[%s2 + $0x2c4] sm:$0xf] %vm3910, %v3575
  %4089 = vst.msk [vmem:[%s2 + $0x2c8] sm:$0xf] %vm3910, %v3576
  %4090 = vst.msk [vmem:[%s2 + $0x2cc] sm:$0xf] %vm3910, %v3577
  %4091 = vst.msk [vmem:[%s2 + $0x2d0] sm:$0xf] %vm3910, %v3578
  %4092 = vst.msk [vmem:[%s2 + $0x2d4] sm:$0xf] %vm3910, %v3579
  %4093 = vst.msk [vmem:[%s2 + $0x2d8] sm:$0xf] %vm3910, %v3580
  %4094 = vst.msk [vmem:[%s2 + $0x2dc] sm:$0xf] %vm3910, %v3581
  %4095 = vst.msk [vmem:[%s2 + $0x2e0] sm:$0xf] %vm3910, %v3582
  %4096 = vst.msk [vmem:[%s2 + $0x2e4] sm:$0xf] %vm3910, %v3583
  %4097 = vst.msk [vmem:[%s2 + $0x2e8] sm:$0xf] %vm3910, %v3584
  %4098 = vst.msk [vmem:[%s2 + $0x2ec] sm:$0xf] %vm3910, %v3585
  %4099 = vst.msk [vmem:[%s2 + $0x2f0] sm:$0xf] %vm3910, %v3586
  %4100 = vst.msk [vmem:[%s2 + $0x2f4] sm:$0xf] %vm3910, %v3587
  %4101 = vst.msk [vmem:[%s2 + $0x2f8] sm:$0xf] %vm3910, %v3588
  %4102 = vst.msk [vmem:[%s2 + $0x2fc] sm:$0xf] %vm3910, %v3589
  %4103 = vst.msk [vmem:[%s2 + $0x300] sm:$0xf] %vm3910, %v3590
  %4104 = vst.msk [vmem:[%s2 + $0x304] sm:$0xf] %vm3910, %v3591
  %4105 = vst.msk [vmem:[%s2 + $0x308] sm:$0xf] %vm3910, %v3592
  %4106 = vst.msk [vmem:[%s2 + $0x30c] sm:$0xf] %vm3910, %v3593
  %4107 = vst.msk [vmem:[%s2 + $0x310] sm:$0xf] %vm3910, %v3594
  %4108 = vst.msk [vmem:[%s2 + $0x314] sm:$0xf] %vm3910, %v3595
  %4109 = vst.msk [vmem:[%s2 + $0x318] sm:$0xf] %vm3910, %v3596
  %4110 = vst.msk [vmem:[%s2 + $0x31c] sm:$0xf] %vm3910, %v3597
  %4111 = vst.msk [vmem:[%s2 + $0x320] sm:$0xf] %vm3910, %v3598
  %4112 = vst.msk [vmem:[%s2 + $0x324] sm:$0xf] %vm3910, %v3599
  %4113 = vst.msk [vmem:[%s2 + $0x328] sm:$0xf] %vm3910, %v3600
  %4114 = vst.msk [vmem:[%s2 + $0x32c] sm:$0xf] %vm3910, %v3601
  %4115 = vst.msk [vmem:[%s2 + $0x330] sm:$0xf] %vm3910, %v3602
  %4116 = vst.msk [vmem:[%s2 + $0x334] sm:$0xf] %vm3910, %v3603
  %4117 = vst.msk [vmem:[%s2 + $0x338] sm:$0xf] %vm3910, %v3604
  %4118 = vst.msk [vmem:[%s2 + $0x33c] sm:$0xf] %vm3910, %v3605
  %4119 = vst.msk [vmem:[%s2 + $0x340] sm:$0xf] %vm3910, %v3606
  %4120 = vst.msk [vmem:[%s2 + $0x344] sm:$0xf] %vm3910, %v3607
  %4121 = vst.msk [vmem:[%s2 + $0x348] sm:$0xf] %vm3910, %v3608
  %4122 = vst.msk [vmem:[%s2 + $0x34c] sm:$0xf] %vm3910, %v3609
  %4123 = vst.msk [vmem:[%s2 + $0x350] sm:$0xf] %vm3910, %v3610
  %4124 = vst.msk [vmem:[%s2 + $0x354] sm:$0xf] %vm3910, %v3611
  %4125 = vst.msk [vmem:[%s2 + $0x358] sm:$0xf] %vm3910, %v3612
  %4126 = vst.msk [vmem:[%s2 + $0x35c] sm:$0xf] %vm3910, %v3613
  %4127 = vst.msk [vmem:[%s2 + $0x360] sm:$0xf] %vm3910, %v3614
  %4128 = vst.msk [vmem:[%s2 + $0x364] sm:$0xf] %vm3910, %v3615
  %4129 = vst.msk [vmem:[%s2 + $0x368] sm:$0xf] %vm3910, %v3616
  %4130 = vst.msk [vmem:[%s2 + $0x36c] sm:$0xf] %vm3910, %v3617
  %4131 = vst.msk [vmem:[%s2 + $0x370] sm:$0xf] %vm3910, %v3618
  %4132 = vst.msk [vmem:[%s2 + $0x374] sm:$0xf] %vm3910, %v3619
  %4133 = vst.msk [vmem:[%s2 + $0x378] sm:$0xf] %vm3910, %v3620
  %4134 = vst.msk [vmem:[%s2 + $0x37c] sm:$0xf] %vm3910, %v3621
  %4135 = vst.msk [vmem:[%s2 + $0x380] sm:$0xf] %vm3910, %v3622
  %4136 = vst.msk [vmem:[%s2 + $0x384] sm:$0xf] %vm3910, %v3623
  %4137 = vst.msk [vmem:[%s2 + $0x388] sm:$0xf] %vm3910, %v3624
  %4138 = vst.msk [vmem:[%s2 + $0x38c] sm:$0xf] %vm3910, %v3625
  %4139 = vst.msk [vmem:[%s2 + $0x390] sm:$0xf] %vm3910, %v3626
  %4140 = vst.msk [vmem:[%s2 + $0x394] sm:$0xf] %vm3910, %v3627
  %4141 = vst.msk [vmem:[%s2 + $0x398] sm:$0xf] %vm3910, %v3628
  %4142 = vst.msk [vmem:[%s2 + $0x39c] sm:$0xf] %vm3910, %v3629
  %4143 = vst.msk [vmem:[%s2 + $0x3a0] sm:$0xf] %vm3910, %v3630
  %4144 = vst.msk [vmem:[%s2 + $0x3a4] sm:$0xf] %vm3910, %v3631
  %4145 = vst.msk [vmem:[%s2 + $0x3a8] sm:$0xf] %vm3910, %v3632
  %4146 = vst.msk [vmem:[%s2 + $0x3ac] sm:$0xf] %vm3910, %v3633
  %4147 = vst.msk [vmem:[%s2 + $0x3b0] sm:$0xf] %vm3910, %v3634
  %4148 = vst.msk [vmem:[%s2 + $0x3b4] sm:$0xf] %vm3910, %v3635
  %4149 = vst.msk [vmem:[%s2 + $0x3b8] sm:$0xf] %vm3910, %v3636
  %4150 = vst.msk [vmem:[%s2 + $0x3bc] sm:$0xf] %vm3910, %v3637
  %4151 = vst.msk [vmem:[%s2 + $0x3c0] sm:$0xf] %vm3910, %v3638
  %4152 = vst.msk [vmem:[%s2 + $0x3c4] sm:$0xf] %vm3910, %v3639
  %4153 = vst.msk [vmem:[%s2 + $0x3c8] sm:$0xf] %vm3910, %v3640
  %4154 = vst.msk [vmem:[%s2 + $0x3cc] sm:$0xf] %vm3910, %v3641
  %4155 = vst.msk [vmem:[%s2 + $0x3d0] sm:$0xf] %vm3910, %v3642
  %4156 = vst.msk [vmem:[%s2 + $0x3d4] sm:$0xf] %vm3910, %v3643
  %4157 = vst.msk [vmem:[%s2 + $0x3d8] sm:$0xf] %vm3910, %v3644
  %4158 = vst.msk [vmem:[%s2 + $0x3dc] sm:$0xf] %vm3910, %v3645
  %4159 = vst.msk [vmem:[%s2 + $0x3e0] sm:$0xf] %vm3910, %v3646
  %4160 = vst.msk [vmem:[%s2 + $0x3e4] sm:$0xf] %vm3910, %v3647
  %4161 = vst.msk [vmem:[%s2 + $0x3e8] sm:$0xf] %vm3910, %v3648
  %4162 = vst.msk [vmem:[%s2 + $0x3ec] sm:$0xf] %vm3910, %v3649
  %4163 = vst.msk [vmem:[%s2 + $0x3f0] sm:$0xf] %vm3910, %v3650
  %4164 = vst.msk [vmem:[%s2 + $0x3f4] sm:$0xf] %vm3910, %v3651
  %4165 = vst.msk [vmem:[%s2 + $0x3f8] sm:$0xf] %vm3910, %v3652
  %4166 = vst.msk [vmem:[%s2 + $0x3fc] sm:$0xf] %vm3910, %v3653
  // Predicated region
  $region10: #{forward.12} parent=0 // pred_check
    _
  $region11: #{forward.12} parent=0 // pred_check_branch
    %4168 = sbr.rel (0) target = $region13
  $region12: #{forward.12} parent=0 // pred_region
    _
  $region13: #{forward.12} parent=0 // pred_fallthru
    _
  // Predicated region
  $region14: #{forward.12} parent=0 // pred_check
    _
  $region15: #{forward.12} parent=0 // pred_check_branch
    %4170 = sbr.rel (0) target = $region17
  $region16: #{forward.12} parent=0 // pred_region
    _
  $region17: #{forward.12} parent=0 // pred_fallthru
    _

// kernel: forward.13
$region0: #{forward.13}
  #allocation0 [shape = 'u32[]', space=smem, size = 0x4, offset = 0x4, fixed_abs, tag = 'smem constant byte address 0x4 - core index']
  #allocation1 [shape = 'u32[144,128]{1,0:T(1,128)}', space=vmem, size = 0x12000, scoped, tag = 'internal scratch']
  %s0 = inlined_call_operand.vmem [shape: bf16[512,128], index: 0, kind: input, shape index: {}]
  %s1 = inlined_call_operand.vmem [shape: bf16[128,16], index: 1, kind: input, shape index: {}]
  %s2 = inlined_call_operand.vmem [shape: f32[1,16], index: 2, kind: input, shape index: {}]
  %s3 = inlined_call_operand.vmem [shape: bf16[512,16], index: 3, kind: output, shape index: {}]
  %s4 = sld [smem:[#allocation0]]
  $region22: #{forward.13} parent=0
    _
  %s6 = ssub.s32 1, %s4
  %s7 = scalar_select 0, %s6, %s4
  // Predicated region
  $region2: #{forward.13} parent=0 // pred_check
    _
  $region3: #{forward.13} parent=0 // pred_check_branch
    %9 = sbr.rel (0) target = $region5
  $region4: #{forward.13} parent=0 // pred_region
    _
  $region5: #{forward.13} parent=0 // pred_fallthru
    _
  // Predicated region
  $region6: #{forward.13} parent=0 // pred_check
    _
  $region7: #{forward.13} parent=0 // pred_check_branch
    %11 = sbr.rel (0) target = $region9
  $region8: #{forward.13} parent=0 // pred_region
    _
  $region9: #{forward.13} parent=0 // pred_fallthru
    _
  // Predicated region
  $region10: #{forward.13} parent=0 // pred_check
    _
  $region11: #{forward.13} parent=0 // pred_check_branch
    %13 = sbr.rel (0) target = $region13
  $region12: #{forward.13} parent=0 // pred_region
    _
  $region13: #{forward.13} parent=0 // pred_fallthru
    _
  %v15 = vld [vmem:[%s0] sm:$0xf]
  %v16 = vld [vmem:[%s0 + $0x4] sm:$0xf]
  %v17 = vld [vmem:[%s0 + $0x8] sm:$0xf]
  %v18 = vld [vmem:[%s0 + $0xc] sm:$0xf]
  %v19 = vld [vmem:[%s0 + $0x10] sm:$0xf]
  %v20 = vld [vmem:[%s0 + $0x14] sm:$0xf]
  %v21 = vld [vmem:[%s0 + $0x18] sm:$0xf]
  %v22 = vld [vmem:[%s0 + $0x1c] sm:$0xf]
  %v23 = vld [vmem:[%s0 + $0x20] sm:$0xf]
  %v24 = vld [vmem:[%s0 + $0x24] sm:$0xf]
  %v25 = vld [vmem:[%s0 + $0x28] sm:$0xf]
  %v26 = vld [vmem:[%s0 + $0x2c] sm:$0xf]
  %v27 = vld [vmem:[%s0 + $0x30] sm:$0xf]
  %v28 = vld [vmem:[%s0 + $0x34] sm:$0xf]
  %v29 = vld [vmem:[%s0 + $0x38] sm:$0xf]
  %v30 = vld [vmem:[%s0 + $0x3c] sm:$0xf]
  %v31 = vld [vmem:[%s0 + $0x40] sm:$0xf]
  %v32 = vld [vmem:[%s0 + $0x44] sm:$0xf]
  %v33 = vld [vmem:[%s0 + $0x48] sm:$0xf]
  %v34 = vld [vmem:[%s0 + $0x4c] sm:$0xf]
  %v35 = vld [vmem:[%s0 + $0x50] sm:$0xf]
  %v36 = vld [vmem:[%s0 + $0x54] sm:$0xf]
  %v37 = vld [vmem:[%s0 + $0x58] sm:$0xf]
  %v38 = vld [vmem:[%s0 + $0x5c] sm:$0xf]
  %v39 = vld [vmem:[%s0 + $0x60] sm:$0xf]
  %v40 = vld [vmem:[%s0 + $0x64] sm:$0xf]
  %v41 = vld [vmem:[%s0 + $0x68] sm:$0xf]
  %v42 = vld [vmem:[%s0 + $0x6c] sm:$0xf]
  %v43 = vld [vmem:[%s0 + $0x70] sm:$0xf]
  %v44 = vld [vmem:[%s0 + $0x74] sm:$0xf]
  %v45 = vld [vmem:[%s0 + $0x78] sm:$0xf]
  %v46 = vld [vmem:[%s0 + $0x7c] sm:$0xf]
  %v47 = vld [vmem:[%s0 + $0x80] sm:$0xf]
  %v48 = vld [vmem:[%s0 + $0x84] sm:$0xf]
  %v49 = vld [vmem:[%s0 + $0x88] sm:$0xf]
  %v50 = vld [vmem:[%s0 + $0x8c] sm:$0xf]
  %v51 = vld [vmem:[%s0 + $0x90] sm:$0xf]
  %v52 = vld [vmem:[%s0 + $0x94] sm:$0xf]
  %v53 = vld [vmem:[%s0 + $0x98] sm:$0xf]
  %v54 = vld [vmem:[%s0 + $0x9c] sm:$0xf]
  %v55 = vld [vmem:[%s0 + $0xa0] sm:$0xf]
  %v56 = vld [vmem:[%s0 + $0xa4] sm:$0xf]
  %v57 = vld [vmem:[%s0 + $0xa8] sm:$0xf]
  %v58 = vld [vmem:[%s0 + $0xac] sm:$0xf]
  %v59 = vld [vmem:[%s0 + $0xb0] sm:$0xf]
  %v60 = vld [vmem:[%s0 + $0xb4] sm:$0xf]
  %v61 = vld [vmem:[%s0 + $0xb8] sm:$0xf]
  %v62 = vld [vmem:[%s0 + $0xbc] sm:$0xf]
  %v63 = vld [vmem:[%s0 + $0xc0] sm:$0xf]
  %v64 = vld [vmem:[%s0 + $0xc4] sm:$0xf]
  %v65 = vld [vmem:[%s0 + $0xc8] sm:$0xf]
  %v66 = vld [vmem:[%s0 + $0xcc] sm:$0xf]
  %v67 = vld [vmem:[%s0 + $0xd0] sm:$0xf]
  %v68 = vld [vmem:[%s0 + $0xd4] sm:$0xf]
  %v69 = vld [vmem:[%s0 + $0xd8] sm:$0xf]
  %v70 = vld [vmem:[%s0 + $0xdc] sm:$0xf]
  %v71 = vld [vmem:[%s0 + $0xe0] sm:$0xf]
  %v72 = vld [vmem:[%s0 + $0xe4] sm:$0xf]
  %v73 = vld [vmem:[%s0 + $0xe8] sm:$0xf]
  %v74 = vld [vmem:[%s0 + $0xec] sm:$0xf]
  %v75 = vld [vmem:[%s0 + $0xf0] sm:$0xf]
  %v76 = vld [vmem:[%s0 + $0xf4] sm:$0xf]
  %v77 = vld [vmem:[%s0 + $0xf8] sm:$0xf]
  %v78 = vld [vmem:[%s0 + $0xfc] sm:$0xf]
  %v79 = vld [vmem:[%s1] sm:$0xf]
  %v80 = vld [vmem:[%s1 + $0x4] sm:$0xf]
  %v81 = vld [vmem:[%s1 + $0x8] sm:$0xf]
  %v82 = vld [vmem:[%s1 + $0xc] sm:$0xf]
  %v83 = vld [vmem:[%s1 + $0x10] sm:$0xf]
  %v84 = vld [vmem:[%s1 + $0x14] sm:$0xf]
  %v85 = vld [vmem:[%s1 + $0x18] sm:$0xf]
  %v86 = vld [vmem:[%s1 + $0x1c] sm:$0xf]
  %v87 = vld [vmem:[%s1 + $0x20] sm:$0xf]
  %v88 = vld [vmem:[%s1 + $0x24] sm:$0xf]
  %v89 = vld [vmem:[%s1 + $0x28] sm:$0xf]
  %v90 = vld [vmem:[%s1 + $0x2c] sm:$0xf]
  %v91 = vld [vmem:[%s1 + $0x30] sm:$0xf]
  %v92 = vld [vmem:[%s1 + $0x34] sm:$0xf]
  %v93 = vld [vmem:[%s1 + $0x38] sm:$0xf]
  %v94 = vld [vmem:[%s1 + $0x3c] sm:$0xf]
  %v95 = vld [vmem:[%s2] sm:$0x1]
  %v97 = vlaneseq
  %v98 = vshrl.u32 %v97, 7
  %v99 = vsub.s32 0, %v98
  %v100 = vrot.slane %v95, %v99
  %v166 = vunpack.c.l.b16 %v15
  %v167 = vunpack.c.l.b16 %v16
  %v168 = vunpack.c.l.b16 %v17
  %v169 = vunpack.c.l.b16 %v18
  %v170 = vunpack.c.l.b16 %v19
  %v171 = vunpack.c.l.b16 %v20
  %v172 = vunpack.c.l.b16 %v21
  %v173 = vunpack.c.l.b16 %v22
  %v174 = vunpack.c.l.b16 %v23
  %v175 = vunpack.c.l.b16 %v24
  %v176 = vunpack.c.l.b16 %v25
  %v177 = vunpack.c.l.b16 %v26
  %v178 = vunpack.c.l.b16 %v27
  %v179 = vunpack.c.l.b16 %v28
  %v180 = vunpack.c.l.b16 %v29
  %v181 = vunpack.c.l.b16 %v30
  %v182 = vunpack.c.l.b16 %v31
  %v183 = vunpack.c.l.b16 %v32
  %v184 = vunpack.c.l.b16 %v33
  %v185 = vunpack.c.l.b16 %v34
  %v186 = vunpack.c.l.b16 %v35
  %v187 = vunpack.c.l.b16 %v36
  %v188 = vunpack.c.l.b16 %v37
  %v189 = vunpack.c.l.b16 %v38
  %v190 = vunpack.c.l.b16 %v39
  %v191 = vunpack.c.l.b16 %v40
  %v192 = vunpack.c.l.b16 %v41
  %v193 = vunpack.c.l.b16 %v42
  %v194 = vunpack.c.l.b16 %v43
  %v195 = vunpack.c.l.b16 %v44
  %v196 = vunpack.c.l.b16 %v45
  %v197 = vunpack.c.l.b16 %v46
  %v198 = vunpack.c.l.b16 %v47
  %v199 = vunpack.c.l.b16 %v48
  %v200 = vunpack.c.l.b16 %v49
  %v201 = vunpack.c.l.b16 %v50
  %v202 = vunpack.c.l.b16 %v51
  %v203 = vunpack.c.l.b16 %v52
  %v204 = vunpack.c.l.b16 %v53
  %v205 = vunpack.c.l.b16 %v54
  %v206 = vunpack.c.l.b16 %v55
  %v207 = vunpack.c.l.b16 %v56
  %v208 = vunpack.c.l.b16 %v57
  %v209 = vunpack.c.l.b16 %v58
  %v210 = vunpack.c.l.b16 %v59
  %v211 = vunpack.c.l.b16 %v60
  %v212 = vunpack.c.l.b16 %v61
  %v213 = vunpack.c.l.b16 %v62
  %v214 = vunpack.c.l.b16 %v63
  %v215 = vunpack.c.l.b16 %v64
  %v216 = vunpack.c.l.b16 %v65
  %v217 = vunpack.c.l.b16 %v66
  %v218 = vunpack.c.l.b16 %v67
  %v219 = vunpack.c.l.b16 %v68
  %v220 = vunpack.c.l.b16 %v69
  %v221 = vunpack.c.l.b16 %v70
  %v222 = vunpack.c.l.b16 %v71
  %v223 = vunpack.c.l.b16 %v72
  %v224 = vunpack.c.l.b16 %v73
  %v225 = vunpack.c.l.b16 %v74
  %v226 = vunpack.c.l.b16 %v75
  %v227 = vunpack.c.l.b16 %v76
  %v228 = vunpack.c.l.b16 %v77
  %v229 = vunpack.c.l.b16 %v78
  %v230 = vpack.c.b16 %v167, %v166
  %v231 = vpack.c.b16 %v169, %v168
  %v232 = vpack.c.b16 %v171, %v170
  %v233 = vpack.c.b16 %v173, %v172
  %v234 = vpack.c.b16 %v175, %v174
  %v235 = vpack.c.b16 %v177, %v176
  %v236 = vpack.c.b16 %v179, %v178
  %v237 = vpack.c.b16 %v181, %v180
  %v238 = vpack.c.b16 %v183, %v182
  %v239 = vpack.c.b16 %v185, %v184
  %v240 = vpack.c.b16 %v187, %v186
  %v241 = vpack.c.b16 %v189, %v188
  %v242 = vpack.c.b16 %v191, %v190
  %v243 = vpack.c.b16 %v193, %v192
  %v244 = vpack.c.b16 %v195, %v194
  %v245 = vpack.c.b16 %v197, %v196
  %v246 = vpack.c.b16 %v199, %v198
  %v247 = vpack.c.b16 %v201, %v200
  %v248 = vpack.c.b16 %v203, %v202
  %v249 = vpack.c.b16 %v205, %v204
  %v250 = vpack.c.b16 %v207, %v206
  %v251 = vpack.c.b16 %v209, %v208
  %v252 = vpack.c.b16 %v211, %v210
  %v253 = vpack.c.b16 %v213, %v212
  %v254 = vpack.c.b16 %v215, %v214
  %v255 = vpack.c.b16 %v217, %v216
  %v256 = vpack.c.b16 %v219, %v218
  %v257 = vpack.c.b16 %v221, %v220
  %v258 = vpack.c.b16 %v223, %v222
  %v259 = vpack.c.b16 %v225, %v224
  %v260 = vpack.c.b16 %v227, %v226
  %v261 = vpack.c.b16 %v229, %v228
  %v310 = vunpack.c.l.b16 %v79
  %v311 = vunpack.c.l.b16 %v80
  %v312 = vunpack.c.l.b16 %v81
  %v313 = vunpack.c.l.b16 %v82
  %v314 = vunpack.c.l.b16 %v83
  %v315 = vunpack.c.l.b16 %v84
  %v316 = vunpack.c.l.b16 %v85
  %v317 = vunpack.c.l.b16 %v86
  %v318 = vunpack.c.l.b16 %v87
  %v319 = vunpack.c.l.b16 %v88
  %v320 = vunpack.c.l.b16 %v89
  %v321 = vunpack.c.l.b16 %v90
  %v322 = vunpack.c.l.b16 %v91
  %v323 = vunpack.c.l.b16 %v92
  %v324 = vunpack.c.l.b16 %v93
  %v325 = vunpack.c.l.b16 %v94
  %v326 = vpack.c.b16 %v311, %v310
  %v327 = vpack.c.b16 %v313, %v312
  %v328 = vpack.c.b16 %v315, %v314
  %v329 = vpack.c.b16 %v317, %v316
  %v330 = vpack.c.b16 %v319, %v318
  %v331 = vpack.c.b16 %v321, %v320
  %v332 = vpack.c.b16 %v323, %v322
  %v333 = vpack.c.b16 %v325, %v324
  %342 = vmatprep.subr.bf16.mxu0 0
  %343 = vmatpush1.bf16.msra.mxu0 %v333
  %344 = vmatprep.subr.bf16.mxu0 0
  %345 = vmatpush1.bf16.msra.mxu0 %v332
  %346 = vmatprep.subr.bf16.mxu0 0
  %347 = vmatpush1.bf16.msra.mxu0 %v331
  %348 = vmatprep.subr.bf16.mxu0 0
  %349 = vmatpush1.bf16.msra.mxu0 %v330
  %350 = vmatprep.subr.bf16.mxu0 0
  %351 = vmatpush1.bf16.msra.mxu0 %v329
  %352 = vmatprep.subr.bf16.mxu0 0
  %353 = vmatpush1.bf16.msra.mxu0 %v328
  %354 = vmatprep.subr.bf16.mxu0 0
  %355 = vmatpush1.bf16.msra.mxu0 %v327
  %356 = vmatprep.subr.bf16.mxu0 0
  %357 = vmatpush1.bf16.msra.mxu0 %v326
  %358 = vmatprep.subr.bf16.mxu0 0
  %359 = vmatpush2.bf16.msra.mxu0 0
  %360 = vmatprep.subr.bf16.mxu0 0
  %361 = vmatpush2.bf16.msra.mxu0 0
  %362 = vmatprep.subr.bf16.mxu0 0
  %363 = vmatpush2.bf16.msra.mxu0 0
  %364 = vmatprep.subr.bf16.mxu0 0
  %365 = vmatpush2.bf16.msra.mxu0 0
  %366 = vmatprep.subr.bf16.mxu0 0
  %367 = vmatpush2.bf16.msra.mxu0 0
  %368 = vmatprep.subr.bf16.mxu0 0
  %369 = vmatpush2.bf16.msra.mxu0 0
  %370 = vmatprep.subr.bf16.mxu0 0
  %371 = vmatpush2.bf16.msra.mxu0 0
  %372 = vmatprep.subr.bf16.mxu0 0
  %373 = vmatpush2.bf16.msra.mxu0 0
  %374 = vmatprep.mubr.bf16.mxu0 0
  %375 = vmatmul.mubr.bf16.gmra.mxu0 %v230
  %v376 = vpop.f32.mrf.mxu0
  %v377 = vadd.f32 %v100, %v376
  %v378 = vpop.f32.mrf.mxu0
  %v379 = vpop.f32.mrf.mxu0
  %v380 = vadd.f32 %v100, %v379
  %v381 = vpop.f32.mrf.mxu0
  %382 = vmatprep.mubr.bf16.mxu0 0
  %383 = vmatmul.mubr.bf16.gmra.mxu0 %v231
  %v384 = vpop.f32.mrf.mxu0
  %v385 = vadd.f32 %v100, %v384
  %v386 = vpop.f32.mrf.mxu0
  %v387 = vpop.f32.mrf.mxu0
  %v388 = vadd.f32 %v100, %v387
  %v389 = vpop.f32.mrf.mxu0
  %390 = vmatprep.mubr.bf16.mxu0 0
  %391 = vmatmul.mubr.bf16.gmra.mxu0 %v232
  %v392 = vpop.f32.mrf.mxu0
  %v393 = vadd.f32 %v100, %v392
  %v394 = vpop.f32.mrf.mxu0
  %v395 = vpop.f32.mrf.mxu0
  %v396 = vadd.f32 %v100, %v395
  %v397 = vpop.f32.mrf.mxu0
  %398 = vmatprep.mubr.bf16.mxu0 0
  %399 = vmatmul.mubr.bf16.gmra.mxu0 %v233
  %v400 = vpop.f32.mrf.mxu0
  %v401 = vadd.f32 %v100, %v400
  %v402 = vpop.f32.mrf.mxu0
  %v403 = vpop.f32.mrf.mxu0
  %v404 = vadd.f32 %v100, %v403
  %v405 = vpop.f32.mrf.mxu0
  %406 = vmatprep.mubr.bf16.mxu0 0
  %407 = vmatmul.mubr.bf16.gmra.mxu0 %v234
  %v408 = vpop.f32.mrf.mxu0
  %v409 = vadd.f32 %v100, %v408
  %v410 = vpop.f32.mrf.mxu0
  %v411 = vpop.f32.mrf.mxu0
  %v412 = vadd.f32 %v100, %v411
  %v413 = vpop.f32.mrf.mxu0
  %414 = vmatprep.mubr.bf16.mxu0 0
  %415 = vmatmul.mubr.bf16.gmra.mxu0 %v235
  %v416 = vpop.f32.mrf.mxu0
  %v417 = vadd.f32 %v100, %v416
  %v418 = vpop.f32.mrf.mxu0
  %v419 = vpop.f32.mrf.mxu0
  %v420 = vadd.f32 %v100, %v419
  %v421 = vpop.f32.mrf.mxu0
  %422 = vmatprep.mubr.bf16.mxu0 0
  %423 = vmatmul.mubr.bf16.gmra.mxu0 %v236
  %v424 = vpop.f32.mrf.mxu0
  %v425 = vadd.f32 %v100, %v424
  %v426 = vpop.f32.mrf.mxu0
  %v427 = vpop.f32.mrf.mxu0
  %v428 = vadd.f32 %v100, %v427
  %v429 = vpop.f32.mrf.mxu0
  %430 = vmatprep.mubr.bf16.mxu0 0
  %431 = vmatmul.mubr.bf16.gmra.mxu0 %v237
  %v432 = vpop.f32.mrf.mxu0
  %v433 = vadd.f32 %v100, %v432
  %v434 = vpop.f32.mrf.mxu0
  %v435 = vpop.f32.mrf.mxu0
  %v436 = vadd.f32 %v100, %v435
  %v437 = vpop.f32.mrf.mxu0
  %438 = vmatprep.mubr.bf16.mxu0 0
  %439 = vmatmul.mubr.bf16.gmra.mxu0 %v238
  %v440 = vpop.f32.mrf.mxu0
  %v441 = vadd.f32 %v100, %v440
  %v442 = vpop.f32.mrf.mxu0
  %v443 = vpop.f32.mrf.mxu0
  %v444 = vadd.f32 %v100, %v443
  %v445 = vpop.f32.mrf.mxu0
  %446 = vmatprep.mubr.bf16.mxu0 0
  %447 = vmatmul.mubr.bf16.gmra.mxu0 %v239
  %v448 = vpop.f32.mrf.mxu0
  %v449 = vadd.f32 %v100, %v448
  %v450 = vpop.f32.mrf.mxu0
  %v451 = vpop.f32.mrf.mxu0
  %v452 = vadd.f32 %v100, %v451
  %v453 = vpop.f32.mrf.mxu0
  %454 = vmatprep.mubr.bf16.mxu0 0
  %455 = vmatmul.mubr.bf16.gmra.mxu0 %v240
  %v456 = vpop.f32.mrf.mxu0
  %v457 = vadd.f32 %v100, %v456
  %v458 = vpop.f32.mrf.mxu0
  %v459 = vpop.f32.mrf.mxu0
  %v460 = vadd.f32 %v100, %v459
  %v461 = vpop.f32.mrf.mxu0
  %462 = vmatprep.mubr.bf16.mxu0 0
  %463 = vmatmul.mubr.bf16.gmra.mxu0 %v241
  %v464 = vpop.f32.mrf.mxu0
  %v465 = vadd.f32 %v100, %v464
  %v466 = vpop.f32.mrf.mxu0
  %v467 = vpop.f32.mrf.mxu0
  %v468 = vadd.f32 %v100, %v467
  %v469 = vpop.f32.mrf.mxu0
  %470 = vmatprep.mubr.bf16.mxu0 0
  %471 = vmatmul.mubr.bf16.gmra.mxu0 %v242
  %v472 = vpop.f32.mrf.mxu0
  %v473 = vadd.f32 %v100, %v472
  %v474 = vpop.f32.mrf.mxu0
  %v475 = vpop.f32.mrf.mxu0
  %v476 = vadd.f32 %v100, %v475
  %v477 = vpop.f32.mrf.mxu0
  %478 = vmatprep.mubr.bf16.mxu0 0
  %479 = vmatmul.mubr.bf16.gmra.mxu0 %v243
  %v480 = vpop.f32.mrf.mxu0
  %v481 = vadd.f32 %v100, %v480
  %v482 = vpop.f32.mrf.mxu0
  %v483 = vpop.f32.mrf.mxu0
  %v484 = vadd.f32 %v100, %v483
  %v485 = vpop.f32.mrf.mxu0
  %486 = vmatprep.mubr.bf16.mxu0 0
  %487 = vmatmul.mubr.bf16.gmra.mxu0 %v244
  %v488 = vpop.f32.mrf.mxu0
  %v489 = vadd.f32 %v100, %v488
  %v490 = vpop.f32.mrf.mxu0
  %v491 = vpop.f32.mrf.mxu0
  %v492 = vadd.f32 %v100, %v491
  %v493 = vpop.f32.mrf.mxu0
  %494 = vmatprep.mubr.bf16.mxu0 0
  %495 = vmatmul.mubr.bf16.gmra.mxu0 %v245
  %v496 = vpop.f32.mrf.mxu0
  %v497 = vadd.f32 %v100, %v496
  %v498 = vpop.f32.mrf.mxu0
  %v499 = vpop.f32.mrf.mxu0
  %v500 = vadd.f32 %v100, %v499
  %v501 = vpop.f32.mrf.mxu0
  %502 = vmatprep.mubr.bf16.mxu0 0
  %503 = vmatmul.mubr.bf16.gmra.mxu0 %v246
  %v504 = vpop.f32.mrf.mxu0
  %v505 = vadd.f32 %v100, %v504
  %v506 = vpop.f32.mrf.mxu0
  %v507 = vpop.f32.mrf.mxu0
  %v508 = vadd.f32 %v100, %v507
  %v509 = vpop.f32.mrf.mxu0
  %510 = vmatprep.mubr.bf16.mxu0 0
  %511 = vmatmul.mubr.bf16.gmra.mxu0 %v247
  %v512 = vpop.f32.mrf.mxu0
  %v513 = vadd.f32 %v100, %v512
  %v514 = vpop.f32.mrf.mxu0
  %v515 = vpop.f32.mrf.mxu0
  %v516 = vadd.f32 %v100, %v515
  %v517 = vpop.f32.mrf.mxu0
  %518 = vmatprep.mubr.bf16.mxu0 0
  %519 = vmatmul.mubr.bf16.gmra.mxu0 %v248
  %v520 = vpop.f32.mrf.mxu0
  %v521 = vadd.f32 %v100, %v520
  %v522 = vpop.f32.mrf.mxu0
  %v523 = vpop.f32.mrf.mxu0
  %v524 = vadd.f32 %v100, %v523
  %v525 = vpop.f32.mrf.mxu0
  %526 = vmatprep.mubr.bf16.mxu0 0
  %527 = vmatmul.mubr.bf16.gmra.mxu0 %v249
  %v528 = vpop.f32.mrf.mxu0
  %v529 = vadd.f32 %v100, %v528
  %v530 = vpop.f32.mrf.mxu0
  %v531 = vpop.f32.mrf.mxu0
  %v532 = vadd.f32 %v100, %v531
  %v533 = vpop.f32.mrf.mxu0
  %534 = vmatprep.mubr.bf16.mxu0 0
  %535 = vmatmul.mubr.bf16.gmra.mxu0 %v250
  %v536 = vpop.f32.mrf.mxu0
  %v537 = vadd.f32 %v100, %v536
  %v538 = vpop.f32.mrf.mxu0
  %v539 = vpop.f32.mrf.mxu0
  %v540 = vadd.f32 %v100, %v539
  %v541 = vpop.f32.mrf.mxu0
  %542 = vmatprep.mubr.bf16.mxu0 0
  %543 = vmatmul.mubr.bf16.gmra.mxu0 %v251
  %v544 = vpop.f32.mrf.mxu0
  %v545 = vadd.f32 %v100, %v544
  %v546 = vpop.f32.mrf.mxu0
  %v547 = vpop.f32.mrf.mxu0
  %v548 = vadd.f32 %v100, %v547
  %v549 = vpop.f32.mrf.mxu0
  %550 = vmatprep.mubr.bf16.mxu0 0
  %551 = vmatmul.mubr.bf16.gmra.mxu0 %v252
  %v552 = vpop.f32.mrf.mxu0
  %v553 = vadd.f32 %v100, %v552
  %v554 = vpop.f32.mrf.mxu0
  %v555 = vpop.f32.mrf.mxu0
  %v556 = vadd.f32 %v100, %v555
  %v557 = vpop.f32.mrf.mxu0
  %558 = vmatprep.mubr.bf16.mxu0 0
  %559 = vmatmul.mubr.bf16.gmra.mxu0 %v253
  %v560 = vpop.f32.mrf.mxu0
  %v561 = vadd.f32 %v100, %v560
  %v562 = vpop.f32.mrf.mxu0
  %v563 = vpop.f32.mrf.mxu0
  %v564 = vadd.f32 %v100, %v563
  %v565 = vpop.f32.mrf.mxu0
  %566 = vmatprep.mubr.bf16.mxu0 0
  %567 = vmatmul.mubr.bf16.gmra.mxu0 %v254
  %v568 = vpop.f32.mrf.mxu0
  %v569 = vadd.f32 %v100, %v568
  %v570 = vpop.f32.mrf.mxu0
  %v571 = vpop.f32.mrf.mxu0
  %v572 = vadd.f32 %v100, %v571
  %v573 = vpop.f32.mrf.mxu0
  %574 = vmatprep.mubr.bf16.mxu0 0
  %575 = vmatmul.mubr.bf16.gmra.mxu0 %v255
  %v576 = vpop.f32.mrf.mxu0
  %v577 = vadd.f32 %v100, %v576
  %v578 = vpop.f32.mrf.mxu0
  %v579 = vpop.f32.mrf.mxu0
  %v580 = vadd.f32 %v100, %v579
  %v581 = vpop.f32.mrf.mxu0
  %582 = vmatprep.mubr.bf16.mxu0 0
  %583 = vmatmul.mubr.bf16.gmra.mxu0 %v256
  %v584 = vpop.f32.mrf.mxu0
  %v585 = vadd.f32 %v100, %v584
  %v586 = vpop.f32.mrf.mxu0
  %v587 = vpop.f32.mrf.mxu0
  %v588 = vadd.f32 %v100, %v587
  %v589 = vpop.f32.mrf.mxu0
  %590 = vmatprep.mubr.bf16.mxu0 0
  %591 = vmatmul.mubr.bf16.gmra.mxu0 %v257
  %v592 = vpop.f32.mrf.mxu0
  %v593 = vadd.f32 %v100, %v592
  %v594 = vpop.f32.mrf.mxu0
  %v595 = vpop.f32.mrf.mxu0
  %v596 = vadd.f32 %v100, %v595
  %v597 = vpop.f32.mrf.mxu0
  %598 = vmatprep.mubr.bf16.mxu0 0
  %599 = vmatmul.mubr.bf16.gmra.mxu0 %v258
  %v600 = vpop.f32.mrf.mxu0
  %v601 = vadd.f32 %v100, %v600
  %v602 = vpop.f32.mrf.mxu0
  %v603 = vpop.f32.mrf.mxu0
  %v604 = vadd.f32 %v100, %v603
  %v605 = vpop.f32.mrf.mxu0
  %606 = vmatprep.mubr.bf16.mxu0 0
  %607 = vmatmul.mubr.bf16.gmra.mxu0 %v259
  %v608 = vpop.f32.mrf.mxu0
  %v609 = vadd.f32 %v100, %v608
  %v610 = vpop.f32.mrf.mxu0
  %v611 = vpop.f32.mrf.mxu0
  %v612 = vadd.f32 %v100, %v611
  %v613 = vpop.f32.mrf.mxu0
  %614 = vmatprep.mubr.bf16.mxu0 0
  %615 = vmatmul.mubr.bf16.gmra.mxu0 %v260
  %v616 = vpop.f32.mrf.mxu0
  %v617 = vadd.f32 %v100, %v616
  %v618 = vpop.f32.mrf.mxu0
  %v619 = vpop.f32.mrf.mxu0
  %v620 = vadd.f32 %v100, %v619
  %v621 = vpop.f32.mrf.mxu0
  %622 = vmatprep.mubr.bf16.mxu0 0
  %623 = vmatmul.mubr.bf16.gmra.mxu0 %v261
  %v624 = vpop.f32.mrf.mxu0
  %v625 = vadd.f32 %v100, %v624
  %v626 = vpop.f32.mrf.mxu0
  %v627 = vpop.f32.mrf.mxu0
  %v628 = vadd.f32 %v100, %v627
  %v629 = vpop.f32.mrf.mxu0
  %630 = vdwg.mxu0
  %v631 = vmul.f32 %v377, 0.2
  %v632 = vmul.f32 %v380, 0.2
  %v633 = vmul.f32 %v385, 0.2
  %v634 = vmul.f32 %v388, 0.2
  %v635 = vmul.f32 %v393, 0.2
  %v636 = vmul.f32 %v396, 0.2
  %v637 = vmul.f32 %v401, 0.2
  %v638 = vmul.f32 %v404, 0.2
  %v639 = vmul.f32 %v409, 0.2
  %v640 = vmul.f32 %v412, 0.2
  %v641 = vmul.f32 %v417, 0.2
  %v642 = vmul.f32 %v420, 0.2
  %v643 = vmul.f32 %v425, 0.2
  %v644 = vmul.f32 %v428, 0.2
  %v645 = vmul.f32 %v433, 0.2
  %v646 = vmul.f32 %v436, 0.2
  %v647 = vmul.f32 %v441, 0.2
  %v648 = vmul.f32 %v444, 0.2
  %v649 = vmul.f32 %v449, 0.2
  %v650 = vmul.f32 %v452, 0.2
  %v651 = vmul.f32 %v457, 0.2
  %v652 = vmul.f32 %v460, 0.2
  %v653 = vmul.f32 %v465, 0.2
  %v654 = vmul.f32 %v468, 0.2
  %v655 = vmul.f32 %v473, 0.2
  %v656 = vmul.f32 %v476, 0.2
  %v657 = vmul.f32 %v481, 0.2
  %v658 = vmul.f32 %v484, 0.2
  %v659 = vmul.f32 %v489, 0.2
  %v660 = vmul.f32 %v492, 0.2
  %v661 = vmul.f32 %v497, 0.2
  %v662 = vmul.f32 %v500, 0.2
  %v663 = vmul.f32 %v505, 0.2
  %v664 = vmul.f32 %v508, 0.2
  %v665 = vmul.f32 %v513, 0.2
  %v666 = vmul.f32 %v516, 0.2
  %v667 = vmul.f32 %v521, 0.2
  %v668 = vmul.f32 %v524, 0.2
  %v669 = vmul.f32 %v529, 0.2
  %v670 = vmul.f32 %v532, 0.2
  %v671 = vmul.f32 %v537, 0.2
  %v672 = vmul.f32 %v540, 0.2
  %v673 = vmul.f32 %v545, 0.2
  %v674 = vmul.f32 %v548, 0.2
  %v675 = vmul.f32 %v553, 0.2
  %v676 = vmul.f32 %v556, 0.2
  %v677 = vmul.f32 %v561, 0.2
  %v678 = vmul.f32 %v564, 0.2
  %v679 = vmul.f32 %v569, 0.2
  %v680 = vmul.f32 %v572, 0.2
  %v681 = vmul.f32 %v577, 0.2
  %v682 = vmul.f32 %v580, 0.2
  %v683 = vmul.f32 %v585, 0.2
  %v684 = vmul.f32 %v588, 0.2
  %v685 = vmul.f32 %v593, 0.2
  %v686 = vmul.f32 %v596, 0.2
  %v687 = vmul.f32 %v601, 0.2
  %v688 = vmul.f32 %v604, 0.2
  %v689 = vmul.f32 %v609, 0.2
  %v690 = vmul.f32 %v612, 0.2
  %v691 = vmul.f32 %v617, 0.2
  %v692 = vmul.f32 %v620, 0.2
  %v693 = vmul.f32 %v625, 0.2
  %v694 = vmul.f32 %v628, 0.2
  %v695 = vmax.f32 %v377, %v631
  %v696 = vmax.f32 %v380, %v632
  %v697 = vmax.f32 %v385, %v633
  %v698 = vmax.f32 %v388, %v634
  %v699 = vmax.f32 %v393, %v635
  %v700 = vmax.f32 %v396, %v636
  %v701 = vmax.f32 %v401, %v637
  %v702 = vmax.f32 %v404, %v638
  %v703 = vmax.f32 %v409, %v639
  %v704 = vmax.f32 %v412, %v640
  %v705 = vmax.f32 %v417, %v641
  %v706 = vmax.f32 %v420, %v642
  %v707 = vmax.f32 %v425, %v643
  %v708 = vmax.f32 %v428, %v644
  %v709 = vmax.f32 %v433, %v645
  %v710 = vmax.f32 %v436, %v646
  %v711 = vmax.f32 %v441, %v647
  %v712 = vmax.f32 %v444, %v648
  %v713 = vmax.f32 %v449, %v649
  %v714 = vmax.f32 %v452, %v650
  %v715 = vmax.f32 %v457, %v651
  %v716 = vmax.f32 %v460, %v652
  %v717 = vmax.f32 %v465, %v653
  %v718 = vmax.f32 %v468, %v654
  %v719 = vmax.f32 %v473, %v655
  %v720 = vmax.f32 %v476, %v656
  %v721 = vmax.f32 %v481, %v657
  %v722 = vmax.f32 %v484, %v658
  %v723 = vmax.f32 %v489, %v659
  %v724 = vmax.f32 %v492, %v660
  %v725 = vmax.f32 %v497, %v661
  %v726 = vmax.f32 %v500, %v662
  %v727 = vmax.f32 %v505, %v663
  %v728 = vmax.f32 %v508, %v664
  %v729 = vmax.f32 %v513, %v665
  %v730 = vmax.f32 %v516, %v666
  %v731 = vmax.f32 %v521, %v667
  %v732 = vmax.f32 %v524, %v668
  %v733 = vmax.f32 %v529, %v669
  %v734 = vmax.f32 %v532, %v670
  %v735 = vmax.f32 %v537, %v671
  %v736 = vmax.f32 %v540, %v672
  %v737 = vmax.f32 %v545, %v673
  %v738 = vmax.f32 %v548, %v674
  %v739 = vmax.f32 %v553, %v675
  %v740 = vmax.f32 %v556, %v676
  %v741 = vmax.f32 %v561, %v677
  %v742 = vmax.f32 %v564, %v678
  %v743 = vmax.f32 %v569, %v679
  %v744 = vmax.f32 %v572, %v680
  %v745 = vmax.f32 %v577, %v681
  %v746 = vmax.f32 %v580, %v682
  %v747 = vmax.f32 %v585, %v683
  %v748 = vmax.f32 %v588, %v684
  %v749 = vmax.f32 %v593, %v685
  %v750 = vmax.f32 %v596, %v686
  %v751 = vmax.f32 %v601, %v687
  %v752 = vmax.f32 %v604, %v688
  %v753 = vmax.f32 %v609, %v689
  %v754 = vmax.f32 %v612, %v690
  %v755 = vmax.f32 %v617, %v691
  %v756 = vmax.f32 %v620, %v692
  %v757 = vmax.f32 %v625, %v693
  %v758 = vmax.f32 %v628, %v694
  %v759 = vpack.c.bf16 %v696, %v695
  %v760 = vpack.c.bf16 %v698, %v697
  %v761 = vpack.c.bf16 %v700, %v699
  %v762 = vpack.c.bf16 %v702, %v701
  %v763 = vpack.c.bf16 %v704, %v703
  %v764 = vpack.c.bf16 %v706, %v705
  %v765 = vpack.c.bf16 %v708, %v707
  %v766 = vpack.c.bf16 %v710, %v709
  %v767 = vpack.c.bf16 %v712, %v711
  %v768 = vpack.c.bf16 %v714, %v713
  %v769 = vpack.c.bf16 %v716, %v715
  %v770 = vpack.c.bf16 %v718, %v717
  %v771 = vpack.c.bf16 %v720, %v719
  %v772 = vpack.c.bf16 %v722, %v721
  %v773 = vpack.c.bf16 %v724, %v723
  %v774 = vpack.c.bf16 %v726, %v725
  %v775 = vpack.c.bf16 %v728, %v727
  %v776 = vpack.c.bf16 %v730, %v729
  %v777 = vpack.c.bf16 %v732, %v731
  %v778 = vpack.c.bf16 %v734, %v733
  %v779 = vpack.c.bf16 %v736, %v735
  %v780 = vpack.c.bf16 %v738, %v737
  %v781 = vpack.c.bf16 %v740, %v739
  %v782 = vpack.c.bf16 %v742, %v741
  %v783 = vpack.c.bf16 %v744, %v743
  %v784 = vpack.c.bf16 %v746, %v745
  %v785 = vpack.c.bf16 %v748, %v747
  %v786 = vpack.c.bf16 %v750, %v749
  %v787 = vpack.c.bf16 %v752, %v751
  %v788 = vpack.c.bf16 %v754, %v753
  %v789 = vpack.c.bf16 %v756, %v755
  %v790 = vpack.c.bf16 %v758, %v757
  %v823 = vunpack.c.l.b16 %v759
  %v824 = vunpack.c.h.b16 %v759
  %v825 = vunpack.c.l.b16 %v760
  %v826 = vunpack.c.h.b16 %v760
  %v827 = vunpack.c.l.b16 %v761
  %v828 = vunpack.c.h.b16 %v761
  %v829 = vunpack.c.l.b16 %v762
  %v830 = vunpack.c.h.b16 %v762
  %v831 = vunpack.c.l.b16 %v763
  %v832 = vunpack.c.h.b16 %v763
  %v833 = vunpack.c.l.b16 %v764
  %v834 = vunpack.c.h.b16 %v764
  %v835 = vunpack.c.l.b16 %v765
  %v836 = vunpack.c.h.b16 %v765
  %v837 = vunpack.c.l.b16 %v766
  %v838 = vunpack.c.h.b16 %v766
  %v839 = vunpack.c.l.b16 %v767
  %v840 = vunpack.c.h.b16 %v767
  %v841 = vunpack.c.l.b16 %v768
  %v842 = vunpack.c.h.b16 %v768
  %v843 = vunpack.c.l.b16 %v769
  %v844 = vunpack.c.h.b16 %v769
  %v845 = vunpack.c.l.b16 %v770
  %v846 = vunpack.c.h.b16 %v770
  %v847 = vunpack.c.l.b16 %v771
  %v848 = vunpack.c.h.b16 %v771
  %v849 = vunpack.c.l.b16 %v772
  %v850 = vunpack.c.h.b16 %v772
  %v851 = vunpack.c.l.b16 %v773
  %v852 = vunpack.c.h.b16 %v773
  %v853 = vunpack.c.l.b16 %v774
  %v854 = vunpack.c.h.b16 %v774
  %v855 = vunpack.c.l.b16 %v775
  %v856 = vunpack.c.h.b16 %v775
  %v857 = vunpack.c.l.b16 %v776
  %v858 = vunpack.c.h.b16 %v776
  %v859 = vunpack.c.l.b16 %v777
  %v860 = vunpack.c.h.b16 %v777
  %v861 = vunpack.c.l.b16 %v778
  %v862 = vunpack.c.h.b16 %v778
  %v863 = vunpack.c.l.b16 %v779
  %v864 = vunpack.c.h.b16 %v779
  %v865 = vunpack.c.l.b16 %v780
  %v866 = vunpack.c.h.b16 %v780
  %v867 = vunpack.c.l.b16 %v781
  %v868 = vunpack.c.h.b16 %v781
  %v869 = vunpack.c.l.b16 %v782
  %v870 = vunpack.c.h.b16 %v782
  %v871 = vunpack.c.l.b16 %v783
  %v872 = vunpack.c.h.b16 %v783
  %v873 = vunpack.c.l.b16 %v784
  %v874 = vunpack.c.h.b16 %v784
  %v875 = vunpack.c.l.b16 %v785
  %v876 = vunpack.c.h.b16 %v785
  %v877 = vunpack.c.l.b16 %v786
  %v878 = vunpack.c.h.b16 %v786
  %v879 = vunpack.c.l.b16 %v787
  %v880 = vunpack.c.h.b16 %v787
  %v881 = vunpack.c.l.b16 %v788
  %v882 = vunpack.c.h.b16 %v788
  %v883 = vunpack.c.l.b16 %v789
  %v884 = vunpack.c.h.b16 %v789
  %v885 = vunpack.c.l.b16 %v790
  %v886 = vunpack.c.h.b16 %v790
  %v887 = vpack.c.b16 %v823, %v823
  %v888 = vpack.c.b16 %v824, %v824
  %v889 = vpack.c.b16 %v825, %v825
  %v890 = vpack.c.b16 %v826, %v826
  %v891 = vpack.c.b16 %v827, %v827
  %v892 = vpack.c.b16 %v828, %v828
  %v893 = vpack.c.b16 %v829, %v829
  %v894 = vpack.c.b16 %v830, %v830
  %v895 = vpack.c.b16 %v831, %v831
  %v896 = vpack.c.b16 %v832, %v832
  %v897 = vpack.c.b16 %v833, %v833
  %v898 = vpack.c.b16 %v834, %v834
  %v899 = vpack.c.b16 %v835, %v835
  %v900 = vpack.c.b16 %v836, %v836
  %v901 = vpack.c.b16 %v837, %v837
  %v902 = vpack.c.b16 %v838, %v838
  %v903 = vpack.c.b16 %v839, %v839
  %v904 = vpack.c.b16 %v840, %v840
  %v905 = vpack.c.b16 %v841, %v841
  %v906 = vpack.c.b16 %v842, %v842
  %v907 = vpack.c.b16 %v843, %v843
  %v908 = vpack.c.b16 %v844, %v844
  %v909 = vpack.c.b16 %v845, %v845
  %v910 = vpack.c.b16 %v846, %v846
  %v911 = vpack.c.b16 %v847, %v847
  %v912 = vpack.c.b16 %v848, %v848
  %v913 = vpack.c.b16 %v849, %v849
  %v914 = vpack.c.b16 %v850, %v850
  %v915 = vpack.c.b16 %v851, %v851
  %v916 = vpack.c.b16 %v852, %v852
  %v917 = vpack.c.b16 %v853, %v853
  %v918 = vpack.c.b16 %v854, %v854
  %v919 = vpack.c.b16 %v855, %v855
  %v920 = vpack.c.b16 %v856, %v856
  %v921 = vpack.c.b16 %v857, %v857
  %v922 = vpack.c.b16 %v858, %v858
  %v923 = vpack.c.b16 %v859, %v859
  %v924 = vpack.c.b16 %v860, %v860
  %v925 = vpack.c.b16 %v861, %v861
  %v926 = vpack.c.b16 %v862, %v862
  %v927 = vpack.c.b16 %v863, %v863
  %v928 = vpack.c.b16 %v864, %v864
  %v929 = vpack.c.b16 %v865, %v865
  %v930 = vpack.c.b16 %v866, %v866
  %v931 = vpack.c.b16 %v867, %v867
  %v932 = vpack.c.b16 %v868, %v868
  %v933 = vpack.c.b16 %v869, %v869
  %v934 = vpack.c.b16 %v870, %v870
  %v935 = vpack.c.b16 %v871, %v871
  %v936 = vpack.c.b16 %v872, %v872
  %v937 = vpack.c.b16 %v873, %v873
  %v938 = vpack.c.b16 %v874, %v874
  %v939 = vpack.c.b16 %v875, %v875
  %v940 = vpack.c.b16 %v876, %v876
  %v941 = vpack.c.b16 %v877, %v877
  %v942 = vpack.c.b16 %v878, %v878
  %v943 = vpack.c.b16 %v879, %v879
  %v944 = vpack.c.b16 %v880, %v880
  %v945 = vpack.c.b16 %v881, %v881
  %v946 = vpack.c.b16 %v882, %v882
  %v947 = vpack.c.b16 %v883, %v883
  %v948 = vpack.c.b16 %v884, %v884
  %v949 = vpack.c.b16 %v885, %v885
  %v950 = vpack.c.b16 %v886, %v886
  %vm1015 = vcmask 125952
  %1016 = vst.msk [vmem:[%s3] sm:$0xf] %vm1015, %v887
  %1017 = vst.msk [vmem:[%s3 + $0x4] sm:$0xf] %vm1015, %v888
  %1018 = vst.msk [vmem:[%s3 + $0x8] sm:$0xf] %vm1015, %v889
  %1019 = vst.msk [vmem:[%s3 + $0xc] sm:$0xf] %vm1015, %v890
  %1020 = vst.msk [vmem:[%s3 + $0x10] sm:$0xf] %vm1015, %v891
  %1021 = vst.msk [vmem:[%s3 + $0x14] sm:$0xf] %vm1015, %v892
  %1022 = vst.msk [vmem:[%s3 + $0x18] sm:$0xf] %vm1015, %v893
  %1023 = vst.msk [vmem:[%s3 + $0x1c] sm:$0xf] %vm1015, %v894
  %1024 = vst.msk [vmem:[%s3 + $0x20] sm:$0xf] %vm1015, %v895
  %1025 = vst.msk [vmem:[%s3 + $0x24] sm:$0xf] %vm1015, %v896
  %1026 = vst.msk [vmem:[%s3 + $0x28] sm:$0xf] %vm1015, %v897
  %1027 = vst.msk [vmem:[%s3 + $0x2c] sm:$0xf] %vm1015, %v898
  %1028 = vst.msk [vmem:[%s3 + $0x30] sm:$0xf] %vm1015, %v899
  %1029 = vst.msk [vmem:[%s3 + $0x34] sm:$0xf] %vm1015, %v900
  %1030 = vst.msk [vmem:[%s3 + $0x38] sm:$0xf] %vm1015, %v901
  %1031 = vst.msk [vmem:[%s3 + $0x3c] sm:$0xf] %vm1015, %v902
  %1032 = vst.msk [vmem:[%s3 + $0x40] sm:$0xf] %vm1015, %v903
  %1033 = vst.msk [vmem:[%s3 + $0x44] sm:$0xf] %vm1015, %v904
  %1034 = vst.msk [vmem:[%s3 + $0x48] sm:$0xf] %vm1015, %v905
  %1035 = vst.msk [vmem:[%s3 + $0x4c] sm:$0xf] %vm1015, %v906
  %1036 = vst.msk [vmem:[%s3 + $0x50] sm:$0xf] %vm1015, %v907
  %1037 = vst.msk [vmem:[%s3 + $0x54] sm:$0xf] %vm1015, %v908
  %1038 = vst.msk [vmem:[%s3 + $0x58] sm:$0xf] %vm1015, %v909
  %1039 = vst.msk [vmem:[%s3 + $0x5c] sm:$0xf] %vm1015, %v910
  %1040 = vst.msk [vmem:[%s3 + $0x60] sm:$0xf] %vm1015, %v911
  %1041 = vst.msk [vmem:[%s3 + $0x64] sm:$0xf] %vm1015, %v912
  %1042 = vst.msk [vmem:[%s3 + $0x68] sm:$0xf] %vm1015, %v913
  %1043 = vst.msk [vmem:[%s3 + $0x6c] sm:$0xf] %vm1015, %v914
  %1044 = vst.msk [vmem:[%s3 + $0x70] sm:$0xf] %vm1015, %v915
  %1045 = vst.msk [vmem:[%s3 + $0x74] sm:$0xf] %vm1015, %v916
  %1046 = vst.msk [vmem:[%s3 + $0x78] sm:$0xf] %vm1015, %v917
  %1047 = vst.msk [vmem:[%s3 + $0x7c] sm:$0xf] %vm1015, %v918
  %1048 = vst.msk [vmem:[%s3 + $0x80] sm:$0xf] %vm1015, %v919
  %1049 = vst.msk [vmem:[%s3 + $0x84] sm:$0xf] %vm1015, %v920
  %1050 = vst.msk [vmem:[%s3 + $0x88] sm:$0xf] %vm1015, %v921
  %1051 = vst.msk [vmem:[%s3 + $0x8c] sm:$0xf] %vm1015, %v922
  %1052 = vst.msk [vmem:[%s3 + $0x90] sm:$0xf] %vm1015, %v923
  %1053 = vst.msk [vmem:[%s3 + $0x94] sm:$0xf] %vm1015, %v924
  %1054 = vst.msk [vmem:[%s3 + $0x98] sm:$0xf] %vm1015, %v925
  %1055 = vst.msk [vmem:[%s3 + $0x9c] sm:$0xf] %vm1015, %v926
  %1056 = vst.msk [vmem:[%s3 + $0xa0] sm:$0xf] %vm1015, %v927
  %1057 = vst.msk [vmem:[%s3 + $0xa4] sm:$0xf] %vm1015, %v928
  %1058 = vst.msk [vmem:[%s3 + $0xa8] sm:$0xf] %vm1015, %v929
  %1059 = vst.msk [vmem:[%s3 + $0xac] sm:$0xf] %vm1015, %v930
  %1060 = vst.msk [vmem:[%s3 + $0xb0] sm:$0xf] %vm1015, %v931
  %1061 = vst.msk [vmem:[%s3 + $0xb4] sm:$0xf] %vm1015, %v932
  %1062 = vst.msk [vmem:[%s3 + $0xb8] sm:$0xf] %vm1015, %v933
  %1063 = vst.msk [vmem:[%s3 + $0xbc] sm:$0xf] %vm1015, %v934
  %1064 = vst.msk [vmem:[%s3 + $0xc0] sm:$0xf] %vm1015, %v935
  %1065 = vst.msk [vmem:[%s3 + $0xc4] sm:$0xf] %vm1015, %v936
  %1066 = vst.msk [vmem:[%s3 + $0xc8] sm:$0xf] %vm1015, %v937
  %1067 = vst.msk [vmem:[%s3 + $0xcc] sm:$0xf] %vm1015, %v938
  %1068 = vst.msk [vmem:[%s3 + $0xd0] sm:$0xf] %vm1015, %v939
  %1069 = vst.msk [vmem:[%s3 + $0xd4] sm:$0xf] %vm1015, %v940
  %1070 = vst.msk [vmem:[%s3 + $0xd8] sm:$0xf] %vm1015, %v941
  %1071 = vst.msk [vmem:[%s3 + $0xdc] sm:$0xf] %vm1015, %v942
  %1072 = vst.msk [vmem:[%s3 + $0xe0] sm:$0xf] %vm1015, %v943
  %1073 = vst.msk [vmem:[%s3 + $0xe4] sm:$0xf] %vm1015, %v944
  %1074 = vst.msk [vmem:[%s3 + $0xe8] sm:$0xf] %vm1015, %v945
  %1075 = vst.msk [vmem:[%s3 + $0xec] sm:$0xf] %vm1015, %v946
  %1076 = vst.msk [vmem:[%s3 + $0xf0] sm:$0xf] %vm1015, %v947
  %1077 = vst.msk [vmem:[%s3 + $0xf4] sm:$0xf] %vm1015, %v948
  %1078 = vst.msk [vmem:[%s3 + $0xf8] sm:$0xf] %vm1015, %v949
  %1079 = vst.msk [vmem:[%s3 + $0xfc] sm:$0xf] %vm1015, %v950
  // Predicated region
  $region14: #{forward.13} parent=0 // pred_check
    _
  $region15: #{forward.13} parent=0 // pred_check_branch
    %1081 = sbr.rel (0) target = $region17
  $region16: #{forward.13} parent=0 // pred_region
    _
  $region17: #{forward.13} parent=0 // pred_fallthru
    _
  // Predicated region
  $region18: #{forward.13} parent=0 // pred_check
    _
  $region19: #{forward.13} parent=0 // pred_check_branch
    %1083 = sbr.rel (0) target = $region21
  $region20: #{forward.13} parent=0 // pred_region
    _
  $region21: #{forward.13} parent=0 // pred_fallthru
    _

// kernel: forward.14
$region0: #{forward.14}
  #allocation0 [shape = 'u32[]', space=smem, size = 0x4, offset = 0x4, fixed_abs, tag = 'smem constant byte address 0x4 - core index']
  #allocation1 [shape = 'u32[144,128]{1,0:T(1,128)}', space=vmem, size = 0x12000, scoped, tag = 'internal scratch']
  %s0 = inlined_call_operand.vmem [shape: bf16[128,256], index: 0, kind: input, shape index: {}]
  %s1 = inlined_call_operand.vmem [shape: bf16[256,16], index: 1, kind: input, shape index: {}]
  %s2 = inlined_call_operand.vmem [shape: f32[1,16], index: 2, kind: input, shape index: {}]
  %s3 = inlined_call_operand.vmem [shape: bf16[128,16], index: 3, kind: output, shape index: {}]
  %s4 = sld [smem:[#allocation0]]
  $region22: #{forward.14} parent=0
    _
  %s6 = ssub.s32 1, %s4
  %s7 = scalar_select 0, %s6, %s4
  // Predicated region
  $region2: #{forward.14} parent=0 // pred_check
    _
  $region3: #{forward.14} parent=0 // pred_check_branch
    %9 = sbr.rel (0) target = $region5
  $region4: #{forward.14} parent=0 // pred_region
    _
  $region5: #{forward.14} parent=0 // pred_fallthru
    _
  // Predicated region
  $region6: #{forward.14} parent=0 // pred_check
    _
  $region7: #{forward.14} parent=0 // pred_check_branch
    %11 = sbr.rel (0) target = $region9
  $region8: #{forward.14} parent=0 // pred_region
    _
  $region9: #{forward.14} parent=0 // pred_fallthru
    _
  // Predicated region
  $region10: #{forward.14} parent=0 // pred_check
    _
  $region11: #{forward.14} parent=0 // pred_check_branch
    %13 = sbr.rel (0) target = $region13
  $region12: #{forward.14} parent=0 // pred_region
    _
  $region13: #{forward.14} parent=0 // pred_fallthru
    _
  %v15 = vld [vmem:[%s0] sm:$0xff]
  %v16 = vld [vmem:[%s0 + $0x8] sm:$0xff]
  %v17 = vld [vmem:[%s0 + $0x10] sm:$0xff]
  %v18 = vld [vmem:[%s0 + $0x18] sm:$0xff]
  %v19 = vld [vmem:[%s0 + $0x20] sm:$0xff]
  %v20 = vld [vmem:[%s0 + $0x28] sm:$0xff]
  %v21 = vld [vmem:[%s0 + $0x30] sm:$0xff]
  %v22 = vld [vmem:[%s0 + $0x38] sm:$0xff]
  %v23 = vld [vmem:[%s0 + $0x40] sm:$0xff]
  %v24 = vld [vmem:[%s0 + $0x48] sm:$0xff]
  %v25 = vld [vmem:[%s0 + $0x50] sm:$0xff]
  %v26 = vld [vmem:[%s0 + $0x58] sm:$0xff]
  %v27 = vld [vmem:[%s0 + $0x60] sm:$0xff]
  %v28 = vld [vmem:[%s0 + $0x68] sm:$0xff]
  %v29 = vld [vmem:[%s0 + $0x70] sm:$0xff]
  %v30 = vld [vmem:[%s0 + $0x78] sm:$0xff]
  %v31 = vld [vmem:[%s1] sm:$0xf]
  %v32 = vld [vmem:[%s1 + $0x4] sm:$0xf]
  %v33 = vld [vmem:[%s1 + $0x8] sm:$0xf]
  %v34 = vld [vmem:[%s1 + $0xc] sm:$0xf]
  %v35 = vld [vmem:[%s1 + $0x10] sm:$0xf]
  %v36 = vld [vmem:[%s1 + $0x14] sm:$0xf]
  %v37 = vld [vmem:[%s1 + $0x18] sm:$0xf]
  %v38 = vld [vmem:[%s1 + $0x1c] sm:$0xf]
  %v39 = vld [vmem:[%s1 + $0x20] sm:$0xf]
  %v40 = vld [vmem:[%s1 + $0x24] sm:$0xf]
  %v41 = vld [vmem:[%s1 + $0x28] sm:$0xf]
  %v42 = vld [vmem:[%s1 + $0x2c] sm:$0xf]
  %v43 = vld [vmem:[%s1 + $0x30] sm:$0xf]
  %v44 = vld [vmem:[%s1 + $0x34] sm:$0xf]
  %v45 = vld [vmem:[%s1 + $0x38] sm:$0xf]
  %v46 = vld [vmem:[%s1 + $0x3c] sm:$0xf]
  %v47 = vld [vmem:[%s1 + $0x40] sm:$0xf]
  %v48 = vld [vmem:[%s1 + $0x44] sm:$0xf]
  %v49 = vld [vmem:[%s1 + $0x48] sm:$0xf]
  %v50 = vld [vmem:[%s1 + $0x4c] sm:$0xf]
  %v51 = vld [vmem:[%s1 + $0x50] sm:$0xf]
  %v52 = vld [vmem:[%s1 + $0x54] sm:$0xf]
  %v53 = vld [vmem:[%s1 + $0x58] sm:$0xf]
  %v54 = vld [vmem:[%s1 + $0x5c] sm:$0xf]
  %v55 = vld [vmem:[%s1 + $0x60] sm:$0xf]
  %v56 = vld [vmem:[%s1 + $0x64] sm:$0xf]
  %v57 = vld [vmem:[%s1 + $0x68] sm:$0xf]
  %v58 = vld [vmem:[%s1 + $0x6c] sm:$0xf]
  %v59 = vld [vmem:[%s1 + $0x70] sm:$0xf]
  %v60 = vld [vmem:[%s1 + $0x74] sm:$0xf]
  %v61 = vld [vmem:[%s1 + $0x78] sm:$0xf]
  %v62 = vld [vmem:[%s1 + $0x7c] sm:$0xf]
  %v63 = vld [vmem:[%s2] sm:$0x1]
  %v65 = vlaneseq
  %v66 = vshrl.u32 %v65, 7
  %v67 = vsub.s32 0, %v66
  %v68 = vrot.slane %v63, %v67
  %v86 = vunpack.c.l.b16 %v15
  %v87 = vunpack.c.h.b16 %v15
  %v88 = vunpack.c.l.b16 %v16
  %v89 = vunpack.c.h.b16 %v16
  %v90 = vunpack.c.l.b16 %v17
  %v91 = vunpack.c.h.b16 %v17
  %v92 = vunpack.c.l.b16 %v18
  %v93 = vunpack.c.h.b16 %v18
  %v94 = vunpack.c.l.b16 %v19
  %v95 = vunpack.c.h.b16 %v19
  %v96 = vunpack.c.l.b16 %v20
  %v97 = vunpack.c.h.b16 %v20
  %v98 = vunpack.c.l.b16 %v21
  %v99 = vunpack.c.h.b16 %v21
  %v100 = vunpack.c.l.b16 %v22
  %v101 = vunpack.c.h.b16 %v22
  %v102 = vunpack.c.l.b16 %v23
  %v103 = vunpack.c.h.b16 %v23
  %v104 = vunpack.c.l.b16 %v24
  %v105 = vunpack.c.h.b16 %v24
  %v106 = vunpack.c.l.b16 %v25
  %v107 = vunpack.c.h.b16 %v25
  %v108 = vunpack.c.l.b16 %v26
  %v109 = vunpack.c.h.b16 %v26
  %v110 = vunpack.c.l.b16 %v27
  %v111 = vunpack.c.h.b16 %v27
  %v112 = vunpack.c.l.b16 %v28
  %v113 = vunpack.c.h.b16 %v28
  %v114 = vunpack.c.l.b16 %v29
  %v115 = vunpack.c.h.b16 %v29
  %v116 = vunpack.c.l.b16 %v30
  %v117 = vunpack.c.h.b16 %v30
  %v118 = vpack.c.b16 %v88, %v86
  %v119 = vpack.c.b16 %v89, %v87
  %v120 = vpack.c.b16 %v92, %v90
  %v121 = vpack.c.b16 %v93, %v91
  %v122 = vpack.c.b16 %v96, %v94
  %v123 = vpack.c.b16 %v97, %v95
  %v124 = vpack.c.b16 %v100, %v98
  %v125 = vpack.c.b16 %v101, %v99
  %v126 = vpack.c.b16 %v104, %v102
  %v127 = vpack.c.b16 %v105, %v103
  %v128 = vpack.c.b16 %v108, %v106
  %v129 = vpack.c.b16 %v109, %v107
  %v130 = vpack.c.b16 %v112, %v110
  %v131 = vpack.c.b16 %v113, %v111
  %v132 = vpack.c.b16 %v116, %v114
  %v133 = vpack.c.b16 %v117, %v115
  %v182 = vunpack.c.l.b16 %v31
  %v183 = vunpack.c.l.b16 %v32
  %v184 = vunpack.c.l.b16 %v33
  %v185 = vunpack.c.l.b16 %v34
  %v186 = vunpack.c.l.b16 %v35
  %v187 = vunpack.c.l.b16 %v36
  %v188 = vunpack.c.l.b16 %v37
  %v189 = vunpack.c.l.b16 %v38
  %v190 = vunpack.c.l.b16 %v39
  %v191 = vunpack.c.l.b16 %v40
  %v192 = vunpack.c.l.b16 %v41
  %v193 = vunpack.c.l.b16 %v42
  %v194 = vunpack.c.l.b16 %v43
  %v195 = vunpack.c.l.b16 %v44
  %v196 = vunpack.c.l.b16 %v45
  %v197 = vunpack.c.l.b16 %v46
  %v198 = vunpack.c.l.b16 %v47
  %v199 = vunpack.c.l.b16 %v48
  %v200 = vunpack.c.l.b16 %v49
  %v201 = vunpack.c.l.b16 %v50
  %v202 = vunpack.c.l.b16 %v51
  %v203 = vunpack.c.l.b16 %v52
  %v204 = vunpack.c.l.b16 %v53
  %v205 = vunpack.c.l.b16 %v54
  %v206 = vunpack.c.l.b16 %v55
  %v207 = vunpack.c.l.b16 %v56
  %v208 = vunpack.c.l.b16 %v57
  %v209 = vunpack.c.l.b16 %v58
  %v210 = vunpack.c.l.b16 %v59
  %v211 = vunpack.c.l.b16 %v60
  %v212 = vunpack.c.l.b16 %v61
  %v213 = vunpack.c.l.b16 %v62
  %v214 = vpack.c.b16 %v183, %v182
  %v215 = vpack.c.b16 %v185, %v184
  %v216 = vpack.c.b16 %v187, %v186
  %v217 = vpack.c.b16 %v189, %v188
  %v218 = vpack.c.b16 %v191, %v190
  %v219 = vpack.c.b16 %v193, %v192
  %v220 = vpack.c.b16 %v195, %v194
  %v221 = vpack.c.b16 %v197, %v196
  %v222 = vpack.c.b16 %v199, %v198
  %v223 = vpack.c.b16 %v201, %v200
  %v224 = vpack.c.b16 %v203, %v202
  %v225 = vpack.c.b16 %v205, %v204
  %v226 = vpack.c.b16 %v207, %v206
  %v227 = vpack.c.b16 %v209, %v208
  %v228 = vpack.c.b16 %v211, %v210
  %v229 = vpack.c.b16 %v213, %v212
  %246 = vmatprep.subr.bf16.mxu0 0
  %247 = vmatpush1.bf16.msra.mxu0 %v221
  %248 = vmatprep.subr.bf16.mxu0 0
  %249 = vmatpush1.bf16.msra.mxu0 %v220
  %250 = vmatprep.subr.bf16.mxu0 0
  %251 = vmatpush1.bf16.msra.mxu0 %v219
  %252 = vmatprep.subr.bf16.mxu0 0
  %253 = vmatpush1.bf16.msra.mxu0 %v218
  %254 = vmatprep.subr.bf16.mxu0 0
  %255 = vmatpush1.bf16.msra.mxu0 %v217
  %256 = vmatprep.subr.bf16.mxu0 0
  %257 = vmatpush1.bf16.msra.mxu0 %v216
  %258 = vmatprep.subr.bf16.mxu0 0
  %259 = vmatpush1.bf16.msra.mxu0 %v215
  %260 = vmatprep.subr.bf16.mxu0 0
  %261 = vmatpush1.bf16.msra.mxu0 %v214
  %262 = vmatprep.subr.bf16.mxu0 0
  %263 = vmatpush2.bf16.msra.mxu0 %v229
  %264 = vmatprep.subr.bf16.mxu0 0
  %265 = vmatpush2.bf16.msra.mxu0 %v228
  %266 = vmatprep.subr.bf16.mxu0 0
  %267 = vmatpush2.bf16.msra.mxu0 %v227
  %268 = vmatprep.subr.bf16.mxu0 0
  %269 = vmatpush2.bf16.msra.mxu0 %v226
  %270 = vmatprep.subr.bf16.mxu0 0
  %271 = vmatpush2.bf16.msra.mxu0 %v225
  %272 = vmatprep.subr.bf16.mxu0 0
  %273 = vmatpush2.bf16.msra.mxu0 %v224
  %274 = vmatprep.subr.bf16.mxu0 0
  %275 = vmatpush2.bf16.msra.mxu0 %v223
  %276 = vmatprep.subr.bf16.mxu0 0
  %277 = vmatpush2.bf16.msra.mxu0 %v222
  %278 = vmatprep.mubr.bf16.mxu0 %v119
  %279 = vmatmul.mubr.bf16.gmra.mxu0 %v118
  %v280 = vpop.f32.mrf.mxu0
  %v281 = vadd.f32 %v68, %v280
  %v282 = vpop.f32.mrf.mxu0
  %v283 = vpop.f32.mrf.mxu0
  %v284 = vadd.f32 %v68, %v283
  %v285 = vpop.f32.mrf.mxu0
  %286 = vmatprep.mubr.bf16.mxu0 %v121
  %287 = vmatmul.mubr.bf16.gmra.mxu0 %v120
  %v288 = vpop.f32.mrf.mxu0
  %v289 = vadd.f32 %v68, %v288
  %v290 = vpop.f32.mrf.mxu0
  %v291 = vpop.f32.mrf.mxu0
  %v292 = vadd.f32 %v68, %v291
  %v293 = vpop.f32.mrf.mxu0
  %294 = vmatprep.mubr.bf16.mxu0 %v123
  %295 = vmatmul.mubr.bf16.gmra.mxu0 %v122
  %v296 = vpop.f32.mrf.mxu0
  %v297 = vadd.f32 %v68, %v296
  %v298 = vpop.f32.mrf.mxu0
  %v299 = vpop.f32.mrf.mxu0
  %v300 = vadd.f32 %v68, %v299
  %v301 = vpop.f32.mrf.mxu0
  %302 = vmatprep.mubr.bf16.mxu0 %v125
  %303 = vmatmul.mubr.bf16.gmra.mxu0 %v124
  %v304 = vpop.f32.mrf.mxu0
  %v305 = vadd.f32 %v68, %v304
  %v306 = vpop.f32.mrf.mxu0
  %v307 = vpop.f32.mrf.mxu0
  %v308 = vadd.f32 %v68, %v307
  %v309 = vpop.f32.mrf.mxu0
  %310 = vmatprep.mubr.bf16.mxu0 %v127
  %311 = vmatmul.mubr.bf16.gmra.mxu0 %v126
  %v312 = vpop.f32.mrf.mxu0
  %v313 = vadd.f32 %v68, %v312
  %v314 = vpop.f32.mrf.mxu0
  %v315 = vpop.f32.mrf.mxu0
  %v316 = vadd.f32 %v68, %v315
  %v317 = vpop.f32.mrf.mxu0
  %318 = vmatprep.mubr.bf16.mxu0 %v129
  %319 = vmatmul.mubr.bf16.gmra.mxu0 %v128
  %v320 = vpop.f32.mrf.mxu0
  %v321 = vadd.f32 %v68, %v320
  %v322 = vpop.f32.mrf.mxu0
  %v323 = vpop.f32.mrf.mxu0
  %v324 = vadd.f32 %v68, %v323
  %v325 = vpop.f32.mrf.mxu0
  %326 = vmatprep.mubr.bf16.mxu0 %v131
  %327 = vmatmul.mubr.bf16.gmra.mxu0 %v130
  %v328 = vpop.f32.mrf.mxu0
  %v329 = vadd.f32 %v68, %v328
  %v330 = vpop.f32.mrf.mxu0
  %v331 = vpop.f32.mrf.mxu0
  %v332 = vadd.f32 %v68, %v331
  %v333 = vpop.f32.mrf.mxu0
  %334 = vmatprep.mubr.bf16.mxu0 %v133
  %335 = vmatmul.mubr.bf16.gmra.mxu0 %v132
  %v336 = vpop.f32.mrf.mxu0
  %v337 = vadd.f32 %v68, %v336
  %v338 = vpop.f32.mrf.mxu0
  %v339 = vpop.f32.mrf.mxu0
  %v340 = vadd.f32 %v68, %v339
  %v341 = vpop.f32.mrf.mxu0
  %342 = vdwg.mxu0
  %v343 = vmul.f32 %v281, 0.2
  %v344 = vmul.f32 %v284, 0.2
  %v345 = vmul.f32 %v289, 0.2
  %v346 = vmul.f32 %v292, 0.2
  %v347 = vmul.f32 %v297, 0.2
  %v348 = vmul.f32 %v300, 0.2
  %v349 = vmul.f32 %v305, 0.2
  %v350 = vmul.f32 %v308, 0.2
  %v351 = vmul.f32 %v313, 0.2
  %v352 = vmul.f32 %v316, 0.2
  %v353 = vmul.f32 %v321, 0.2
  %v354 = vmul.f32 %v324, 0.2
  %v355 = vmul.f32 %v329, 0.2
  %v356 = vmul.f32 %v332, 0.2
  %v357 = vmul.f32 %v337, 0.2
  %v358 = vmul.f32 %v340, 0.2
  %v359 = vmax.f32 %v281, %v343
  %v360 = vmax.f32 %v284, %v344
  %v361 = vmax.f32 %v289, %v345
  %v362 = vmax.f32 %v292, %v346
  %v363 = vmax.f32 %v297, %v347
  %v364 = vmax.f32 %v300, %v348
  %v365 = vmax.f32 %v305, %v349
  %v366 = vmax.f32 %v308, %v350
  %v367 = vmax.f32 %v313, %v351
  %v368 = vmax.f32 %v316, %v352
  %v369 = vmax.f32 %v321, %v353
  %v370 = vmax.f32 %v324, %v354
  %v371 = vmax.f32 %v329, %v355
  %v372 = vmax.f32 %v332, %v356
  %v373 = vmax.f32 %v337, %v357
  %v374 = vmax.f32 %v340, %v358
  %v375 = vpack.c.bf16 %v360, %v359
  %v376 = vpack.c.bf16 %v362, %v361
  %v377 = vpack.c.bf16 %v364, %v363
  %v378 = vpack.c.bf16 %v366, %v365
  %v379 = vpack.c.bf16 %v368, %v367
  %v380 = vpack.c.bf16 %v370, %v369
  %v381 = vpack.c.bf16 %v372, %v371
  %v382 = vpack.c.bf16 %v374, %v373
  %v391 = vunpack.c.l.b16 %v375
  %v392 = vunpack.c.h.b16 %v375
  %v393 = vunpack.c.l.b16 %v376
  %v394 = vunpack.c.h.b16 %v376
  %v395 = vunpack.c.l.b16 %v377
  %v396 = vunpack.c.h.b16 %v377
  %v397 = vunpack.c.l.b16 %v378
  %v398 = vunpack.c.h.b16 %v378
  %v399 = vunpack.c.l.b16 %v379
  %v400 = vunpack.c.h.b16 %v379
  %v401 = vunpack.c.l.b16 %v380
  %v402 = vunpack.c.h.b16 %v380
  %v403 = vunpack.c.l.b16 %v381
  %v404 = vunpack.c.h.b16 %v381
  %v405 = vunpack.c.l.b16 %v382
  %v406 = vunpack.c.h.b16 %v382
  %v407 = vpack.c.b16 %v391, %v391
  %v408 = vpack.c.b16 %v392, %v392
  %v409 = vpack.c.b16 %v393, %v393
  %v410 = vpack.c.b16 %v394, %v394
  %v411 = vpack.c.b16 %v395, %v395
  %v412 = vpack.c.b16 %v396, %v396
  %v413 = vpack.c.b16 %v397, %v397
  %v414 = vpack.c.b16 %v398, %v398
  %v415 = vpack.c.b16 %v399, %v399
  %v416 = vpack.c.b16 %v400, %v400
  %v417 = vpack.c.b16 %v401, %v401
  %v418 = vpack.c.b16 %v402, %v402
  %v419 = vpack.c.b16 %v403, %v403
  %v420 = vpack.c.b16 %v404, %v404
  %v421 = vpack.c.b16 %v405, %v405
  %v422 = vpack.c.b16 %v406, %v406
  %vm439 = vcmask 125952
  %440 = vst.msk [vmem:[%s3] sm:$0xf] %vm439, %v407
  %441 = vst.msk [vmem:[%s3 + $0x4] sm:$0xf] %vm439, %v408
  %442 = vst.msk [vmem:[%s3 + $0x8] sm:$0xf] %vm439, %v409
  %443 = vst.msk [vmem:[%s3 + $0xc] sm:$0xf] %vm439, %v410
  %444 = vst.msk [vmem:[%s3 + $0x10] sm:$0xf] %vm439, %v411
  %445 = vst.msk [vmem:[%s3 + $0x14] sm:$0xf] %vm439, %v412
  %446 = vst.msk [vmem:[%s3 + $0x18] sm:$0xf] %vm439, %v413
  %447 = vst.msk [vmem:[%s3 + $0x1c] sm:$0xf] %vm439, %v414
  %448 = vst.msk [vmem:[%s3 + $0x20] sm:$0xf] %vm439, %v415
  %449 = vst.msk [vmem:[%s3 + $0x24] sm:$0xf] %vm439, %v416
  %450 = vst.msk [vmem:[%s3 + $0x28] sm:$0xf] %vm439, %v417
  %451 = vst.msk [vmem:[%s3 + $0x2c] sm:$0xf] %vm439, %v418
  %452 = vst.msk [vmem:[%s3 + $0x30] sm:$0xf] %vm439, %v419
  %453 = vst.msk [vmem:[%s3 + $0x34] sm:$0xf] %vm439, %v420
  %454 = vst.msk [vmem:[%s3 + $0x38] sm:$0xf] %vm439, %v421
  %455 = vst.msk [vmem:[%s3 + $0x3c] sm:$0xf] %vm439, %v422
  // Predicated region
  $region14: #{forward.14} parent=0 // pred_check
    _
  $region15: #{forward.14} parent=0 // pred_check_branch
    %457 = sbr.rel (0) target = $region17
  $region16: #{forward.14} parent=0 // pred_region
    _
  $region17: #{forward.14} parent=0 // pred_fallthru
    _
  // Predicated region
  $region18: #{forward.14} parent=0 // pred_check
    _
  $region19: #{forward.14} parent=0 // pred_check_branch
    %459 = sbr.rel (0) target = $region21
  $region20: #{forward.14} parent=0 // pred_region
    _
  $region21: #{forward.14} parent=0 // pred_fallthru
    _

// kernel: forward.15
$region0: #{forward.15}
  #allocation0 [shape = 'u32[]', space=smem, size = 0x4, offset = 0x4, fixed_abs, tag = 'smem constant byte address 0x4 - core index']
  #allocation1 [shape = 'u32[144,128]{1,0:T(1,128)}', space=vmem, size = 0x12000, scoped, tag = 'internal scratch']
  %s0 = inlined_call_operand.vmem [shape: bf16[32,256], index: 0, kind: input, shape index: {}]
  %s1 = inlined_call_operand.vmem [shape: bf16[256,16], index: 1, kind: input, shape index: {}]
  %s2 = inlined_call_operand.vmem [shape: f32[1,16], index: 2, kind: input, shape index: {}]
  %s3 = inlined_call_operand.vmem [shape: bf16[32,16], index: 3, kind: output, shape index: {}]
  %s4 = sld [smem:[#allocation0]]
  $region22: #{forward.15} parent=0
    _
  %s6 = ssub.s32 1, %s4
  %s7 = scalar_select 0, %s6, %s4
  // Predicated region
  $region2: #{forward.15} parent=0 // pred_check
    _
  $region3: #{forward.15} parent=0 // pred_check_branch
    %9 = sbr.rel (0) target = $region5
  $region4: #{forward.15} parent=0 // pred_region
    _
  $region5: #{forward.15} parent=0 // pred_fallthru
    _
  // Predicated region
  $region6: #{forward.15} parent=0 // pred_check
    _
  $region7: #{forward.15} parent=0 // pred_check_branch
    %11 = sbr.rel (0) target = $region9
  $region8: #{forward.15} parent=0 // pred_region
    _
  $region9: #{forward.15} parent=0 // pred_fallthru
    _
  // Predicated region
  $region10: #{forward.15} parent=0 // pred_check
    _
  $region11: #{forward.15} parent=0 // pred_check_branch
    %13 = sbr.rel (0) target = $region13
  $region12: #{forward.15} parent=0 // pred_region
    _
  $region13: #{forward.15} parent=0 // pred_fallthru
    _
  %v15 = vld [vmem:[%s0] sm:$0xff]
  %v16 = vld [vmem:[%s0 + $0x8] sm:$0xff]
  %v17 = vld [vmem:[%s0 + $0x10] sm:$0xff]
  %v18 = vld [vmem:[%s0 + $0x18] sm:$0xff]
  %v19 = vld [vmem:[%s1] sm:$0xf]
  %v20 = vld [vmem:[%s1 + $0x4] sm:$0xf]
  %v21 = vld [vmem:[%s1 + $0x8] sm:$0xf]
  %v22 = vld [vmem:[%s1 + $0xc] sm:$0xf]
  %v23 = vld [vmem:[%s1 + $0x10] sm:$0xf]
  %v24 = vld [vmem:[%s1 + $0x14] sm:$0xf]
  %v25 = vld [vmem:[%s1 + $0x18] sm:$0xf]
  %v26 = vld [vmem:[%s1 + $0x1c] sm:$0xf]
  %v27 = vld [vmem:[%s1 + $0x20] sm:$0xf]
  %v28 = vld [vmem:[%s1 + $0x24] sm:$0xf]
  %v29 = vld [vmem:[%s1 + $0x28] sm:$0xf]
  %v30 = vld [vmem:[%s1 + $0x2c] sm:$0xf]
  %v31 = vld [vmem:[%s1 + $0x30] sm:$0xf]
  %v32 = vld [vmem:[%s1 + $0x34] sm:$0xf]
  %v33 = vld [vmem:[%s1 + $0x38] sm:$0xf]
  %v34 = vld [vmem:[%s1 + $0x3c] sm:$0xf]
  %v35 = vld [vmem:[%s1 + $0x40] sm:$0xf]
  %v36 = vld [vmem:[%s1 + $0x44] sm:$0xf]
  %v37 = vld [vmem:[%s1 + $0x48] sm:$0xf]
  %v38 = vld [vmem:[%s1 + $0x4c] sm:$0xf]
  %v39 = vld [vmem:[%s1 + $0x50] sm:$0xf]
  %v40 = vld [vmem:[%s1 + $0x54] sm:$0xf]
  %v41 = vld [vmem:[%s1 + $0x58] sm:$0xf]
  %v42 = vld [vmem:[%s1 + $0x5c] sm:$0xf]
  %v43 = vld [vmem:[%s1 + $0x60] sm:$0xf]
  %v44 = vld [vmem:[%s1 + $0x64] sm:$0xf]
  %v45 = vld [vmem:[%s1 + $0x68] sm:$0xf]
  %v46 = vld [vmem:[%s1 + $0x6c] sm:$0xf]
  %v47 = vld [vmem:[%s1 + $0x70] sm:$0xf]
  %v48 = vld [vmem:[%s1 + $0x74] sm:$0xf]
  %v49 = vld [vmem:[%s1 + $0x78] sm:$0xf]
  %v50 = vld [vmem:[%s1 + $0x7c] sm:$0xf]
  %v51 = vld [vmem:[%s2] sm:$0x1]
  %v53 = vlaneseq
  %v54 = vshrl.u32 %v53, 7
  %v55 = vsub.s32 0, %v54
  %v56 = vrot.slane %v51, %v55
  %v62 = vunpack.c.l.b16 %v15
  %v63 = vunpack.c.h.b16 %v15
  %v64 = vunpack.c.l.b16 %v16
  %v65 = vunpack.c.h.b16 %v16
  %v66 = vunpack.c.l.b16 %v17
  %v67 = vunpack.c.h.b16 %v17
  %v68 = vunpack.c.l.b16 %v18
  %v69 = vunpack.c.h.b16 %v18
  %v70 = vpack.c.b16 %v64, %v62
  %v71 = vpack.c.b16 %v65, %v63
  %v72 = vpack.c.b16 %v68, %v66
  %v73 = vpack.c.b16 %v69, %v67
  %v110 = vunpack.c.l.b16 %v19
  %v111 = vunpack.c.l.b16 %v20
  %v112 = vunpack.c.l.b16 %v21
  %v113 = vunpack.c.l.b16 %v22
  %v114 = vunpack.c.l.b16 %v23
  %v115 = vunpack.c.l.b16 %v24
  %v116 = vunpack.c.l.b16 %v25
  %v117 = vunpack.c.l.b16 %v26
  %v118 = vunpack.c.l.b16 %v27
  %v119 = vunpack.c.l.b16 %v28
  %v120 = vunpack.c.l.b16 %v29
  %v121 = vunpack.c.l.b16 %v30
  %v122 = vunpack.c.l.b16 %v31
  %v123 = vunpack.c.l.b16 %v32
  %v124 = vunpack.c.l.b16 %v33
  %v125 = vunpack.c.l.b16 %v34
  %v126 = vunpack.c.l.b16 %v35
  %v127 = vunpack.c.l.b16 %v36
  %v128 = vunpack.c.l.b16 %v37
  %v129 = vunpack.c.l.b16 %v38
  %v130 = vunpack.c.l.b16 %v39
  %v131 = vunpack.c.l.b16 %v40
  %v132 = vunpack.c.l.b16 %v41
  %v133 = vunpack.c.l.b16 %v42
  %v134 = vunpack.c.l.b16 %v43
  %v135 = vunpack.c.l.b16 %v44
  %v136 = vunpack.c.l.b16 %v45
  %v137 = vunpack.c.l.b16 %v46
  %v138 = vunpack.c.l.b16 %v47
  %v139 = vunpack.c.l.b16 %v48
  %v140 = vunpack.c.l.b16 %v49
  %v141 = vunpack.c.l.b16 %v50
  %v142 = vpack.c.b16 %v111, %v110
  %v143 = vpack.c.b16 %v113, %v112
  %v144 = vpack.c.b16 %v115, %v114
  %v145 = vpack.c.b16 %v117, %v116
  %v146 = vpack.c.b16 %v119, %v118
  %v147 = vpack.c.b16 %v121, %v120
  %v148 = vpack.c.b16 %v123, %v122
  %v149 = vpack.c.b16 %v125, %v124
  %v150 = vpack.c.b16 %v127, %v126
  %v151 = vpack.c.b16 %v129, %v128
  %v152 = vpack.c.b16 %v131, %v130
  %v153 = vpack.c.b16 %v133, %v132
  %v154 = vpack.c.b16 %v135, %v134
  %v155 = vpack.c.b16 %v137, %v136
  %v156 = vpack.c.b16 %v139, %v138
  %v157 = vpack.c.b16 %v141, %v140
  %174 = vmatprep.subr.bf16.mxu0 0
  %175 = vmatpush1.bf16.msra.mxu0 %v149
  %176 = vmatprep.subr.bf16.mxu0 0
  %177 = vmatpush1.bf16.msra.mxu0 %v148
  %178 = vmatprep.subr.bf16.mxu0 0
  %179 = vmatpush1.bf16.msra.mxu0 %v147
  %180 = vmatprep.subr.bf16.mxu0 0
  %181 = vmatpush1.bf16.msra.mxu0 %v146
  %182 = vmatprep.subr.bf16.mxu0 0
  %183 = vmatpush1.bf16.msra.mxu0 %v145
  %184 = vmatprep.subr.bf16.mxu0 0
  %185 = vmatpush1.bf16.msra.mxu0 %v144
  %186 = vmatprep.subr.bf16.mxu0 0
  %187 = vmatpush1.bf16.msra.mxu0 %v143
  %188 = vmatprep.subr.bf16.mxu0 0
  %189 = vmatpush1.bf16.msra.mxu0 %v142
  %190 = vmatprep.subr.bf16.mxu0 0
  %191 = vmatpush2.bf16.msra.mxu0 %v157
  %192 = vmatprep.subr.bf16.mxu0 0
  %193 = vmatpush2.bf16.msra.mxu0 %v156
  %194 = vmatprep.subr.bf16.mxu0 0
  %195 = vmatpush2.bf16.msra.mxu0 %v155
  %196 = vmatprep.subr.bf16.mxu0 0
  %197 = vmatpush2.bf16.msra.mxu0 %v154
  %198 = vmatprep.subr.bf16.mxu0 0
  %199 = vmatpush2.bf16.msra.mxu0 %v153
  %200 = vmatprep.subr.bf16.mxu0 0
  %201 = vmatpush2.bf16.msra.mxu0 %v152
  %202 = vmatprep.subr.bf16.mxu0 0
  %203 = vmatpush2.bf16.msra.mxu0 %v151
  %204 = vmatprep.subr.bf16.mxu0 0
  %205 = vmatpush2.bf16.msra.mxu0 %v150
  %206 = vmatprep.mubr.bf16.mxu0 %v71
  %207 = vmatmul.mubr.bf16.gmra.mxu0 %v70
  %v208 = vpop.f32.mrf.mxu0
  %v209 = vadd.f32 %v56, %v208
  %v210 = vpop.f32.mrf.mxu0
  %v211 = vpop.f32.mrf.mxu0
  %v212 = vadd.f32 %v56, %v211
  %v213 = vpop.f32.mrf.mxu0
  %214 = vmatprep.mubr.bf16.mxu0 %v73
  %215 = vmatmul.mubr.bf16.gmra.mxu0 %v72
  %v216 = vpop.f32.mrf.mxu0
  %v217 = vadd.f32 %v56, %v216
  %v218 = vpop.f32.mrf.mxu0
  %v219 = vpop.f32.mrf.mxu0
  %v220 = vadd.f32 %v56, %v219
  %v221 = vpop.f32.mrf.mxu0
  %222 = vdwg.mxu0
  %v223 = vmul.f32 %v209, 0.2
  %v224 = vmul.f32 %v212, 0.2
  %v225 = vmul.f32 %v217, 0.2
  %v226 = vmul.f32 %v220, 0.2
  %v227 = vmax.f32 %v209, %v223
  %v228 = vmax.f32 %v212, %v224
  %v229 = vmax.f32 %v217, %v225
  %v230 = vmax.f32 %v220, %v226
  %v231 = vpack.c.bf16 %v228, %v227
  %v232 = vpack.c.bf16 %v230, %v229
  %v235 = vunpack.c.l.b16 %v231
  %v236 = vunpack.c.h.b16 %v231
  %v237 = vunpack.c.l.b16 %v232
  %v238 = vunpack.c.h.b16 %v232
  %v239 = vpack.c.b16 %v235, %v235
  %v240 = vpack.c.b16 %v236, %v236
  %v241 = vpack.c.b16 %v237, %v237
  %v242 = vpack.c.b16 %v238, %v238
  %vm247 = vcmask 125952
  %248 = vst.msk [vmem:[%s3] sm:$0xf] %vm247, %v239
  %249 = vst.msk [vmem:[%s3 + $0x4] sm:$0xf] %vm247, %v240
  %250 = vst.msk [vmem:[%s3 + $0x8] sm:$0xf] %vm247, %v241
  %251 = vst.msk [vmem:[%s3 + $0xc] sm:$0xf] %vm247, %v242
  // Predicated region
  $region14: #{forward.15} parent=0 // pred_check
    _
  $region15: #{forward.15} parent=0 // pred_check_branch
    %253 = sbr.rel (0) target = $region17
  $region16: #{forward.15} parent=0 // pred_region
    _
  $region17: #{forward.15} parent=0 // pred_fallthru
    _
  // Predicated region
  $region18: #{forward.15} parent=0 // pred_check
    _
  $region19: #{forward.15} parent=0 // pred_check_branch
    %255 = sbr.rel (0) target = $region21
  $region20: #{forward.15} parent=0 // pred_region
    _
  $region21: #{forward.15} parent=0 // pred_fallthru
    _

// kernel: forward.16
$region0: #{forward.16}
  #allocation0 [shape = 'u32[]', space=smem, size = 0x4, offset = 0x4, fixed_abs, tag = 'smem constant byte address 0x4 - core index']
  #allocation1 [shape = 'u32[144,128]{1,0:T(1,128)}', space=vmem, size = 0x12000, scoped, tag = 'internal scratch']
  %s0 = inlined_call_operand.vmem [shape: bf16[16,256], index: 0, kind: input, shape index: {}]
  %s1 = inlined_call_operand.vmem [shape: bf16[256,16], index: 1, kind: input, shape index: {}]
  %s2 = inlined_call_operand.vmem [shape: f32[1,16], index: 2, kind: input, shape index: {}]
  %s3 = inlined_call_operand.vmem [shape: bf16[16,16], index: 3, kind: output, shape index: {}]
  %s4 = sld [smem:[#allocation0]]
  $region22: #{forward.16} parent=0
    _
  %s6 = ssub.s32 1, %s4
  %s7 = scalar_select 0, %s6, %s4
  // Predicated region
  $region2: #{forward.16} parent=0 // pred_check
    _
  $region3: #{forward.16} parent=0 // pred_check_branch
    %9 = sbr.rel (0) target = $region5
  $region4: #{forward.16} parent=0 // pred_region
    _
  $region5: #{forward.16} parent=0 // pred_fallthru
    _
  // Predicated region
  $region6: #{forward.16} parent=0 // pred_check
    _
  $region7: #{forward.16} parent=0 // pred_check_branch
    %11 = sbr.rel (0) target = $region9
  $region8: #{forward.16} parent=0 // pred_region
    _
  $region9: #{forward.16} parent=0 // pred_fallthru
    _
  // Predicated region
  $region10: #{forward.16} parent=0 // pred_check
    _
  $region11: #{forward.16} parent=0 // pred_check_branch
    %13 = sbr.rel (0) target = $region13
  $region12: #{forward.16} parent=0 // pred_region
    _
  $region13: #{forward.16} parent=0 // pred_fallthru
    _
  %v15 = vld [vmem:[%s0] sm:$0xff]
  %v16 = vld [vmem:[%s0 + $0x8] sm:$0xff]
  %v17 = vld [vmem:[%s1] sm:$0xf]
  %v18 = vld [vmem:[%s1 + $0x4] sm:$0xf]
  %v19 = vld [vmem:[%s1 + $0x8] sm:$0xf]
  %v20 = vld [vmem:[%s1 + $0xc] sm:$0xf]
  %v21 = vld [vmem:[%s1 + $0x10] sm:$0xf]
  %v22 = vld [vmem:[%s1 + $0x14] sm:$0xf]
  %v23 = vld [vmem:[%s1 + $0x18] sm:$0xf]
  %v24 = vld [vmem:[%s1 + $0x1c] sm:$0xf]
  %v25 = vld [vmem:[%s1 + $0x20] sm:$0xf]
  %v26 = vld [vmem:[%s1 + $0x24] sm:$0xf]
  %v27 = vld [vmem:[%s1 + $0x28] sm:$0xf]
  %v28 = vld [vmem:[%s1 + $0x2c] sm:$0xf]
  %v29 = vld [vmem:[%s1 + $0x30] sm:$0xf]
  %v30 = vld [vmem:[%s1 + $0x34] sm:$0xf]
  %v31 = vld [vmem:[%s1 + $0x38] sm:$0xf]
  %v32 = vld [vmem:[%s1 + $0x3c] sm:$0xf]
  %v33 = vld [vmem:[%s1 + $0x40] sm:$0xf]
  %v34 = vld [vmem:[%s1 + $0x44] sm:$0xf]
  %v35 = vld [vmem:[%s1 + $0x48] sm:$0xf]
  %v36 = vld [vmem:[%s1 + $0x4c] sm:$0xf]
  %v37 = vld [vmem:[%s1 + $0x50] sm:$0xf]
  %v38 = vld [vmem:[%s1 + $0x54] sm:$0xf]
  %v39 = vld [vmem:[%s1 + $0x58] sm:$0xf]
  %v40 = vld [vmem:[%s1 + $0x5c] sm:$0xf]
  %v41 = vld [vmem:[%s1 + $0x60] sm:$0xf]
  %v42 = vld [vmem:[%s1 + $0x64] sm:$0xf]
  %v43 = vld [vmem:[%s1 + $0x68] sm:$0xf]
  %v44 = vld [vmem:[%s1 + $0x6c] sm:$0xf]
  %v45 = vld [vmem:[%s1 + $0x70] sm:$0xf]
  %v46 = vld [vmem:[%s1 + $0x74] sm:$0xf]
  %v47 = vld [vmem:[%s1 + $0x78] sm:$0xf]
  %v48 = vld [vmem:[%s1 + $0x7c] sm:$0xf]
  %v49 = vld [vmem:[%s2] sm:$0x1]
  %v51 = vlaneseq
  %v52 = vshrl.u32 %v51, 7
  %v53 = vsub.s32 0, %v52
  %v54 = vrot.slane %v49, %v53
  %v58 = vunpack.c.l.b16 %v15
  %v59 = vunpack.c.h.b16 %v15
  %v60 = vunpack.c.l.b16 %v16
  %v61 = vunpack.c.h.b16 %v16
  %v62 = vpack.c.b16 %v60, %v58
  %v63 = vpack.c.b16 %v61, %v59
  %v98 = vunpack.c.l.b16 %v17
  %v99 = vunpack.c.l.b16 %v18
  %v100 = vunpack.c.l.b16 %v19
  %v101 = vunpack.c.l.b16 %v20
  %v102 = vunpack.c.l.b16 %v21
  %v103 = vunpack.c.l.b16 %v22
  %v104 = vunpack.c.l.b16 %v23
  %v105 = vunpack.c.l.b16 %v24
  %v106 = vunpack.c.l.b16 %v25
  %v107 = vunpack.c.l.b16 %v26
  %v108 = vunpack.c.l.b16 %v27
  %v109 = vunpack.c.l.b16 %v28
  %v110 = vunpack.c.l.b16 %v29
  %v111 = vunpack.c.l.b16 %v30
  %v112 = vunpack.c.l.b16 %v31
  %v113 = vunpack.c.l.b16 %v32
  %v114 = vunpack.c.l.b16 %v33
  %v115 = vunpack.c.l.b16 %v34
  %v116 = vunpack.c.l.b16 %v35
  %v117 = vunpack.c.l.b16 %v36
  %v118 = vunpack.c.l.b16 %v37
  %v119 = vunpack.c.l.b16 %v38
  %v120 = vunpack.c.l.b16 %v39
  %v121 = vunpack.c.l.b16 %v40
  %v122 = vunpack.c.l.b16 %v41
  %v123 = vunpack.c.l.b16 %v42
  %v124 = vunpack.c.l.b16 %v43
  %v125 = vunpack.c.l.b16 %v44
  %v126 = vunpack.c.l.b16 %v45
  %v127 = vunpack.c.l.b16 %v46
  %v128 = vunpack.c.l.b16 %v47
  %v129 = vunpack.c.l.b16 %v48
  %v130 = vpack.c.b16 %v99, %v98
  %v131 = vpack.c.b16 %v101, %v100
  %v132 = vpack.c.b16 %v103, %v102
  %v133 = vpack.c.b16 %v105, %v104
  %v134 = vpack.c.b16 %v107, %v106
  %v135 = vpack.c.b16 %v109, %v108
  %v136 = vpack.c.b16 %v111, %v110
  %v137 = vpack.c.b16 %v113, %v112
  %v138 = vpack.c.b16 %v115, %v114
  %v139 = vpack.c.b16 %v117, %v116
  %v140 = vpack.c.b16 %v119, %v118
  %v141 = vpack.c.b16 %v121, %v120
  %v142 = vpack.c.b16 %v123, %v122
  %v143 = vpack.c.b16 %v125, %v124
  %v144 = vpack.c.b16 %v127, %v126
  %v145 = vpack.c.b16 %v129, %v128
  %162 = vmatprep.subr.bf16.mxu0 0
  %163 = vmatpush1.bf16.msra.mxu0 %v137
  %164 = vmatprep.subr.bf16.mxu0 0
  %165 = vmatpush1.bf16.msra.mxu0 %v136
  %166 = vmatprep.subr.bf16.mxu0 0
  %167 = vmatpush1.bf16.msra.mxu0 %v135
  %168 = vmatprep.subr.bf16.mxu0 0
  %169 = vmatpush1.bf16.msra.mxu0 %v134
  %170 = vmatprep.subr.bf16.mxu0 0
  %171 = vmatpush1.bf16.msra.mxu0 %v133
  %172 = vmatprep.subr.bf16.mxu0 0
  %173 = vmatpush1.bf16.msra.mxu0 %v132
  %174 = vmatprep.subr.bf16.mxu0 0
  %175 = vmatpush1.bf16.msra.mxu0 %v131
  %176 = vmatprep.subr.bf16.mxu0 0
  %177 = vmatpush1.bf16.msra.mxu0 %v130
  %178 = vmatprep.subr.bf16.mxu0 0
  %179 = vmatpush2.bf16.msra.mxu0 %v145
  %180 = vmatprep.subr.bf16.mxu0 0
  %181 = vmatpush2.bf16.msra.mxu0 %v144
  %182 = vmatprep.subr.bf16.mxu0 0
  %183 = vmatpush2.bf16.msra.mxu0 %v143
  %184 = vmatprep.subr.bf16.mxu0 0
  %185 = vmatpush2.bf16.msra.mxu0 %v142
  %186 = vmatprep.subr.bf16.mxu0 0
  %187 = vmatpush2.bf16.msra.mxu0 %v141
  %188 = vmatprep.subr.bf16.mxu0 0
  %189 = vmatpush2.bf16.msra.mxu0 %v140
  %190 = vmatprep.subr.bf16.mxu0 0
  %191 = vmatpush2.bf16.msra.mxu0 %v139
  %192 = vmatprep.subr.bf16.mxu0 0
  %193 = vmatpush2.bf16.msra.mxu0 %v138
  %194 = vmatprep.mubr.bf16.mxu0 %v63
  %195 = vmatmul.mubr.bf16.gmra.mxu0 %v62
  %v196 = vpop.f32.mrf.mxu0
  %v197 = vadd.f32 %v54, %v196
  %v198 = vpop.f32.mrf.mxu0
  %v199 = vpop.f32.mrf.mxu0
  %v200 = vadd.f32 %v54, %v199
  %v201 = vpop.f32.mrf.mxu0
  %202 = vdwg.mxu0
  %v203 = vmul.f32 %v197, 0.2
  %v204 = vmul.f32 %v200, 0.2
  %v205 = vmax.f32 %v197, %v203
  %v206 = vmax.f32 %v200, %v204
  %v207 = vpack.c.bf16 %v206, %v205
  %v209 = vunpack.c.l.b16 %v207
  %v210 = vunpack.c.h.b16 %v207
  %v211 = vpack.c.b16 %v209, %v209
  %v212 = vpack.c.b16 %v210, %v210
  %vm215 = vcmask 125952
  %216 = vst.msk [vmem:[%s3] sm:$0xf] %vm215, %v211
  %217 = vst.msk [vmem:[%s3 + $0x4] sm:$0xf] %vm215, %v212
  // Predicated region
  $region14: #{forward.16} parent=0 // pred_check
    _
  $region15: #{forward.16} parent=0 // pred_check_branch
    %219 = sbr.rel (0) target = $region17
  $region16: #{forward.16} parent=0 // pred_region
    _
  $region17: #{forward.16} parent=0 // pred_fallthru
    _
  // Predicated region
  $region18: #{forward.16} parent=0 // pred_check
    _
  $region19: #{forward.16} parent=0 // pred_check_branch
    %221 = sbr.rel (0) target = $region21
  $region20: #{forward.16} parent=0 // pred_region
    _
  $region21: #{forward.16} parent=0 // pred_fallthru
    _

// kernel: forward.17
$region0: #{forward.17}
  #allocation0 [shape = 'u32[]', space=smem, size = 0x4, offset = 0x4, fixed_abs, tag = 'smem constant byte address 0x4 - core index']
  #allocation1 [shape = 'u32[144,128]{1,0:T(1,128)}', space=vmem, size = 0x12000, scoped, tag = 'internal scratch']
  %s0 = inlined_call_operand.vmem [shape: bf16[16,256], index: 0, kind: input, shape index: {}]
  %s1 = inlined_call_operand.vmem [shape: bf16[256,16], index: 1, kind: input, shape index: {}]
  %s2 = inlined_call_operand.vmem [shape: bf16[16,16], index: 2, kind: output, shape index: {}]
  %s3 = sld [smem:[#allocation0]]
  $region18: #{forward.17} parent=0
    _
  %s5 = ssub.s32 1, %s3
  %s6 = scalar_select 0, %s5, %s3
  // Predicated region
  $region2: #{forward.17} parent=0 // pred_check
    _
  $region3: #{forward.17} parent=0 // pred_check_branch
    %8 = sbr.rel (0) target = $region5
  $region4: #{forward.17} parent=0 // pred_region
    _
  $region5: #{forward.17} parent=0 // pred_fallthru
    _
  // Predicated region
  $region6: #{forward.17} parent=0 // pred_check
    _
  $region7: #{forward.17} parent=0 // pred_check_branch
    %10 = sbr.rel (0) target = $region9
  $region8: #{forward.17} parent=0 // pred_region
    _
  $region9: #{forward.17} parent=0 // pred_fallthru
    _
  %v12 = vld [vmem:[%s0] sm:$0xff]
  %v13 = vld [vmem:[%s0 + $0x8] sm:$0xff]
  %v14 = vld [vmem:[%s1] sm:$0xf]
  %v15 = vld [vmem:[%s1 + $0x4] sm:$0xf]
  %v16 = vld [vmem:[%s1 + $0x8] sm:$0xf]
  %v17 = vld [vmem:[%s1 + $0xc] sm:$0xf]
  %v18 = vld [vmem:[%s1 + $0x10] sm:$0xf]
  %v19 = vld [vmem:[%s1 + $0x14] sm:$0xf]
  %v20 = vld [vmem:[%s1 + $0x18] sm:$0xf]
  %v21 = vld [vmem:[%s1 + $0x1c] sm:$0xf]
  %v22 = vld [vmem:[%s1 + $0x20] sm:$0xf]
  %v23 = vld [vmem:[%s1 + $0x24] sm:$0xf]
  %v24 = vld [vmem:[%s1 + $0x28] sm:$0xf]
  %v25 = vld [vmem:[%s1 + $0x2c] sm:$0xf]
  %v26 = vld [vmem:[%s1 + $0x30] sm:$0xf]
  %v27 = vld [vmem:[%s1 + $0x34] sm:$0xf]
  %v28 = vld [vmem:[%s1 + $0x38] sm:$0xf]
  %v29 = vld [vmem:[%s1 + $0x3c] sm:$0xf]
  %v30 = vld [vmem:[%s1 + $0x40] sm:$0xf]
  %v31 = vld [vmem:[%s1 + $0x44] sm:$0xf]
  %v32 = vld [vmem:[%s1 + $0x48] sm:$0xf]
  %v33 = vld [vmem:[%s1 + $0x4c] sm:$0xf]
  %v34 = vld [vmem:[%s1 + $0x50] sm:$0xf]
  %v35 = vld [vmem:[%s1 + $0x54] sm:$0xf]
  %v36 = vld [vmem:[%s1 + $0x58] sm:$0xf]
  %v37 = vld [vmem:[%s1 + $0x5c] sm:$0xf]
  %v38 = vld [vmem:[%s1 + $0x60] sm:$0xf]
  %v39 = vld [vmem:[%s1 + $0x64] sm:$0xf]
  %v40 = vld [vmem:[%s1 + $0x68] sm:$0xf]
  %v41 = vld [vmem:[%s1 + $0x6c] sm:$0xf]
  %v42 = vld [vmem:[%s1 + $0x70] sm:$0xf]
  %v43 = vld [vmem:[%s1 + $0x74] sm:$0xf]
  %v44 = vld [vmem:[%s1 + $0x78] sm:$0xf]
  %v45 = vld [vmem:[%s1 + $0x7c] sm:$0xf]
  %v48 = vunpack.c.l.b16 %v12
  %v49 = vunpack.c.h.b16 %v12
  %v50 = vunpack.c.l.b16 %v13
  %v51 = vunpack.c.h.b16 %v13
  %v52 = vpack.c.b16 %v50, %v48
  %v53 = vpack.c.b16 %v51, %v49
  %v88 = vunpack.c.l.b16 %v14
  %v89 = vunpack.c.l.b16 %v15
  %v90 = vunpack.c.l.b16 %v16
  %v91 = vunpack.c.l.b16 %v17
  %v92 = vunpack.c.l.b16 %v18
  %v93 = vunpack.c.l.b16 %v19
  %v94 = vunpack.c.l.b16 %v20
  %v95 = vunpack.c.l.b16 %v21
  %v96 = vunpack.c.l.b16 %v22
  %v97 = vunpack.c.l.b16 %v23
  %v98 = vunpack.c.l.b16 %v24
  %v99 = vunpack.c.l.b16 %v25
  %v100 = vunpack.c.l.b16 %v26
  %v101 = vunpack.c.l.b16 %v27
  %v102 = vunpack.c.l.b16 %v28
  %v103 = vunpack.c.l.b16 %v29
  %v104 = vunpack.c.l.b16 %v30
  %v105 = vunpack.c.l.b16 %v31
  %v106 = vunpack.c.l.b16 %v32
  %v107 = vunpack.c.l.b16 %v33
  %v108 = vunpack.c.l.b16 %v34
  %v109 = vunpack.c.l.b16 %v35
  %v110 = vunpack.c.l.b16 %v36
  %v111 = vunpack.c.l.b16 %v37
  %v112 = vunpack.c.l.b16 %v38
  %v113 = vunpack.c.l.b16 %v39
  %v114 = vunpack.c.l.b16 %v40
  %v115 = vunpack.c.l.b16 %v41
  %v116 = vunpack.c.l.b16 %v42
  %v117 = vunpack.c.l.b16 %v43
  %v118 = vunpack.c.l.b16 %v44
  %v119 = vunpack.c.l.b16 %v45
  %v120 = vpack.c.b16 %v89, %v88
  %v121 = vpack.c.b16 %v91, %v90
  %v122 = vpack.c.b16 %v93, %v92
  %v123 = vpack.c.b16 %v95, %v94
  %v124 = vpack.c.b16 %v97, %v96
  %v125 = vpack.c.b16 %v99, %v98
  %v126 = vpack.c.b16 %v101, %v100
  %v127 = vpack.c.b16 %v103, %v102
  %v128 = vpack.c.b16 %v105, %v104
  %v129 = vpack.c.b16 %v107, %v106
  %v130 = vpack.c.b16 %v109, %v108
  %v131 = vpack.c.b16 %v111, %v110
  %v132 = vpack.c.b16 %v113, %v112
  %v133 = vpack.c.b16 %v115, %v114
  %v134 = vpack.c.b16 %v117, %v116
  %v135 = vpack.c.b16 %v119, %v118
  %152 = vmatprep.subr.bf16.mxu0 0
  %153 = vmatpush1.bf16.msra.mxu0 %v127
  %154 = vmatprep.subr.bf16.mxu0 0
  %155 = vmatpush1.bf16.msra.mxu0 %v126
  %156 = vmatprep.subr.bf16.mxu0 0
  %157 = vmatpush1.bf16.msra.mxu0 %v125
  %158 = vmatprep.subr.bf16.mxu0 0
  %159 = vmatpush1.bf16.msra.mxu0 %v124
  %160 = vmatprep.subr.bf16.mxu0 0
  %161 = vmatpush1.bf16.msra.mxu0 %v123
  %162 = vmatprep.subr.bf16.mxu0 0
  %163 = vmatpush1.bf16.msra.mxu0 %v122
  %164 = vmatprep.subr.bf16.mxu0 0
  %165 = vmatpush1.bf16.msra.mxu0 %v121
  %166 = vmatprep.subr.bf16.mxu0 0
  %167 = vmatpush1.bf16.msra.mxu0 %v120
  %168 = vmatprep.subr.bf16.mxu0 0
  %169 = vmatpush2.bf16.msra.mxu0 %v135
  %170 = vmatprep.subr.bf16.mxu0 0
  %171 = vmatpush2.bf16.msra.mxu0 %v134
  %172 = vmatprep.subr.bf16.mxu0 0
  %173 = vmatpush2.bf16.msra.mxu0 %v133
  %174 = vmatprep.subr.bf16.mxu0 0
  %175 = vmatpush2.bf16.msra.mxu0 %v132
  %176 = vmatprep.subr.bf16.mxu0 0
  %177 = vmatpush2.bf16.msra.mxu0 %v131
  %178 = vmatprep.subr.bf16.mxu0 0
  %179 = vmatpush2.bf16.msra.mxu0 %v130
  %180 = vmatprep.subr.bf16.mxu0 0
  %181 = vmatpush2.bf16.msra.mxu0 %v129
  %182 = vmatprep.subr.bf16.mxu0 0
  %183 = vmatpush2.bf16.msra.mxu0 %v128
  %184 = vmatprep.mubr.bf16.mxu0 %v53
  %185 = vmatmul.mubr.bf16.gmra.mxu0 %v52
  %v186 = vpop.f32.mrf.mxu0
  %v187 = vadd.f32 0.0, %v186
  %v188 = vpop.f32.mrf.mxu0
  %v189 = vpop.f32.mrf.mxu0
  %v190 = vadd.f32 0.0, %v189
  %v191 = vpop.f32.mrf.mxu0
  %192 = vdwg.mxu0
  %v193 = vmax.f32 %v187, 0.0
  %v194 = vmax.f32 %v190, 0.0
  %v195 = vpack.c.bf16 %v194, %v193
  %v197 = vunpack.c.l.b16 %v195
  %v198 = vunpack.c.h.b16 %v195
  %v199 = vpack.c.b16 %v197, %v197
  %v200 = vpack.c.b16 %v198, %v198
  %vm203 = vcmask 125952
  %204 = vst.msk [vmem:[%s2] sm:$0xf] %vm203, %v199
  %205 = vst.msk [vmem:[%s2 + $0x4] sm:$0xf] %vm203, %v200
  // Predicated region
  $region10: #{forward.17} parent=0 // pred_check
    _
  $region11: #{forward.17} parent=0 // pred_check_branch
    %207 = sbr.rel (0) target = $region13
  $region12: #{forward.17} parent=0 // pred_region
    _
  $region13: #{forward.17} parent=0 // pred_fallthru
    _
  // Predicated region
  $region14: #{forward.17} parent=0 // pred_check
    _
  $region15: #{forward.17} parent=0 // pred_check_branch
    %209 = sbr.rel (0) target = $region17
  $region16: #{forward.17} parent=0 // pred_region
    _
  $region17: #{forward.17} parent=0 // pred_fallthru
    _

// kernel: forward.18
$region0: #{forward.18}
  #allocation0 [shape = 'u32[]', space=smem, size = 0x4, offset = 0x4, fixed_abs, tag = 'smem constant byte address 0x4 - core index']
  #allocation1 [shape = 'u32[144,128]{1,0:T(1,128)}', space=vmem, size = 0x12000, scoped, tag = 'internal scratch']
  %s0 = inlined_call_operand.vmem [shape: bf16[16,144], index: 0, kind: input, shape index: {}]
  %s1 = inlined_call_operand.vmem [shape: bf16[144,64], index: 1, kind: input, shape index: {}]
  %s2 = inlined_call_operand.vmem [shape: f32[1,64], index: 2, kind: input, shape index: {}]
  %s3 = inlined_call_operand.vmem [shape: bf16[16,64], index: 3, kind: output, shape index: {}]
  %s4 = sld [smem:[#allocation0]]
  $region22: #{forward.18} parent=0
    _
  %s6 = ssub.s32 1, %s4
  %s7 = scalar_select 0, %s6, %s4
  // Predicated region
  $region2: #{forward.18} parent=0 // pred_check
    _
  $region3: #{forward.18} parent=0 // pred_check_branch
    %9 = sbr.rel (0) target = $region5
  $region4: #{forward.18} parent=0 // pred_region
    _
  $region5: #{forward.18} parent=0 // pred_fallthru
    _
  // Predicated region
  $region6: #{forward.18} parent=0 // pred_check
    _
  $region7: #{forward.18} parent=0 // pred_check_branch
    %11 = sbr.rel (0) target = $region9
  $region8: #{forward.18} parent=0 // pred_region
    _
  $region9: #{forward.18} parent=0 // pred_fallthru
    _
  // Predicated region
  $region10: #{forward.18} parent=0 // pred_check
    _
  $region11: #{forward.18} parent=0 // pred_check_branch
    %13 = sbr.rel (0) target = $region13
  $region12: #{forward.18} parent=0 // pred_region
    _
  $region13: #{forward.18} parent=0 // pred_fallthru
    _
  %v15 = vld [vmem:[%s0] sm:$0xff]
  %v16 = vld [vmem:[%s0 + $0x8] sm:$0xff]
  %v17 = vld [vmem:[%s1] sm:$0xf]
  %v18 = vld [vmem:[%s1 + $0x4] sm:$0xf]
  %v19 = vld [vmem:[%s1 + $0x8] sm:$0xf]
  %v20 = vld [vmem:[%s1 + $0xc] sm:$0xf]
  %v21 = vld [vmem:[%s1 + $0x10] sm:$0xf]
  %v22 = vld [vmem:[%s1 + $0x14] sm:$0xf]
  %v23 = vld [vmem:[%s1 + $0x18] sm:$0xf]
  %v24 = vld [vmem:[%s1 + $0x1c] sm:$0xf]
  %v25 = vld [vmem:[%s1 + $0x20] sm:$0xf]
  %v26 = vld [vmem:[%s1 + $0x24] sm:$0xf]
  %v27 = vld [vmem:[%s1 + $0x28] sm:$0xf]
  %v28 = vld [vmem:[%s1 + $0x2c] sm:$0xf]
  %v29 = vld [vmem:[%s1 + $0x30] sm:$0xf]
  %v30 = vld [vmem:[%s1 + $0x34] sm:$0xf]
  %v31 = vld [vmem:[%s1 + $0x38] sm:$0xf]
  %v32 = vld [vmem:[%s1 + $0x3c] sm:$0xf]
  %v33 = vld [vmem:[%s1 + $0x40] sm:$0xf]
  %v34 = vld [vmem:[%s1 + $0x44] sm:$0xf]
  %v35 = vld [vmem:[%s2] sm:$0x1]
  %v37 = vlaneseq
  %v38 = vshrl.u32 %v37, 7
  %v39 = vsub.s32 0, %v38
  %v40 = vrot.slane %v35, %v39
  %v44 = vunpack.c.l.b16 %v15
  %v45 = vunpack.c.h.b16 %v15
  %v46 = vunpack.c.l.b16 %v16
  %v47 = vunpack.c.h.b16 %v16
  %v48 = vpack.c.b16 %v46, %v44
  %v49 = vpack.c.b16 %v47, %v45
  %v69 = vunpack.c.l.b16 %v17
  %v70 = vunpack.c.l.b16 %v18
  %v71 = vunpack.c.l.b16 %v19
  %v72 = vunpack.c.l.b16 %v20
  %v73 = vunpack.c.l.b16 %v21
  %v74 = vunpack.c.l.b16 %v22
  %v75 = vunpack.c.l.b16 %v23
  %v76 = vunpack.c.l.b16 %v24
  %v77 = vunpack.c.l.b16 %v25
  %v78 = vunpack.c.l.b16 %v26
  %v79 = vunpack.c.l.b16 %v27
  %v80 = vunpack.c.l.b16 %v28
  %v81 = vunpack.c.l.b16 %v29
  %v82 = vunpack.c.l.b16 %v30
  %v83 = vunpack.c.l.b16 %v31
  %v84 = vunpack.c.l.b16 %v32
  %v85 = vunpack.c.l.b16 %v33
  %v86 = vunpack.c.l.b16 %v34
  %v87 = vpack.c.b16 %v70, %v69
  %v88 = vpack.c.b16 %v72, %v71
  %v89 = vpack.c.b16 %v74, %v73
  %v90 = vpack.c.b16 %v76, %v75
  %v91 = vpack.c.b16 %v78, %v77
  %v92 = vpack.c.b16 %v80, %v79
  %v93 = vpack.c.b16 %v82, %v81
  %v94 = vpack.c.b16 %v84, %v83
  %v95 = vpack.c.b16 %v86, %v85
  %vm105 = vcmask 130048
  %v107 = vsel %vm105, %v49, 0
  %109 = vmatprep.subr.bf16.mxu0 0
  %110 = vmatpush1.bf16.msra.mxu0 %v94
  %111 = vmatprep.subr.bf16.mxu0 0
  %112 = vmatpush1.bf16.msra.mxu0 %v93
  %113 = vmatprep.subr.bf16.mxu0 0
  %114 = vmatpush1.bf16.msra.mxu0 %v92
  %115 = vmatprep.subr.bf16.mxu0 0
  %116 = vmatpush1.bf16.msra.mxu0 %v91
  %117 = vmatprep.subr.bf16.mxu0 0
  %118 = vmatpush1.bf16.msra.mxu0 %v90
  %119 = vmatprep.subr.bf16.mxu0 0
  %120 = vmatpush1.bf16.msra.mxu0 %v89
  %121 = vmatprep.subr.bf16.mxu0 0
  %122 = vmatpush1.bf16.msra.mxu0 %v88
  %123 = vmatprep.subr.bf16.mxu0 0
  %124 = vmatpush1.bf16.msra.mxu0 %v87
  %125 = vmatprep.subr.bf16.mxu0 0
  %126 = vmatpush2.bf16.msra.mxu0 0
  %127 = vmatprep.subr.bf16.mxu0 0
  %128 = vmatpush2.bf16.msra.mxu0 0
  %129 = vmatprep.subr.bf16.mxu0 0
  %130 = vmatpush2.bf16.msra.mxu0 0
  %131 = vmatprep.subr.bf16.mxu0 0
  %132 = vmatpush2.bf16.msra.mxu0 0
  %133 = vmatprep.subr.bf16.mxu0 0
  %134 = vmatpush2.bf16.msra.mxu0 0
  %135 = vmatprep.subr.bf16.mxu0 0
  %136 = vmatpush2.bf16.msra.mxu0 0
  %137 = vmatprep.subr.bf16.mxu0 0
  %138 = vmatpush2.bf16.msra.mxu0 0
  %139 = vmatprep.subr.bf16.mxu0 0
  %140 = vmatpush2.bf16.msra.mxu0 %v95
  %141 = vmatprep.mubr.bf16.mxu0 %v107
  %142 = vmatmul.mubr.bf16.gmra.mxu0 %v48
  %v143 = vpop.f32.mrf.mxu0
  %v144 = vadd.f32 %v40, %v143
  %v145 = vpop.f32.mrf.mxu0
  %v146 = vpop.f32.mrf.mxu0
  %v147 = vadd.f32 %v40, %v146
  %v148 = vpop.f32.mrf.mxu0
  %149 = vdwg.mxu0
  %v150 = vmax.f32 %v144, 0.0
  %v151 = vmax.f32 %v147, 0.0
  %v152 = vpack.c.bf16 %v151, %v150
  %v154 = vunpack.c.l.b16 %v152
  %v155 = vunpack.c.h.b16 %v152
  %v156 = vpack.c.b16 %v154, %v154
  %v157 = vpack.c.b16 %v155, %v155
  %vm160 = vcmask 519168
  %161 = vst.msk [vmem:[%s3] sm:$0xf] %vm160, %v156
  %162 = vst.msk [vmem:[%s3 + $0x4] sm:$0xf] %vm160, %v157
  // Predicated region
  $region14: #{forward.18} parent=0 // pred_check
    _
  $region15: #{forward.18} parent=0 // pred_check_branch
    %164 = sbr.rel (0) target = $region17
  $region16: #{forward.18} parent=0 // pred_region
    _
  $region17: #{forward.18} parent=0 // pred_fallthru
    _
  // Predicated region
  $region18: #{forward.18} parent=0 // pred_check
    _
  $region19: #{forward.18} parent=0 // pred_check_branch
    %166 = sbr.rel (0) target = $region21
  $region20: #{forward.18} parent=0 // pred_region
    _
  $region21: #{forward.18} parent=0 // pred_fallthru
    _

// kernel: forward.20
$region0: #{forward.20}
  #allocation0 [shape = 'u32[]', space=smem, size = 0x4, offset = 0x4, fixed_abs, tag = 'smem constant byte address 0x4 - core index']
  #allocation1 [shape = 'u32[144,128]{1,0:T(1,128)}', space=vmem, size = 0x12000, scoped, tag = 'internal scratch']
  %s0 = inlined_call_operand.vmem [shape: bf16[32,144], index: 0, kind: input, shape index: {}]
  %s1 = inlined_call_operand.vmem [shape: bf16[144,64], index: 1, kind: input, shape index: {}]
  %s2 = inlined_call_operand.vmem [shape: f32[1,64], index: 2, kind: input, shape index: {}]
  %s3 = inlined_call_operand.vmem [shape: bf16[32,64], index: 3, kind: output, shape index: {}]
  %s4 = sld [smem:[#allocation0]]
  $region22: #{forward.20} parent=0
    _
  %s6 = ssub.s32 1, %s4
  %s7 = scalar_select 0, %s6, %s4
  // Predicated region
  $region2: #{forward.20} parent=0 // pred_check
    _
  $region3: #{forward.20} parent=0 // pred_check_branch
    %9 = sbr.rel (0) target = $region5
  $region4: #{forward.20} parent=0 // pred_region
    _
  $region5: #{forward.20} parent=0 // pred_fallthru
    _
  // Predicated region
  $region6: #{forward.20} parent=0 // pred_check
    _
  $region7: #{forward.20} parent=0 // pred_check_branch
    %11 = sbr.rel (0) target = $region9
  $region8: #{forward.20} parent=0 // pred_region
    _
  $region9: #{forward.20} parent=0 // pred_fallthru
    _
  // Predicated region
  $region10: #{forward.20} parent=0 // pred_check
    _
  $region11: #{forward.20} parent=0 // pred_check_branch
    %13 = sbr.rel (0) target = $region13
  $region12: #{forward.20} parent=0 // pred_region
    _
  $region13: #{forward.20} parent=0 // pred_fallthru
    _
  %v15 = vld [vmem:[%s0] sm:$0xff]
  %v16 = vld [vmem:[%s0 + $0x8] sm:$0xff]
  %v17 = vld [vmem:[%s0 + $0x10] sm:$0xff]
  %v18 = vld [vmem:[%s0 + $0x18] sm:$0xff]
  %v19 = vld [vmem:[%s1] sm:$0xf]
  %v20 = vld [vmem:[%s1 + $0x4] sm:$0xf]
  %v21 = vld [vmem:[%s1 + $0x8] sm:$0xf]
  %v22 = vld [vmem:[%s1 + $0xc] sm:$0xf]
  %v23 = vld [vmem:[%s1 + $0x10] sm:$0xf]
  %v24 = vld [vmem:[%s1 + $0x14] sm:$0xf]
  %v25 = vld [vmem:[%s1 + $0x18] sm:$0xf]
  %v26 = vld [vmem:[%s1 + $0x1c] sm:$0xf]
  %v27 = vld [vmem:[%s1 + $0x20] sm:$0xf]
  %v28 = vld [vmem:[%s1 + $0x24] sm:$0xf]
  %v29 = vld [vmem:[%s1 + $0x28] sm:$0xf]
  %v30 = vld [vmem:[%s1 + $0x2c] sm:$0xf]
  %v31 = vld [vmem:[%s1 + $0x30] sm:$0xf]
  %v32 = vld [vmem:[%s1 + $0x34] sm:$0xf]
  %v33 = vld [vmem:[%s1 + $0x38] sm:$0xf]
  %v34 = vld [vmem:[%s1 + $0x3c] sm:$0xf]
  %v35 = vld [vmem:[%s1 + $0x40] sm:$0xf]
  %v36 = vld [vmem:[%s1 + $0x44] sm:$0xf]
  %v37 = vld [vmem:[%s2] sm:$0x1]
  %v39 = vlaneseq
  %v40 = vshrl.u32 %v39, 7
  %v41 = vsub.s32 0, %v40
  %v42 = vrot.slane %v37, %v41
  %v48 = vunpack.c.l.b16 %v15
  %v49 = vunpack.c.h.b16 %v15
  %v50 = vunpack.c.l.b16 %v16
  %v51 = vunpack.c.h.b16 %v16
  %v52 = vunpack.c.l.b16 %v17
  %v53 = vunpack.c.h.b16 %v17
  %v54 = vunpack.c.l.b16 %v18
  %v55 = vunpack.c.h.b16 %v18
  %v56 = vpack.c.b16 %v50, %v48
  %v57 = vpack.c.b16 %v51, %v49
  %v58 = vpack.c.b16 %v54, %v52
  %v59 = vpack.c.b16 %v55, %v53
  %v80 = vunpack.c.l.b16 %v19
  %v81 = vunpack.c.l.b16 %v20
  %v82 = vunpack.c.l.b16 %v21
  %v83 = vunpack.c.l.b16 %v22
  %v84 = vunpack.c.l.b16 %v23
  %v85 = vunpack.c.l.b16 %v24
  %v86 = vunpack.c.l.b16 %v25
  %v87 = vunpack.c.l.b16 %v26
  %v88 = vunpack.c.l.b16 %v27
  %v89 = vunpack.c.l.b16 %v28
  %v90 = vunpack.c.l.b16 %v29
  %v91 = vunpack.c.l.b16 %v30
  %v92 = vunpack.c.l.b16 %v31
  %v93 = vunpack.c.l.b16 %v32
  %v94 = vunpack.c.l.b16 %v33
  %v95 = vunpack.c.l.b16 %v34
  %v96 = vunpack.c.l.b16 %v35
  %v97 = vunpack.c.l.b16 %v36
  %v98 = vpack.c.b16 %v81, %v80
  %v99 = vpack.c.b16 %v83, %v82
  %v100 = vpack.c.b16 %v85, %v84
  %v101 = vpack.c.b16 %v87, %v86
  %v102 = vpack.c.b16 %v89, %v88
  %v103 = vpack.c.b16 %v91, %v90
  %v104 = vpack.c.b16 %v93, %v92
  %v105 = vpack.c.b16 %v95, %v94
  %v106 = vpack.c.b16 %v97, %v96
  %vm116 = vcmask 130048
  %v118 = vsel %vm116, %v57, 0
  %v121 = vsel %vm116, %v59, 0
  %123 = vmatprep.subr.bf16.mxu0 0
  %124 = vmatpush1.bf16.msra.mxu0 %v105
  %125 = vmatprep.subr.bf16.mxu0 0
  %126 = vmatpush1.bf16.msra.mxu0 %v104
  %127 = vmatprep.subr.bf16.mxu0 0
  %128 = vmatpush1.bf16.msra.mxu0 %v103
  %129 = vmatprep.subr.bf16.mxu0 0
  %130 = vmatpush1.bf16.msra.mxu0 %v102
  %131 = vmatprep.subr.bf16.mxu0 0
  %132 = vmatpush1.bf16.msra.mxu0 %v101
  %133 = vmatprep.subr.bf16.mxu0 0
  %134 = vmatpush1.bf16.msra.mxu0 %v100
  %135 = vmatprep.subr.bf16.mxu0 0
  %136 = vmatpush1.bf16.msra.mxu0 %v99
  %137 = vmatprep.subr.bf16.mxu0 0
  %138 = vmatpush1.bf16.msra.mxu0 %v98
  %139 = vmatprep.subr.bf16.mxu0 0
  %140 = vmatpush2.bf16.msra.mxu0 0
  %141 = vmatprep.subr.bf16.mxu0 0
  %142 = vmatpush2.bf16.msra.mxu0 0
  %143 = vmatprep.subr.bf16.mxu0 0
  %144 = vmatpush2.bf16.msra.mxu0 0
  %145 = vmatprep.subr.bf16.mxu0 0
  %146 = vmatpush2.bf16.msra.mxu0 0
  %147 = vmatprep.subr.bf16.mxu0 0
  %148 = vmatpush2.bf16.msra.mxu0 0
  %149 = vmatprep.subr.bf16.mxu0 0
  %150 = vmatpush2.bf16.msra.mxu0 0
  %151 = vmatprep.subr.bf16.mxu0 0
  %152 = vmatpush2.bf16.msra.mxu0 0
  %153 = vmatprep.subr.bf16.mxu0 0
  %154 = vmatpush2.bf16.msra.mxu0 %v106
  %155 = vmatprep.mubr.bf16.mxu0 %v118
  %156 = vmatmul.mubr.bf16.gmra.mxu0 %v56
  %v157 = vpop.f32.mrf.mxu0
  %v158 = vadd.f32 %v42, %v157
  %v159 = vpop.f32.mrf.mxu0
  %v160 = vpop.f32.mrf.mxu0
  %v161 = vadd.f32 %v42, %v160
  %v162 = vpop.f32.mrf.mxu0
  %163 = vmatprep.mubr.bf16.mxu0 %v121
  %164 = vmatmul.mubr.bf16.gmra.mxu0 %v58
  %v165 = vpop.f32.mrf.mxu0
  %v166 = vadd.f32 %v42, %v165
  %v167 = vpop.f32.mrf.mxu0
  %v168 = vpop.f32.mrf.mxu0
  %v169 = vadd.f32 %v42, %v168
  %v170 = vpop.f32.mrf.mxu0
  %171 = vdwg.mxu0
  %v172 = vmax.f32 %v158, 0.0
  %v173 = vmax.f32 %v161, 0.0
  %v174 = vmax.f32 %v166, 0.0
  %v175 = vmax.f32 %v169, 0.0
  %v176 = vpack.c.bf16 %v173, %v172
  %v177 = vpack.c.bf16 %v175, %v174
  %v180 = vunpack.c.l.b16 %v176
  %v181 = vunpack.c.h.b16 %v176
  %v182 = vunpack.c.l.b16 %v177
  %v183 = vunpack.c.h.b16 %v177
  %v184 = vpack.c.b16 %v180, %v180
  %v185 = vpack.c.b16 %v181, %v181
  %v186 = vpack.c.b16 %v182, %v182
  %v187 = vpack.c.b16 %v183, %v183
  %vm192 = vcmask 519168
  %193 = vst.msk [vmem:[%s3] sm:$0xf] %vm192, %v184
  %194 = vst.msk [vmem:[%s3 + $0x4] sm:$0xf] %vm192, %v185
  %195 = vst.msk [vmem:[%s3 + $0x8] sm:$0xf] %vm192, %v186
  %196 = vst.msk [vmem:[%s3 + $0xc] sm:$0xf] %vm192, %v187
  // Predicated region
  $region14: #{forward.20} parent=0 // pred_check
    _
  $region15: #{forward.20} parent=0 // pred_check_branch
    %198 = sbr.rel (0) target = $region17
  $region16: #{forward.20} parent=0 // pred_region
    _
  $region17: #{forward.20} parent=0 // pred_fallthru
    _
  // Predicated region
  $region18: #{forward.20} parent=0 // pred_check
    _
  $region19: #{forward.20} parent=0 // pred_check_branch
    %200 = sbr.rel (0) target = $region21
  $region20: #{forward.20} parent=0 // pred_region
    _
  $region21: #{forward.20} parent=0 // pred_fallthru
    _

// kernel: forward.21
$region0: #{forward.21}
  #allocation0 [shape = 'u32[]', space=smem, size = 0x4, offset = 0x4, fixed_abs, tag = 'smem constant byte address 0x4 - core index']
  #allocation1 [shape = 'u32[144,128]{1,0:T(1,128)}', space=vmem, size = 0x12000, scoped, tag = 'internal scratch']
  %s0 = inlined_call_operand.vmem [shape: bf16[128,144], index: 0, kind: input, shape index: {}]
  %s1 = inlined_call_operand.vmem [shape: bf16[144,64], index: 1, kind: input, shape index: {}]
  %s2 = inlined_call_operand.vmem [shape: f32[1,64], index: 2, kind: input, shape index: {}]
  %s3 = inlined_call_operand.vmem [shape: bf16[128,64], index: 3, kind: output, shape index: {}]
  %s4 = sld [smem:[#allocation0]]
  $region22: #{forward.21} parent=0
    _
  %s6 = ssub.s32 1, %s4
  %s7 = scalar_select 0, %s6, %s4
  // Predicated region
  $region2: #{forward.21} parent=0 // pred_check
    _
  $region3: #{forward.21} parent=0 // pred_check_branch
    %9 = sbr.rel (0) target = $region5
  $region4: #{forward.21} parent=0 // pred_region
    _
  $region5: #{forward.21} parent=0 // pred_fallthru
    _
  // Predicated region
  $region6: #{forward.21} parent=0 // pred_check
    _
  $region7: #{forward.21} parent=0 // pred_check_branch
    %11 = sbr.rel (0) target = $region9
  $region8: #{forward.21} parent=0 // pred_region
    _
  $region9: #{forward.21} parent=0 // pred_fallthru
    _
  // Predicated region
  $region10: #{forward.21} parent=0 // pred_check
    _
  $region11: #{forward.21} parent=0 // pred_check_branch
    %13 = sbr.rel (0) target = $region13
  $region12: #{forward.21} parent=0 // pred_region
    _
  $region13: #{forward.21} parent=0 // pred_fallthru
    _
  %v15 = vld [vmem:[%s0] sm:$0xff]
  %v16 = vld [vmem:[%s0 + $0x8] sm:$0xff]
  %v17 = vld [vmem:[%s0 + $0x10] sm:$0xff]
  %v18 = vld [vmem:[%s0 + $0x18] sm:$0xff]
  %v19 = vld [vmem:[%s0 + $0x20] sm:$0xff]
  %v20 = vld [vmem:[%s0 + $0x28] sm:$0xff]
  %v21 = vld [vmem:[%s0 + $0x30] sm:$0xff]
  %v22 = vld [vmem:[%s0 + $0x38] sm:$0xff]
  %v23 = vld [vmem:[%s0 + $0x40] sm:$0xff]
  %v24 = vld [vmem:[%s0 + $0x48] sm:$0xff]
  %v25 = vld [vmem:[%s0 + $0x50] sm:$0xff]
  %v26 = vld [vmem:[%s0 + $0x58] sm:$0xff]
  %v27 = vld [vmem:[%s0 + $0x60] sm:$0xff]
  %v28 = vld [vmem:[%s0 + $0x68] sm:$0xff]
  %v29 = vld [vmem:[%s0 + $0x70] sm:$0xff]
  %v30 = vld [vmem:[%s0 + $0x78] sm:$0xff]
  %v31 = vld [vmem:[%s1] sm:$0xf]
  %v32 = vld [vmem:[%s1 + $0x4] sm:$0xf]
  %v33 = vld [vmem:[%s1 + $0x8] sm:$0xf]
  %v34 = vld [vmem:[%s1 + $0xc] sm:$0xf]
  %v35 = vld [vmem:[%s1 + $0x10] sm:$0xf]
  %v36 = vld [vmem:[%s1 + $0x14] sm:$0xf]
  %v37 = vld [vmem:[%s1 + $0x18] sm:$0xf]
  %v38 = vld [vmem:[%s1 + $0x1c] sm:$0xf]
  %v39 = vld [vmem:[%s1 + $0x20] sm:$0xf]
  %v40 = vld [vmem:[%s1 + $0x24] sm:$0xf]
  %v41 = vld [vmem:[%s1 + $0x28] sm:$0xf]
  %v42 = vld [vmem:[%s1 + $0x2c] sm:$0xf]
  %v43 = vld [vmem:[%s1 + $0x30] sm:$0xf]
  %v44 = vld [vmem:[%s1 + $0x34] sm:$0xf]
  %v45 = vld [vmem:[%s1 + $0x38] sm:$0xf]
  %v46 = vld [vmem:[%s1 + $0x3c] sm:$0xf]
  %v47 = vld [vmem:[%s1 + $0x40] sm:$0xf]
  %v48 = vld [vmem:[%s1 + $0x44] sm:$0xf]
  %v49 = vld [vmem:[%s2] sm:$0x1]
  %v51 = vlaneseq
  %v52 = vshrl.u32 %v51, 7
  %v53 = vsub.s32 0, %v52
  %v54 = vrot.slane %v49, %v53
  %v72 = vunpack.c.l.b16 %v15
  %v73 = vunpack.c.h.b16 %v15
  %v74 = vunpack.c.l.b16 %v16
  %v75 = vunpack.c.h.b16 %v16
  %v76 = vunpack.c.l.b16 %v17
  %v77 = vunpack.c.h.b16 %v17
  %v78 = vunpack.c.l.b16 %v18
  %v79 = vunpack.c.h.b16 %v18
  %v80 = vunpack.c.l.b16 %v19
  %v81 = vunpack.c.h.b16 %v19
  %v82 = vunpack.c.l.b16 %v20
  %v83 = vunpack.c.h.b16 %v20
  %v84 = vunpack.c.l.b16 %v21
  %v85 = vunpack.c.h.b16 %v21
  %v86 = vunpack.c.l.b16 %v22
  %v87 = vunpack.c.h.b16 %v22
  %v88 = vunpack.c.l.b16 %v23
  %v89 = vunpack.c.h.b16 %v23
  %v90 = vunpack.c.l.b16 %v24
  %v91 = vunpack.c.h.b16 %v24
  %v92 = vunpack.c.l.b16 %v25
  %v93 = vunpack.c.h.b16 %v25
  %v94 = vunpack.c.l.b16 %v26
  %v95 = vunpack.c.h.b16 %v26
  %v96 = vunpack.c.l.b16 %v27
  %v97 = vunpack.c.h.b16 %v27
  %v98 = vunpack.c.l.b16 %v28
  %v99 = vunpack.c.h.b16 %v28
  %v100 = vunpack.c.l.b16 %v29
  %v101 = vunpack.c.h.b16 %v29
  %v102 = vunpack.c.l.b16 %v30
  %v103 = vunpack.c.h.b16 %v30
  %v104 = vpack.c.b16 %v74, %v72
  %v105 = vpack.c.b16 %v75, %v73
  %v106 = vpack.c.b16 %v78, %v76
  %v107 = vpack.c.b16 %v79, %v77
  %v108 = vpack.c.b16 %v82, %v80
  %v109 = vpack.c.b16 %v83, %v81
  %v110 = vpack.c.b16 %v86, %v84
  %v111 = vpack.c.b16 %v87, %v85
  %v112 = vpack.c.b16 %v90, %v88
  %v113 = vpack.c.b16 %v91, %v89
  %v114 = vpack.c.b16 %v94, %v92
  %v115 = vpack.c.b16 %v95, %v93
  %v116 = vpack.c.b16 %v98, %v96
  %v117 = vpack.c.b16 %v99, %v97
  %v118 = vpack.c.b16 %v102, %v100
  %v119 = vpack.c.b16 %v103, %v101
  %v146 = vunpack.c.l.b16 %v31
  %v147 = vunpack.c.l.b16 %v32
  %v148 = vunpack.c.l.b16 %v33
  %v149 = vunpack.c.l.b16 %v34
  %v150 = vunpack.c.l.b16 %v35
  %v151 = vunpack.c.l.b16 %v36
  %v152 = vunpack.c.l.b16 %v37
  %v153 = vunpack.c.l.b16 %v38
  %v154 = vunpack.c.l.b16 %v39
  %v155 = vunpack.c.l.b16 %v40
  %v156 = vunpack.c.l.b16 %v41
  %v157 = vunpack.c.l.b16 %v42
  %v158 = vunpack.c.l.b16 %v43
  %v159 = vunpack.c.l.b16 %v44
  %v160 = vunpack.c.l.b16 %v45
  %v161 = vunpack.c.l.b16 %v46
  %v162 = vunpack.c.l.b16 %v47
  %v163 = vunpack.c.l.b16 %v48
  %v164 = vpack.c.b16 %v147, %v146
  %v165 = vpack.c.b16 %v149, %v148
  %v166 = vpack.c.b16 %v151, %v150
  %v167 = vpack.c.b16 %v153, %v152
  %v168 = vpack.c.b16 %v155, %v154
  %v169 = vpack.c.b16 %v157, %v156
  %v170 = vpack.c.b16 %v159, %v158
  %v171 = vpack.c.b16 %v161, %v160
  %v172 = vpack.c.b16 %v163, %v162
  %vm182 = vcmask 130048
  %v184 = vsel %vm182, %v105, 0
  %v187 = vsel %vm182, %v107, 0
  %v190 = vsel %vm182, %v109, 0
  %v193 = vsel %vm182, %v111, 0
  %v196 = vsel %vm182, %v113, 0
  %v199 = vsel %vm182, %v115, 0
  %v202 = vsel %vm182, %v117, 0
  %v205 = vsel %vm182, %v119, 0
  %207 = vmatprep.subr.bf16.mxu0 0
  %208 = vmatpush1.bf16.msra.mxu0 %v171
  %209 = vmatprep.subr.bf16.mxu0 0
  %210 = vmatpush1.bf16.msra.mxu0 %v170
  %211 = vmatprep.subr.bf16.mxu0 0
  %212 = vmatpush1.bf16.msra.mxu0 %v169
  %213 = vmatprep.subr.bf16.mxu0 0
  %214 = vmatpush1.bf16.msra.mxu0 %v168
  %215 = vmatprep.subr.bf16.mxu0 0
  %216 = vmatpush1.bf16.msra.mxu0 %v167
  %217 = vmatprep.subr.bf16.mxu0 0
  %218 = vmatpush1.bf16.msra.mxu0 %v166
  %219 = vmatprep.subr.bf16.mxu0 0
  %220 = vmatpush1.bf16.msra.mxu0 %v165
  %221 = vmatprep.subr.bf16.mxu0 0
  %222 = vmatpush1.bf16.msra.mxu0 %v164
  %223 = vmatprep.subr.bf16.mxu0 0
  %224 = vmatpush2.bf16.msra.mxu0 0
  %225 = vmatprep.subr.bf16.mxu0 0
  %226 = vmatpush2.bf16.msra.mxu0 0
  %227 = vmatprep.subr.bf16.mxu0 0
  %228 = vmatpush2.bf16.msra.mxu0 0
  %229 = vmatprep.subr.bf16.mxu0 0
  %230 = vmatpush2.bf16.msra.mxu0 0
  %231 = vmatprep.subr.bf16.mxu0 0
  %232 = vmatpush2.bf16.msra.mxu0 0
  %233 = vmatprep.subr.bf16.mxu0 0
  %234 = vmatpush2.bf16.msra.mxu0 0
  %235 = vmatprep.subr.bf16.mxu0 0
  %236 = vmatpush2.bf16.msra.mxu0 0
  %237 = vmatprep.subr.bf16.mxu0 0
  %238 = vmatpush2.bf16.msra.mxu0 %v172
  %239 = vmatprep.mubr.bf16.mxu0 %v184
  %240 = vmatmul.mubr.bf16.gmra.mxu0 %v104
  %v241 = vpop.f32.mrf.mxu0
  %v242 = vadd.f32 %v54, %v241
  %v243 = vpop.f32.mrf.mxu0
  %v244 = vpop.f32.mrf.mxu0
  %v245 = vadd.f32 %v54, %v244
  %v246 = vpop.f32.mrf.mxu0
  %247 = vmatprep.mubr.bf16.mxu0 %v187
  %248 = vmatmul.mubr.bf16.gmra.mxu0 %v106
  %v249 = vpop.f32.mrf.mxu0
  %v250 = vadd.f32 %v54, %v249
  %v251 = vpop.f32.mrf.mxu0
  %v252 = vpop.f32.mrf.mxu0
  %v253 = vadd.f32 %v54, %v252
  %v254 = vpop.f32.mrf.mxu0
  %255 = vmatprep.mubr.bf16.mxu0 %v190
  %256 = vmatmul.mubr.bf16.gmra.mxu0 %v108
  %v257 = vpop.f32.mrf.mxu0
  %v258 = vadd.f32 %v54, %v257
  %v259 = vpop.f32.mrf.mxu0
  %v260 = vpop.f32.mrf.mxu0
  %v261 = vadd.f32 %v54, %v260
  %v262 = vpop.f32.mrf.mxu0
  %263 = vmatprep.mubr.bf16.mxu0 %v193
  %264 = vmatmul.mubr.bf16.gmra.mxu0 %v110
  %v265 = vpop.f32.mrf.mxu0
  %v266 = vadd.f32 %v54, %v265
  %v267 = vpop.f32.mrf.mxu0
  %v268 = vpop.f32.mrf.mxu0
  %v269 = vadd.f32 %v54, %v268
  %v270 = vpop.f32.mrf.mxu0
  %271 = vmatprep.mubr.bf16.mxu0 %v196
  %272 = vmatmul.mubr.bf16.gmra.mxu0 %v112
  %v273 = vpop.f32.mrf.mxu0
  %v274 = vadd.f32 %v54, %v273
  %v275 = vpop.f32.mrf.mxu0
  %v276 = vpop.f32.mrf.mxu0
  %v277 = vadd.f32 %v54, %v276
  %v278 = vpop.f32.mrf.mxu0
  %279 = vmatprep.mubr.bf16.mxu0 %v199
  %280 = vmatmul.mubr.bf16.gmra.mxu0 %v114
  %v281 = vpop.f32.mrf.mxu0
  %v282 = vadd.f32 %v54, %v281
  %v283 = vpop.f32.mrf.mxu0
  %v284 = vpop.f32.mrf.mxu0
  %v285 = vadd.f32 %v54, %v284
  %v286 = vpop.f32.mrf.mxu0
  %287 = vmatprep.mubr.bf16.mxu0 %v202
  %288 = vmatmul.mubr.bf16.gmra.mxu0 %v116
  %v289 = vpop.f32.mrf.mxu0
  %v290 = vadd.f32 %v54, %v289
  %v291 = vpop.f32.mrf.mxu0
  %v292 = vpop.f32.mrf.mxu0
  %v293 = vadd.f32 %v54, %v292
  %v294 = vpop.f32.mrf.mxu0
  %295 = vmatprep.mubr.bf16.mxu0 %v205
  %296 = vmatmul.mubr.bf16.gmra.mxu0 %v118
  %v297 = vpop.f32.mrf.mxu0
  %v298 = vadd.f32 %v54, %v297
  %v299 = vpop.f32.mrf.mxu0
  %v300 = vpop.f32.mrf.mxu0
  %v301 = vadd.f32 %v54, %v300
  %v302 = vpop.f32.mrf.mxu0
  %303 = vdwg.mxu0
  %v304 = vmax.f32 %v242, 0.0
  %v305 = vmax.f32 %v245, 0.0
  %v306 = vmax.f32 %v250, 0.0
  %v307 = vmax.f32 %v253, 0.0
  %v308 = vmax.f32 %v258, 0.0
  %v309 = vmax.f32 %v261, 0.0
  %v310 = vmax.f32 %v266, 0.0
  %v311 = vmax.f32 %v269, 0.0
  %v312 = vmax.f32 %v274, 0.0
  %v313 = vmax.f32 %v277, 0.0
  %v314 = vmax.f32 %v282, 0.0
  %v315 = vmax.f32 %v285, 0.0
  %v316 = vmax.f32 %v290, 0.0
  %v317 = vmax.f32 %v293, 0.0
  %v318 = vmax.f32 %v298, 0.0
  %v319 = vmax.f32 %v301, 0.0
  %v320 = vpack.c.bf16 %v305, %v304
  %v321 = vpack.c.bf16 %v307, %v306
  %v322 = vpack.c.bf16 %v309, %v308
  %v323 = vpack.c.bf16 %v311, %v310
  %v324 = vpack.c.bf16 %v313, %v312
  %v325 = vpack.c.bf16 %v315, %v314
  %v326 = vpack.c.bf16 %v317, %v316
  %v327 = vpack.c.bf16 %v319, %v318
  %v336 = vunpack.c.l.b16 %v320
  %v337 = vunpack.c.h.b16 %v320
  %v338 = vunpack.c.l.b16 %v321
  %v339 = vunpack.c.h.b16 %v321
  %v340 = vunpack.c.l.b16 %v322
  %v341 = vunpack.c.h.b16 %v322
  %v342 = vunpack.c.l.b16 %v323
  %v343 = vunpack.c.h.b16 %v323
  %v344 = vunpack.c.l.b16 %v324
  %v345 = vunpack.c.h.b16 %v324
  %v346 = vunpack.c.l.b16 %v325
  %v347 = vunpack.c.h.b16 %v325
  %v348 = vunpack.c.l.b16 %v326
  %v349 = vunpack.c.h.b16 %v326
  %v350 = vunpack.c.l.b16 %v327
  %v351 = vunpack.c.h.b16 %v327
  %v352 = vpack.c.b16 %v336, %v336
  %v353 = vpack.c.b16 %v337, %v337
  %v354 = vpack.c.b16 %v338, %v338
  %v355 = vpack.c.b16 %v339, %v339
  %v356 = vpack.c.b16 %v340, %v340
  %v357 = vpack.c.b16 %v341, %v341
  %v358 = vpack.c.b16 %v342, %v342
  %v359 = vpack.c.b16 %v343, %v343
  %v360 = vpack.c.b16 %v344, %v344
  %v361 = vpack.c.b16 %v345, %v345
  %v362 = vpack.c.b16 %v346, %v346
  %v363 = vpack.c.b16 %v347, %v347
  %v364 = vpack.c.b16 %v348, %v348
  %v365 = vpack.c.b16 %v349, %v349
  %v366 = vpack.c.b16 %v350, %v350
  %v367 = vpack.c.b16 %v351, %v351
  %vm384 = vcmask 519168
  %385 = vst.msk [vmem:[%s3] sm:$0xf] %vm384, %v352
  %386 = vst.msk [vmem:[%s3 + $0x4] sm:$0xf] %vm384, %v353
  %387 = vst.msk [vmem:[%s3 + $0x8] sm:$0xf] %vm384, %v354
  %388 = vst.msk [vmem:[%s3 + $0xc] sm:$0xf] %vm384, %v355
  %389 = vst.msk [vmem:[%s3 + $0x10] sm:$0xf] %vm384, %v356
  %390 = vst.msk [vmem:[%s3 + $0x14] sm:$0xf] %vm384, %v357
  %391 = vst.msk [vmem:[%s3 + $0x18] sm:$0xf] %vm384, %v358
  %392 = vst.msk [vmem:[%s3 + $0x1c] sm:$0xf] %vm384, %v359
  %393 = vst.msk [vmem:[%s3 + $0x20] sm:$0xf] %vm384, %v360
  %394 = vst.msk [vmem:[%s3 + $0x24] sm:$0xf] %vm384, %v361
  %395 = vst.msk [vmem:[%s3 + $0x28] sm:$0xf] %vm384, %v362
  %396 = vst.msk [vmem:[%s3 + $0x2c] sm:$0xf] %vm384, %v363
  %397 = vst.msk [vmem:[%s3 + $0x30] sm:$0xf] %vm384, %v364
  %398 = vst.msk [vmem:[%s3 + $0x34] sm:$0xf] %vm384, %v365
  %399 = vst.msk [vmem:[%s3 + $0x38] sm:$0xf] %vm384, %v366
  %400 = vst.msk [vmem:[%s3 + $0x3c] sm:$0xf] %vm384, %v367
  // Predicated region
  $region14: #{forward.21} parent=0 // pred_check
    _
  $region15: #{forward.21} parent=0 // pred_check_branch
    %402 = sbr.rel (0) target = $region17
  $region16: #{forward.21} parent=0 // pred_region
    _
  $region17: #{forward.21} parent=0 // pred_fallthru
    _
  // Predicated region
  $region18: #{forward.21} parent=0 // pred_check
    _
  $region19: #{forward.21} parent=0 // pred_check_branch
    %404 = sbr.rel (0) target = $region21
  $region20: #{forward.21} parent=0 // pred_region
    _
  $region21: #{forward.21} parent=0 // pred_fallthru
    _

// kernel: forward.22
$region0: #{forward.22}
  #allocation0 [shape = 'u32[]', space=smem, size = 0x4, offset = 0x4, fixed_abs, tag = 'smem constant byte address 0x4 - core index']
  #allocation1 [shape = 'u32[144,128]{1,0:T(1,128)}', space=vmem, size = 0x12000, scoped, tag = 'internal scratch']
  %s0 = inlined_call_operand.vmem [shape: bf16[512,144], index: 0, kind: input, shape index: {}]
  %s1 = inlined_call_operand.vmem [shape: bf16[144,32], index: 1, kind: input, shape index: {}]
  %s2 = inlined_call_operand.vmem [shape: f32[1,32], index: 2, kind: input, shape index: {}]
  %s3 = inlined_call_operand.vmem [shape: bf16[512,32], index: 3, kind: output, shape index: {}]
  %s4 = sld [smem:[#allocation0]]
  $region22: #{forward.22} parent=0
    _
  %s6 = ssub.s32 1, %s4
  %s7 = scalar_select 0, %s6, %s4
  // Predicated region
  $region2: #{forward.22} parent=0 // pred_check
    _
  $region3: #{forward.22} parent=0 // pred_check_branch
    %9 = sbr.rel (0) target = $region5
  $region4: #{forward.22} parent=0 // pred_region
    _
  $region5: #{forward.22} parent=0 // pred_fallthru
    _
  // Predicated region
  $region6: #{forward.22} parent=0 // pred_check
    _
  $region7: #{forward.22} parent=0 // pred_check_branch
    %11 = sbr.rel (0) target = $region9
  $region8: #{forward.22} parent=0 // pred_region
    _
  $region9: #{forward.22} parent=0 // pred_fallthru
    _
  // Predicated region
  $region10: #{forward.22} parent=0 // pred_check
    _
  $region11: #{forward.22} parent=0 // pred_check_branch
    %13 = sbr.rel (0) target = $region13
  $region12: #{forward.22} parent=0 // pred_region
    _
  $region13: #{forward.22} parent=0 // pred_fallthru
    _
  %v15 = vld [vmem:[%s0] sm:$0xff]
  %v16 = vld [vmem:[%s0 + $0x8] sm:$0xff]
  %v17 = vld [vmem:[%s0 + $0x10] sm:$0xff]
  %v18 = vld [vmem:[%s0 + $0x18] sm:$0xff]
  %v19 = vld [vmem:[%s0 + $0x20] sm:$0xff]
  %v20 = vld [vmem:[%s0 + $0x28] sm:$0xff]
  %v21 = vld [vmem:[%s0 + $0x30] sm:$0xff]
  %v22 = vld [vmem:[%s0 + $0x38] sm:$0xff]
  %v23 = vld [vmem:[%s0 + $0x40] sm:$0xff]
  %v24 = vld [vmem:[%s0 + $0x48] sm:$0xff]
  %v25 = vld [vmem:[%s0 + $0x50] sm:$0xff]
  %v26 = vld [vmem:[%s0 + $0x58] sm:$0xff]
  %v27 = vld [vmem:[%s0 + $0x60] sm:$0xff]
  %v28 = vld [vmem:[%s0 + $0x68] sm:$0xff]
  %v29 = vld [vmem:[%s0 + $0x70] sm:$0xff]
  %v30 = vld [vmem:[%s0 + $0x78] sm:$0xff]
  %v31 = vld [vmem:[%s0 + $0x80] sm:$0xff]
  %v32 = vld [vmem:[%s0 + $0x88] sm:$0xff]
  %v33 = vld [vmem:[%s0 + $0x90] sm:$0xff]
  %v34 = vld [vmem:[%s0 + $0x98] sm:$0xff]
  %v35 = vld [vmem:[%s0 + $0xa0] sm:$0xff]
  %v36 = vld [vmem:[%s0 + $0xa8] sm:$0xff]
  %v37 = vld [vmem:[%s0 + $0xb0] sm:$0xff]
  %v38 = vld [vmem:[%s0 + $0xb8] sm:$0xff]
  %v39 = vld [vmem:[%s0 + $0xc0] sm:$0xff]
  %v40 = vld [vmem:[%s0 + $0xc8] sm:$0xff]
  %v41 = vld [vmem:[%s0 + $0xd0] sm:$0xff]
  %v42 = vld [vmem:[%s0 + $0xd8] sm:$0xff]
  %v43 = vld [vmem:[%s0 + $0xe0] sm:$0xff]
  %v44 = vld [vmem:[%s0 + $0xe8] sm:$0xff]
  %v45 = vld [vmem:[%s0 + $0xf0] sm:$0xff]
  %v46 = vld [vmem:[%s0 + $0xf8] sm:$0xff]
  %v47 = vld [vmem:[%s0 + $0x100] sm:$0xff]
  %v48 = vld [vmem:[%s0 + $0x108] sm:$0xff]
  %v49 = vld [vmem:[%s0 + $0x110] sm:$0xff]
  %v50 = vld [vmem:[%s0 + $0x118] sm:$0xff]
  %v51 = vld [vmem:[%s0 + $0x120] sm:$0xff]
  %v52 = vld [vmem:[%s0 + $0x128] sm:$0xff]
  %v53 = vld [vmem:[%s0 + $0x130] sm:$0xff]
  %v54 = vld [vmem:[%s0 + $0x138] sm:$0xff]
  %v55 = vld [vmem:[%s0 + $0x140] sm:$0xff]
  %v56 = vld [vmem:[%s0 + $0x148] sm:$0xff]
  %v57 = vld [vmem:[%s0 + $0x150] sm:$0xff]
  %v58 = vld [vmem:[%s0 + $0x158] sm:$0xff]
  %v59 = vld [vmem:[%s0 + $0x160] sm:$0xff]
  %v60 = vld [vmem:[%s0 + $0x168] sm:$0xff]
  %v61 = vld [vmem:[%s0 + $0x170] sm:$0xff]
  %v62 = vld [vmem:[%s0 + $0x178] sm:$0xff]
  %v63 = vld [vmem:[%s0 + $0x180] sm:$0xff]
  %v64 = vld [vmem:[%s0 + $0x188] sm:$0xff]
  %v65 = vld [vmem:[%s0 + $0x190] sm:$0xff]
  %v66 = vld [vmem:[%s0 + $0x198] sm:$0xff]
  %v67 = vld [vmem:[%s0 + $0x1a0] sm:$0xff]
  %v68 = vld [vmem:[%s0 + $0x1a8] sm:$0xff]
  %v69 = vld [vmem:[%s0 + $0x1b0] sm:$0xff]
  %v70 = vld [vmem:[%s0 + $0x1b8] sm:$0xff]
  %v71 = vld [vmem:[%s0 + $0x1c0] sm:$0xff]
  %v72 = vld [vmem:[%s0 + $0x1c8] sm:$0xff]
  %v73 = vld [vmem:[%s0 + $0x1d0] sm:$0xff]
  %v74 = vld [vmem:[%s0 + $0x1d8] sm:$0xff]
  %v75 = vld [vmem:[%s0 + $0x1e0] sm:$0xff]
  %v76 = vld [vmem:[%s0 + $0x1e8] sm:$0xff]
  %v77 = vld [vmem:[%s0 + $0x1f0] sm:$0xff]
  %v78 = vld [vmem:[%s0 + $0x1f8] sm:$0xff]
  %v79 = vld [vmem:[%s1] sm:$0xf]
  %v80 = vld [vmem:[%s1 + $0x4] sm:$0xf]
  %v81 = vld [vmem:[%s1 + $0x8] sm:$0xf]
  %v82 = vld [vmem:[%s1 + $0xc] sm:$0xf]
  %v83 = vld [vmem:[%s1 + $0x10] sm:$0xf]
  %v84 = vld [vmem:[%s1 + $0x14] sm:$0xf]
  %v85 = vld [vmem:[%s1 + $0x18] sm:$0xf]
  %v86 = vld [vmem:[%s1 + $0x1c] sm:$0xf]
  %v87 = vld [vmem:[%s1 + $0x20] sm:$0xf]
  %v88 = vld [vmem:[%s1 + $0x24] sm:$0xf]
  %v89 = vld [vmem:[%s1 + $0x28] sm:$0xf]
  %v90 = vld [vmem:[%s1 + $0x2c] sm:$0xf]
  %v91 = vld [vmem:[%s1 + $0x30] sm:$0xf]
  %v92 = vld [vmem:[%s1 + $0x34] sm:$0xf]
  %v93 = vld [vmem:[%s1 + $0x38] sm:$0xf]
  %v94 = vld [vmem:[%s1 + $0x3c] sm:$0xf]
  %v95 = vld [vmem:[%s1 + $0x40] sm:$0xf]
  %v96 = vld [vmem:[%s1 + $0x44] sm:$0xf]
  %v97 = vld [vmem:[%s2] sm:$0x1]
  %v99 = vlaneseq
  %v100 = vshrl.u32 %v99, 7
  %v101 = vsub.s32 0, %v100
  %v102 = vrot.slane %v97, %v101
  %v168 = vunpack.c.l.b16 %v15
  %v169 = vunpack.c.h.b16 %v15
  %v170 = vunpack.c.l.b16 %v16
  %v171 = vunpack.c.h.b16 %v16
  %v172 = vunpack.c.l.b16 %v17
  %v173 = vunpack.c.h.b16 %v17
  %v174 = vunpack.c.l.b16 %v18
  %v175 = vunpack.c.h.b16 %v18
  %v176 = vunpack.c.l.b16 %v19
  %v177 = vunpack.c.h.b16 %v19
  %v178 = vunpack.c.l.b16 %v20
  %v179 = vunpack.c.h.b16 %v20
  %v180 = vunpack.c.l.b16 %v21
  %v181 = vunpack.c.h.b16 %v21
  %v182 = vunpack.c.l.b16 %v22
  %v183 = vunpack.c.h.b16 %v22
  %v184 = vunpack.c.l.b16 %v23
  %v185 = vunpack.c.h.b16 %v23
  %v186 = vunpack.c.l.b16 %v24
  %v187 = vunpack.c.h.b16 %v24
  %v188 = vunpack.c.l.b16 %v25
  %v189 = vunpack.c.h.b16 %v25
  %v190 = vunpack.c.l.b16 %v26
  %v191 = vunpack.c.h.b16 %v26
  %v192 = vunpack.c.l.b16 %v27
  %v193 = vunpack.c.h.b16 %v27
  %v194 = vunpack.c.l.b16 %v28
  %v195 = vunpack.c.h.b16 %v28
  %v196 = vunpack.c.l.b16 %v29
  %v197 = vunpack.c.h.b16 %v29
  %v198 = vunpack.c.l.b16 %v30
  %v199 = vunpack.c.h.b16 %v30
  %v200 = vunpack.c.l.b16 %v31
  %v201 = vunpack.c.h.b16 %v31
  %v202 = vunpack.c.l.b16 %v32
  %v203 = vunpack.c.h.b16 %v32
  %v204 = vunpack.c.l.b16 %v33
  %v205 = vunpack.c.h.b16 %v33
  %v206 = vunpack.c.l.b16 %v34
  %v207 = vunpack.c.h.b16 %v34
  %v208 = vunpack.c.l.b16 %v35
  %v209 = vunpack.c.h.b16 %v35
  %v210 = vunpack.c.l.b16 %v36
  %v211 = vunpack.c.h.b16 %v36
  %v212 = vunpack.c.l.b16 %v37
  %v213 = vunpack.c.h.b16 %v37
  %v214 = vunpack.c.l.b16 %v38
  %v215 = vunpack.c.h.b16 %v38
  %v216 = vunpack.c.l.b16 %v39
  %v217 = vunpack.c.h.b16 %v39
  %v218 = vunpack.c.l.b16 %v40
  %v219 = vunpack.c.h.b16 %v40
  %v220 = vunpack.c.l.b16 %v41
  %v221 = vunpack.c.h.b16 %v41
  %v222 = vunpack.c.l.b16 %v42
  %v223 = vunpack.c.h.b16 %v42
  %v224 = vunpack.c.l.b16 %v43
  %v225 = vunpack.c.h.b16 %v43
  %v226 = vunpack.c.l.b16 %v44
  %v227 = vunpack.c.h.b16 %v44
  %v228 = vunpack.c.l.b16 %v45
  %v229 = vunpack.c.h.b16 %v45
  %v230 = vunpack.c.l.b16 %v46
  %v231 = vunpack.c.h.b16 %v46
  %v232 = vunpack.c.l.b16 %v47
  %v233 = vunpack.c.h.b16 %v47
  %v234 = vunpack.c.l.b16 %v48
  %v235 = vunpack.c.h.b16 %v48
  %v236 = vunpack.c.l.b16 %v49
  %v237 = vunpack.c.h.b16 %v49
  %v238 = vunpack.c.l.b16 %v50
  %v239 = vunpack.c.h.b16 %v50
  %v240 = vunpack.c.l.b16 %v51
  %v241 = vunpack.c.h.b16 %v51
  %v242 = vunpack.c.l.b16 %v52
  %v243 = vunpack.c.h.b16 %v52
  %v244 = vunpack.c.l.b16 %v53
  %v245 = vunpack.c.h.b16 %v53
  %v246 = vunpack.c.l.b16 %v54
  %v247 = vunpack.c.h.b16 %v54
  %v248 = vunpack.c.l.b16 %v55
  %v249 = vunpack.c.h.b16 %v55
  %v250 = vunpack.c.l.b16 %v56
  %v251 = vunpack.c.h.b16 %v56
  %v252 = vunpack.c.l.b16 %v57
  %v253 = vunpack.c.h.b16 %v57
  %v254 = vunpack.c.l.b16 %v58
  %v255 = vunpack.c.h.b16 %v58
  %v256 = vunpack.c.l.b16 %v59
  %v257 = vunpack.c.h.b16 %v59
  %v258 = vunpack.c.l.b16 %v60
  %v259 = vunpack.c.h.b16 %v60
  %v260 = vunpack.c.l.b16 %v61
  %v261 = vunpack.c.h.b16 %v61
  %v262 = vunpack.c.l.b16 %v62
  %v263 = vunpack.c.h.b16 %v62
  %v264 = vunpack.c.l.b16 %v63
  %v265 = vunpack.c.h.b16 %v63
  %v266 = vunpack.c.l.b16 %v64
  %v267 = vunpack.c.h.b16 %v64
  %v268 = vunpack.c.l.b16 %v65
  %v269 = vunpack.c.h.b16 %v65
  %v270 = vunpack.c.l.b16 %v66
  %v271 = vunpack.c.h.b16 %v66
  %v272 = vunpack.c.l.b16 %v67
  %v273 = vunpack.c.h.b16 %v67
  %v274 = vunpack.c.l.b16 %v68
  %v275 = vunpack.c.h.b16 %v68
  %v276 = vunpack.c.l.b16 %v69
  %v277 = vunpack.c.h.b16 %v69
  %v278 = vunpack.c.l.b16 %v70
  %v279 = vunpack.c.h.b16 %v70
  %v280 = vunpack.c.l.b16 %v71
  %v281 = vunpack.c.h.b16 %v71
  %v282 = vunpack.c.l.b16 %v72
  %v283 = vunpack.c.h.b16 %v72
  %v284 = vunpack.c.l.b16 %v73
  %v285 = vunpack.c.h.b16 %v73
  %v286 = vunpack.c.l.b16 %v74
  %v287 = vunpack.c.h.b16 %v74
  %v288 = vunpack.c.l.b16 %v75
  %v289 = vunpack.c.h.b16 %v75
  %v290 = vunpack.c.l.b16 %v76
  %v291 = vunpack.c.h.b16 %v76
  %v292 = vunpack.c.l.b16 %v77
  %v293 = vunpack.c.h.b16 %v77
  %v294 = vunpack.c.l.b16 %v78
  %v295 = vunpack.c.h.b16 %v78
  %v296 = vpack.c.b16 %v170, %v168
  %v297 = vpack.c.b16 %v171, %v169
  %v298 = vpack.c.b16 %v174, %v172
  %v299 = vpack.c.b16 %v175, %v173
  %v300 = vpack.c.b16 %v178, %v176
  %v301 = vpack.c.b16 %v179, %v177
  %v302 = vpack.c.b16 %v182, %v180
  %v303 = vpack.c.b16 %v183, %v181
  %v304 = vpack.c.b16 %v186, %v184
  %v305 = vpack.c.b16 %v187, %v185
  %v306 = vpack.c.b16 %v190, %v188
  %v307 = vpack.c.b16 %v191, %v189
  %v308 = vpack.c.b16 %v194, %v192
  %v309 = vpack.c.b16 %v195, %v193
  %v310 = vpack.c.b16 %v198, %v196
  %v311 = vpack.c.b16 %v199, %v197
  %v312 = vpack.c.b16 %v202, %v200
  %v313 = vpack.c.b16 %v203, %v201
  %v314 = vpack.c.b16 %v206, %v204
  %v315 = vpack.c.b16 %v207, %v205
  %v316 = vpack.c.b16 %v210, %v208
  %v317 = vpack.c.b16 %v211, %v209
  %v318 = vpack.c.b16 %v214, %v212
  %v319 = vpack.c.b16 %v215, %v213
  %v320 = vpack.c.b16 %v218, %v216
  %v321 = vpack.c.b16 %v219, %v217
  %v322 = vpack.c.b16 %v222, %v220
  %v323 = vpack.c.b16 %v223, %v221
  %v324 = vpack.c.b16 %v226, %v224
  %v325 = vpack.c.b16 %v227, %v225
  %v326 = vpack.c.b16 %v230, %v228
  %v327 = vpack.c.b16 %v231, %v229
  %v328 = vpack.c.b16 %v234, %v232
  %v329 = vpack.c.b16 %v235, %v233
  %v330 = vpack.c.b16 %v238, %v236
  %v331 = vpack.c.b16 %v239, %v237
  %v332 = vpack.c.b16 %v242, %v240
  %v333 = vpack.c.b16 %v243, %v241
  %v334 = vpack.c.b16 %v246, %v244
  %v335 = vpack.c.b16 %v247, %v245
  %v336 = vpack.c.b16 %v250, %v248
  %v337 = vpack.c.b16 %v251, %v249
  %v338 = vpack.c.b16 %v254, %v252
  %v339 = vpack.c.b16 %v255, %v253
  %v340 = vpack.c.b16 %v258, %v256
  %v341 = vpack.c.b16 %v259, %v257
  %v342 = vpack.c.b16 %v262, %v260
  %v343 = vpack.c.b16 %v263, %v261
  %v344 = vpack.c.b16 %v266, %v264
  %v345 = vpack.c.b16 %v267, %v265
  %v346 = vpack.c.b16 %v270, %v268
  %v347 = vpack.c.b16 %v271, %v269
  %v348 = vpack.c.b16 %v274, %v272
  %v349 = vpack.c.b16 %v275, %v273
  %v350 = vpack.c.b16 %v278, %v276
  %v351 = vpack.c.b16 %v279, %v277
  %v352 = vpack.c.b16 %v282, %v280
  %v353 = vpack.c.b16 %v283, %v281
  %v354 = vpack.c.b16 %v286, %v284
  %v355 = vpack.c.b16 %v287, %v285
  %v356 = vpack.c.b16 %v290, %v288
  %v357 = vpack.c.b16 %v291, %v289
  %v358 = vpack.c.b16 %v294, %v292
  %v359 = vpack.c.b16 %v295, %v293
  %v410 = vunpack.c.l.b16 %v79
  %v411 = vunpack.c.l.b16 %v80
  %v412 = vunpack.c.l.b16 %v81
  %v413 = vunpack.c.l.b16 %v82
  %v414 = vunpack.c.l.b16 %v83
  %v415 = vunpack.c.l.b16 %v84
  %v416 = vunpack.c.l.b16 %v85
  %v417 = vunpack.c.l.b16 %v86
  %v418 = vunpack.c.l.b16 %v87
  %v419 = vunpack.c.l.b16 %v88
  %v420 = vunpack.c.l.b16 %v89
  %v421 = vunpack.c.l.b16 %v90
  %v422 = vunpack.c.l.b16 %v91
  %v423 = vunpack.c.l.b16 %v92
  %v424 = vunpack.c.l.b16 %v93
  %v425 = vunpack.c.l.b16 %v94
  %v426 = vunpack.c.l.b16 %v95
  %v427 = vunpack.c.l.b16 %v96
  %v428 = vpack.c.b16 %v411, %v410
  %v429 = vpack.c.b16 %v413, %v412
  %v430 = vpack.c.b16 %v415, %v414
  %v431 = vpack.c.b16 %v417, %v416
  %v432 = vpack.c.b16 %v419, %v418
  %v433 = vpack.c.b16 %v421, %v420
  %v434 = vpack.c.b16 %v423, %v422
  %v435 = vpack.c.b16 %v425, %v424
  %v436 = vpack.c.b16 %v427, %v426
  %vm446 = vcmask 130048
  %v448 = vsel %vm446, %v297, 0
  %v451 = vsel %vm446, %v299, 0
  %v454 = vsel %vm446, %v301, 0
  %v457 = vsel %vm446, %v303, 0
  %v460 = vsel %vm446, %v305, 0
  %v463 = vsel %vm446, %v307, 0
  %v466 = vsel %vm446, %v309, 0
  %v469 = vsel %vm446, %v311, 0
  %v472 = vsel %vm446, %v313, 0
  %v475 = vsel %vm446, %v315, 0
  %v478 = vsel %vm446, %v317, 0
  %v481 = vsel %vm446, %v319, 0
  %v484 = vsel %vm446, %v321, 0
  %v487 = vsel %vm446, %v323, 0
  %v490 = vsel %vm446, %v325, 0
  %v493 = vsel %vm446, %v327, 0
  %v496 = vsel %vm446, %v329, 0
  %v499 = vsel %vm446, %v331, 0
  %v502 = vsel %vm446, %v333, 0
  %v505 = vsel %vm446, %v335, 0
  %v508 = vsel %vm446, %v337, 0
  %v511 = vsel %vm446, %v339, 0
  %v514 = vsel %vm446, %v341, 0
  %v517 = vsel %vm446, %v343, 0
  %v520 = vsel %vm446, %v345, 0
  %v523 = vsel %vm446, %v347, 0
  %v526 = vsel %vm446, %v349, 0
  %v529 = vsel %vm446, %v351, 0
  %v532 = vsel %vm446, %v353, 0
  %v535 = vsel %vm446, %v355, 0
  %v538 = vsel %vm446, %v357, 0
  %v541 = vsel %vm446, %v359, 0
  %543 = vmatprep.subr.bf16.mxu0 0
  %544 = vmatpush1.bf16.msra.mxu0 %v435
  %545 = vmatprep.subr.bf16.mxu0 0
  %546 = vmatpush1.bf16.msra.mxu0 %v434
  %547 = vmatprep.subr.bf16.mxu0 0
  %548 = vmatpush1.bf16.msra.mxu0 %v433
  %549 = vmatprep.subr.bf16.mxu0 0
  %550 = vmatpush1.bf16.msra.mxu0 %v432
  %551 = vmatprep.subr.bf16.mxu0 0
  %552 = vmatpush1.bf16.msra.mxu0 %v431
  %553 = vmatprep.subr.bf16.mxu0 0
  %554 = vmatpush1.bf16.msra.mxu0 %v430
  %555 = vmatprep.subr.bf16.mxu0 0
  %556 = vmatpush1.bf16.msra.mxu0 %v429
  %557 = vmatprep.subr.bf16.mxu0 0
  %558 = vmatpush1.bf16.msra.mxu0 %v428
  %559 = vmatprep.subr.bf16.mxu0 0
  %560 = vmatpush2.bf16.msra.mxu0 0
  %561 = vmatprep.subr.bf16.mxu0 0
  %562 = vmatpush2.bf16.msra.mxu0 0
  %563 = vmatprep.subr.bf16.mxu0 0
  %564 = vmatpush2.bf16.msra.mxu0 0
  %565 = vmatprep.subr.bf16.mxu0 0
  %566 = vmatpush2.bf16.msra.mxu0 0
  %567 = vmatprep.subr.bf16.mxu0 0
  %568 = vmatpush2.bf16.msra.mxu0 0
  %569 = vmatprep.subr.bf16.mxu0 0
  %570 = vmatpush2.bf16.msra.mxu0 0
  %571 = vmatprep.subr.bf16.mxu0 0
  %572 = vmatpush2.bf16.msra.mxu0 0
  %573 = vmatprep.subr.bf16.mxu0 0
  %574 = vmatpush2.bf16.msra.mxu0 %v436
  %575 = vmatprep.mubr.bf16.mxu0 %v448
  %576 = vmatmul.mubr.bf16.gmra.mxu0 %v296
  %v577 = vpop.f32.mrf.mxu0
  %v578 = vadd.f32 %v102, %v577
  %v579 = vpop.f32.mrf.mxu0
  %v580 = vpop.f32.mrf.mxu0
  %v581 = vadd.f32 %v102, %v580
  %v582 = vpop.f32.mrf.mxu0
  %583 = vmatprep.mubr.bf16.mxu0 %v451
  %584 = vmatmul.mubr.bf16.gmra.mxu0 %v298
  %v585 = vpop.f32.mrf.mxu0
  %v586 = vadd.f32 %v102, %v585
  %v587 = vpop.f32.mrf.mxu0
  %v588 = vpop.f32.mrf.mxu0
  %v589 = vadd.f32 %v102, %v588
  %v590 = vpop.f32.mrf.mxu0
  %591 = vmatprep.mubr.bf16.mxu0 %v454
  %592 = vmatmul.mubr.bf16.gmra.mxu0 %v300
  %v593 = vpop.f32.mrf.mxu0
  %v594 = vadd.f32 %v102, %v593
  %v595 = vpop.f32.mrf.mxu0
  %v596 = vpop.f32.mrf.mxu0
  %v597 = vadd.f32 %v102, %v596
  %v598 = vpop.f32.mrf.mxu0
  %599 = vmatprep.mubr.bf16.mxu0 %v457
  %600 = vmatmul.mubr.bf16.gmra.mxu0 %v302
  %v601 = vpop.f32.mrf.mxu0
  %v602 = vadd.f32 %v102, %v601
  %v603 = vpop.f32.mrf.mxu0
  %v604 = vpop.f32.mrf.mxu0
  %v605 = vadd.f32 %v102, %v604
  %v606 = vpop.f32.mrf.mxu0
  %607 = vmatprep.mubr.bf16.mxu0 %v460
  %608 = vmatmul.mubr.bf16.gmra.mxu0 %v304
  %v609 = vpop.f32.mrf.mxu0
  %v610 = vadd.f32 %v102, %v609
  %v611 = vpop.f32.mrf.mxu0
  %v612 = vpop.f32.mrf.mxu0
  %v613 = vadd.f32 %v102, %v612
  %v614 = vpop.f32.mrf.mxu0
  %615 = vmatprep.mubr.bf16.mxu0 %v463
  %616 = vmatmul.mubr.bf16.gmra.mxu0 %v306
  %v617 = vpop.f32.mrf.mxu0
  %v618 = vadd.f32 %v102, %v617
  %v619 = vpop.f32.mrf.mxu0
  %v620 = vpop.f32.mrf.mxu0
  %v621 = vadd.f32 %v102, %v620
  %v622 = vpop.f32.mrf.mxu0
  %623 = vmatprep.mubr.bf16.mxu0 %v466
  %624 = vmatmul.mubr.bf16.gmra.mxu0 %v308
  %v625 = vpop.f32.mrf.mxu0
  %v626 = vadd.f32 %v102, %v625
  %v627 = vpop.f32.mrf.mxu0
  %v628 = vpop.f32.mrf.mxu0
  %v629 = vadd.f32 %v102, %v628
  %v630 = vpop.f32.mrf.mxu0
  %631 = vmatprep.mubr.bf16.mxu0 %v469
  %632 = vmatmul.mubr.bf16.gmra.mxu0 %v310
  %v633 = vpop.f32.mrf.mxu0
  %v634 = vadd.f32 %v102, %v633
  %v635 = vpop.f32.mrf.mxu0
  %v636 = vpop.f32.mrf.mxu0
  %v637 = vadd.f32 %v102, %v636
  %v638 = vpop.f32.mrf.mxu0
  %639 = vmatprep.mubr.bf16.mxu0 %v472
  %640 = vmatmul.mubr.bf16.gmra.mxu0 %v312
  %v641 = vpop.f32.mrf.mxu0
  %v642 = vadd.f32 %v102, %v641
  %v643 = vpop.f32.mrf.mxu0
  %v644 = vpop.f32.mrf.mxu0
  %v645 = vadd.f32 %v102, %v644
  %v646 = vpop.f32.mrf.mxu0
  %647 = vmatprep.mubr.bf16.mxu0 %v475
  %648 = vmatmul.mubr.bf16.gmra.mxu0 %v314
  %v649 = vpop.f32.mrf.mxu0
  %v650 = vadd.f32 %v102, %v649
  %v651 = vpop.f32.mrf.mxu0
  %v652 = vpop.f32.mrf.mxu0
  %v653 = vadd.f32 %v102, %v652
  %v654 = vpop.f32.mrf.mxu0
  %655 = vmatprep.mubr.bf16.mxu0 %v478
  %656 = vmatmul.mubr.bf16.gmra.mxu0 %v316
  %v657 = vpop.f32.mrf.mxu0
  %v658 = vadd.f32 %v102, %v657
  %v659 = vpop.f32.mrf.mxu0
  %v660 = vpop.f32.mrf.mxu0
  %v661 = vadd.f32 %v102, %v660
  %v662 = vpop.f32.mrf.mxu0
  %663 = vmatprep.mubr.bf16.mxu0 %v481
  %664 = vmatmul.mubr.bf16.gmra.mxu0 %v318
  %v665 = vpop.f32.mrf.mxu0
  %v666 = vadd.f32 %v102, %v665
  %v667 = vpop.f32.mrf.mxu0
  %v668 = vpop.f32.mrf.mxu0
  %v669 = vadd.f32 %v102, %v668
  %v670 = vpop.f32.mrf.mxu0
  %671 = vmatprep.mubr.bf16.mxu0 %v484
  %672 = vmatmul.mubr.bf16.gmra.mxu0 %v320
  %v673 = vpop.f32.mrf.mxu0
  %v674 = vadd.f32 %v102, %v673
  %v675 = vpop.f32.mrf.mxu0
  %v676 = vpop.f32.mrf.mxu0
  %v677 = vadd.f32 %v102, %v676
  %v678 = vpop.f32.mrf.mxu0
  %679 = vmatprep.mubr.bf16.mxu0 %v487
  %680 = vmatmul.mubr.bf16.gmra.mxu0 %v322
  %v681 = vpop.f32.mrf.mxu0
  %v682 = vadd.f32 %v102, %v681
  %v683 = vpop.f32.mrf.mxu0
  %v684 = vpop.f32.mrf.mxu0
  %v685 = vadd.f32 %v102, %v684
  %v686 = vpop.f32.mrf.mxu0
  %687 = vmatprep.mubr.bf16.mxu0 %v490
  %688 = vmatmul.mubr.bf16.gmra.mxu0 %v324
  %v689 = vpop.f32.mrf.mxu0
  %v690 = vadd.f32 %v102, %v689
  %v691 = vpop.f32.mrf.mxu0
  %v692 = vpop.f32.mrf.mxu0
  %v693 = vadd.f32 %v102, %v692
  %v694 = vpop.f32.mrf.mxu0
  %695 = vmatprep.mubr.bf16.mxu0 %v493
  %696 = vmatmul.mubr.bf16.gmra.mxu0 %v326
  %v697 = vpop.f32.mrf.mxu0
  %v698 = vadd.f32 %v102, %v697
  %v699 = vpop.f32.mrf.mxu0
  %v700 = vpop.f32.mrf.mxu0
  %v701 = vadd.f32 %v102, %v700
  %v702 = vpop.f32.mrf.mxu0
  %703 = vmatprep.mubr.bf16.mxu0 %v496
  %704 = vmatmul.mubr.bf16.gmra.mxu0 %v328
  %v705 = vpop.f32.mrf.mxu0
  %v706 = vadd.f32 %v102, %v705
  %v707 = vpop.f32.mrf.mxu0
  %v708 = vpop.f32.mrf.mxu0
  %v709 = vadd.f32 %v102, %v708
  %v710 = vpop.f32.mrf.mxu0
  %711 = vmatprep.mubr.bf16.mxu0 %v499
  %712 = vmatmul.mubr.bf16.gmra.mxu0 %v330
  %v713 = vpop.f32.mrf.mxu0
  %v714 = vadd.f32 %v102, %v713
  %v715 = vpop.f32.mrf.mxu0
  %v716 = vpop.f32.mrf.mxu0
  %v717 = vadd.f32 %v102, %v716
  %v718 = vpop.f32.mrf.mxu0
  %719 = vmatprep.mubr.bf16.mxu0 %v502
  %720 = vmatmul.mubr.bf16.gmra.mxu0 %v332
  %v721 = vpop.f32.mrf.mxu0
  %v722 = vadd.f32 %v102, %v721
  %v723 = vpop.f32.mrf.mxu0
  %v724 = vpop.f32.mrf.mxu0
  %v725 = vadd.f32 %v102, %v724
  %v726 = vpop.f32.mrf.mxu0
  %727 = vmatprep.mubr.bf16.mxu0 %v505
  %728 = vmatmul.mubr.bf16.gmra.mxu0 %v334
  %v729 = vpop.f32.mrf.mxu0
  %v730 = vadd.f32 %v102, %v729
  %v731 = vpop.f32.mrf.mxu0
  %v732 = vpop.f32.mrf.mxu0
  %v733 = vadd.f32 %v102, %v732
  %v734 = vpop.f32.mrf.mxu0
  %735 = vmatprep.mubr.bf16.mxu0 %v508
  %736 = vmatmul.mubr.bf16.gmra.mxu0 %v336
  %v737 = vpop.f32.mrf.mxu0
  %v738 = vadd.f32 %v102, %v737
  %v739 = vpop.f32.mrf.mxu0
  %v740 = vpop.f32.mrf.mxu0
  %v741 = vadd.f32 %v102, %v740
  %v742 = vpop.f32.mrf.mxu0
  %743 = vmatprep.mubr.bf16.mxu0 %v511
  %744 = vmatmul.mubr.bf16.gmra.mxu0 %v338
  %v745 = vpop.f32.mrf.mxu0
  %v746 = vadd.f32 %v102, %v745
  %v747 = vpop.f32.mrf.mxu0
  %v748 = vpop.f32.mrf.mxu0
  %v749 = vadd.f32 %v102, %v748
  %v750 = vpop.f32.mrf.mxu0
  %751 = vmatprep.mubr.bf16.mxu0 %v514
  %752 = vmatmul.mubr.bf16.gmra.mxu0 %v340
  %v753 = vpop.f32.mrf.mxu0
  %v754 = vadd.f32 %v102, %v753
  %v755 = vpop.f32.mrf.mxu0
  %v756 = vpop.f32.mrf.mxu0
  %v757 = vadd.f32 %v102, %v756
  %v758 = vpop.f32.mrf.mxu0
  %759 = vmatprep.mubr.bf16.mxu0 %v517
  %760 = vmatmul.mubr.bf16.gmra.mxu0 %v342
  %v761 = vpop.f32.mrf.mxu0
  %v762 = vadd.f32 %v102, %v761
  %v763 = vpop.f32.mrf.mxu0
  %v764 = vpop.f32.mrf.mxu0
  %v765 = vadd.f32 %v102, %v764
  %v766 = vpop.f32.mrf.mxu0
  %767 = vmatprep.mubr.bf16.mxu0 %v520
  %768 = vmatmul.mubr.bf16.gmra.mxu0 %v344
  %v769 = vpop.f32.mrf.mxu0
  %v770 = vadd.f32 %v102, %v769
  %v771 = vpop.f32.mrf.mxu0
  %v772 = vpop.f32.mrf.mxu0
  %v773 = vadd.f32 %v102, %v772
  %v774 = vpop.f32.mrf.mxu0
  %775 = vmatprep.mubr.bf16.mxu0 %v523
  %776 = vmatmul.mubr.bf16.gmra.mxu0 %v346
  %v777 = vpop.f32.mrf.mxu0
  %v778 = vadd.f32 %v102, %v777
  %v779 = vpop.f32.mrf.mxu0
  %v780 = vpop.f32.mrf.mxu0
  %v781 = vadd.f32 %v102, %v780
  %v782 = vpop.f32.mrf.mxu0
  %783 = vmatprep.mubr.bf16.mxu0 %v526
  %784 = vmatmul.mubr.bf16.gmra.mxu0 %v348
  %v785 = vpop.f32.mrf.mxu0
  %v786 = vadd.f32 %v102, %v785
  %v787 = vpop.f32.mrf.mxu0
  %v788 = vpop.f32.mrf.mxu0
  %v789 = vadd.f32 %v102, %v788
  %v790 = vpop.f32.mrf.mxu0
  %791 = vmatprep.mubr.bf16.mxu0 %v529
  %792 = vmatmul.mubr.bf16.gmra.mxu0 %v350
  %v793 = vpop.f32.mrf.mxu0
  %v794 = vadd.f32 %v102, %v793
  %v795 = vpop.f32.mrf.mxu0
  %v796 = vpop.f32.mrf.mxu0
  %v797 = vadd.f32 %v102, %v796
  %v798 = vpop.f32.mrf.mxu0
  %799 = vmatprep.mubr.bf16.mxu0 %v532
  %800 = vmatmul.mubr.bf16.gmra.mxu0 %v352
  %v801 = vpop.f32.mrf.mxu0
  %v802 = vadd.f32 %v102, %v801
  %v803 = vpop.f32.mrf.mxu0
  %v804 = vpop.f32.mrf.mxu0
  %v805 = vadd.f32 %v102, %v804
  %v806 = vpop.f32.mrf.mxu0
  %807 = vmatprep.mubr.bf16.mxu0 %v535
  %808 = vmatmul.mubr.bf16.gmra.mxu0 %v354
  %v809 = vpop.f32.mrf.mxu0
  %v810 = vadd.f32 %v102, %v809
  %v811 = vpop.f32.mrf.mxu0
  %v812 = vpop.f32.mrf.mxu0
  %v813 = vadd.f32 %v102, %v812
  %v814 = vpop.f32.mrf.mxu0
  %815 = vmatprep.mubr.bf16.mxu0 %v538
  %816 = vmatmul.mubr.bf16.gmra.mxu0 %v356
  %v817 = vpop.f32.mrf.mxu0
  %v818 = vadd.f32 %v102, %v817
  %v819 = vpop.f32.mrf.mxu0
  %v820 = vpop.f32.mrf.mxu0
  %v821 = vadd.f32 %v102, %v820
  %v822 = vpop.f32.mrf.mxu0
  %823 = vmatprep.mubr.bf16.mxu0 %v541
  %824 = vmatmul.mubr.bf16.gmra.mxu0 %v358
  %v825 = vpop.f32.mrf.mxu0
  %v826 = vadd.f32 %v102, %v825
  %v827 = vpop.f32.mrf.mxu0
  %v828 = vpop.f32.mrf.mxu0
  %v829 = vadd.f32 %v102, %v828
  %v830 = vpop.f32.mrf.mxu0
  %831 = vdwg.mxu0
  %v832 = vmax.f32 %v578, 0.0
  %v833 = vmax.f32 %v581, 0.0
  %v834 = vmax.f32 %v586, 0.0
  %v835 = vmax.f32 %v589, 0.0
  %v836 = vmax.f32 %v594, 0.0
  %v837 = vmax.f32 %v597, 0.0
  %v838 = vmax.f32 %v602, 0.0
  %v839 = vmax.f32 %v605, 0.0
  %v840 = vmax.f32 %v610, 0.0
  %v841 = vmax.f32 %v613, 0.0
  %v842 = vmax.f32 %v618, 0.0
  %v843 = vmax.f32 %v621, 0.0
  %v844 = vmax.f32 %v626, 0.0
  %v845 = vmax.f32 %v629, 0.0
  %v846 = vmax.f32 %v634, 0.0
  %v847 = vmax.f32 %v637, 0.0
  %v848 = vmax.f32 %v642, 0.0
  %v849 = vmax.f32 %v645, 0.0
  %v850 = vmax.f32 %v650, 0.0
  %v851 = vmax.f32 %v653, 0.0
  %v852 = vmax.f32 %v658, 0.0
  %v853 = vmax.f32 %v661, 0.0
  %v854 = vmax.f32 %v666, 0.0
  %v855 = vmax.f32 %v669, 0.0
  %v856 = vmax.f32 %v674, 0.0
  %v857 = vmax.f32 %v677, 0.0
  %v858 = vmax.f32 %v682, 0.0
  %v859 = vmax.f32 %v685, 0.0
  %v860 = vmax.f32 %v690, 0.0
  %v861 = vmax.f32 %v693, 0.0
  %v862 = vmax.f32 %v698, 0.0
  %v863 = vmax.f32 %v701, 0.0
  %v864 = vmax.f32 %v706, 0.0
  %v865 = vmax.f32 %v709, 0.0
  %v866 = vmax.f32 %v714, 0.0
  %v867 = vmax.f32 %v717, 0.0
  %v868 = vmax.f32 %v722, 0.0
  %v869 = vmax.f32 %v725, 0.0
  %v870 = vmax.f32 %v730, 0.0
  %v871 = vmax.f32 %v733, 0.0
  %v872 = vmax.f32 %v738, 0.0
  %v873 = vmax.f32 %v741, 0.0
  %v874 = vmax.f32 %v746, 0.0
  %v875 = vmax.f32 %v749, 0.0
  %v876 = vmax.f32 %v754, 0.0
  %v877 = vmax.f32 %v757, 0.0
  %v878 = vmax.f32 %v762, 0.0
  %v879 = vmax.f32 %v765, 0.0
  %v880 = vmax.f32 %v770, 0.0
  %v881 = vmax.f32 %v773, 0.0
  %v882 = vmax.f32 %v778, 0.0
  %v883 = vmax.f32 %v781, 0.0
  %v884 = vmax.f32 %v786, 0.0
  %v885 = vmax.f32 %v789, 0.0
  %v886 = vmax.f32 %v794, 0.0
  %v887 = vmax.f32 %v797, 0.0
  %v888 = vmax.f32 %v802, 0.0
  %v889 = vmax.f32 %v805, 0.0
  %v890 = vmax.f32 %v810, 0.0
  %v891 = vmax.f32 %v813, 0.0
  %v892 = vmax.f32 %v818, 0.0
  %v893 = vmax.f32 %v821, 0.0
  %v894 = vmax.f32 %v826, 0.0
  %v895 = vmax.f32 %v829, 0.0
  %v896 = vpack.c.bf16 %v833, %v832
  %v897 = vpack.c.bf16 %v835, %v834
  %v898 = vpack.c.bf16 %v837, %v836
  %v899 = vpack.c.bf16 %v839, %v838
  %v900 = vpack.c.bf16 %v841, %v840
  %v901 = vpack.c.bf16 %v843, %v842
  %v902 = vpack.c.bf16 %v845, %v844
  %v903 = vpack.c.bf16 %v847, %v846
  %v904 = vpack.c.bf16 %v849, %v848
  %v905 = vpack.c.bf16 %v851, %v850
  %v906 = vpack.c.bf16 %v853, %v852
  %v907 = vpack.c.bf16 %v855, %v854
  %v908 = vpack.c.bf16 %v857, %v856
  %v909 = vpack.c.bf16 %v859, %v858
  %v910 = vpack.c.bf16 %v861, %v860
  %v911 = vpack.c.bf16 %v863, %v862
  %v912 = vpack.c.bf16 %v865, %v864
  %v913 = vpack.c.bf16 %v867, %v866
  %v914 = vpack.c.bf16 %v869, %v868
  %v915 = vpack.c.bf16 %v871, %v870
  %v916 = vpack.c.bf16 %v873, %v872
  %v917 = vpack.c.bf16 %v875, %v874
  %v918 = vpack.c.bf16 %v877, %v876
  %v919 = vpack.c.bf16 %v879, %v878
  %v920 = vpack.c.bf16 %v881, %v880
  %v921 = vpack.c.bf16 %v883, %v882
  %v922 = vpack.c.bf16 %v885, %v884
  %v923 = vpack.c.bf16 %v887, %v886
  %v924 = vpack.c.bf16 %v889, %v888
  %v925 = vpack.c.bf16 %v891, %v890
  %v926 = vpack.c.bf16 %v893, %v892
  %v927 = vpack.c.bf16 %v895, %v894
  %v960 = vunpack.c.l.b16 %v896
  %v961 = vunpack.c.h.b16 %v896
  %v962 = vunpack.c.l.b16 %v897
  %v963 = vunpack.c.h.b16 %v897
  %v964 = vunpack.c.l.b16 %v898
  %v965 = vunpack.c.h.b16 %v898
  %v966 = vunpack.c.l.b16 %v899
  %v967 = vunpack.c.h.b16 %v899
  %v968 = vunpack.c.l.b16 %v900
  %v969 = vunpack.c.h.b16 %v900
  %v970 = vunpack.c.l.b16 %v901
  %v971 = vunpack.c.h.b16 %v901
  %v972 = vunpack.c.l.b16 %v902
  %v973 = vunpack.c.h.b16 %v902
  %v974 = vunpack.c.l.b16 %v903
  %v975 = vunpack.c.h.b16 %v903
  %v976 = vunpack.c.l.b16 %v904
  %v977 = vunpack.c.h.b16 %v904
  %v978 = vunpack.c.l.b16 %v905
  %v979 = vunpack.c.h.b16 %v905
  %v980 = vunpack.c.l.b16 %v906
  %v981 = vunpack.c.h.b16 %v906
  %v982 = vunpack.c.l.b16 %v907
  %v983 = vunpack.c.h.b16 %v907
  %v984 = vunpack.c.l.b16 %v908
  %v985 = vunpack.c.h.b16 %v908
  %v986 = vunpack.c.l.b16 %v909
  %v987 = vunpack.c.h.b16 %v909
  %v988 = vunpack.c.l.b16 %v910
  %v989 = vunpack.c.h.b16 %v910
  %v990 = vunpack.c.l.b16 %v911
  %v991 = vunpack.c.h.b16 %v911
  %v992 = vunpack.c.l.b16 %v912
  %v993 = vunpack.c.h.b16 %v912
  %v994 = vunpack.c.l.b16 %v913
  %v995 = vunpack.c.h.b16 %v913
  %v996 = vunpack.c.l.b16 %v914
  %v997 = vunpack.c.h.b16 %v914
  %v998 = vunpack.c.l.b16 %v915
  %v999 = vunpack.c.h.b16 %v915
  %v1000 = vunpack.c.l.b16 %v916
  %v1001 = vunpack.c.h.b16 %v916
  %v1002 = vunpack.c.l.b16 %v917
  %v1003 = vunpack.c.h.b16 %v917
  %v1004 = vunpack.c.l.b16 %v918
  %v1005 = vunpack.c.h.b16 %v918
  %v1006 = vunpack.c.l.b16 %v919
  %v1007 = vunpack.c.h.b16 %v919
  %v1008 = vunpack.c.l.b16 %v920
  %v1009 = vunpack.c.h.b16 %v920
  %v1010 = vunpack.c.l.b16 %v921
  %v1011 = vunpack.c.h.b16 %v921
  %v1012 = vunpack.c.l.b16 %v922
  %v1013 = vunpack.c.h.b16 %v922
  %v1014 = vunpack.c.l.b16 %v923
  %v1015 = vunpack.c.h.b16 %v923
  %v1016 = vunpack.c.l.b16 %v924
  %v1017 = vunpack.c.h.b16 %v924
  %v1018 = vunpack.c.l.b16 %v925
  %v1019 = vunpack.c.h.b16 %v925
  %v1020 = vunpack.c.l.b16 %v926
  %v1021 = vunpack.c.h.b16 %v926
  %v1022 = vunpack.c.l.b16 %v927
  %v1023 = vunpack.c.h.b16 %v927
  %v1024 = vpack.c.b16 %v960, %v960
  %v1025 = vpack.c.b16 %v961, %v961
  %v1026 = vpack.c.b16 %v962, %v962
  %v1027 = vpack.c.b16 %v963, %v963
  %v1028 = vpack.c.b16 %v964, %v964
  %v1029 = vpack.c.b16 %v965, %v965
  %v1030 = vpack.c.b16 %v966, %v966
  %v1031 = vpack.c.b16 %v967, %v967
  %v1032 = vpack.c.b16 %v968, %v968
  %v1033 = vpack.c.b16 %v969, %v969
  %v1034 = vpack.c.b16 %v970, %v970
  %v1035 = vpack.c.b16 %v971, %v971
  %v1036 = vpack.c.b16 %v972, %v972
  %v1037 = vpack.c.b16 %v973, %v973
  %v1038 = vpack.c.b16 %v974, %v974
  %v1039 = vpack.c.b16 %v975, %v975
  %v1040 = vpack.c.b16 %v976, %v976
  %v1041 = vpack.c.b16 %v977, %v977
  %v1042 = vpack.c.b16 %v978, %v978
  %v1043 = vpack.c.b16 %v979, %v979
  %v1044 = vpack.c.b16 %v980, %v980
  %v1045 = vpack.c.b16 %v981, %v981
  %v1046 = vpack.c.b16 %v982, %v982
  %v1047 = vpack.c.b16 %v983, %v983
  %v1048 = vpack.c.b16 %v984, %v984
  %v1049 = vpack.c.b16 %v985, %v985
  %v1050 = vpack.c.b16 %v986, %v986
  %v1051 = vpack.c.b16 %v987, %v987
  %v1052 = vpack.c.b16 %v988, %v988
  %v1053 = vpack.c.b16 %v989, %v989
  %v1054 = vpack.c.b16 %v990, %v990
  %v1055 = vpack.c.b16 %v991, %v991
  %v1056 = vpack.c.b16 %v992, %v992
  %v1057 = vpack.c.b16 %v993, %v993
  %v1058 = vpack.c.b16 %v994, %v994
  %v1059 = vpack.c.b16 %v995, %v995
  %v1060 = vpack.c.b16 %v996, %v996
  %v1061 = vpack.c.b16 %v997, %v997
  %v1062 = vpack.c.b16 %v998, %v998
  %v1063 = vpack.c.b16 %v999, %v999
  %v1064 = vpack.c.b16 %v1000, %v1000
  %v1065 = vpack.c.b16 %v1001, %v1001
  %v1066 = vpack.c.b16 %v1002, %v1002
  %v1067 = vpack.c.b16 %v1003, %v1003
  %v1068 = vpack.c.b16 %v1004, %v1004
  %v1069 = vpack.c.b16 %v1005, %v1005
  %v1070 = vpack.c.b16 %v1006, %v1006
  %v1071 = vpack.c.b16 %v1007, %v1007
  %v1072 = vpack.c.b16 %v1008, %v1008
  %v1073 = vpack.c.b16 %v1009, %v1009
  %v1074 = vpack.c.b16 %v1010, %v1010
  %v1075 = vpack.c.b16 %v1011, %v1011
  %v1076 = vpack.c.b16 %v1012, %v1012
  %v1077 = vpack.c.b16 %v1013, %v1013
  %v1078 = vpack.c.b16 %v1014, %v1014
  %v1079 = vpack.c.b16 %v1015, %v1015
  %v1080 = vpack.c.b16 %v1016, %v1016
  %v1081 = vpack.c.b16 %v1017, %v1017
  %v1082 = vpack.c.b16 %v1018, %v1018
  %v1083 = vpack.c.b16 %v1019, %v1019
  %v1084 = vpack.c.b16 %v1020, %v1020
  %v1085 = vpack.c.b16 %v1021, %v1021
  %v1086 = vpack.c.b16 %v1022, %v1022
  %v1087 = vpack.c.b16 %v1023, %v1023
  %vm1152 = vcmask 257024
  %1153 = vst.msk [vmem:[%s3] sm:$0xf] %vm1152, %v1024
  %1154 = vst.msk [vmem:[%s3 + $0x4] sm:$0xf] %vm1152, %v1025
  %1155 = vst.msk [vmem:[%s3 + $0x8] sm:$0xf] %vm1152, %v1026
  %1156 = vst.msk [vmem:[%s3 + $0xc] sm:$0xf] %vm1152, %v1027
  %1157 = vst.msk [vmem:[%s3 + $0x10] sm:$0xf] %vm1152, %v1028
  %1158 = vst.msk [vmem:[%s3 + $0x14] sm:$0xf] %vm1152, %v1029
  %1159 = vst.msk [vmem:[%s3 + $0x18] sm:$0xf] %vm1152, %v1030
  %1160 = vst.msk [vmem:[%s3 + $0x1c] sm:$0xf] %vm1152, %v1031
  %1161 = vst.msk [vmem:[%s3 + $0x20] sm:$0xf] %vm1152, %v1032
  %1162 = vst.msk [vmem:[%s3 + $0x24] sm:$0xf] %vm1152, %v1033
  %1163 = vst.msk [vmem:[%s3 + $0x28] sm:$0xf] %vm1152, %v1034
  %1164 = vst.msk [vmem:[%s3 + $0x2c] sm:$0xf] %vm1152, %v1035
  %1165 = vst.msk [vmem:[%s3 + $0x30] sm:$0xf] %vm1152, %v1036
  %1166 = vst.msk [vmem:[%s3 + $0x34] sm:$0xf] %vm1152, %v1037
  %1167 = vst.msk [vmem:[%s3 + $0x38] sm:$0xf] %vm1152, %v1038
  %1168 = vst.msk [vmem:[%s3 + $0x3c] sm:$0xf] %vm1152, %v1039
  %1169 = vst.msk [vmem:[%s3 + $0x40] sm:$0xf] %vm1152, %v1040
  %1170 = vst.msk [vmem:[%s3 + $0x44] sm:$0xf] %vm1152, %v1041
  %1171 = vst.msk [vmem:[%s3 + $0x48] sm:$0xf] %vm1152, %v1042
  %1172 = vst.msk [vmem:[%s3 + $0x4c] sm:$0xf] %vm1152, %v1043
  %1173 = vst.msk [vmem:[%s3 + $0x50] sm:$0xf] %vm1152, %v1044
  %1174 = vst.msk [vmem:[%s3 + $0x54] sm:$0xf] %vm1152, %v1045
  %1175 = vst.msk [vmem:[%s3 + $0x58] sm:$0xf] %vm1152, %v1046
  %1176 = vst.msk [vmem:[%s3 + $0x5c] sm:$0xf] %vm1152, %v1047
  %1177 = vst.msk [vmem:[%s3 + $0x60] sm:$0xf] %vm1152, %v1048
  %1178 = vst.msk [vmem:[%s3 + $0x64] sm:$0xf] %vm1152, %v1049
  %1179 = vst.msk [vmem:[%s3 + $0x68] sm:$0xf] %vm1152, %v1050
  %1180 = vst.msk [vmem:[%s3 + $0x6c] sm:$0xf] %vm1152, %v1051
  %1181 = vst.msk [vmem:[%s3 + $0x70] sm:$0xf] %vm1152, %v1052
  %1182 = vst.msk [vmem:[%s3 + $0x74] sm:$0xf] %vm1152, %v1053
  %1183 = vst.msk [vmem:[%s3 + $0x78] sm:$0xf] %vm1152, %v1054
  %1184 = vst.msk [vmem:[%s3 + $0x7c] sm:$0xf] %vm1152, %v1055
  %1185 = vst.msk [vmem:[%s3 + $0x80] sm:$0xf] %vm1152, %v1056
  %1186 = vst.msk [vmem:[%s3 + $0x84] sm:$0xf] %vm1152, %v1057
  %1187 = vst.msk [vmem:[%s3 + $0x88] sm:$0xf] %vm1152, %v1058
  %1188 = vst.msk [vmem:[%s3 + $0x8c] sm:$0xf] %vm1152, %v1059
  %1189 = vst.msk [vmem:[%s3 + $0x90] sm:$0xf] %vm1152, %v1060
  %1190 = vst.msk [vmem:[%s3 + $0x94] sm:$0xf] %vm1152, %v1061
  %1191 = vst.msk [vmem:[%s3 + $0x98] sm:$0xf] %vm1152, %v1062
  %1192 = vst.msk [vmem:[%s3 + $0x9c] sm:$0xf] %vm1152, %v1063
  %1193 = vst.msk [vmem:[%s3 + $0xa0] sm:$0xf] %vm1152, %v1064
  %1194 = vst.msk [vmem:[%s3 + $0xa4] sm:$0xf] %vm1152, %v1065
  %1195 = vst.msk [vmem:[%s3 + $0xa8] sm:$0xf] %vm1152, %v1066
  %1196 = vst.msk [vmem:[%s3 + $0xac] sm:$0xf] %vm1152, %v1067
  %1197 = vst.msk [vmem:[%s3 + $0xb0] sm:$0xf] %vm1152, %v1068
  %1198 = vst.msk [vmem:[%s3 + $0xb4] sm:$0xf] %vm1152, %v1069
  %1199 = vst.msk [vmem:[%s3 + $0xb8] sm:$0xf] %vm1152, %v1070
  %1200 = vst.msk [vmem:[%s3 + $0xbc] sm:$0xf] %vm1152, %v1071
  %1201 = vst.msk [vmem:[%s3 + $0xc0] sm:$0xf] %vm1152, %v1072
  %1202 = vst.msk [vmem:[%s3 + $0xc4] sm:$0xf] %vm1152, %v1073
  %1203 = vst.msk [vmem:[%s3 + $0xc8] sm:$0xf] %vm1152, %v1074
  %1204 = vst.msk [vmem:[%s3 + $0xcc] sm:$0xf] %vm1152, %v1075
  %1205 = vst.msk [vmem:[%s3 + $0xd0] sm:$0xf] %vm1152, %v1076
  %1206 = vst.msk [vmem:[%s3 + $0xd4] sm:$0xf] %vm1152, %v1077
  %1207 = vst.msk [vmem:[%s3 + $0xd8] sm:$0xf] %vm1152, %v1078
  %1208 = vst.msk [vmem:[%s3 + $0xdc] sm:$0xf] %vm1152, %v1079
  %1209 = vst.msk [vmem:[%s3 + $0xe0] sm:$0xf] %vm1152, %v1080
  %1210 = vst.msk [vmem:[%s3 + $0xe4] sm:$0xf] %vm1152, %v1081
  %1211 = vst.msk [vmem:[%s3 + $0xe8] sm:$0xf] %vm1152, %v1082
  %1212 = vst.msk [vmem:[%s3 + $0xec] sm:$0xf] %vm1152, %v1083
  %1213 = vst.msk [vmem:[%s3 + $0xf0] sm:$0xf] %vm1152, %v1084
  %1214 = vst.msk [vmem:[%s3 + $0xf4] sm:$0xf] %vm1152, %v1085
  %1215 = vst.msk [vmem:[%s3 + $0xf8] sm:$0xf] %vm1152, %v1086
  %1216 = vst.msk [vmem:[%s3 + $0xfc] sm:$0xf] %vm1152, %v1087
  // Predicated region
  $region14: #{forward.22} parent=0 // pred_check
    _
  $region15: #{forward.22} parent=0 // pred_check_branch
    %1218 = sbr.rel (0) target = $region17
  $region16: #{forward.22} parent=0 // pred_region
    _
  $region17: #{forward.22} parent=0 // pred_fallthru
    _
  // Predicated region
  $region18: #{forward.22} parent=0 // pred_check
    _
  $region19: #{forward.22} parent=0 // pred_check_branch
    %1220 = sbr.rel (0) target = $region21
  $region20: #{forward.22} parent=0 // pred_region
    _
  $region21: #{forward.22} parent=0 // pred_fallthru
    _

// kernel: forward.23
$region0: #{forward.23}
  #allocation0 [shape = 'u32[]', space=smem, size = 0x4, offset = 0x4, fixed_abs, tag = 'smem constant byte address 0x4 - core index']
  #allocation1 [shape = 'u32[144,128]{1,0:T(1,128)}', space=vmem, size = 0x12000, scoped, tag = 'internal scratch']
  %s0 = inlined_call_operand.vmem [shape: bf16[2048,72], index: 0, kind: input, shape index: {}]
  %s1 = inlined_call_operand.vmem [shape: bf16[72,12], index: 1, kind: input, shape index: {}]
  %s2 = inlined_call_operand.vmem [shape: f32[2048,12], index: 2, kind: output, shape index: {}]
  %s3 = sld [smem:[#allocation0]]
  $region18: #{forward.23} parent=0
    _
  %s5 = ssub.s32 1, %s3
  %s6 = scalar_select 0, %s5, %s3
  // Predicated region
  $region2: #{forward.23} parent=0 // pred_check
    _
  $region3: #{forward.23} parent=0 // pred_check_branch
    %8 = sbr.rel (0) target = $region5
  $region4: #{forward.23} parent=0 // pred_region
    _
  $region5: #{forward.23} parent=0 // pred_fallthru
    _
  // Predicated region
  $region6: #{forward.23} parent=0 // pred_check
    _
  $region7: #{forward.23} parent=0 // pred_check_branch
    %10 = sbr.rel (0) target = $region9
  $region8: #{forward.23} parent=0 // pred_region
    _
  $region9: #{forward.23} parent=0 // pred_fallthru
    _
  %v12 = vld [vmem:[%s0] sm:$0xf]
  %v13 = vld [vmem:[%s0 + $0x4] sm:$0xf]
  %v14 = vld [vmem:[%s0 + $0x8] sm:$0xf]
  %v15 = vld [vmem:[%s0 + $0xc] sm:$0xf]
  %v16 = vld [vmem:[%s0 + $0x10] sm:$0xf]
  %v17 = vld [vmem:[%s0 + $0x14] sm:$0xf]
  %v18 = vld [vmem:[%s0 + $0x18] sm:$0xf]
  %v19 = vld [vmem:[%s0 + $0x1c] sm:$0xf]
  %v20 = vld [vmem:[%s0 + $0x20] sm:$0xf]
  %v21 = vld [vmem:[%s0 + $0x24] sm:$0xf]
  %v22 = vld [vmem:[%s0 + $0x28] sm:$0xf]
  %v23 = vld [vmem:[%s0 + $0x2c] sm:$0xf]
  %v24 = vld [vmem:[%s0 + $0x30] sm:$0xf]
  %v25 = vld [vmem:[%s0 + $0x34] sm:$0xf]
  %v26 = vld [vmem:[%s0 + $0x38] sm:$0xf]
  %v27 = vld [vmem:[%s0 + $0x3c] sm:$0xf]
  %v28 = vld [vmem:[%s0 + $0x40] sm:$0xf]
  %v29 = vld [vmem:[%s0 + $0x44] sm:$0xf]
  %v30 = vld [vmem:[%s0 + $0x48] sm:$0xf]
  %v31 = vld [vmem:[%s0 + $0x4c] sm:$0xf]
  %v32 = vld [vmem:[%s0 + $0x50] sm:$0xf]
  %v33 = vld [vmem:[%s0 + $0x54] sm:$0xf]
  %v34 = vld [vmem:[%s0 + $0x58] sm:$0xf]
  %v35 = vld [vmem:[%s0 + $0x5c] sm:$0xf]
  %v36 = vld [vmem:[%s0 + $0x60] sm:$0xf]
  %v37 = vld [vmem:[%s0 + $0x64] sm:$0xf]
  %v38 = vld [vmem:[%s0 + $0x68] sm:$0xf]
  %v39 = vld [vmem:[%s0 + $0x6c] sm:$0xf]
  %v40 = vld [vmem:[%s0 + $0x70] sm:$0xf]
  %v41 = vld [vmem:[%s0 + $0x74] sm:$0xf]
  %v42 = vld [vmem:[%s0 + $0x78] sm:$0xf]
  %v43 = vld [vmem:[%s0 + $0x7c] sm:$0xf]
  %v44 = vld [vmem:[%s0 + $0x80] sm:$0xf]
  %v45 = vld [vmem:[%s0 + $0x84] sm:$0xf]
  %v46 = vld [vmem:[%s0 + $0x88] sm:$0xf]
  %v47 = vld [vmem:[%s0 + $0x8c] sm:$0xf]
  %v48 = vld [vmem:[%s0 + $0x90] sm:$0xf]
  %v49 = vld [vmem:[%s0 + $0x94] sm:$0xf]
  %v50 = vld [vmem:[%s0 + $0x98] sm:$0xf]
  %v51 = vld [vmem:[%s0 + $0x9c] sm:$0xf]
  %v52 = vld [vmem:[%s0 + $0xa0] sm:$0xf]
  %v53 = vld [vmem:[%s0 + $0xa4] sm:$0xf]
  %v54 = vld [vmem:[%s0 + $0xa8] sm:$0xf]
  %v55 = vld [vmem:[%s0 + $0xac] sm:$0xf]
  %v56 = vld [vmem:[%s0 + $0xb0] sm:$0xf]
  %v57 = vld [vmem:[%s0 + $0xb4] sm:$0xf]
  %v58 = vld [vmem:[%s0 + $0xb8] sm:$0xf]
  %v59 = vld [vmem:[%s0 + $0xbc] sm:$0xf]
  %v60 = vld [vmem:[%s0 + $0xc0] sm:$0xf]
  %v61 = vld [vmem:[%s0 + $0xc4] sm:$0xf]
  %v62 = vld [vmem:[%s0 + $0xc8] sm:$0xf]
  %v63 = vld [vmem:[%s0 + $0xcc] sm:$0xf]
  %v64 = vld [vmem:[%s0 + $0xd0] sm:$0xf]
  %v65 = vld [vmem:[%s0 + $0xd4] sm:$0xf]
  %v66 = vld [vmem:[%s0 + $0xd8] sm:$0xf]
  %v67 = vld [vmem:[%s0 + $0xdc] sm:$0xf]
  %v68 = vld [vmem:[%s0 + $0xe0] sm:$0xf]
  %v69 = vld [vmem:[%s0 + $0xe4] sm:$0xf]
  %v70 = vld [vmem:[%s0 + $0xe8] sm:$0xf]
  %v71 = vld [vmem:[%s0 + $0xec] sm:$0xf]
  %v72 = vld [vmem:[%s0 + $0xf0] sm:$0xf]
  %v73 = vld [vmem:[%s0 + $0xf4] sm:$0xf]
  %v74 = vld [vmem:[%s0 + $0xf8] sm:$0xf]
  %v75 = vld [vmem:[%s0 + $0xfc] sm:$0xf]
  %v76 = vld [vmem:[%s0 + $0x100] sm:$0xf]
  %v77 = vld [vmem:[%s0 + $0x104] sm:$0xf]
  %v78 = vld [vmem:[%s0 + $0x108] sm:$0xf]
  %v79 = vld [vmem:[%s0 + $0x10c] sm:$0xf]
  %v80 = vld [vmem:[%s0 + $0x110] sm:$0xf]
  %v81 = vld [vmem:[%s0 + $0x114] sm:$0xf]
  %v82 = vld [vmem:[%s0 + $0x118] sm:$0xf]
  %v83 = vld [vmem:[%s0 + $0x11c] sm:$0xf]
  %v84 = vld [vmem:[%s0 + $0x120] sm:$0xf]
  %v85 = vld [vmem:[%s0 + $0x124] sm:$0xf]
  %v86 = vld [vmem:[%s0 + $0x128] sm:$0xf]
  %v87 = vld [vmem:[%s0 + $0x12c] sm:$0xf]
  %v88 = vld [vmem:[%s0 + $0x130] sm:$0xf]
  %v89 = vld [vmem:[%s0 + $0x134] sm:$0xf]
  %v90 = vld [vmem:[%s0 + $0x138] sm:$0xf]
  %v91 = vld [vmem:[%s0 + $0x13c] sm:$0xf]
  %v92 = vld [vmem:[%s0 + $0x140] sm:$0xf]
  %v93 = vld [vmem:[%s0 + $0x144] sm:$0xf]
  %v94 = vld [vmem:[%s0 + $0x148] sm:$0xf]
  %v95 = vld [vmem:[%s0 + $0x14c] sm:$0xf]
  %v96 = vld [vmem:[%s0 + $0x150] sm:$0xf]
  %v97 = vld [vmem:[%s0 + $0x154] sm:$0xf]
  %v98 = vld [vmem:[%s0 + $0x158] sm:$0xf]
  %v99 = vld [vmem:[%s0 + $0x15c] sm:$0xf]
  %v100 = vld [vmem:[%s0 + $0x160] sm:$0xf]
  %v101 = vld [vmem:[%s0 + $0x164] sm:$0xf]
  %v102 = vld [vmem:[%s0 + $0x168] sm:$0xf]
  %v103 = vld [vmem:[%s0 + $0x16c] sm:$0xf]
  %v104 = vld [vmem:[%s0 + $0x170] sm:$0xf]
  %v105 = vld [vmem:[%s0 + $0x174] sm:$0xf]
  %v106 = vld [vmem:[%s0 + $0x178] sm:$0xf]
  %v107 = vld [vmem:[%s0 + $0x17c] sm:$0xf]
  %v108 = vld [vmem:[%s0 + $0x180] sm:$0xf]
  %v109 = vld [vmem:[%s0 + $0x184] sm:$0xf]
  %v110 = vld [vmem:[%s0 + $0x188] sm:$0xf]
  %v111 = vld [vmem:[%s0 + $0x18c] sm:$0xf]
  %v112 = vld [vmem:[%s0 + $0x190] sm:$0xf]
  %v113 = vld [vmem:[%s0 + $0x194] sm:$0xf]
  %v114 = vld [vmem:[%s0 + $0x198] sm:$0xf]
  %v115 = vld [vmem:[%s0 + $0x19c] sm:$0xf]
  %v116 = vld [vmem:[%s0 + $0x1a0] sm:$0xf]
  %v117 = vld [vmem:[%s0 + $0x1a4] sm:$0xf]
  %v118 = vld [vmem:[%s0 + $0x1a8] sm:$0xf]
  %v119 = vld [vmem:[%s0 + $0x1ac] sm:$0xf]
  %v120 = vld [vmem:[%s0 + $0x1b0] sm:$0xf]
  %v121 = vld [vmem:[%s0 + $0x1b4] sm:$0xf]
  %v122 = vld [vmem:[%s0 + $0x1b8] sm:$0xf]
  %v123 = vld [vmem:[%s0 + $0x1bc] sm:$0xf]
  %v124 = vld [vmem:[%s0 + $0x1c0] sm:$0xf]
  %v125 = vld [vmem:[%s0 + $0x1c4] sm:$0xf]
  %v126 = vld [vmem:[%s0 + $0x1c8] sm:$0xf]
  %v127 = vld [vmem:[%s0 + $0x1cc] sm:$0xf]
  %v128 = vld [vmem:[%s0 + $0x1d0] sm:$0xf]
  %v129 = vld [vmem:[%s0 + $0x1d4] sm:$0xf]
  %v130 = vld [vmem:[%s0 + $0x1d8] sm:$0xf]
  %v131 = vld [vmem:[%s0 + $0x1dc] sm:$0xf]
  %v132 = vld [vmem:[%s0 + $0x1e0] sm:$0xf]
  %v133 = vld [vmem:[%s0 + $0x1e4] sm:$0xf]
  %v134 = vld [vmem:[%s0 + $0x1e8] sm:$0xf]
  %v135 = vld [vmem:[%s0 + $0x1ec] sm:$0xf]
  %v136 = vld [vmem:[%s0 + $0x1f0] sm:$0xf]
  %v137 = vld [vmem:[%s0 + $0x1f4] sm:$0xf]
  %v138 = vld [vmem:[%s0 + $0x1f8] sm:$0xf]
  %v139 = vld [vmem:[%s0 + $0x1fc] sm:$0xf]
  %v140 = vld [vmem:[%s0 + $0x200] sm:$0xf]
  %v141 = vld [vmem:[%s0 + $0x204] sm:$0xf]
  %v142 = vld [vmem:[%s0 + $0x208] sm:$0xf]
  %v143 = vld [vmem:[%s0 + $0x20c] sm:$0xf]
  %v144 = vld [vmem:[%s0 + $0x210] sm:$0xf]
  %v145 = vld [vmem:[%s0 + $0x214] sm:$0xf]
  %v146 = vld [vmem:[%s0 + $0x218] sm:$0xf]
  %v147 = vld [vmem:[%s0 + $0x21c] sm:$0xf]
  %v148 = vld [vmem:[%s0 + $0x220] sm:$0xf]
  %v149 = vld [vmem:[%s0 + $0x224] sm:$0xf]
  %v150 = vld [vmem:[%s0 + $0x228] sm:$0xf]
  %v151 = vld [vmem:[%s0 + $0x22c] sm:$0xf]
  %v152 = vld [vmem:[%s0 + $0x230] sm:$0xf]
  %v153 = vld [vmem:[%s0 + $0x234] sm:$0xf]
  %v154 = vld [vmem:[%s0 + $0x238] sm:$0xf]
  %v155 = vld [vmem:[%s0 + $0x23c] sm:$0xf]
  %v156 = vld [vmem:[%s0 + $0x240] sm:$0xf]
  %v157 = vld [vmem:[%s0 + $0x244] sm:$0xf]
  %v158 = vld [vmem:[%s0 + $0x248] sm:$0xf]
  %v159 = vld [vmem:[%s0 + $0x24c] sm:$0xf]
  %v160 = vld [vmem:[%s0 + $0x250] sm:$0xf]
  %v161 = vld [vmem:[%s0 + $0x254] sm:$0xf]
  %v162 = vld [vmem:[%s0 + $0x258] sm:$0xf]
  %v163 = vld [vmem:[%s0 + $0x25c] sm:$0xf]
  %v164 = vld [vmem:[%s0 + $0x260] sm:$0xf]
  %v165 = vld [vmem:[%s0 + $0x264] sm:$0xf]
  %v166 = vld [vmem:[%s0 + $0x268] sm:$0xf]
  %v167 = vld [vmem:[%s0 + $0x26c] sm:$0xf]
  %v168 = vld [vmem:[%s0 + $0x270] sm:$0xf]
  %v169 = vld [vmem:[%s0 + $0x274] sm:$0xf]
  %v170 = vld [vmem:[%s0 + $0x278] sm:$0xf]
  %v171 = vld [vmem:[%s0 + $0x27c] sm:$0xf]
  %v172 = vld [vmem:[%s0 + $0x280] sm:$0xf]
  %v173 = vld [vmem:[%s0 + $0x284] sm:$0xf]
  %v174 = vld [vmem:[%s0 + $0x288] sm:$0xf]
  %v175 = vld [vmem:[%s0 + $0x28c] sm:$0xf]
  %v176 = vld [vmem:[%s0 + $0x290] sm:$0xf]
  %v177 = vld [vmem:[%s0 + $0x294] sm:$0xf]
  %v178 = vld [vmem:[%s0 + $0x298] sm:$0xf]
  %v179 = vld [vmem:[%s0 + $0x29c] sm:$0xf]
  %v180 = vld [vmem:[%s0 + $0x2a0] sm:$0xf]
  %v181 = vld [vmem:[%s0 + $0x2a4] sm:$0xf]
  %v182 = vld [vmem:[%s0 + $0x2a8] sm:$0xf]
  %v183 = vld [vmem:[%s0 + $0x2ac] sm:$0xf]
  %v184 = vld [vmem:[%s0 + $0x2b0] sm:$0xf]
  %v185 = vld [vmem:[%s0 + $0x2b4] sm:$0xf]
  %v186 = vld [vmem:[%s0 + $0x2b8] sm:$0xf]
  %v187 = vld [vmem:[%s0 + $0x2bc] sm:$0xf]
  %v188 = vld [vmem:[%s0 + $0x2c0] sm:$0xf]
  %v189 = vld [vmem:[%s0 + $0x2c4] sm:$0xf]
  %v190 = vld [vmem:[%s0 + $0x2c8] sm:$0xf]
  %v191 = vld [vmem:[%s0 + $0x2cc] sm:$0xf]
  %v192 = vld [vmem:[%s0 + $0x2d0] sm:$0xf]
  %v193 = vld [vmem:[%s0 + $0x2d4] sm:$0xf]
  %v194 = vld [vmem:[%s0 + $0x2d8] sm:$0xf]
  %v195 = vld [vmem:[%s0 + $0x2dc] sm:$0xf]
  %v196 = vld [vmem:[%s0 + $0x2e0] sm:$0xf]
  %v197 = vld [vmem:[%s0 + $0x2e4] sm:$0xf]
  %v198 = vld [vmem:[%s0 + $0x2e8] sm:$0xf]
  %v199 = vld [vmem:[%s0 + $0x2ec] sm:$0xf]
  %v200 = vld [vmem:[%s0 + $0x2f0] sm:$0xf]
  %v201 = vld [vmem:[%s0 + $0x2f4] sm:$0xf]
  %v202 = vld [vmem:[%s0 + $0x2f8] sm:$0xf]
  %v203 = vld [vmem:[%s0 + $0x2fc] sm:$0xf]
  %v204 = vld [vmem:[%s0 + $0x300] sm:$0xf]
  %v205 = vld [vmem:[%s0 + $0x304] sm:$0xf]
  %v206 = vld [vmem:[%s0 + $0x308] sm:$0xf]
  %v207 = vld [vmem:[%s0 + $0x30c] sm:$0xf]
  %v208 = vld [vmem:[%s0 + $0x310] sm:$0xf]
  %v209 = vld [vmem:[%s0 + $0x314] sm:$0xf]
  %v210 = vld [vmem:[%s0 + $0x318] sm:$0xf]
  %v211 = vld [vmem:[%s0 + $0x31c] sm:$0xf]
  %v212 = vld [vmem:[%s0 + $0x320] sm:$0xf]
  %v213 = vld [vmem:[%s0 + $0x324] sm:$0xf]
  %v214 = vld [vmem:[%s0 + $0x328] sm:$0xf]
  %v215 = vld [vmem:[%s0 + $0x32c] sm:$0xf]
  %v216 = vld [vmem:[%s0 + $0x330] sm:$0xf]
  %v217 = vld [vmem:[%s0 + $0x334] sm:$0xf]
  %v218 = vld [vmem:[%s0 + $0x338] sm:$0xf]
  %v219 = vld [vmem:[%s0 + $0x33c] sm:$0xf]
  %v220 = vld [vmem:[%s0 + $0x340] sm:$0xf]
  %v221 = vld [vmem:[%s0 + $0x344] sm:$0xf]
  %v222 = vld [vmem:[%s0 + $0x348] sm:$0xf]
  %v223 = vld [vmem:[%s0 + $0x34c] sm:$0xf]
  %v224 = vld [vmem:[%s0 + $0x350] sm:$0xf]
  %v225 = vld [vmem:[%s0 + $0x354] sm:$0xf]
  %v226 = vld [vmem:[%s0 + $0x358] sm:$0xf]
  %v227 = vld [vmem:[%s0 + $0x35c] sm:$0xf]
  %v228 = vld [vmem:[%s0 + $0x360] sm:$0xf]
  %v229 = vld [vmem:[%s0 + $0x364] sm:$0xf]
  %v230 = vld [vmem:[%s0 + $0x368] sm:$0xf]
  %v231 = vld [vmem:[%s0 + $0x36c] sm:$0xf]
  %v232 = vld [vmem:[%s0 + $0x370] sm:$0xf]
  %v233 = vld [vmem:[%s0 + $0x374] sm:$0xf]
  %v234 = vld [vmem:[%s0 + $0x378] sm:$0xf]
  %v235 = vld [vmem:[%s0 + $0x37c] sm:$0xf]
  %v236 = vld [vmem:[%s0 + $0x380] sm:$0xf]
  %v237 = vld [vmem:[%s0 + $0x384] sm:$0xf]
  %v238 = vld [vmem:[%s0 + $0x388] sm:$0xf]
  %v239 = vld [vmem:[%s0 + $0x38c] sm:$0xf]
  %v240 = vld [vmem:[%s0 + $0x390] sm:$0xf]
  %v241 = vld [vmem:[%s0 + $0x394] sm:$0xf]
  %v242 = vld [vmem:[%s0 + $0x398] sm:$0xf]
  %v243 = vld [vmem:[%s0 + $0x39c] sm:$0xf]
  %v244 = vld [vmem:[%s0 + $0x3a0] sm:$0xf]
  %v245 = vld [vmem:[%s0 + $0x3a4] sm:$0xf]
  %v246 = vld [vmem:[%s0 + $0x3a8] sm:$0xf]
  %v247 = vld [vmem:[%s0 + $0x3ac] sm:$0xf]
  %v248 = vld [vmem:[%s0 + $0x3b0] sm:$0xf]
  %v249 = vld [vmem:[%s0 + $0x3b4] sm:$0xf]
  %v250 = vld [vmem:[%s0 + $0x3b8] sm:$0xf]
  %v251 = vld [vmem:[%s0 + $0x3bc] sm:$0xf]
  %v252 = vld [vmem:[%s0 + $0x3c0] sm:$0xf]
  %v253 = vld [vmem:[%s0 + $0x3c4] sm:$0xf]
  %v254 = vld [vmem:[%s0 + $0x3c8] sm:$0xf]
  %v255 = vld [vmem:[%s0 + $0x3cc] sm:$0xf]
  %v256 = vld [vmem:[%s0 + $0x3d0] sm:$0xf]
  %v257 = vld [vmem:[%s0 + $0x3d4] sm:$0xf]
  %v258 = vld [vmem:[%s0 + $0x3d8] sm:$0xf]
  %v259 = vld [vmem:[%s0 + $0x3dc] sm:$0xf]
  %v260 = vld [vmem:[%s0 + $0x3e0] sm:$0xf]
  %v261 = vld [vmem:[%s0 + $0x3e4] sm:$0xf]
  %v262 = vld [vmem:[%s0 + $0x3e8] sm:$0xf]
  %v263 = vld [vmem:[%s0 + $0x3ec] sm:$0xf]
  %v264 = vld [vmem:[%s0 + $0x3f0] sm:$0xf]
  %v265 = vld [vmem:[%s0 + $0x3f4] sm:$0xf]
  %v266 = vld [vmem:[%s0 + $0x3f8] sm:$0xf]
  %v267 = vld [vmem:[%s0 + $0x3fc] sm:$0xf]
  %v268 = vld [vmem:[%s1] sm:$0xf]
  %v269 = vld [vmem:[%s1 + $0x4] sm:$0xf]
  %v270 = vld [vmem:[%s1 + $0x8] sm:$0xf]
  %v271 = vld [vmem:[%s1 + $0xc] sm:$0xf]
  %v272 = vld [vmem:[%s1 + $0x10] sm:$0xf]
  %v273 = vld [vmem:[%s1 + $0x14] sm:$0xf]
  %v274 = vld [vmem:[%s1 + $0x18] sm:$0xf]
  %v275 = vld [vmem:[%s1 + $0x1c] sm:$0xf]
  %v276 = vld [vmem:[%s1 + $0x20] sm:$0xf]
  %v533 = vunpack.c.l.b16 %v12
  %v534 = vunpack.c.l.b16 %v13
  %v535 = vunpack.c.l.b16 %v14
  %v536 = vunpack.c.l.b16 %v15
  %v537 = vunpack.c.l.b16 %v16
  %v538 = vunpack.c.l.b16 %v17
  %v539 = vunpack.c.l.b16 %v18
  %v540 = vunpack.c.l.b16 %v19
  %v541 = vunpack.c.l.b16 %v20
  %v542 = vunpack.c.l.b16 %v21
  %v543 = vunpack.c.l.b16 %v22
  %v544 = vunpack.c.l.b16 %v23
  %v545 = vunpack.c.l.b16 %v24
  %v546 = vunpack.c.l.b16 %v25
  %v547 = vunpack.c.l.b16 %v26
  %v548 = vunpack.c.l.b16 %v27
  %v549 = vunpack.c.l.b16 %v28
  %v550 = vunpack.c.l.b16 %v29
  %v551 = vunpack.c.l.b16 %v30
  %v552 = vunpack.c.l.b16 %v31
  %v553 = vunpack.c.l.b16 %v32
  %v554 = vunpack.c.l.b16 %v33
  %v555 = vunpack.c.l.b16 %v34
  %v556 = vunpack.c.l.b16 %v35
  %v557 = vunpack.c.l.b16 %v36
  %v558 = vunpack.c.l.b16 %v37
  %v559 = vunpack.c.l.b16 %v38
  %v560 = vunpack.c.l.b16 %v39
  %v561 = vunpack.c.l.b16 %v40
  %v562 = vunpack.c.l.b16 %v41
  %v563 = vunpack.c.l.b16 %v42
  %v564 = vunpack.c.l.b16 %v43
  %v565 = vunpack.c.l.b16 %v44
  %v566 = vunpack.c.l.b16 %v45
  %v567 = vunpack.c.l.b16 %v46
  %v568 = vunpack.c.l.b16 %v47
  %v569 = vunpack.c.l.b16 %v48
  %v570 = vunpack.c.l.b16 %v49
  %v571 = vunpack.c.l.b16 %v50
  %v572 = vunpack.c.l.b16 %v51
  %v573 = vunpack.c.l.b16 %v52
  %v574 = vunpack.c.l.b16 %v53
  %v575 = vunpack.c.l.b16 %v54
  %v576 = vunpack.c.l.b16 %v55
  %v577 = vunpack.c.l.b16 %v56
  %v578 = vunpack.c.l.b16 %v57
  %v579 = vunpack.c.l.b16 %v58
  %v580 = vunpack.c.l.b16 %v59
  %v581 = vunpack.c.l.b16 %v60
  %v582 = vunpack.c.l.b16 %v61
  %v583 = vunpack.c.l.b16 %v62
  %v584 = vunpack.c.l.b16 %v63
  %v585 = vunpack.c.l.b16 %v64
  %v586 = vunpack.c.l.b16 %v65
  %v587 = vunpack.c.l.b16 %v66
  %v588 = vunpack.c.l.b16 %v67
  %v589 = vunpack.c.l.b16 %v68
  %v590 = vunpack.c.l.b16 %v69
  %v591 = vunpack.c.l.b16 %v70
  %v592 = vunpack.c.l.b16 %v71
  %v593 = vunpack.c.l.b16 %v72
  %v594 = vunpack.c.l.b16 %v73
  %v595 = vunpack.c.l.b16 %v74
  %v596 = vunpack.c.l.b16 %v75
  %v597 = vunpack.c.l.b16 %v76
  %v598 = vunpack.c.l.b16 %v77
  %v599 = vunpack.c.l.b16 %v78
  %v600 = vunpack.c.l.b16 %v79
  %v601 = vunpack.c.l.b16 %v80
  %v602 = vunpack.c.l.b16 %v81
  %v603 = vunpack.c.l.b16 %v82
  %v604 = vunpack.c.l.b16 %v83
  %v605 = vunpack.c.l.b16 %v84
  %v606 = vunpack.c.l.b16 %v85
  %v607 = vunpack.c.l.b16 %v86
  %v608 = vunpack.c.l.b16 %v87
  %v609 = vunpack.c.l.b16 %v88
  %v610 = vunpack.c.l.b16 %v89
  %v611 = vunpack.c.l.b16 %v90
  %v612 = vunpack.c.l.b16 %v91
  %v613 = vunpack.c.l.b16 %v92
  %v614 = vunpack.c.l.b16 %v93
  %v615 = vunpack.c.l.b16 %v94
  %v616 = vunpack.c.l.b16 %v95
  %v617 = vunpack.c.l.b16 %v96
  %v618 = vunpack.c.l.b16 %v97
  %v619 = vunpack.c.l.b16 %v98
  %v620 = vunpack.c.l.b16 %v99
  %v621 = vunpack.c.l.b16 %v100
  %v622 = vunpack.c.l.b16 %v101
  %v623 = vunpack.c.l.b16 %v102
  %v624 = vunpack.c.l.b16 %v103
  %v625 = vunpack.c.l.b16 %v104
  %v626 = vunpack.c.l.b16 %v105
  %v627 = vunpack.c.l.b16 %v106
  %v628 = vunpack.c.l.b16 %v107
  %v629 = vunpack.c.l.b16 %v108
  %v630 = vunpack.c.l.b16 %v109
  %v631 = vunpack.c.l.b16 %v110
  %v632 = vunpack.c.l.b16 %v111
  %v633 = vunpack.c.l.b16 %v112
  %v634 = vunpack.c.l.b16 %v113
  %v635 = vunpack.c.l.b16 %v114
  %v636 = vunpack.c.l.b16 %v115
  %v637 = vunpack.c.l.b16 %v116
  %v638 = vunpack.c.l.b16 %v117
  %v639 = vunpack.c.l.b16 %v118
  %v640 = vunpack.c.l.b16 %v119
  %v641 = vunpack.c.l.b16 %v120
  %v642 = vunpack.c.l.b16 %v121
  %v643 = vunpack.c.l.b16 %v122
  %v644 = vunpack.c.l.b16 %v123
  %v645 = vunpack.c.l.b16 %v124
  %v646 = vunpack.c.l.b16 %v125
  %v647 = vunpack.c.l.b16 %v126
  %v648 = vunpack.c.l.b16 %v127
  %v649 = vunpack.c.l.b16 %v128
  %v650 = vunpack.c.l.b16 %v129
  %v651 = vunpack.c.l.b16 %v130
  %v652 = vunpack.c.l.b16 %v131
  %v653 = vunpack.c.l.b16 %v132
  %v654 = vunpack.c.l.b16 %v133
  %v655 = vunpack.c.l.b16 %v134
  %v656 = vunpack.c.l.b16 %v135
  %v657 = vunpack.c.l.b16 %v136
  %v658 = vunpack.c.l.b16 %v137
  %v659 = vunpack.c.l.b16 %v138
  %v660 = vunpack.c.l.b16 %v139
  %v661 = vunpack.c.l.b16 %v140
  %v662 = vunpack.c.l.b16 %v141
  %v663 = vunpack.c.l.b16 %v142
  %v664 = vunpack.c.l.b16 %v143
  %v665 = vunpack.c.l.b16 %v144
  %v666 = vunpack.c.l.b16 %v145
  %v667 = vunpack.c.l.b16 %v146
  %v668 = vunpack.c.l.b16 %v147
  %v669 = vunpack.c.l.b16 %v148
  %v670 = vunpack.c.l.b16 %v149
  %v671 = vunpack.c.l.b16 %v150
  %v672 = vunpack.c.l.b16 %v151
  %v673 = vunpack.c.l.b16 %v152
  %v674 = vunpack.c.l.b16 %v153
  %v675 = vunpack.c.l.b16 %v154
  %v676 = vunpack.c.l.b16 %v155
  %v677 = vunpack.c.l.b16 %v156
  %v678 = vunpack.c.l.b16 %v157
  %v679 = vunpack.c.l.b16 %v158
  %v680 = vunpack.c.l.b16 %v159
  %v681 = vunpack.c.l.b16 %v160
  %v682 = vunpack.c.l.b16 %v161
  %v683 = vunpack.c.l.b16 %v162
  %v684 = vunpack.c.l.b16 %v163
  %v685 = vunpack.c.l.b16 %v164
  %v686 = vunpack.c.l.b16 %v165
  %v687 = vunpack.c.l.b16 %v166
  %v688 = vunpack.c.l.b16 %v167
  %v689 = vunpack.c.l.b16 %v168
  %v690 = vunpack.c.l.b16 %v169
  %v691 = vunpack.c.l.b16 %v170
  %v692 = vunpack.c.l.b16 %v171
  %v693 = vunpack.c.l.b16 %v172
  %v694 = vunpack.c.l.b16 %v173
  %v695 = vunpack.c.l.b16 %v174
  %v696 = vunpack.c.l.b16 %v175
  %v697 = vunpack.c.l.b16 %v176
  %v698 = vunpack.c.l.b16 %v177
  %v699 = vunpack.c.l.b16 %v178
  %v700 = vunpack.c.l.b16 %v179
  %v701 = vunpack.c.l.b16 %v180
  %v702 = vunpack.c.l.b16 %v181
  %v703 = vunpack.c.l.b16 %v182
  %v704 = vunpack.c.l.b16 %v183
  %v705 = vunpack.c.l.b16 %v184
  %v706 = vunpack.c.l.b16 %v185
  %v707 = vunpack.c.l.b16 %v186
  %v708 = vunpack.c.l.b16 %v187
  %v709 = vunpack.c.l.b16 %v188
  %v710 = vunpack.c.l.b16 %v189
  %v711 = vunpack.c.l.b16 %v190
  %v712 = vunpack.c.l.b16 %v191
  %v713 = vunpack.c.l.b16 %v192
  %v714 = vunpack.c.l.b16 %v193
  %v715 = vunpack.c.l.b16 %v194
  %v716 = vunpack.c.l.b16 %v195
  %v717 = vunpack.c.l.b16 %v196
  %v718 = vunpack.c.l.b16 %v197
  %v719 = vunpack.c.l.b16 %v198
  %v720 = vunpack.c.l.b16 %v199
  %v721 = vunpack.c.l.b16 %v200
  %v722 = vunpack.c.l.b16 %v201
  %v723 = vunpack.c.l.b16 %v202
  %v724 = vunpack.c.l.b16 %v203
  %v725 = vunpack.c.l.b16 %v204
  %v726 = vunpack.c.l.b16 %v205
  %v727 = vunpack.c.l.b16 %v206
  %v728 = vunpack.c.l.b16 %v207
  %v729 = vunpack.c.l.b16 %v208
  %v730 = vunpack.c.l.b16 %v209
  %v731 = vunpack.c.l.b16 %v210
  %v732 = vunpack.c.l.b16 %v211
  %v733 = vunpack.c.l.b16 %v212
  %v734 = vunpack.c.l.b16 %v213
  %v735 = vunpack.c.l.b16 %v214
  %v736 = vunpack.c.l.b16 %v215
  %v737 = vunpack.c.l.b16 %v216
  %v738 = vunpack.c.l.b16 %v217
  %v739 = vunpack.c.l.b16 %v218
  %v740 = vunpack.c.l.b16 %v219
  %v741 = vunpack.c.l.b16 %v220
  %v742 = vunpack.c.l.b16 %v221
  %v743 = vunpack.c.l.b16 %v222
  %v744 = vunpack.c.l.b16 %v223
  %v745 = vunpack.c.l.b16 %v224
  %v746 = vunpack.c.l.b16 %v225
  %v747 = vunpack.c.l.b16 %v226
  %v748 = vunpack.c.l.b16 %v227
  %v749 = vunpack.c.l.b16 %v228
  %v750 = vunpack.c.l.b16 %v229
  %v751 = vunpack.c.l.b16 %v230
  %v752 = vunpack.c.l.b16 %v231
  %v753 = vunpack.c.l.b16 %v232
  %v754 = vunpack.c.l.b16 %v233
  %v755 = vunpack.c.l.b16 %v234
  %v756 = vunpack.c.l.b16 %v235
  %v757 = vunpack.c.l.b16 %v236
  %v758 = vunpack.c.l.b16 %v237
  %v759 = vunpack.c.l.b16 %v238
  %v760 = vunpack.c.l.b16 %v239
  %v761 = vunpack.c.l.b16 %v240
  %v762 = vunpack.c.l.b16 %v241
  %v763 = vunpack.c.l.b16 %v242
  %v764 = vunpack.c.l.b16 %v243
  %v765 = vunpack.c.l.b16 %v244
  %v766 = vunpack.c.l.b16 %v245
  %v767 = vunpack.c.l.b16 %v246
  %v768 = vunpack.c.l.b16 %v247
  %v769 = vunpack.c.l.b16 %v248
  %v770 = vunpack.c.l.b16 %v249
  %v771 = vunpack.c.l.b16 %v250
  %v772 = vunpack.c.l.b16 %v251
  %v773 = vunpack.c.l.b16 %v252
  %v774 = vunpack.c.l.b16 %v253
  %v775 = vunpack.c.l.b16 %v254
  %v776 = vunpack.c.l.b16 %v255
  %v777 = vunpack.c.l.b16 %v256
  %v778 = vunpack.c.l.b16 %v257
  %v779 = vunpack.c.l.b16 %v258
  %v780 = vunpack.c.l.b16 %v259
  %v781 = vunpack.c.l.b16 %v260
  %v782 = vunpack.c.l.b16 %v261
  %v783 = vunpack.c.l.b16 %v262
  %v784 = vunpack.c.l.b16 %v263
  %v785 = vunpack.c.l.b16 %v264
  %v786 = vunpack.c.l.b16 %v265
  %v787 = vunpack.c.l.b16 %v266
  %v788 = vunpack.c.l.b16 %v267
  %v789 = vpack.c.b16 %v534, %v533
  %v790 = vpack.c.b16 %v536, %v535
  %v791 = vpack.c.b16 %v538, %v537
  %v792 = vpack.c.b16 %v540, %v539
  %v793 = vpack.c.b16 %v542, %v541
  %v794 = vpack.c.b16 %v544, %v543
  %v795 = vpack.c.b16 %v546, %v545
  %v796 = vpack.c.b16 %v548, %v547
  %v797 = vpack.c.b16 %v550, %v549
  %v798 = vpack.c.b16 %v552, %v551
  %v799 = vpack.c.b16 %v554, %v553
  %v800 = vpack.c.b16 %v556, %v555
  %v801 = vpack.c.b16 %v558, %v557
  %v802 = vpack.c.b16 %v560, %v559
  %v803 = vpack.c.b16 %v562, %v561
  %v804 = vpack.c.b16 %v564, %v563
  %v805 = vpack.c.b16 %v566, %v565
  %v806 = vpack.c.b16 %v568, %v567
  %v807 = vpack.c.b16 %v570, %v569
  %v808 = vpack.c.b16 %v572, %v571
  %v809 = vpack.c.b16 %v574, %v573
  %v810 = vpack.c.b16 %v576, %v575
  %v811 = vpack.c.b16 %v578, %v577
  %v812 = vpack.c.b16 %v580, %v579
  %v813 = vpack.c.b16 %v582, %v581
  %v814 = vpack.c.b16 %v584, %v583
  %v815 = vpack.c.b16 %v586, %v585
  %v816 = vpack.c.b16 %v588, %v587
  %v817 = vpack.c.b16 %v590, %v589
  %v818 = vpack.c.b16 %v592, %v591
  %v819 = vpack.c.b16 %v594, %v593
  %v820 = vpack.c.b16 %v596, %v595
  %v821 = vpack.c.b16 %v598, %v597
  %v822 = vpack.c.b16 %v600, %v599
  %v823 = vpack.c.b16 %v602, %v601
  %v824 = vpack.c.b16 %v604, %v603
  %v825 = vpack.c.b16 %v606, %v605
  %v826 = vpack.c.b16 %v608, %v607
  %v827 = vpack.c.b16 %v610, %v609
  %v828 = vpack.c.b16 %v612, %v611
  %v829 = vpack.c.b16 %v614, %v613
  %v830 = vpack.c.b16 %v616, %v615
  %v831 = vpack.c.b16 %v618, %v617
  %v832 = vpack.c.b16 %v620, %v619
  %v833 = vpack.c.b16 %v622, %v621
  %v834 = vpack.c.b16 %v624, %v623
  %v835 = vpack.c.b16 %v626, %v625
  %v836 = vpack.c.b16 %v628, %v627
  %v837 = vpack.c.b16 %v630, %v629
  %v838 = vpack.c.b16 %v632, %v631
  %v839 = vpack.c.b16 %v634, %v633
  %v840 = vpack.c.b16 %v636, %v635
  %v841 = vpack.c.b16 %v638, %v637
  %v842 = vpack.c.b16 %v640, %v639
  %v843 = vpack.c.b16 %v642, %v641
  %v844 = vpack.c.b16 %v644, %v643
  %v845 = vpack.c.b16 %v646, %v645
  %v846 = vpack.c.b16 %v648, %v647
  %v847 = vpack.c.b16 %v650, %v649
  %v848 = vpack.c.b16 %v652, %v651
  %v849 = vpack.c.b16 %v654, %v653
  %v850 = vpack.c.b16 %v656, %v655
  %v851 = vpack.c.b16 %v658, %v657
  %v852 = vpack.c.b16 %v660, %v659
  %v853 = vpack.c.b16 %v662, %v661
  %v854 = vpack.c.b16 %v664, %v663
  %v855 = vpack.c.b16 %v666, %v665
  %v856 = vpack.c.b16 %v668, %v667
  %v857 = vpack.c.b16 %v670, %v669
  %v858 = vpack.c.b16 %v672, %v671
  %v859 = vpack.c.b16 %v674, %v673
  %v860 = vpack.c.b16 %v676, %v675
  %v861 = vpack.c.b16 %v678, %v677
  %v862 = vpack.c.b16 %v680, %v679
  %v863 = vpack.c.b16 %v682, %v681
  %v864 = vpack.c.b16 %v684, %v683
  %v865 = vpack.c.b16 %v686, %v685
  %v866 = vpack.c.b16 %v688, %v687
  %v867 = vpack.c.b16 %v690, %v689
  %v868 = vpack.c.b16 %v692, %v691
  %v869 = vpack.c.b16 %v694, %v693
  %v870 = vpack.c.b16 %v696, %v695
  %v871 = vpack.c.b16 %v698, %v697
  %v872 = vpack.c.b16 %v700, %v699
  %v873 = vpack.c.b16 %v702, %v701
  %v874 = vpack.c.b16 %v704, %v703
  %v875 = vpack.c.b16 %v706, %v705
  %v876 = vpack.c.b16 %v708, %v707
  %v877 = vpack.c.b16 %v710, %v709
  %v878 = vpack.c.b16 %v712, %v711
  %v879 = vpack.c.b16 %v714, %v713
  %v880 = vpack.c.b16 %v716, %v715
  %v881 = vpack.c.b16 %v718, %v717
  %v882 = vpack.c.b16 %v720, %v719
  %v883 = vpack.c.b16 %v722, %v721
  %v884 = vpack.c.b16 %v724, %v723
  %v885 = vpack.c.b16 %v726, %v725
  %v886 = vpack.c.b16 %v728, %v727
  %v887 = vpack.c.b16 %v730, %v729
  %v888 = vpack.c.b16 %v732, %v731
  %v889 = vpack.c.b16 %v734, %v733
  %v890 = vpack.c.b16 %v736, %v735
  %v891 = vpack.c.b16 %v738, %v737
  %v892 = vpack.c.b16 %v740, %v739
  %v893 = vpack.c.b16 %v742, %v741
  %v894 = vpack.c.b16 %v744, %v743
  %v895 = vpack.c.b16 %v746, %v745
  %v896 = vpack.c.b16 %v748, %v747
  %v897 = vpack.c.b16 %v750, %v749
  %v898 = vpack.c.b16 %v752, %v751
  %v899 = vpack.c.b16 %v754, %v753
  %v900 = vpack.c.b16 %v756, %v755
  %v901 = vpack.c.b16 %v758, %v757
  %v902 = vpack.c.b16 %v760, %v759
  %v903 = vpack.c.b16 %v762, %v761
  %v904 = vpack.c.b16 %v764, %v763
  %v905 = vpack.c.b16 %v766, %v765
  %v906 = vpack.c.b16 %v768, %v767
  %v907 = vpack.c.b16 %v770, %v769
  %v908 = vpack.c.b16 %v772, %v771
  %v909 = vpack.c.b16 %v774, %v773
  %v910 = vpack.c.b16 %v776, %v775
  %v911 = vpack.c.b16 %v778, %v777
  %v912 = vpack.c.b16 %v780, %v779
  %v913 = vpack.c.b16 %v782, %v781
  %v914 = vpack.c.b16 %v784, %v783
  %v915 = vpack.c.b16 %v786, %v785
  %v916 = vpack.c.b16 %v788, %v787
  %v926 = vunpack.c.l.b16 %v268
  %v927 = vunpack.c.l.b16 %v269
  %v928 = vunpack.c.l.b16 %v270
  %v929 = vunpack.c.l.b16 %v271
  %v930 = vunpack.c.l.b16 %v272
  %v931 = vunpack.c.l.b16 %v273
  %v932 = vunpack.c.l.b16 %v274
  %v933 = vunpack.c.l.b16 %v275
  %v934 = vunpack.c.l.b16 %v276
  %v935 = vpack.c.b16 %v927, %v926
  %v936 = vpack.c.b16 %v929, %v928
  %v937 = vpack.c.b16 %v931, %v930
  %v938 = vpack.c.b16 %v933, %v932
  %v939 = vpack.c.b16 %v934, %v934
  %vm944 = vcmask 588800
  %v946 = vsel %vm944, %v789, 0
  %v949 = vsel %vm944, %v790, 0
  %v952 = vsel %vm944, %v791, 0
  %v955 = vsel %vm944, %v792, 0
  %v958 = vsel %vm944, %v793, 0
  %v961 = vsel %vm944, %v794, 0
  %v964 = vsel %vm944, %v795, 0
  %v967 = vsel %vm944, %v796, 0
  %v970 = vsel %vm944, %v797, 0
  %v973 = vsel %vm944, %v798, 0
  %v976 = vsel %vm944, %v799, 0
  %v979 = vsel %vm944, %v800, 0
  %v982 = vsel %vm944, %v801, 0
  %v985 = vsel %vm944, %v802, 0
  %v988 = vsel %vm944, %v803, 0
  %v991 = vsel %vm944, %v804, 0
  %v994 = vsel %vm944, %v805, 0
  %v997 = vsel %vm944, %v806, 0
  %v1000 = vsel %vm944, %v807, 0
  %v1003 = vsel %vm944, %v808, 0
  %v1006 = vsel %vm944, %v809, 0
  %v1009 = vsel %vm944, %v810, 0
  %v1012 = vsel %vm944, %v811, 0
  %v1015 = vsel %vm944, %v812, 0
  %v1018 = vsel %vm944, %v813, 0
  %v1021 = vsel %vm944, %v814, 0
  %v1024 = vsel %vm944, %v815, 0
  %v1027 = vsel %vm944, %v816, 0
  %v1030 = vsel %vm944, %v817, 0
  %v1033 = vsel %vm944, %v818, 0
  %v1036 = vsel %vm944, %v819, 0
  %v1039 = vsel %vm944, %v820, 0
  %v1042 = vsel %vm944, %v821, 0
  %v1045 = vsel %vm944, %v822, 0
  %v1048 = vsel %vm944, %v823, 0
  %v1051 = vsel %vm944, %v824, 0
  %v1054 = vsel %vm944, %v825, 0
  %v1057 = vsel %vm944, %v826, 0
  %v1060 = vsel %vm944, %v827, 0
  %v1063 = vsel %vm944, %v828, 0
  %v1066 = vsel %vm944, %v829, 0
  %v1069 = vsel %vm944, %v830, 0
  %v1072 = vsel %vm944, %v831, 0
  %v1075 = vsel %vm944, %v832, 0
  %v1078 = vsel %vm944, %v833, 0
  %v1081 = vsel %vm944, %v834, 0
  %v1084 = vsel %vm944, %v835, 0
  %v1087 = vsel %vm944, %v836, 0
  %v1090 = vsel %vm944, %v837, 0
  %v1093 = vsel %vm944, %v838, 0
  %v1096 = vsel %vm944, %v839, 0
  %v1099 = vsel %vm944, %v840, 0
  %v1102 = vsel %vm944, %v841, 0
  %v1105 = vsel %vm944, %v842, 0
  %v1108 = vsel %vm944, %v843, 0
  %v1111 = vsel %vm944, %v844, 0
  %v1114 = vsel %vm944, %v845, 0
  %v1117 = vsel %vm944, %v846, 0
  %v1120 = vsel %vm944, %v847, 0
  %v1123 = vsel %vm944, %v848, 0
  %v1126 = vsel %vm944, %v849, 0
  %v1129 = vsel %vm944, %v850, 0
  %v1132 = vsel %vm944, %v851, 0
  %v1135 = vsel %vm944, %v852, 0
  %v1138 = vsel %vm944, %v853, 0
  %v1141 = vsel %vm944, %v854, 0
  %v1144 = vsel %vm944, %v855, 0
  %v1147 = vsel %vm944, %v856, 0
  %v1150 = vsel %vm944, %v857, 0
  %v1153 = vsel %vm944, %v858, 0
  %v1156 = vsel %vm944, %v859, 0
  %v1159 = vsel %vm944, %v860, 0
  %v1162 = vsel %vm944, %v861, 0
  %v1165 = vsel %vm944, %v862, 0
  %v1168 = vsel %vm944, %v863, 0
  %v1171 = vsel %vm944, %v864, 0
  %v1174 = vsel %vm944, %v865, 0
  %v1177 = vsel %vm944, %v866, 0
  %v1180 = vsel %vm944, %v867, 0
  %v1183 = vsel %vm944, %v868, 0
  %v1186 = vsel %vm944, %v869, 0
  %v1189 = vsel %vm944, %v870, 0
  %v1192 = vsel %vm944, %v871, 0
  %v1195 = vsel %vm944, %v872, 0
  %v1198 = vsel %vm944, %v873, 0
  %v1201 = vsel %vm944, %v874, 0
  %v1204 = vsel %vm944, %v875, 0
  %v1207 = vsel %vm944, %v876, 0
  %v1210 = vsel %vm944, %v877, 0
  %v1213 = vsel %vm944, %v878, 0
  %v1216 = vsel %vm944, %v879, 0
  %v1219 = vsel %vm944, %v880, 0
  %v1222 = vsel %vm944, %v881, 0
  %v1225 = vsel %vm944, %v882, 0
  %v1228 = vsel %vm944, %v883, 0
  %v1231 = vsel %vm944, %v884, 0
  %v1234 = vsel %vm944, %v885, 0
  %v1237 = vsel %vm944, %v886, 0
  %v1240 = vsel %vm944, %v887, 0
  %v1243 = vsel %vm944, %v888, 0
  %v1246 = vsel %vm944, %v889, 0
  %v1249 = vsel %vm944, %v890, 0
  %v1252 = vsel %vm944, %v891, 0
  %v1255 = vsel %vm944, %v892, 0
  %v1258 = vsel %vm944, %v893, 0
  %v1261 = vsel %vm944, %v894, 0
  %v1264 = vsel %vm944, %v895, 0
  %v1267 = vsel %vm944, %v896, 0
  %v1270 = vsel %vm944, %v897, 0
  %v1273 = vsel %vm944, %v898, 0
  %v1276 = vsel %vm944, %v899, 0
  %v1279 = vsel %vm944, %v900, 0
  %v1282 = vsel %vm944, %v901, 0
  %v1285 = vsel %vm944, %v902, 0
  %v1288 = vsel %vm944, %v903, 0
  %v1291 = vsel %vm944, %v904, 0
  %v1294 = vsel %vm944, %v905, 0
  %v1297 = vsel %vm944, %v906, 0
  %v1300 = vsel %vm944, %v907, 0
  %v1303 = vsel %vm944, %v908, 0
  %v1306 = vsel %vm944, %v909, 0
  %v1309 = vsel %vm944, %v910, 0
  %v1312 = vsel %vm944, %v911, 0
  %v1315 = vsel %vm944, %v912, 0
  %v1318 = vsel %vm944, %v913, 0
  %v1321 = vsel %vm944, %v914, 0
  %v1324 = vsel %vm944, %v915, 0
  %v1327 = vsel %vm944, %v916, 0
  %vm1329 = vcmask 1043456
  %v1331 = vsel %vm1329, %v939, 0
  %1333 = vmatprep.subr.bf16.mxu0 0
  %1334 = vmatpush1.bf16.msra.mxu0 0
  %1335 = vmatprep.subr.bf16.mxu0 0
  %1336 = vmatpush1.bf16.msra.mxu0 0
  %1337 = vmatprep.subr.bf16.mxu0 0
  %1338 = vmatpush1.bf16.msra.mxu0 0
  %1339 = vmatprep.subr.bf16.mxu0 0
  %1340 = vmatpush1.bf16.msra.mxu0 %v1331
  %1341 = vmatprep.subr.bf16.mxu0 0
  %1342 = vmatpush1.bf16.msra.mxu0 %v938
  %1343 = vmatprep.subr.bf16.mxu0 0
  %1344 = vmatpush1.bf16.msra.mxu0 %v937
  %1345 = vmatprep.subr.bf16.mxu0 0
  %1346 = vmatpush1.bf16.msra.mxu0 %v936
  %1347 = vmatprep.subr.bf16.mxu0 0
  %1348 = vmatpush1.bf16.msra.mxu0 %v935
  %1349 = vmatprep.subr.bf16.mxu0 0
  %1350 = vmatpush2.bf16.msra.mxu0 0
  %1351 = vmatprep.subr.bf16.mxu0 0
  %1352 = vmatpush2.bf16.msra.mxu0 0
  %1353 = vmatprep.subr.bf16.mxu0 0
  %1354 = vmatpush2.bf16.msra.mxu0 0
  %1355 = vmatprep.subr.bf16.mxu0 0
  %1356 = vmatpush2.bf16.msra.mxu0 0
  %1357 = vmatprep.subr.bf16.mxu0 0
  %1358 = vmatpush2.bf16.msra.mxu0 0
  %1359 = vmatprep.subr.bf16.mxu0 0
  %1360 = vmatpush2.bf16.msra.mxu0 0
  %1361 = vmatprep.subr.bf16.mxu0 0
  %1362 = vmatpush2.bf16.msra.mxu0 0
  %1363 = vmatprep.subr.bf16.mxu0 0
  %1364 = vmatpush2.bf16.msra.mxu0 0
  %1365 = vmatprep.mubr.bf16.mxu0 0
  %1366 = vmatmul.mubr.bf16.gmra.mxu0 %v946
  %v1367 = vpop.f32.mrf.mxu0
  %v1368 = vadd.f32 0.0, %v1367
  %v1369 = vpop.f32.mrf.mxu0
  %v1370 = vpop.f32.mrf.mxu0
  %v1371 = vadd.f32 0.0, %v1370
  %v1372 = vpop.f32.mrf.mxu0
  %1373 = vmatprep.mubr.bf16.mxu0 0
  %1374 = vmatmul.mubr.bf16.gmra.mxu0 %v949
  %v1375 = vpop.f32.mrf.mxu0
  %v1376 = vadd.f32 0.0, %v1375
  %v1377 = vpop.f32.mrf.mxu0
  %v1378 = vpop.f32.mrf.mxu0
  %v1379 = vadd.f32 0.0, %v1378
  %v1380 = vpop.f32.mrf.mxu0
  %1381 = vmatprep.mubr.bf16.mxu0 0
  %1382 = vmatmul.mubr.bf16.gmra.mxu0 %v952
  %v1383 = vpop.f32.mrf.mxu0
  %v1384 = vadd.f32 0.0, %v1383
  %v1385 = vpop.f32.mrf.mxu0
  %v1386 = vpop.f32.mrf.mxu0
  %v1387 = vadd.f32 0.0, %v1386
  %v1388 = vpop.f32.mrf.mxu0
  %1389 = vmatprep.mubr.bf16.mxu0 0
  %1390 = vmatmul.mubr.bf16.gmra.mxu0 %v955
  %v1391 = vpop.f32.mrf.mxu0
  %v1392 = vadd.f32 0.0, %v1391
  %v1393 = vpop.f32.mrf.mxu0
  %v1394 = vpop.f32.mrf.mxu0
  %v1395 = vadd.f32 0.0, %v1394
  %v1396 = vpop.f32.mrf.mxu0
  %1397 = vmatprep.mubr.bf16.mxu0 0
  %1398 = vmatmul.mubr.bf16.gmra.mxu0 %v958
  %v1399 = vpop.f32.mrf.mxu0
  %v1400 = vadd.f32 0.0, %v1399
  %v1401 = vpop.f32.mrf.mxu0
  %v1402 = vpop.f32.mrf.mxu0
  %v1403 = vadd.f32 0.0, %v1402
  %v1404 = vpop.f32.mrf.mxu0
  %1405 = vmatprep.mubr.bf16.mxu0 0
  %1406 = vmatmul.mubr.bf16.gmra.mxu0 %v961
  %v1407 = vpop.f32.mrf.mxu0
  %v1408 = vadd.f32 0.0, %v1407
  %v1409 = vpop.f32.mrf.mxu0
  %v1410 = vpop.f32.mrf.mxu0
  %v1411 = vadd.f32 0.0, %v1410
  %v1412 = vpop.f32.mrf.mxu0
  %1413 = vmatprep.mubr.bf16.mxu0 0
  %1414 = vmatmul.mubr.bf16.gmra.mxu0 %v964
  %v1415 = vpop.f32.mrf.mxu0
  %v1416 = vadd.f32 0.0, %v1415
  %v1417 = vpop.f32.mrf.mxu0
  %v1418 = vpop.f32.mrf.mxu0
  %v1419 = vadd.f32 0.0, %v1418
  %v1420 = vpop.f32.mrf.mxu0
  %1421 = vmatprep.mubr.bf16.mxu0 0
  %1422 = vmatmul.mubr.bf16.gmra.mxu0 %v967
  %v1423 = vpop.f32.mrf.mxu0
  %v1424 = vadd.f32 0.0, %v1423
  %v1425 = vpop.f32.mrf.mxu0
  %v1426 = vpop.f32.mrf.mxu0
  %v1427 = vadd.f32 0.0, %v1426
  %v1428 = vpop.f32.mrf.mxu0
  %1429 = vmatprep.mubr.bf16.mxu0 0
  %1430 = vmatmul.mubr.bf16.gmra.mxu0 %v970
  %v1431 = vpop.f32.mrf.mxu0
  %v1432 = vadd.f32 0.0, %v1431
  %v1433 = vpop.f32.mrf.mxu0
  %v1434 = vpop.f32.mrf.mxu0
  %v1435 = vadd.f32 0.0, %v1434
  %v1436 = vpop.f32.mrf.mxu0
  %1437 = vmatprep.mubr.bf16.mxu0 0
  %1438 = vmatmul.mubr.bf16.gmra.mxu0 %v973
  %v1439 = vpop.f32.mrf.mxu0
  %v1440 = vadd.f32 0.0, %v1439
  %v1441 = vpop.f32.mrf.mxu0
  %v1442 = vpop.f32.mrf.mxu0
  %v1443 = vadd.f32 0.0, %v1442
  %v1444 = vpop.f32.mrf.mxu0
  %1445 = vmatprep.mubr.bf16.mxu0 0
  %1446 = vmatmul.mubr.bf16.gmra.mxu0 %v976
  %v1447 = vpop.f32.mrf.mxu0
  %v1448 = vadd.f32 0.0, %v1447
  %v1449 = vpop.f32.mrf.mxu0
  %v1450 = vpop.f32.mrf.mxu0
  %v1451 = vadd.f32 0.0, %v1450
  %v1452 = vpop.f32.mrf.mxu0
  %1453 = vmatprep.mubr.bf16.mxu0 0
  %1454 = vmatmul.mubr.bf16.gmra.mxu0 %v979
  %v1455 = vpop.f32.mrf.mxu0
  %v1456 = vadd.f32 0.0, %v1455
  %v1457 = vpop.f32.mrf.mxu0
  %v1458 = vpop.f32.mrf.mxu0
  %v1459 = vadd.f32 0.0, %v1458
  %v1460 = vpop.f32.mrf.mxu0
  %1461 = vmatprep.mubr.bf16.mxu0 0
  %1462 = vmatmul.mubr.bf16.gmra.mxu0 %v982
  %v1463 = vpop.f32.mrf.mxu0
  %v1464 = vadd.f32 0.0, %v1463
  %v1465 = vpop.f32.mrf.mxu0
  %v1466 = vpop.f32.mrf.mxu0
  %v1467 = vadd.f32 0.0, %v1466
  %v1468 = vpop.f32.mrf.mxu0
  %1469 = vmatprep.mubr.bf16.mxu0 0
  %1470 = vmatmul.mubr.bf16.gmra.mxu0 %v985
  %v1471 = vpop.f32.mrf.mxu0
  %v1472 = vadd.f32 0.0, %v1471
  %v1473 = vpop.f32.mrf.mxu0
  %v1474 = vpop.f32.mrf.mxu0
  %v1475 = vadd.f32 0.0, %v1474
  %v1476 = vpop.f32.mrf.mxu0
  %1477 = vmatprep.mubr.bf16.mxu0 0
  %1478 = vmatmul.mubr.bf16.gmra.mxu0 %v988
  %v1479 = vpop.f32.mrf.mxu0
  %v1480 = vadd.f32 0.0, %v1479
  %v1481 = vpop.f32.mrf.mxu0
  %v1482 = vpop.f32.mrf.mxu0
  %v1483 = vadd.f32 0.0, %v1482
  %v1484 = vpop.f32.mrf.mxu0
  %1485 = vmatprep.mubr.bf16.mxu0 0
  %1486 = vmatmul.mubr.bf16.gmra.mxu0 %v991
  %v1487 = vpop.f32.mrf.mxu0
  %v1488 = vadd.f32 0.0, %v1487
  %v1489 = vpop.f32.mrf.mxu0
  %v1490 = vpop.f32.mrf.mxu0
  %v1491 = vadd.f32 0.0, %v1490
  %v1492 = vpop.f32.mrf.mxu0
  %1493 = vmatprep.mubr.bf16.mxu0 0
  %1494 = vmatmul.mubr.bf16.gmra.mxu0 %v994
  %v1495 = vpop.f32.mrf.mxu0
  %v1496 = vadd.f32 0.0, %v1495
  %v1497 = vpop.f32.mrf.mxu0
  %v1498 = vpop.f32.mrf.mxu0
  %v1499 = vadd.f32 0.0, %v1498
  %v1500 = vpop.f32.mrf.mxu0
  %1501 = vmatprep.mubr.bf16.mxu0 0
  %1502 = vmatmul.mubr.bf16.gmra.mxu0 %v997
  %v1503 = vpop.f32.mrf.mxu0
  %v1504 = vadd.f32 0.0, %v1503
  %v1505 = vpop.f32.mrf.mxu0
  %v1506 = vpop.f32.mrf.mxu0
  %v1507 = vadd.f32 0.0, %v1506
  %v1508 = vpop.f32.mrf.mxu0
  %1509 = vmatprep.mubr.bf16.mxu0 0
  %1510 = vmatmul.mubr.bf16.gmra.mxu0 %v1000
  %v1511 = vpop.f32.mrf.mxu0
  %v1512 = vadd.f32 0.0, %v1511
  %v1513 = vpop.f32.mrf.mxu0
  %v1514 = vpop.f32.mrf.mxu0
  %v1515 = vadd.f32 0.0, %v1514
  %v1516 = vpop.f32.mrf.mxu0
  %1517 = vmatprep.mubr.bf16.mxu0 0
  %1518 = vmatmul.mubr.bf16.gmra.mxu0 %v1003
  %v1519 = vpop.f32.mrf.mxu0
  %v1520 = vadd.f32 0.0, %v1519
  %v1521 = vpop.f32.mrf.mxu0
  %v1522 = vpop.f32.mrf.mxu0
  %v1523 = vadd.f32 0.0, %v1522
  %v1524 = vpop.f32.mrf.mxu0
  %1525 = vmatprep.mubr.bf16.mxu0 0
  %1526 = vmatmul.mubr.bf16.gmra.mxu0 %v1006
  %v1527 = vpop.f32.mrf.mxu0
  %v1528 = vadd.f32 0.0, %v1527
  %v1529 = vpop.f32.mrf.mxu0
  %v1530 = vpop.f32.mrf.mxu0
  %v1531 = vadd.f32 0.0, %v1530
  %v1532 = vpop.f32.mrf.mxu0
  %1533 = vmatprep.mubr.bf16.mxu0 0
  %1534 = vmatmul.mubr.bf16.gmra.mxu0 %v1009
  %v1535 = vpop.f32.mrf.mxu0
  %v1536 = vadd.f32 0.0, %v1535
  %v1537 = vpop.f32.mrf.mxu0
  %v1538 = vpop.f32.mrf.mxu0
  %v1539 = vadd.f32 0.0, %v1538
  %v1540 = vpop.f32.mrf.mxu0
  %1541 = vmatprep.mubr.bf16.mxu0 0
  %1542 = vmatmul.mubr.bf16.gmra.mxu0 %v1012
  %v1543 = vpop.f32.mrf.mxu0
  %v1544 = vadd.f32 0.0, %v1543
  %v1545 = vpop.f32.mrf.mxu0
  %v1546 = vpop.f32.mrf.mxu0
  %v1547 = vadd.f32 0.0, %v1546
  %v1548 = vpop.f32.mrf.mxu0
  %1549 = vmatprep.mubr.bf16.mxu0 0
  %1550 = vmatmul.mubr.bf16.gmra.mxu0 %v1015
  %v1551 = vpop.f32.mrf.mxu0
  %v1552 = vadd.f32 0.0, %v1551
  %v1553 = vpop.f32.mrf.mxu0
  %v1554 = vpop.f32.mrf.mxu0
  %v1555 = vadd.f32 0.0, %v1554
  %v1556 = vpop.f32.mrf.mxu0
  %1557 = vmatprep.mubr.bf16.mxu0 0
  %1558 = vmatmul.mubr.bf16.gmra.mxu0 %v1018
  %v1559 = vpop.f32.mrf.mxu0
  %v1560 = vadd.f32 0.0, %v1559
  %v1561 = vpop.f32.mrf.mxu0
  %v1562 = vpop.f32.mrf.mxu0
  %v1563 = vadd.f32 0.0, %v1562
  %v1564 = vpop.f32.mrf.mxu0
  %1565 = vmatprep.mubr.bf16.mxu0 0
  %1566 = vmatmul.mubr.bf16.gmra.mxu0 %v1021
  %v1567 = vpop.f32.mrf.mxu0
  %v1568 = vadd.f32 0.0, %v1567
  %v1569 = vpop.f32.mrf.mxu0
  %v1570 = vpop.f32.mrf.mxu0
  %v1571 = vadd.f32 0.0, %v1570
  %v1572 = vpop.f32.mrf.mxu0
  %1573 = vmatprep.mubr.bf16.mxu0 0
  %1574 = vmatmul.mubr.bf16.gmra.mxu0 %v1024
  %v1575 = vpop.f32.mrf.mxu0
  %v1576 = vadd.f32 0.0, %v1575
  %v1577 = vpop.f32.mrf.mxu0
  %v1578 = vpop.f32.mrf.mxu0
  %v1579 = vadd.f32 0.0, %v1578
  %v1580 = vpop.f32.mrf.mxu0
  %1581 = vmatprep.mubr.bf16.mxu0 0
  %1582 = vmatmul.mubr.bf16.gmra.mxu0 %v1027
  %v1583 = vpop.f32.mrf.mxu0
  %v1584 = vadd.f32 0.0, %v1583
  %v1585 = vpop.f32.mrf.mxu0
  %v1586 = vpop.f32.mrf.mxu0
  %v1587 = vadd.f32 0.0, %v1586
  %v1588 = vpop.f32.mrf.mxu0
  %1589 = vmatprep.mubr.bf16.mxu0 0
  %1590 = vmatmul.mubr.bf16.gmra.mxu0 %v1030
  %v1591 = vpop.f32.mrf.mxu0
  %v1592 = vadd.f32 0.0, %v1591
  %v1593 = vpop.f32.mrf.mxu0
  %v1594 = vpop.f32.mrf.mxu0
  %v1595 = vadd.f32 0.0, %v1594
  %v1596 = vpop.f32.mrf.mxu0
  %1597 = vmatprep.mubr.bf16.mxu0 0
  %1598 = vmatmul.mubr.bf16.gmra.mxu0 %v1033
  %v1599 = vpop.f32.mrf.mxu0
  %v1600 = vadd.f32 0.0, %v1599
  %v1601 = vpop.f32.mrf.mxu0
  %v1602 = vpop.f32.mrf.mxu0
  %v1603 = vadd.f32 0.0, %v1602
  %v1604 = vpop.f32.mrf.mxu0
  %1605 = vmatprep.mubr.bf16.mxu0 0
  %1606 = vmatmul.mubr.bf16.gmra.mxu0 %v1036
  %v1607 = vpop.f32.mrf.mxu0
  %v1608 = vadd.f32 0.0, %v1607
  %v1609 = vpop.f32.mrf.mxu0
  %v1610 = vpop.f32.mrf.mxu0
  %v1611 = vadd.f32 0.0, %v1610
  %v1612 = vpop.f32.mrf.mxu0
  %1613 = vmatprep.mubr.bf16.mxu0 0
  %1614 = vmatmul.mubr.bf16.gmra.mxu0 %v1039
  %v1615 = vpop.f32.mrf.mxu0
  %v1616 = vadd.f32 0.0, %v1615
  %v1617 = vpop.f32.mrf.mxu0
  %v1618 = vpop.f32.mrf.mxu0
  %v1619 = vadd.f32 0.0, %v1618
  %v1620 = vpop.f32.mrf.mxu0
  %1621 = vmatprep.mubr.bf16.mxu0 0
  %1622 = vmatmul.mubr.bf16.gmra.mxu0 %v1042
  %v1623 = vpop.f32.mrf.mxu0
  %v1624 = vadd.f32 0.0, %v1623
  %v1625 = vpop.f32.mrf.mxu0
  %v1626 = vpop.f32.mrf.mxu0
  %v1627 = vadd.f32 0.0, %v1626
  %v1628 = vpop.f32.mrf.mxu0
  %1629 = vmatprep.mubr.bf16.mxu0 0
  %1630 = vmatmul.mubr.bf16.gmra.mxu0 %v1045
  %v1631 = vpop.f32.mrf.mxu0
  %v1632 = vadd.f32 0.0, %v1631
  %v1633 = vpop.f32.mrf.mxu0
  %v1634 = vpop.f32.mrf.mxu0
  %v1635 = vadd.f32 0.0, %v1634
  %v1636 = vpop.f32.mrf.mxu0
  %1637 = vmatprep.mubr.bf16.mxu0 0
  %1638 = vmatmul.mubr.bf16.gmra.mxu0 %v1048
  %v1639 = vpop.f32.mrf.mxu0
  %v1640 = vadd.f32 0.0, %v1639
  %v1641 = vpop.f32.mrf.mxu0
  %v1642 = vpop.f32.mrf.mxu0
  %v1643 = vadd.f32 0.0, %v1642
  %v1644 = vpop.f32.mrf.mxu0
  %1645 = vmatprep.mubr.bf16.mxu0 0
  %1646 = vmatmul.mubr.bf16.gmra.mxu0 %v1051
  %v1647 = vpop.f32.mrf.mxu0
  %v1648 = vadd.f32 0.0, %v1647
  %v1649 = vpop.f32.mrf.mxu0
  %v1650 = vpop.f32.mrf.mxu0
  %v1651 = vadd.f32 0.0, %v1650
  %v1652 = vpop.f32.mrf.mxu0
  %1653 = vmatprep.mubr.bf16.mxu0 0
  %1654 = vmatmul.mubr.bf16.gmra.mxu0 %v1054
  %v1655 = vpop.f32.mrf.mxu0
  %v1656 = vadd.f32 0.0, %v1655
  %v1657 = vpop.f32.mrf.mxu0
  %v1658 = vpop.f32.mrf.mxu0
  %v1659 = vadd.f32 0.0, %v1658
  %v1660 = vpop.f32.mrf.mxu0
  %1661 = vmatprep.mubr.bf16.mxu0 0
  %1662 = vmatmul.mubr.bf16.gmra.mxu0 %v1057
  %v1663 = vpop.f32.mrf.mxu0
  %v1664 = vadd.f32 0.0, %v1663
  %v1665 = vpop.f32.mrf.mxu0
  %v1666 = vpop.f32.mrf.mxu0
  %v1667 = vadd.f32 0.0, %v1666
  %v1668 = vpop.f32.mrf.mxu0
  %1669 = vmatprep.mubr.bf16.mxu0 0
  %1670 = vmatmul.mubr.bf16.gmra.mxu0 %v1060
  %v1671 = vpop.f32.mrf.mxu0
  %v1672 = vadd.f32 0.0, %v1671
  %v1673 = vpop.f32.mrf.mxu0
  %v1674 = vpop.f32.mrf.mxu0
  %v1675 = vadd.f32 0.0, %v1674
  %v1676 = vpop.f32.mrf.mxu0
  %1677 = vmatprep.mubr.bf16.mxu0 0
  %1678 = vmatmul.mubr.bf16.gmra.mxu0 %v1063
  %v1679 = vpop.f32.mrf.mxu0
  %v1680 = vadd.f32 0.0, %v1679
  %v1681 = vpop.f32.mrf.mxu0
  %v1682 = vpop.f32.mrf.mxu0
  %v1683 = vadd.f32 0.0, %v1682
  %v1684 = vpop.f32.mrf.mxu0
  %1685 = vmatprep.mubr.bf16.mxu0 0
  %1686 = vmatmul.mubr.bf16.gmra.mxu0 %v1066
  %v1687 = vpop.f32.mrf.mxu0
  %v1688 = vadd.f32 0.0, %v1687
  %v1689 = vpop.f32.mrf.mxu0
  %v1690 = vpop.f32.mrf.mxu0
  %v1691 = vadd.f32 0.0, %v1690
  %v1692 = vpop.f32.mrf.mxu0
  %1693 = vmatprep.mubr.bf16.mxu0 0
  %1694 = vmatmul.mubr.bf16.gmra.mxu0 %v1069
  %v1695 = vpop.f32.mrf.mxu0
  %v1696 = vadd.f32 0.0, %v1695
  %v1697 = vpop.f32.mrf.mxu0
  %v1698 = vpop.f32.mrf.mxu0
  %v1699 = vadd.f32 0.0, %v1698
  %v1700 = vpop.f32.mrf.mxu0
  %1701 = vmatprep.mubr.bf16.mxu0 0
  %1702 = vmatmul.mubr.bf16.gmra.mxu0 %v1072
  %v1703 = vpop.f32.mrf.mxu0
  %v1704 = vadd.f32 0.0, %v1703
  %v1705 = vpop.f32.mrf.mxu0
  %v1706 = vpop.f32.mrf.mxu0
  %v1707 = vadd.f32 0.0, %v1706
  %v1708 = vpop.f32.mrf.mxu0
  %1709 = vmatprep.mubr.bf16.mxu0 0
  %1710 = vmatmul.mubr.bf16.gmra.mxu0 %v1075
  %v1711 = vpop.f32.mrf.mxu0
  %v1712 = vadd.f32 0.0, %v1711
  %v1713 = vpop.f32.mrf.mxu0
  %v1714 = vpop.f32.mrf.mxu0
  %v1715 = vadd.f32 0.0, %v1714
  %v1716 = vpop.f32.mrf.mxu0
  %1717 = vmatprep.mubr.bf16.mxu0 0
  %1718 = vmatmul.mubr.bf16.gmra.mxu0 %v1078
  %v1719 = vpop.f32.mrf.mxu0
  %v1720 = vadd.f32 0.0, %v1719
  %v1721 = vpop.f32.mrf.mxu0
  %v1722 = vpop.f32.mrf.mxu0
  %v1723 = vadd.f32 0.0, %v1722
  %v1724 = vpop.f32.mrf.mxu0
  %1725 = vmatprep.mubr.bf16.mxu0 0
  %1726 = vmatmul.mubr.bf16.gmra.mxu0 %v1081
  %v1727 = vpop.f32.mrf.mxu0
  %v1728 = vadd.f32 0.0, %v1727
  %v1729 = vpop.f32.mrf.mxu0
  %v1730 = vpop.f32.mrf.mxu0
  %v1731 = vadd.f32 0.0, %v1730
  %v1732 = vpop.f32.mrf.mxu0
  %1733 = vmatprep.mubr.bf16.mxu0 0
  %1734 = vmatmul.mubr.bf16.gmra.mxu0 %v1084
  %v1735 = vpop.f32.mrf.mxu0
  %v1736 = vadd.f32 0.0, %v1735
  %v1737 = vpop.f32.mrf.mxu0
  %v1738 = vpop.f32.mrf.mxu0
  %v1739 = vadd.f32 0.0, %v1738
  %v1740 = vpop.f32.mrf.mxu0
  %1741 = vmatprep.mubr.bf16.mxu0 0
  %1742 = vmatmul.mubr.bf16.gmra.mxu0 %v1087
  %v1743 = vpop.f32.mrf.mxu0
  %v1744 = vadd.f32 0.0, %v1743
  %v1745 = vpop.f32.mrf.mxu0
  %v1746 = vpop.f32.mrf.mxu0
  %v1747 = vadd.f32 0.0, %v1746
  %v1748 = vpop.f32.mrf.mxu0
  %1749 = vmatprep.mubr.bf16.mxu0 0
  %1750 = vmatmul.mubr.bf16.gmra.mxu0 %v1090
  %v1751 = vpop.f32.mrf.mxu0
  %v1752 = vadd.f32 0.0, %v1751
  %v1753 = vpop.f32.mrf.mxu0
  %v1754 = vpop.f32.mrf.mxu0
  %v1755 = vadd.f32 0.0, %v1754
  %v1756 = vpop.f32.mrf.mxu0
  %1757 = vmatprep.mubr.bf16.mxu0 0
  %1758 = vmatmul.mubr.bf16.gmra.mxu0 %v1093
  %v1759 = vpop.f32.mrf.mxu0
  %v1760 = vadd.f32 0.0, %v1759
  %v1761 = vpop.f32.mrf.mxu0
  %v1762 = vpop.f32.mrf.mxu0
  %v1763 = vadd.f32 0.0, %v1762
  %v1764 = vpop.f32.mrf.mxu0
  %1765 = vmatprep.mubr.bf16.mxu0 0
  %1766 = vmatmul.mubr.bf16.gmra.mxu0 %v1096
  %v1767 = vpop.f32.mrf.mxu0
  %v1768 = vadd.f32 0.0, %v1767
  %v1769 = vpop.f32.mrf.mxu0
  %v1770 = vpop.f32.mrf.mxu0
  %v1771 = vadd.f32 0.0, %v1770
  %v1772 = vpop.f32.mrf.mxu0
  %1773 = vmatprep.mubr.bf16.mxu0 0
  %1774 = vmatmul.mubr.bf16.gmra.mxu0 %v1099
  %v1775 = vpop.f32.mrf.mxu0
  %v1776 = vadd.f32 0.0, %v1775
  %v1777 = vpop.f32.mrf.mxu0
  %v1778 = vpop.f32.mrf.mxu0
  %v1779 = vadd.f32 0.0, %v1778
  %v1780 = vpop.f32.mrf.mxu0
  %1781 = vmatprep.mubr.bf16.mxu0 0
  %1782 = vmatmul.mubr.bf16.gmra.mxu0 %v1102
  %v1783 = vpop.f32.mrf.mxu0
  %v1784 = vadd.f32 0.0, %v1783
  %v1785 = vpop.f32.mrf.mxu0
  %v1786 = vpop.f32.mrf.mxu0
  %v1787 = vadd.f32 0.0, %v1786
  %v1788 = vpop.f32.mrf.mxu0
  %1789 = vmatprep.mubr.bf16.mxu0 0
  %1790 = vmatmul.mubr.bf16.gmra.mxu0 %v1105
  %v1791 = vpop.f32.mrf.mxu0
  %v1792 = vadd.f32 0.0, %v1791
  %v1793 = vpop.f32.mrf.mxu0
  %v1794 = vpop.f32.mrf.mxu0
  %v1795 = vadd.f32 0.0, %v1794
  %v1796 = vpop.f32.mrf.mxu0
  %1797 = vmatprep.mubr.bf16.mxu0 0
  %1798 = vmatmul.mubr.bf16.gmra.mxu0 %v1108
  %v1799 = vpop.f32.mrf.mxu0
  %v1800 = vadd.f32 0.0, %v1799
  %v1801 = vpop.f32.mrf.mxu0
  %v1802 = vpop.f32.mrf.mxu0
  %v1803 = vadd.f32 0.0, %v1802
  %v1804 = vpop.f32.mrf.mxu0
  %1805 = vmatprep.mubr.bf16.mxu0 0
  %1806 = vmatmul.mubr.bf16.gmra.mxu0 %v1111
  %v1807 = vpop.f32.mrf.mxu0
  %v1808 = vadd.f32 0.0, %v1807
  %v1809 = vpop.f32.mrf.mxu0
  %v1810 = vpop.f32.mrf.mxu0
  %v1811 = vadd.f32 0.0, %v1810
  %v1812 = vpop.f32.mrf.mxu0
  %1813 = vmatprep.mubr.bf16.mxu0 0
  %1814 = vmatmul.mubr.bf16.gmra.mxu0 %v1114
  %v1815 = vpop.f32.mrf.mxu0
  %v1816 = vadd.f32 0.0, %v1815
  %v1817 = vpop.f32.mrf.mxu0
  %v1818 = vpop.f32.mrf.mxu0
  %v1819 = vadd.f32 0.0, %v1818
  %v1820 = vpop.f32.mrf.mxu0
  %1821 = vmatprep.mubr.bf16.mxu0 0
  %1822 = vmatmul.mubr.bf16.gmra.mxu0 %v1117
  %v1823 = vpop.f32.mrf.mxu0
  %v1824 = vadd.f32 0.0, %v1823
  %v1825 = vpop.f32.mrf.mxu0
  %v1826 = vpop.f32.mrf.mxu0
  %v1827 = vadd.f32 0.0, %v1826
  %v1828 = vpop.f32.mrf.mxu0
  %1829 = vmatprep.mubr.bf16.mxu0 0
  %1830 = vmatmul.mubr.bf16.gmra.mxu0 %v1120
  %v1831 = vpop.f32.mrf.mxu0
  %v1832 = vadd.f32 0.0, %v1831
  %v1833 = vpop.f32.mrf.mxu0
  %v1834 = vpop.f32.mrf.mxu0
  %v1835 = vadd.f32 0.0, %v1834
  %v1836 = vpop.f32.mrf.mxu0
  %1837 = vmatprep.mubr.bf16.mxu0 0
  %1838 = vmatmul.mubr.bf16.gmra.mxu0 %v1123
  %v1839 = vpop.f32.mrf.mxu0
  %v1840 = vadd.f32 0.0, %v1839
  %v1841 = vpop.f32.mrf.mxu0
  %v1842 = vpop.f32.mrf.mxu0
  %v1843 = vadd.f32 0.0, %v1842
  %v1844 = vpop.f32.mrf.mxu0
  %1845 = vmatprep.mubr.bf16.mxu0 0
  %1846 = vmatmul.mubr.bf16.gmra.mxu0 %v1126
  %v1847 = vpop.f32.mrf.mxu0
  %v1848 = vadd.f32 0.0, %v1847
  %v1849 = vpop.f32.mrf.mxu0
  %v1850 = vpop.f32.mrf.mxu0
  %v1851 = vadd.f32 0.0, %v1850
  %v1852 = vpop.f32.mrf.mxu0
  %1853 = vmatprep.mubr.bf16.mxu0 0
  %1854 = vmatmul.mubr.bf16.gmra.mxu0 %v1129
  %v1855 = vpop.f32.mrf.mxu0
  %v1856 = vadd.f32 0.0, %v1855
  %v1857 = vpop.f32.mrf.mxu0
  %v1858 = vpop.f32.mrf.mxu0
  %v1859 = vadd.f32 0.0, %v1858
  %v1860 = vpop.f32.mrf.mxu0
  %1861 = vmatprep.mubr.bf16.mxu0 0
  %1862 = vmatmul.mubr.bf16.gmra.mxu0 %v1132
  %v1863 = vpop.f32.mrf.mxu0
  %v1864 = vadd.f32 0.0, %v1863
  %v1865 = vpop.f32.mrf.mxu0
  %v1866 = vpop.f32.mrf.mxu0
  %v1867 = vadd.f32 0.0, %v1866
  %v1868 = vpop.f32.mrf.mxu0
  %1869 = vmatprep.mubr.bf16.mxu0 0
  %1870 = vmatmul.mubr.bf16.gmra.mxu0 %v1135
  %v1871 = vpop.f32.mrf.mxu0
  %v1872 = vadd.f32 0.0, %v1871
  %v1873 = vpop.f32.mrf.mxu0
  %v1874 = vpop.f32.mrf.mxu0
  %v1875 = vadd.f32 0.0, %v1874
  %v1876 = vpop.f32.mrf.mxu0
  %1877 = vmatprep.mubr.bf16.mxu0 0
  %1878 = vmatmul.mubr.bf16.gmra.mxu0 %v1138
  %v1879 = vpop.f32.mrf.mxu0
  %v1880 = vadd.f32 0.0, %v1879
  %v1881 = vpop.f32.mrf.mxu0
  %v1882 = vpop.f32.mrf.mxu0
  %v1883 = vadd.f32 0.0, %v1882
  %v1884 = vpop.f32.mrf.mxu0
  %1885 = vmatprep.mubr.bf16.mxu0 0
  %1886 = vmatmul.mubr.bf16.gmra.mxu0 %v1141
  %v1887 = vpop.f32.mrf.mxu0
  %v1888 = vadd.f32 0.0, %v1887
  %v1889 = vpop.f32.mrf.mxu0
  %v1890 = vpop.f32.mrf.mxu0
  %v1891 = vadd.f32 0.0, %v1890
  %v1892 = vpop.f32.mrf.mxu0
  %1893 = vmatprep.mubr.bf16.mxu0 0
  %1894 = vmatmul.mubr.bf16.gmra.mxu0 %v1144
  %v1895 = vpop.f32.mrf.mxu0
  %v1896 = vadd.f32 0.0, %v1895
  %v1897 = vpop.f32.mrf.mxu0
  %v1898 = vpop.f32.mrf.mxu0
  %v1899 = vadd.f32 0.0, %v1898
  %v1900 = vpop.f32.mrf.mxu0
  %1901 = vmatprep.mubr.bf16.mxu0 0
  %1902 = vmatmul.mubr.bf16.gmra.mxu0 %v1147
  %v1903 = vpop.f32.mrf.mxu0
  %v1904 = vadd.f32 0.0, %v1903
  %v1905 = vpop.f32.mrf.mxu0
  %v1906 = vpop.f32.mrf.mxu0
  %v1907 = vadd.f32 0.0, %v1906
  %v1908 = vpop.f32.mrf.mxu0
  %1909 = vmatprep.mubr.bf16.mxu0 0
  %1910 = vmatmul.mubr.bf16.gmra.mxu0 %v1150
  %v1911 = vpop.f32.mrf.mxu0
  %v1912 = vadd.f32 0.0, %v1911
  %v1913 = vpop.f32.mrf.mxu0
  %v1914 = vpop.f32.mrf.mxu0
  %v1915 = vadd.f32 0.0, %v1914
  %v1916 = vpop.f32.mrf.mxu0
  %1917 = vmatprep.mubr.bf16.mxu0 0
  %1918 = vmatmul.mubr.bf16.gmra.mxu0 %v1153
  %v1919 = vpop.f32.mrf.mxu0
  %v1920 = vadd.f32 0.0, %v1919
  %v1921 = vpop.f32.mrf.mxu0
  %v1922 = vpop.f32.mrf.mxu0
  %v1923 = vadd.f32 0.0, %v1922
  %v1924 = vpop.f32.mrf.mxu0
  %1925 = vmatprep.mubr.bf16.mxu0 0
  %1926 = vmatmul.mubr.bf16.gmra.mxu0 %v1156
  %v1927 = vpop.f32.mrf.mxu0
  %v1928 = vadd.f32 0.0, %v1927
  %v1929 = vpop.f32.mrf.mxu0
  %v1930 = vpop.f32.mrf.mxu0
  %v1931 = vadd.f32 0.0, %v1930
  %v1932 = vpop.f32.mrf.mxu0
  %1933 = vmatprep.mubr.bf16.mxu0 0
  %1934 = vmatmul.mubr.bf16.gmra.mxu0 %v1159
  %v1935 = vpop.f32.mrf.mxu0
  %v1936 = vadd.f32 0.0, %v1935
  %v1937 = vpop.f32.mrf.mxu0
  %v1938 = vpop.f32.mrf.mxu0
  %v1939 = vadd.f32 0.0, %v1938
  %v1940 = vpop.f32.mrf.mxu0
  %1941 = vmatprep.mubr.bf16.mxu0 0
  %1942 = vmatmul.mubr.bf16.gmra.mxu0 %v1162
  %v1943 = vpop.f32.mrf.mxu0
  %v1944 = vadd.f32 0.0, %v1943
  %v1945 = vpop.f32.mrf.mxu0
  %v1946 = vpop.f32.mrf.mxu0
  %v1947 = vadd.f32 0.0, %v1946
  %v1948 = vpop.f32.mrf.mxu0
  %1949 = vmatprep.mubr.bf16.mxu0 0
  %1950 = vmatmul.mubr.bf16.gmra.mxu0 %v1165
  %v1951 = vpop.f32.mrf.mxu0
  %v1952 = vadd.f32 0.0, %v1951
  %v1953 = vpop.f32.mrf.mxu0
  %v1954 = vpop.f32.mrf.mxu0
  %v1955 = vadd.f32 0.0, %v1954
  %v1956 = vpop.f32.mrf.mxu0
  %1957 = vmatprep.mubr.bf16.mxu0 0
  %1958 = vmatmul.mubr.bf16.gmra.mxu0 %v1168
  %v1959 = vpop.f32.mrf.mxu0
  %v1960 = vadd.f32 0.0, %v1959
  %v1961 = vpop.f32.mrf.mxu0
  %v1962 = vpop.f32.mrf.mxu0
  %v1963 = vadd.f32 0.0, %v1962
  %v1964 = vpop.f32.mrf.mxu0
  %1965 = vmatprep.mubr.bf16.mxu0 0
  %1966 = vmatmul.mubr.bf16.gmra.mxu0 %v1171
  %v1967 = vpop.f32.mrf.mxu0
  %v1968 = vadd.f32 0.0, %v1967
  %v1969 = vpop.f32.mrf.mxu0
  %v1970 = vpop.f32.mrf.mxu0
  %v1971 = vadd.f32 0.0, %v1970
  %v1972 = vpop.f32.mrf.mxu0
  %1973 = vmatprep.mubr.bf16.mxu0 0
  %1974 = vmatmul.mubr.bf16.gmra.mxu0 %v1174
  %v1975 = vpop.f32.mrf.mxu0
  %v1976 = vadd.f32 0.0, %v1975
  %v1977 = vpop.f32.mrf.mxu0
  %v1978 = vpop.f32.mrf.mxu0
  %v1979 = vadd.f32 0.0, %v1978
  %v1980 = vpop.f32.mrf.mxu0
  %1981 = vmatprep.mubr.bf16.mxu0 0
  %1982 = vmatmul.mubr.bf16.gmra.mxu0 %v1177
  %v1983 = vpop.f32.mrf.mxu0
  %v1984 = vadd.f32 0.0, %v1983
  %v1985 = vpop.f32.mrf.mxu0
  %v1986 = vpop.f32.mrf.mxu0
  %v1987 = vadd.f32 0.0, %v1986
  %v1988 = vpop.f32.mrf.mxu0
  %1989 = vmatprep.mubr.bf16.mxu0 0
  %1990 = vmatmul.mubr.bf16.gmra.mxu0 %v1180
  %v1991 = vpop.f32.mrf.mxu0
  %v1992 = vadd.f32 0.0, %v1991
  %v1993 = vpop.f32.mrf.mxu0
  %v1994 = vpop.f32.mrf.mxu0
  %v1995 = vadd.f32 0.0, %v1994
  %v1996 = vpop.f32.mrf.mxu0
  %1997 = vmatprep.mubr.bf16.mxu0 0
  %1998 = vmatmul.mubr.bf16.gmra.mxu0 %v1183
  %v1999 = vpop.f32.mrf.mxu0
  %v2000 = vadd.f32 0.0, %v1999
  %v2001 = vpop.f32.mrf.mxu0
  %v2002 = vpop.f32.mrf.mxu0
  %v2003 = vadd.f32 0.0, %v2002
  %v2004 = vpop.f32.mrf.mxu0
  %2005 = vmatprep.mubr.bf16.mxu0 0
  %2006 = vmatmul.mubr.bf16.gmra.mxu0 %v1186
  %v2007 = vpop.f32.mrf.mxu0
  %v2008 = vadd.f32 0.0, %v2007
  %v2009 = vpop.f32.mrf.mxu0
  %v2010 = vpop.f32.mrf.mxu0
  %v2011 = vadd.f32 0.0, %v2010
  %v2012 = vpop.f32.mrf.mxu0
  %2013 = vmatprep.mubr.bf16.mxu0 0
  %2014 = vmatmul.mubr.bf16.gmra.mxu0 %v1189
  %v2015 = vpop.f32.mrf.mxu0
  %v2016 = vadd.f32 0.0, %v2015
  %v2017 = vpop.f32.mrf.mxu0
  %v2018 = vpop.f32.mrf.mxu0
  %v2019 = vadd.f32 0.0, %v2018
  %v2020 = vpop.f32.mrf.mxu0
  %2021 = vmatprep.mubr.bf16.mxu0 0
  %2022 = vmatmul.mubr.bf16.gmra.mxu0 %v1192
  %v2023 = vpop.f32.mrf.mxu0
  %v2024 = vadd.f32 0.0, %v2023
  %v2025 = vpop.f32.mrf.mxu0
  %v2026 = vpop.f32.mrf.mxu0
  %v2027 = vadd.f32 0.0, %v2026
  %v2028 = vpop.f32.mrf.mxu0
  %2029 = vmatprep.mubr.bf16.mxu0 0
  %2030 = vmatmul.mubr.bf16.gmra.mxu0 %v1195
  %v2031 = vpop.f32.mrf.mxu0
  %v2032 = vadd.f32 0.0, %v2031
  %v2033 = vpop.f32.mrf.mxu0
  %v2034 = vpop.f32.mrf.mxu0
  %v2035 = vadd.f32 0.0, %v2034
  %v2036 = vpop.f32.mrf.mxu0
  %2037 = vmatprep.mubr.bf16.mxu0 0
  %2038 = vmatmul.mubr.bf16.gmra.mxu0 %v1198
  %v2039 = vpop.f32.mrf.mxu0
  %v2040 = vadd.f32 0.0, %v2039
  %v2041 = vpop.f32.mrf.mxu0
  %v2042 = vpop.f32.mrf.mxu0
  %v2043 = vadd.f32 0.0, %v2042
  %v2044 = vpop.f32.mrf.mxu0
  %2045 = vmatprep.mubr.bf16.mxu0 0
  %2046 = vmatmul.mubr.bf16.gmra.mxu0 %v1201
  %v2047 = vpop.f32.mrf.mxu0
  %v2048 = vadd.f32 0.0, %v2047
  %v2049 = vpop.f32.mrf.mxu0
  %v2050 = vpop.f32.mrf.mxu0
  %v2051 = vadd.f32 0.0, %v2050
  %v2052 = vpop.f32.mrf.mxu0
  %2053 = vmatprep.mubr.bf16.mxu0 0
  %2054 = vmatmul.mubr.bf16.gmra.mxu0 %v1204
  %v2055 = vpop.f32.mrf.mxu0
  %v2056 = vadd.f32 0.0, %v2055
  %v2057 = vpop.f32.mrf.mxu0
  %v2058 = vpop.f32.mrf.mxu0
  %v2059 = vadd.f32 0.0, %v2058
  %v2060 = vpop.f32.mrf.mxu0
  %2061 = vmatprep.mubr.bf16.mxu0 0
  %2062 = vmatmul.mubr.bf16.gmra.mxu0 %v1207
  %v2063 = vpop.f32.mrf.mxu0
  %v2064 = vadd.f32 0.0, %v2063
  %v2065 = vpop.f32.mrf.mxu0
  %v2066 = vpop.f32.mrf.mxu0
  %v2067 = vadd.f32 0.0, %v2066
  %v2068 = vpop.f32.mrf.mxu0
  %2069 = vmatprep.mubr.bf16.mxu0 0
  %2070 = vmatmul.mubr.bf16.gmra.mxu0 %v1210
  %v2071 = vpop.f32.mrf.mxu0
  %v2072 = vadd.f32 0.0, %v2071
  %v2073 = vpop.f32.mrf.mxu0
  %v2074 = vpop.f32.mrf.mxu0
  %v2075 = vadd.f32 0.0, %v2074
  %v2076 = vpop.f32.mrf.mxu0
  %2077 = vmatprep.mubr.bf16.mxu0 0
  %2078 = vmatmul.mubr.bf16.gmra.mxu0 %v1213
  %v2079 = vpop.f32.mrf.mxu0
  %v2080 = vadd.f32 0.0, %v2079
  %v2081 = vpop.f32.mrf.mxu0
  %v2082 = vpop.f32.mrf.mxu0
  %v2083 = vadd.f32 0.0, %v2082
  %v2084 = vpop.f32.mrf.mxu0
  %2085 = vmatprep.mubr.bf16.mxu0 0
  %2086 = vmatmul.mubr.bf16.gmra.mxu0 %v1216
  %v2087 = vpop.f32.mrf.mxu0
  %v2088 = vadd.f32 0.0, %v2087
  %v2089 = vpop.f32.mrf.mxu0
  %v2090 = vpop.f32.mrf.mxu0
  %v2091 = vadd.f32 0.0, %v2090
  %v2092 = vpop.f32.mrf.mxu0
  %2093 = vmatprep.mubr.bf16.mxu0 0
  %2094 = vmatmul.mubr.bf16.gmra.mxu0 %v1219
  %v2095 = vpop.f32.mrf.mxu0
  %v2096 = vadd.f32 0.0, %v2095
  %v2097 = vpop.f32.mrf.mxu0
  %v2098 = vpop.f32.mrf.mxu0
  %v2099 = vadd.f32 0.0, %v2098
  %v2100 = vpop.f32.mrf.mxu0
  %2101 = vmatprep.mubr.bf16.mxu0 0
  %2102 = vmatmul.mubr.bf16.gmra.mxu0 %v1222
  %v2103 = vpop.f32.mrf.mxu0
  %v2104 = vadd.f32 0.0, %v2103
  %v2105 = vpop.f32.mrf.mxu0
  %v2106 = vpop.f32.mrf.mxu0
  %v2107 = vadd.f32 0.0, %v2106
  %v2108 = vpop.f32.mrf.mxu0
  %2109 = vmatprep.mubr.bf16.mxu0 0
  %2110 = vmatmul.mubr.bf16.gmra.mxu0 %v1225
  %v2111 = vpop.f32.mrf.mxu0
  %v2112 = vadd.f32 0.0, %v2111
  %v2113 = vpop.f32.mrf.mxu0
  %v2114 = vpop.f32.mrf.mxu0
  %v2115 = vadd.f32 0.0, %v2114
  %v2116 = vpop.f32.mrf.mxu0
  %2117 = vmatprep.mubr.bf16.mxu0 0
  %2118 = vmatmul.mubr.bf16.gmra.mxu0 %v1228
  %v2119 = vpop.f32.mrf.mxu0
  %v2120 = vadd.f32 0.0, %v2119
  %v2121 = vpop.f32.mrf.mxu0
  %v2122 = vpop.f32.mrf.mxu0
  %v2123 = vadd.f32 0.0, %v2122
  %v2124 = vpop.f32.mrf.mxu0
  %2125 = vmatprep.mubr.bf16.mxu0 0
  %2126 = vmatmul.mubr.bf16.gmra.mxu0 %v1231
  %v2127 = vpop.f32.mrf.mxu0
  %v2128 = vadd.f32 0.0, %v2127
  %v2129 = vpop.f32.mrf.mxu0
  %v2130 = vpop.f32.mrf.mxu0
  %v2131 = vadd.f32 0.0, %v2130
  %v2132 = vpop.f32.mrf.mxu0
  %2133 = vmatprep.mubr.bf16.mxu0 0
  %2134 = vmatmul.mubr.bf16.gmra.mxu0 %v1234
  %v2135 = vpop.f32.mrf.mxu0
  %v2136 = vadd.f32 0.0, %v2135
  %v2137 = vpop.f32.mrf.mxu0
  %v2138 = vpop.f32.mrf.mxu0
  %v2139 = vadd.f32 0.0, %v2138
  %v2140 = vpop.f32.mrf.mxu0
  %2141 = vmatprep.mubr.bf16.mxu0 0
  %2142 = vmatmul.mubr.bf16.gmra.mxu0 %v1237
  %v2143 = vpop.f32.mrf.mxu0
  %v2144 = vadd.f32 0.0, %v2143
  %v2145 = vpop.f32.mrf.mxu0
  %v2146 = vpop.f32.mrf.mxu0
  %v2147 = vadd.f32 0.0, %v2146
  %v2148 = vpop.f32.mrf.mxu0
  %2149 = vmatprep.mubr.bf16.mxu0 0
  %2150 = vmatmul.mubr.bf16.gmra.mxu0 %v1240
  %v2151 = vpop.f32.mrf.mxu0
  %v2152 = vadd.f32 0.0, %v2151
  %v2153 = vpop.f32.mrf.mxu0
  %v2154 = vpop.f32.mrf.mxu0
  %v2155 = vadd.f32 0.0, %v2154
  %v2156 = vpop.f32.mrf.mxu0
  %2157 = vmatprep.mubr.bf16.mxu0 0
  %2158 = vmatmul.mubr.bf16.gmra.mxu0 %v1243
  %v2159 = vpop.f32.mrf.mxu0
  %v2160 = vadd.f32 0.0, %v2159
  %v2161 = vpop.f32.mrf.mxu0
  %v2162 = vpop.f32.mrf.mxu0
  %v2163 = vadd.f32 0.0, %v2162
  %v2164 = vpop.f32.mrf.mxu0
  %2165 = vmatprep.mubr.bf16.mxu0 0
  %2166 = vmatmul.mubr.bf16.gmra.mxu0 %v1246
  %v2167 = vpop.f32.mrf.mxu0
  %v2168 = vadd.f32 0.0, %v2167
  %v2169 = vpop.f32.mrf.mxu0
  %v2170 = vpop.f32.mrf.mxu0
  %v2171 = vadd.f32 0.0, %v2170
  %v2172 = vpop.f32.mrf.mxu0
  %2173 = vmatprep.mubr.bf16.mxu0 0
  %2174 = vmatmul.mubr.bf16.gmra.mxu0 %v1249
  %v2175 = vpop.f32.mrf.mxu0
  %v2176 = vadd.f32 0.0, %v2175
  %v2177 = vpop.f32.mrf.mxu0
  %v2178 = vpop.f32.mrf.mxu0
  %v2179 = vadd.f32 0.0, %v2178
  %v2180 = vpop.f32.mrf.mxu0
  %2181 = vmatprep.mubr.bf16.mxu0 0
  %2182 = vmatmul.mubr.bf16.gmra.mxu0 %v1252
  %v2183 = vpop.f32.mrf.mxu0
  %v2184 = vadd.f32 0.0, %v2183
  %v2185 = vpop.f32.mrf.mxu0
  %v2186 = vpop.f32.mrf.mxu0
  %v2187 = vadd.f32 0.0, %v2186
  %v2188 = vpop.f32.mrf.mxu0
  %2189 = vmatprep.mubr.bf16.mxu0 0
  %2190 = vmatmul.mubr.bf16.gmra.mxu0 %v1255
  %v2191 = vpop.f32.mrf.mxu0
  %v2192 = vadd.f32 0.0, %v2191
  %v2193 = vpop.f32.mrf.mxu0
  %v2194 = vpop.f32.mrf.mxu0
  %v2195 = vadd.f32 0.0, %v2194
  %v2196 = vpop.f32.mrf.mxu0
  %2197 = vmatprep.mubr.bf16.mxu0 0
  %2198 = vmatmul.mubr.bf16.gmra.mxu0 %v1258
  %v2199 = vpop.f32.mrf.mxu0
  %v2200 = vadd.f32 0.0, %v2199
  %v2201 = vpop.f32.mrf.mxu0
  %v2202 = vpop.f32.mrf.mxu0
  %v2203 = vadd.f32 0.0, %v2202
  %v2204 = vpop.f32.mrf.mxu0
  %2205 = vmatprep.mubr.bf16.mxu0 0
  %2206 = vmatmul.mubr.bf16.gmra.mxu0 %v1261
  %v2207 = vpop.f32.mrf.mxu0
  %v2208 = vadd.f32 0.0, %v2207
  %v2209 = vpop.f32.mrf.mxu0
  %v2210 = vpop.f32.mrf.mxu0
  %v2211 = vadd.f32 0.0, %v2210
  %v2212 = vpop.f32.mrf.mxu0
  %2213 = vmatprep.mubr.bf16.mxu0 0
  %2214 = vmatmul.mubr.bf16.gmra.mxu0 %v1264
  %v2215 = vpop.f32.mrf.mxu0
  %v2216 = vadd.f32 0.0, %v2215
  %v2217 = vpop.f32.mrf.mxu0
  %v2218 = vpop.f32.mrf.mxu0
  %v2219 = vadd.f32 0.0, %v2218
  %v2220 = vpop.f32.mrf.mxu0
  %2221 = vmatprep.mubr.bf16.mxu0 0
  %2222 = vmatmul.mubr.bf16.gmra.mxu0 %v1267
  %v2223 = vpop.f32.mrf.mxu0
  %v2224 = vadd.f32 0.0, %v2223
  %v2225 = vpop.f32.mrf.mxu0
  %v2226 = vpop.f32.mrf.mxu0
  %v2227 = vadd.f32 0.0, %v2226
  %v2228 = vpop.f32.mrf.mxu0
  %2229 = vmatprep.mubr.bf16.mxu0 0
  %2230 = vmatmul.mubr.bf16.gmra.mxu0 %v1270
  %v2231 = vpop.f32.mrf.mxu0
  %v2232 = vadd.f32 0.0, %v2231
  %v2233 = vpop.f32.mrf.mxu0
  %v2234 = vpop.f32.mrf.mxu0
  %v2235 = vadd.f32 0.0, %v2234
  %v2236 = vpop.f32.mrf.mxu0
  %2237 = vmatprep.mubr.bf16.mxu0 0
  %2238 = vmatmul.mubr.bf16.gmra.mxu0 %v1273
  %v2239 = vpop.f32.mrf.mxu0
  %v2240 = vadd.f32 0.0, %v2239
  %v2241 = vpop.f32.mrf.mxu0
  %v2242 = vpop.f32.mrf.mxu0
  %v2243 = vadd.f32 0.0, %v2242
  %v2244 = vpop.f32.mrf.mxu0
  %2245 = vmatprep.mubr.bf16.mxu0 0
  %2246 = vmatmul.mubr.bf16.gmra.mxu0 %v1276
  %v2247 = vpop.f32.mrf.mxu0
  %v2248 = vadd.f32 0.0, %v2247
  %v2249 = vpop.f32.mrf.mxu0
  %v2250 = vpop.f32.mrf.mxu0
  %v2251 = vadd.f32 0.0, %v2250
  %v2252 = vpop.f32.mrf.mxu0
  %2253 = vmatprep.mubr.bf16.mxu0 0
  %2254 = vmatmul.mubr.bf16.gmra.mxu0 %v1279
  %v2255 = vpop.f32.mrf.mxu0
  %v2256 = vadd.f32 0.0, %v2255
  %v2257 = vpop.f32.mrf.mxu0
  %v2258 = vpop.f32.mrf.mxu0
  %v2259 = vadd.f32 0.0, %v2258
  %v2260 = vpop.f32.mrf.mxu0
  %2261 = vmatprep.mubr.bf16.mxu0 0
  %2262 = vmatmul.mubr.bf16.gmra.mxu0 %v1282
  %v2263 = vpop.f32.mrf.mxu0
  %v2264 = vadd.f32 0.0, %v2263
  %v2265 = vpop.f32.mrf.mxu0
  %v2266 = vpop.f32.mrf.mxu0
  %v2267 = vadd.f32 0.0, %v2266
  %v2268 = vpop.f32.mrf.mxu0
  %2269 = vmatprep.mubr.bf16.mxu0 0
  %2270 = vmatmul.mubr.bf16.gmra.mxu0 %v1285
  %v2271 = vpop.f32.mrf.mxu0
  %v2272 = vadd.f32 0.0, %v2271
  %v2273 = vpop.f32.mrf.mxu0
  %v2274 = vpop.f32.mrf.mxu0
  %v2275 = vadd.f32 0.0, %v2274
  %v2276 = vpop.f32.mrf.mxu0
  %2277 = vmatprep.mubr.bf16.mxu0 0
  %2278 = vmatmul.mubr.bf16.gmra.mxu0 %v1288
  %v2279 = vpop.f32.mrf.mxu0
  %v2280 = vadd.f32 0.0, %v2279
  %v2281 = vpop.f32.mrf.mxu0
  %v2282 = vpop.f32.mrf.mxu0
  %v2283 = vadd.f32 0.0, %v2282
  %v2284 = vpop.f32.mrf.mxu0
  %2285 = vmatprep.mubr.bf16.mxu0 0
  %2286 = vmatmul.mubr.bf16.gmra.mxu0 %v1291
  %v2287 = vpop.f32.mrf.mxu0
  %v2288 = vadd.f32 0.0, %v2287
  %v2289 = vpop.f32.mrf.mxu0
  %v2290 = vpop.f32.mrf.mxu0
  %v2291 = vadd.f32 0.0, %v2290
  %v2292 = vpop.f32.mrf.mxu0
  %2293 = vmatprep.mubr.bf16.mxu0 0
  %2294 = vmatmul.mubr.bf16.gmra.mxu0 %v1294
  %v2295 = vpop.f32.mrf.mxu0
  %v2296 = vadd.f32 0.0, %v2295
  %v2297 = vpop.f32.mrf.mxu0
  %v2298 = vpop.f32.mrf.mxu0
  %v2299 = vadd.f32 0.0, %v2298
  %v2300 = vpop.f32.mrf.mxu0
  %2301 = vmatprep.mubr.bf16.mxu0 0
  %2302 = vmatmul.mubr.bf16.gmra.mxu0 %v1297
  %v2303 = vpop.f32.mrf.mxu0
  %v2304 = vadd.f32 0.0, %v2303
  %v2305 = vpop.f32.mrf.mxu0
  %v2306 = vpop.f32.mrf.mxu0
  %v2307 = vadd.f32 0.0, %v2306
  %v2308 = vpop.f32.mrf.mxu0
  %2309 = vmatprep.mubr.bf16.mxu0 0
  %2310 = vmatmul.mubr.bf16.gmra.mxu0 %v1300
  %v2311 = vpop.f32.mrf.mxu0
  %v2312 = vadd.f32 0.0, %v2311
  %v2313 = vpop.f32.mrf.mxu0
  %v2314 = vpop.f32.mrf.mxu0
  %v2315 = vadd.f32 0.0, %v2314
  %v2316 = vpop.f32.mrf.mxu0
  %2317 = vmatprep.mubr.bf16.mxu0 0
  %2318 = vmatmul.mubr.bf16.gmra.mxu0 %v1303
  %v2319 = vpop.f32.mrf.mxu0
  %v2320 = vadd.f32 0.0, %v2319
  %v2321 = vpop.f32.mrf.mxu0
  %v2322 = vpop.f32.mrf.mxu0
  %v2323 = vadd.f32 0.0, %v2322
  %v2324 = vpop.f32.mrf.mxu0
  %2325 = vmatprep.mubr.bf16.mxu0 0
  %2326 = vmatmul.mubr.bf16.gmra.mxu0 %v1306
  %v2327 = vpop.f32.mrf.mxu0
  %v2328 = vadd.f32 0.0, %v2327
  %v2329 = vpop.f32.mrf.mxu0
  %v2330 = vpop.f32.mrf.mxu0
  %v2331 = vadd.f32 0.0, %v2330
  %v2332 = vpop.f32.mrf.mxu0
  %2333 = vmatprep.mubr.bf16.mxu0 0
  %2334 = vmatmul.mubr.bf16.gmra.mxu0 %v1309
  %v2335 = vpop.f32.mrf.mxu0
  %v2336 = vadd.f32 0.0, %v2335
  %v2337 = vpop.f32.mrf.mxu0
  %v2338 = vpop.f32.mrf.mxu0
  %v2339 = vadd.f32 0.0, %v2338
  %v2340 = vpop.f32.mrf.mxu0
  %2341 = vmatprep.mubr.bf16.mxu0 0
  %2342 = vmatmul.mubr.bf16.gmra.mxu0 %v1312
  %v2343 = vpop.f32.mrf.mxu0
  %v2344 = vadd.f32 0.0, %v2343
  %v2345 = vpop.f32.mrf.mxu0
  %v2346 = vpop.f32.mrf.mxu0
  %v2347 = vadd.f32 0.0, %v2346
  %v2348 = vpop.f32.mrf.mxu0
  %2349 = vmatprep.mubr.bf16.mxu0 0
  %2350 = vmatmul.mubr.bf16.gmra.mxu0 %v1315
  %v2351 = vpop.f32.mrf.mxu0
  %v2352 = vadd.f32 0.0, %v2351
  %v2353 = vpop.f32.mrf.mxu0
  %v2354 = vpop.f32.mrf.mxu0
  %v2355 = vadd.f32 0.0, %v2354
  %v2356 = vpop.f32.mrf.mxu0
  %2357 = vmatprep.mubr.bf16.mxu0 0
  %2358 = vmatmul.mubr.bf16.gmra.mxu0 %v1318
  %v2359 = vpop.f32.mrf.mxu0
  %v2360 = vadd.f32 0.0, %v2359
  %v2361 = vpop.f32.mrf.mxu0
  %v2362 = vpop.f32.mrf.mxu0
  %v2363 = vadd.f32 0.0, %v2362
  %v2364 = vpop.f32.mrf.mxu0
  %2365 = vmatprep.mubr.bf16.mxu0 0
  %2366 = vmatmul.mubr.bf16.gmra.mxu0 %v1321
  %v2367 = vpop.f32.mrf.mxu0
  %v2368 = vadd.f32 0.0, %v2367
  %v2369 = vpop.f32.mrf.mxu0
  %v2370 = vpop.f32.mrf.mxu0
  %v2371 = vadd.f32 0.0, %v2370
  %v2372 = vpop.f32.mrf.mxu0
  %2373 = vmatprep.mubr.bf16.mxu0 0
  %2374 = vmatmul.mubr.bf16.gmra.mxu0 %v1324
  %v2375 = vpop.f32.mrf.mxu0
  %v2376 = vadd.f32 0.0, %v2375
  %v2377 = vpop.f32.mrf.mxu0
  %v2378 = vpop.f32.mrf.mxu0
  %v2379 = vadd.f32 0.0, %v2378
  %v2380 = vpop.f32.mrf.mxu0
  %2381 = vmatprep.mubr.bf16.mxu0 0
  %2382 = vmatmul.mubr.bf16.gmra.mxu0 %v1327
  %v2383 = vpop.f32.mrf.mxu0
  %v2384 = vadd.f32 0.0, %v2383
  %v2385 = vpop.f32.mrf.mxu0
  %v2386 = vpop.f32.mrf.mxu0
  %v2387 = vadd.f32 0.0, %v2386
  %v2388 = vpop.f32.mrf.mxu0
  %2389 = vdwg.mxu0
  %v2390 = vtanh.pop %v1368
  %v2391 = vtanh.pop %v1371
  %v2392 = vtanh.pop %v1376
  %v2393 = vtanh.pop %v1379
  %v2394 = vtanh.pop %v1384
  %v2395 = vtanh.pop %v1387
  %v2396 = vtanh.pop %v1392
  %v2397 = vtanh.pop %v1395
  %v2398 = vtanh.pop %v1400
  %v2399 = vtanh.pop %v1403
  %v2400 = vtanh.pop %v1408
  %v2401 = vtanh.pop %v1411
  %v2402 = vtanh.pop %v1416
  %v2403 = vtanh.pop %v1419
  %v2404 = vtanh.pop %v1424
  %v2405 = vtanh.pop %v1427
  %v2406 = vtanh.pop %v1432
  %v2407 = vtanh.pop %v1435
  %v2408 = vtanh.pop %v1440
  %v2409 = vtanh.pop %v1443
  %v2410 = vtanh.pop %v1448
  %v2411 = vtanh.pop %v1451
  %v2412 = vtanh.pop %v1456
  %v2413 = vtanh.pop %v1459
  %v2414 = vtanh.pop %v1464
  %v2415 = vtanh.pop %v1467
  %v2416 = vtanh.pop %v1472
  %v2417 = vtanh.pop %v1475
  %v2418 = vtanh.pop %v1480
  %v2419 = vtanh.pop %v1483
  %v2420 = vtanh.pop %v1488
  %v2421 = vtanh.pop %v1491
  %v2422 = vtanh.pop %v1496
  %v2423 = vtanh.pop %v1499
  %v2424 = vtanh.pop %v1504
  %v2425 = vtanh.pop %v1507
  %v2426 = vtanh.pop %v1512
  %v2427 = vtanh.pop %v1515
  %v2428 = vtanh.pop %v1520
  %v2429 = vtanh.pop %v1523
  %v2430 = vtanh.pop %v1528
  %v2431 = vtanh.pop %v1531
  %v2432 = vtanh.pop %v1536
  %v2433 = vtanh.pop %v1539
  %v2434 = vtanh.pop %v1544
  %v2435 = vtanh.pop %v1547
  %v2436 = vtanh.pop %v1552
  %v2437 = vtanh.pop %v1555
  %v2438 = vtanh.pop %v1560
  %v2439 = vtanh.pop %v1563
  %v2440 = vtanh.pop %v1568
  %v2441 = vtanh.pop %v1571
  %v2442 = vtanh.pop %v1576
  %v2443 = vtanh.pop %v1579
  %v2444 = vtanh.pop %v1584
  %v2445 = vtanh.pop %v1587
  %v2446 = vtanh.pop %v1592
  %v2447 = vtanh.pop %v1595
  %v2448 = vtanh.pop %v1600
  %v2449 = vtanh.pop %v1603
  %v2450 = vtanh.pop %v1608
  %v2451 = vtanh.pop %v1611
  %v2452 = vtanh.pop %v1616
  %v2453 = vtanh.pop %v1619
  %v2454 = vtanh.pop %v1624
  %v2455 = vtanh.pop %v1627
  %v2456 = vtanh.pop %v1632
  %v2457 = vtanh.pop %v1635
  %v2458 = vtanh.pop %v1640
  %v2459 = vtanh.pop %v1643
  %v2460 = vtanh.pop %v1648
  %v2461 = vtanh.pop %v1651
  %v2462 = vtanh.pop %v1656
  %v2463 = vtanh.pop %v1659
  %v2464 = vtanh.pop %v1664
  %v2465 = vtanh.pop %v1667
  %v2466 = vtanh.pop %v1672
  %v2467 = vtanh.pop %v1675
  %v2468 = vtanh.pop %v1680
  %v2469 = vtanh.pop %v1683
  %v2470 = vtanh.pop %v1688
  %v2471 = vtanh.pop %v1691
  %v2472 = vtanh.pop %v1696
  %v2473 = vtanh.pop %v1699
  %v2474 = vtanh.pop %v1704
  %v2475 = vtanh.pop %v1707
  %v2476 = vtanh.pop %v1712
  %v2477 = vtanh.pop %v1715
  %v2478 = vtanh.pop %v1720
  %v2479 = vtanh.pop %v1723
  %v2480 = vtanh.pop %v1728
  %v2481 = vtanh.pop %v1731
  %v2482 = vtanh.pop %v1736
  %v2483 = vtanh.pop %v1739
  %v2484 = vtanh.pop %v1744
  %v2485 = vtanh.pop %v1747
  %v2486 = vtanh.pop %v1752
  %v2487 = vtanh.pop %v1755
  %v2488 = vtanh.pop %v1760
  %v2489 = vtanh.pop %v1763
  %v2490 = vtanh.pop %v1768
  %v2491 = vtanh.pop %v1771
  %v2492 = vtanh.pop %v1776
  %v2493 = vtanh.pop %v1779
  %v2494 = vtanh.pop %v1784
  %v2495 = vtanh.pop %v1787
  %v2496 = vtanh.pop %v1792
  %v2497 = vtanh.pop %v1795
  %v2498 = vtanh.pop %v1800
  %v2499 = vtanh.pop %v1803
  %v2500 = vtanh.pop %v1808
  %v2501 = vtanh.pop %v1811
  %v2502 = vtanh.pop %v1816
  %v2503 = vtanh.pop %v1819
  %v2504 = vtanh.pop %v1824
  %v2505 = vtanh.pop %v1827
  %v2506 = vtanh.pop %v1832
  %v2507 = vtanh.pop %v1835
  %v2508 = vtanh.pop %v1840
  %v2509 = vtanh.pop %v1843
  %v2510 = vtanh.pop %v1848
  %v2511 = vtanh.pop %v1851
  %v2512 = vtanh.pop %v1856
  %v2513 = vtanh.pop %v1859
  %v2514 = vtanh.pop %v1864
  %v2515 = vtanh.pop %v1867
  %v2516 = vtanh.pop %v1872
  %v2517 = vtanh.pop %v1875
  %v2518 = vtanh.pop %v1880
  %v2519 = vtanh.pop %v1883
  %v2520 = vtanh.pop %v1888
  %v2521 = vtanh.pop %v1891
  %v2522 = vtanh.pop %v1896
  %v2523 = vtanh.pop %v1899
  %v2524 = vtanh.pop %v1904
  %v2525 = vtanh.pop %v1907
  %v2526 = vtanh.pop %v1912
  %v2527 = vtanh.pop %v1915
  %v2528 = vtanh.pop %v1920
  %v2529 = vtanh.pop %v1923
  %v2530 = vtanh.pop %v1928
  %v2531 = vtanh.pop %v1931
  %v2532 = vtanh.pop %v1936
  %v2533 = vtanh.pop %v1939
  %v2534 = vtanh.pop %v1944
  %v2535 = vtanh.pop %v1947
  %v2536 = vtanh.pop %v1952
  %v2537 = vtanh.pop %v1955
  %v2538 = vtanh.pop %v1960
  %v2539 = vtanh.pop %v1963
  %v2540 = vtanh.pop %v1968
  %v2541 = vtanh.pop %v1971
  %v2542 = vtanh.pop %v1976
  %v2543 = vtanh.pop %v1979
  %v2544 = vtanh.pop %v1984
  %v2545 = vtanh.pop %v1987
  %v2546 = vtanh.pop %v1992
  %v2547 = vtanh.pop %v1995
  %v2548 = vtanh.pop %v2000
  %v2549 = vtanh.pop %v2003
  %v2550 = vtanh.pop %v2008
  %v2551 = vtanh.pop %v2011
  %v2552 = vtanh.pop %v2016
  %v2553 = vtanh.pop %v2019
  %v2554 = vtanh.pop %v2024
  %v2555 = vtanh.pop %v2027
  %v2556 = vtanh.pop %v2032
  %v2557 = vtanh.pop %v2035
  %v2558 = vtanh.pop %v2040
  %v2559 = vtanh.pop %v2043
  %v2560 = vtanh.pop %v2048
  %v2561 = vtanh.pop %v2051
  %v2562 = vtanh.pop %v2056
  %v2563 = vtanh.pop %v2059
  %v2564 = vtanh.pop %v2064
  %v2565 = vtanh.pop %v2067
  %v2566 = vtanh.pop %v2072
  %v2567 = vtanh.pop %v2075
  %v2568 = vtanh.pop %v2080
  %v2569 = vtanh.pop %v2083
  %v2570 = vtanh.pop %v2088
  %v2571 = vtanh.pop %v2091
  %v2572 = vtanh.pop %v2096
  %v2573 = vtanh.pop %v2099
  %v2574 = vtanh.pop %v2104
  %v2575 = vtanh.pop %v2107
  %v2576 = vtanh.pop %v2112
  %v2577 = vtanh.pop %v2115
  %v2578 = vtanh.pop %v2120
  %v2579 = vtanh.pop %v2123
  %v2580 = vtanh.pop %v2128
  %v2581 = vtanh.pop %v2131
  %v2582 = vtanh.pop %v2136
  %v2583 = vtanh.pop %v2139
  %v2584 = vtanh.pop %v2144
  %v2585 = vtanh.pop %v2147
  %v2586 = vtanh.pop %v2152
  %v2587 = vtanh.pop %v2155
  %v2588 = vtanh.pop %v2160
  %v2589 = vtanh.pop %v2163
  %v2590 = vtanh.pop %v2168
  %v2591 = vtanh.pop %v2171
  %v2592 = vtanh.pop %v2176
  %v2593 = vtanh.pop %v2179
  %v2594 = vtanh.pop %v2184
  %v2595 = vtanh.pop %v2187
  %v2596 = vtanh.pop %v2192
  %v2597 = vtanh.pop %v2195
  %v2598 = vtanh.pop %v2200
  %v2599 = vtanh.pop %v2203
  %v2600 = vtanh.pop %v2208
  %v2601 = vtanh.pop %v2211
  %v2602 = vtanh.pop %v2216
  %v2603 = vtanh.pop %v2219
  %v2604 = vtanh.pop %v2224
  %v2605 = vtanh.pop %v2227
  %v2606 = vtanh.pop %v2232
  %v2607 = vtanh.pop %v2235
  %v2608 = vtanh.pop %v2240
  %v2609 = vtanh.pop %v2243
  %v2610 = vtanh.pop %v2248
  %v2611 = vtanh.pop %v2251
  %v2612 = vtanh.pop %v2256
  %v2613 = vtanh.pop %v2259
  %v2614 = vtanh.pop %v2264
  %v2615 = vtanh.pop %v2267
  %v2616 = vtanh.pop %v2272
  %v2617 = vtanh.pop %v2275
  %v2618 = vtanh.pop %v2280
  %v2619 = vtanh.pop %v2283
  %v2620 = vtanh.pop %v2288
  %v2621 = vtanh.pop %v2291
  %v2622 = vtanh.pop %v2296
  %v2623 = vtanh.pop %v2299
  %v2624 = vtanh.pop %v2304
  %v2625 = vtanh.pop %v2307
  %v2626 = vtanh.pop %v2312
  %v2627 = vtanh.pop %v2315
  %v2628 = vtanh.pop %v2320
  %v2629 = vtanh.pop %v2323
  %v2630 = vtanh.pop %v2328
  %v2631 = vtanh.pop %v2331
  %v2632 = vtanh.pop %v2336
  %v2633 = vtanh.pop %v2339
  %v2634 = vtanh.pop %v2344
  %v2635 = vtanh.pop %v2347
  %v2636 = vtanh.pop %v2352
  %v2637 = vtanh.pop %v2355
  %v2638 = vtanh.pop %v2360
  %v2639 = vtanh.pop %v2363
  %v2640 = vtanh.pop %v2368
  %v2641 = vtanh.pop %v2371
  %v2642 = vtanh.pop %v2376
  %v2643 = vtanh.pop %v2379
  %v2644 = vtanh.pop %v2384
  %v2645 = vtanh.pop %v2387
  %vm2646 = vcmask 97280
  %2647 = vst.msk [vmem:[%s2] sm:$0xff] %vm2646, %v2390
  %2648 = vst.msk [vmem:[%s2 + $0x8] sm:$0xff] %vm2646, %v2391
  %2649 = vst.msk [vmem:[%s2 + $0x10] sm:$0xff] %vm2646, %v2392
  %2650 = vst.msk [vmem:[%s2 + $0x18] sm:$0xff] %vm2646, %v2393
  %2651 = vst.msk [vmem:[%s2 + $0x20] sm:$0xff] %vm2646, %v2394
  %2652 = vst.msk [vmem:[%s2 + $0x28] sm:$0xff] %vm2646, %v2395
  %2653 = vst.msk [vmem:[%s2 + $0x30] sm:$0xff] %vm2646, %v2396
  %2654 = vst.msk [vmem:[%s2 + $0x38] sm:$0xff] %vm2646, %v2397
  %2655 = vst.msk [vmem:[%s2 + $0x40] sm:$0xff] %vm2646, %v2398
  %2656 = vst.msk [vmem:[%s2 + $0x48] sm:$0xff] %vm2646, %v2399
  %2657 = vst.msk [vmem:[%s2 + $0x50] sm:$0xff] %vm2646, %v2400
  %2658 = vst.msk [vmem:[%s2 + $0x58] sm:$0xff] %vm2646, %v2401
  %2659 = vst.msk [vmem:[%s2 + $0x60] sm:$0xff] %vm2646, %v2402
  %2660 = vst.msk [vmem:[%s2 + $0x68] sm:$0xff] %vm2646, %v2403
  %2661 = vst.msk [vmem:[%s2 + $0x70] sm:$0xff] %vm2646, %v2404
  %2662 = vst.msk [vmem:[%s2 + $0x78] sm:$0xff] %vm2646, %v2405
  %2663 = vst.msk [vmem:[%s2 + $0x80] sm:$0xff] %vm2646, %v2406
  %2664 = vst.msk [vmem:[%s2 + $0x88] sm:$0xff] %vm2646, %v2407
  %2665 = vst.msk [vmem:[%s2 + $0x90] sm:$0xff] %vm2646, %v2408
  %2666 = vst.msk [vmem:[%s2 + $0x98] sm:$0xff] %vm2646, %v2409
  %2667 = vst.msk [vmem:[%s2 + $0xa0] sm:$0xff] %vm2646, %v2410
  %2668 = vst.msk [vmem:[%s2 + $0xa8] sm:$0xff] %vm2646, %v2411
  %2669 = vst.msk [vmem:[%s2 + $0xb0] sm:$0xff] %vm2646, %v2412
  %2670 = vst.msk [vmem:[%s2 + $0xb8] sm:$0xff] %vm2646, %v2413
  %2671 = vst.msk [vmem:[%s2 + $0xc0] sm:$0xff] %vm2646, %v2414
  %2672 = vst.msk [vmem:[%s2 + $0xc8] sm:$0xff] %vm2646, %v2415
  %2673 = vst.msk [vmem:[%s2 + $0xd0] sm:$0xff] %vm2646, %v2416
  %2674 = vst.msk [vmem:[%s2 + $0xd8] sm:$0xff] %vm2646, %v2417
  %2675 = vst.msk [vmem:[%s2 + $0xe0] sm:$0xff] %vm2646, %v2418
  %2676 = vst.msk [vmem:[%s2 + $0xe8] sm:$0xff] %vm2646, %v2419
  %2677 = vst.msk [vmem:[%s2 + $0xf0] sm:$0xff] %vm2646, %v2420
  %2678 = vst.msk [vmem:[%s2 + $0xf8] sm:$0xff] %vm2646, %v2421
  %2679 = vst.msk [vmem:[%s2 + $0x100] sm:$0xff] %vm2646, %v2422
  %2680 = vst.msk [vmem:[%s2 + $0x108] sm:$0xff] %vm2646, %v2423
  %2681 = vst.msk [vmem:[%s2 + $0x110] sm:$0xff] %vm2646, %v2424
  %2682 = vst.msk [vmem:[%s2 + $0x118] sm:$0xff] %vm2646, %v2425
  %2683 = vst.msk [vmem:[%s2 + $0x120] sm:$0xff] %vm2646, %v2426
  %2684 = vst.msk [vmem:[%s2 + $0x128] sm:$0xff] %vm2646, %v2427
  %2685 = vst.msk [vmem:[%s2 + $0x130] sm:$0xff] %vm2646, %v2428
  %2686 = vst.msk [vmem:[%s2 + $0x138] sm:$0xff] %vm2646, %v2429
  %2687 = vst.msk [vmem:[%s2 + $0x140] sm:$0xff] %vm2646, %v2430
  %2688 = vst.msk [vmem:[%s2 + $0x148] sm:$0xff] %vm2646, %v2431
  %2689 = vst.msk [vmem:[%s2 + $0x150] sm:$0xff] %vm2646, %v2432
  %2690 = vst.msk [vmem:[%s2 + $0x158] sm:$0xff] %vm2646, %v2433
  %2691 = vst.msk [vmem:[%s2 + $0x160] sm:$0xff] %vm2646, %v2434
  %2692 = vst.msk [vmem:[%s2 + $0x168] sm:$0xff] %vm2646, %v2435
  %2693 = vst.msk [vmem:[%s2 + $0x170] sm:$0xff] %vm2646, %v2436
  %2694 = vst.msk [vmem:[%s2 + $0x178] sm:$0xff] %vm2646, %v2437
  %2695 = vst.msk [vmem:[%s2 + $0x180] sm:$0xff] %vm2646, %v2438
  %2696 = vst.msk [vmem:[%s2 + $0x188] sm:$0xff] %vm2646, %v2439
  %2697 = vst.msk [vmem:[%s2 + $0x190] sm:$0xff] %vm2646, %v2440
  %2698 = vst.msk [vmem:[%s2 + $0x198] sm:$0xff] %vm2646, %v2441
  %2699 = vst.msk [vmem:[%s2 + $0x1a0] sm:$0xff] %vm2646, %v2442
  %2700 = vst.msk [vmem:[%s2 + $0x1a8] sm:$0xff] %vm2646, %v2443
  %2701 = vst.msk [vmem:[%s2 + $0x1b0] sm:$0xff] %vm2646, %v2444
  %2702 = vst.msk [vmem:[%s2 + $0x1b8] sm:$0xff] %vm2646, %v2445
  %2703 = vst.msk [vmem:[%s2 + $0x1c0] sm:$0xff] %vm2646, %v2446
  %2704 = vst.msk [vmem:[%s2 + $0x1c8] sm:$0xff] %vm2646, %v2447
  %2705 = vst.msk [vmem:[%s2 + $0x1d0] sm:$0xff] %vm2646, %v2448
  %2706 = vst.msk [vmem:[%s2 + $0x1d8] sm:$0xff] %vm2646, %v2449
  %2707 = vst.msk [vmem:[%s2 + $0x1e0] sm:$0xff] %vm2646, %v2450
  %2708 = vst.msk [vmem:[%s2 + $0x1e8] sm:$0xff] %vm2646, %v2451
  %2709 = vst.msk [vmem:[%s2 + $0x1f0] sm:$0xff] %vm2646, %v2452
  %2710 = vst.msk [vmem:[%s2 + $0x1f8] sm:$0xff] %vm2646, %v2453
  %2711 = vst.msk [vmem:[%s2 + $0x200] sm:$0xff] %vm2646, %v2454
  %2712 = vst.msk [vmem:[%s2 + $0x208] sm:$0xff] %vm2646, %v2455
  %2713 = vst.msk [vmem:[%s2 + $0x210] sm:$0xff] %vm2646, %v2456
  %2714 = vst.msk [vmem:[%s2 + $0x218] sm:$0xff] %vm2646, %v2457
  %2715 = vst.msk [vmem:[%s2 + $0x220] sm:$0xff] %vm2646, %v2458
  %2716 = vst.msk [vmem:[%s2 + $0x228] sm:$0xff] %vm2646, %v2459
  %2717 = vst.msk [vmem:[%s2 + $0x230] sm:$0xff] %vm2646, %v2460
  %2718 = vst.msk [vmem:[%s2 + $0x238] sm:$0xff] %vm2646, %v2461
  %2719 = vst.msk [vmem:[%s2 + $0x240] sm:$0xff] %vm2646, %v2462
  %2720 = vst.msk [vmem:[%s2 + $0x248] sm:$0xff] %vm2646, %v2463
  %2721 = vst.msk [vmem:[%s2 + $0x250] sm:$0xff] %vm2646, %v2464
  %2722 = vst.msk [vmem:[%s2 + $0x258] sm:$0xff] %vm2646, %v2465
  %2723 = vst.msk [vmem:[%s2 + $0x260] sm:$0xff] %vm2646, %v2466
  %2724 = vst.msk [vmem:[%s2 + $0x268] sm:$0xff] %vm2646, %v2467
  %2725 = vst.msk [vmem:[%s2 + $0x270] sm:$0xff] %vm2646, %v2468
  %2726 = vst.msk [vmem:[%s2 + $0x278] sm:$0xff] %vm2646, %v2469
  %2727 = vst.msk [vmem:[%s2 + $0x280] sm:$0xff] %vm2646, %v2470
  %2728 = vst.msk [vmem:[%s2 + $0x288] sm:$0xff] %vm2646, %v2471
  %2729 = vst.msk [vmem:[%s2 + $0x290] sm:$0xff] %vm2646, %v2472
  %2730 = vst.msk [vmem:[%s2 + $0x298] sm:$0xff] %vm2646, %v2473
  %2731 = vst.msk [vmem:[%s2 + $0x2a0] sm:$0xff] %vm2646, %v2474
  %2732 = vst.msk [vmem:[%s2 + $0x2a8] sm:$0xff] %vm2646, %v2475
  %2733 = vst.msk [vmem:[%s2 + $0x2b0] sm:$0xff] %vm2646, %v2476
  %2734 = vst.msk [vmem:[%s2 + $0x2b8] sm:$0xff] %vm2646, %v2477
  %2735 = vst.msk [vmem:[%s2 + $0x2c0] sm:$0xff] %vm2646, %v2478
  %2736 = vst.msk [vmem:[%s2 + $0x2c8] sm:$0xff] %vm2646, %v2479
  %2737 = vst.msk [vmem:[%s2 + $0x2d0] sm:$0xff] %vm2646, %v2480
  %2738 = vst.msk [vmem:[%s2 + $0x2d8] sm:$0xff] %vm2646, %v2481
  %2739 = vst.msk [vmem:[%s2 + $0x2e0] sm:$0xff] %vm2646, %v2482
  %2740 = vst.msk [vmem:[%s2 + $0x2e8] sm:$0xff] %vm2646, %v2483
  %2741 = vst.msk [vmem:[%s2 + $0x2f0] sm:$0xff] %vm2646, %v2484
  %2742 = vst.msk [vmem:[%s2 + $0x2f8] sm:$0xff] %vm2646, %v2485
  %2743 = vst.msk [vmem:[%s2 + $0x300] sm:$0xff] %vm2646, %v2486
  %2744 = vst.msk [vmem:[%s2 + $0x308] sm:$0xff] %vm2646, %v2487
  %2745 = vst.msk [vmem:[%s2 + $0x310] sm:$0xff] %vm2646, %v2488
  %2746 = vst.msk [vmem:[%s2 + $0x318] sm:$0xff] %vm2646, %v2489
  %2747 = vst.msk [vmem:[%s2 + $0x320] sm:$0xff] %vm2646, %v2490
  %2748 = vst.msk [vmem:[%s2 + $0x328] sm:$0xff] %vm2646, %v2491
  %2749 = vst.msk [vmem:[%s2 + $0x330] sm:$0xff] %vm2646, %v2492
  %2750 = vst.msk [vmem:[%s2 + $0x338] sm:$0xff] %vm2646, %v2493
  %2751 = vst.msk [vmem:[%s2 + $0x340] sm:$0xff] %vm2646, %v2494
  %2752 = vst.msk [vmem:[%s2 + $0x348] sm:$0xff] %vm2646, %v2495
  %2753 = vst.msk [vmem:[%s2 + $0x350] sm:$0xff] %vm2646, %v2496
  %2754 = vst.msk [vmem:[%s2 + $0x358] sm:$0xff] %vm2646, %v2497
  %2755 = vst.msk [vmem:[%s2 + $0x360] sm:$0xff] %vm2646, %v2498
  %2756 = vst.msk [vmem:[%s2 + $0x368] sm:$0xff] %vm2646, %v2499
  %2757 = vst.msk [vmem:[%s2 + $0x370] sm:$0xff] %vm2646, %v2500
  %2758 = vst.msk [vmem:[%s2 + $0x378] sm:$0xff] %vm2646, %v2501
  %2759 = vst.msk [vmem:[%s2 + $0x380] sm:$0xff] %vm2646, %v2502
  %2760 = vst.msk [vmem:[%s2 + $0x388] sm:$0xff] %vm2646, %v2503
  %2761 = vst.msk [vmem:[%s2 + $0x390] sm:$0xff] %vm2646, %v2504
  %2762 = vst.msk [vmem:[%s2 + $0x398] sm:$0xff] %vm2646, %v2505
  %2763 = vst.msk [vmem:[%s2 + $0x3a0] sm:$0xff] %vm2646, %v2506
  %2764 = vst.msk [vmem:[%s2 + $0x3a8] sm:$0xff] %vm2646, %v2507
  %2765 = vst.msk [vmem:[%s2 + $0x3b0] sm:$0xff] %vm2646, %v2508
  %2766 = vst.msk [vmem:[%s2 + $0x3b8] sm:$0xff] %vm2646, %v2509
  %2767 = vst.msk [vmem:[%s2 + $0x3c0] sm:$0xff] %vm2646, %v2510
  %2768 = vst.msk [vmem:[%s2 + $0x3c8] sm:$0xff] %vm2646, %v2511
  %2769 = vst.msk [vmem:[%s2 + $0x3d0] sm:$0xff] %vm2646, %v2512
  %2770 = vst.msk [vmem:[%s2 + $0x3d8] sm:$0xff] %vm2646, %v2513
  %2771 = vst.msk [vmem:[%s2 + $0x3e0] sm:$0xff] %vm2646, %v2514
  %2772 = vst.msk [vmem:[%s2 + $0x3e8] sm:$0xff] %vm2646, %v2515
  %2773 = vst.msk [vmem:[%s2 + $0x3f0] sm:$0xff] %vm2646, %v2516
  %2774 = vst.msk [vmem:[%s2 + $0x3f8] sm:$0xff] %vm2646, %v2517
  %2775 = vst.msk [vmem:[%s2 + $0x400] sm:$0xff] %vm2646, %v2518
  %2776 = vst.msk [vmem:[%s2 + $0x408] sm:$0xff] %vm2646, %v2519
  %2777 = vst.msk [vmem:[%s2 + $0x410] sm:$0xff] %vm2646, %v2520
  %2778 = vst.msk [vmem:[%s2 + $0x418] sm:$0xff] %vm2646, %v2521
  %2779 = vst.msk [vmem:[%s2 + $0x420] sm:$0xff] %vm2646, %v2522
  %2780 = vst.msk [vmem:[%s2 + $0x428] sm:$0xff] %vm2646, %v2523
  %2781 = vst.msk [vmem:[%s2 + $0x430] sm:$0xff] %vm2646, %v2524
  %2782 = vst.msk [vmem:[%s2 + $0x438] sm:$0xff] %vm2646, %v2525
  %2783 = vst.msk [vmem:[%s2 + $0x440] sm:$0xff] %vm2646, %v2526
  %2784 = vst.msk [vmem:[%s2 + $0x448] sm:$0xff] %vm2646, %v2527
  %2785 = vst.msk [vmem:[%s2 + $0x450] sm:$0xff] %vm2646, %v2528
  %2786 = vst.msk [vmem:[%s2 + $0x458] sm:$0xff] %vm2646, %v2529
  %2787 = vst.msk [vmem:[%s2 + $0x460] sm:$0xff] %vm2646, %v2530
  %2788 = vst.msk [vmem:[%s2 + $0x468] sm:$0xff] %vm2646, %v2531
  %2789 = vst.msk [vmem:[%s2 + $0x470] sm:$0xff] %vm2646, %v2532
  %2790 = vst.msk [vmem:[%s2 + $0x478] sm:$0xff] %vm2646, %v2533
  %2791 = vst.msk [vmem:[%s2 + $0x480] sm:$0xff] %vm2646, %v2534
  %2792 = vst.msk [vmem:[%s2 + $0x488] sm:$0xff] %vm2646, %v2535
  %2793 = vst.msk [vmem:[%s2 + $0x490] sm:$0xff] %vm2646, %v2536
  %2794 = vst.msk [vmem:[%s2 + $0x498] sm:$0xff] %vm2646, %v2537
  %2795 = vst.msk [vmem:[%s2 + $0x4a0] sm:$0xff] %vm2646, %v2538
  %2796 = vst.msk [vmem:[%s2 + $0x4a8] sm:$0xff] %vm2646, %v2539
  %2797 = vst.msk [vmem:[%s2 + $0x4b0] sm:$0xff] %vm2646, %v2540
  %2798 = vst.msk [vmem:[%s2 + $0x4b8] sm:$0xff] %vm2646, %v2541
  %2799 = vst.msk [vmem:[%s2 + $0x4c0] sm:$0xff] %vm2646, %v2542
  %2800 = vst.msk [vmem:[%s2 + $0x4c8] sm:$0xff] %vm2646, %v2543
  %2801 = vst.msk [vmem:[%s2 + $0x4d0] sm:$0xff] %vm2646, %v2544
  %2802 = vst.msk [vmem:[%s2 + $0x4d8] sm:$0xff] %vm2646, %v2545
  %2803 = vst.msk [vmem:[%s2 + $0x4e0] sm:$0xff] %vm2646, %v2546
  %2804 = vst.msk [vmem:[%s2 + $0x4e8] sm:$0xff] %vm2646, %v2547
  %2805 = vst.msk [vmem:[%s2 + $0x4f0] sm:$0xff] %vm2646, %v2548
  %2806 = vst.msk [vmem:[%s2 + $0x4f8] sm:$0xff] %vm2646, %v2549
  %2807 = vst.msk [vmem:[%s2 + $0x500] sm:$0xff] %vm2646, %v2550
  %2808 = vst.msk [vmem:[%s2 + $0x508] sm:$0xff] %vm2646, %v2551
  %2809 = vst.msk [vmem:[%s2 + $0x510] sm:$0xff] %vm2646, %v2552
  %2810 = vst.msk [vmem:[%s2 + $0x518] sm:$0xff] %vm2646, %v2553
  %2811 = vst.msk [vmem:[%s2 + $0x520] sm:$0xff] %vm2646, %v2554
  %2812 = vst.msk [vmem:[%s2 + $0x528] sm:$0xff] %vm2646, %v2555
  %2813 = vst.msk [vmem:[%s2 + $0x530] sm:$0xff] %vm2646, %v2556
  %2814 = vst.msk [vmem:[%s2 + $0x538] sm:$0xff] %vm2646, %v2557
  %2815 = vst.msk [vmem:[%s2 + $0x540] sm:$0xff] %vm2646, %v2558
  %2816 = vst.msk [vmem:[%s2 + $0x548] sm:$0xff] %vm2646, %v2559
  %2817 = vst.msk [vmem:[%s2 + $0x550] sm:$0xff] %vm2646, %v2560
  %2818 = vst.msk [vmem:[%s2 + $0x558] sm:$0xff] %vm2646, %v2561
  %2819 = vst.msk [vmem:[%s2 + $0x560] sm:$0xff] %vm2646, %v2562
  %2820 = vst.msk [vmem:[%s2 + $0x568] sm:$0xff] %vm2646, %v2563
  %2821 = vst.msk [vmem:[%s2 + $0x570] sm:$0xff] %vm2646, %v2564
  %2822 = vst.msk [vmem:[%s2 + $0x578] sm:$0xff] %vm2646, %v2565
  %2823 = vst.msk [vmem:[%s2 + $0x580] sm:$0xff] %vm2646, %v2566
  %2824 = vst.msk [vmem:[%s2 + $0x588] sm:$0xff] %vm2646, %v2567
  %2825 = vst.msk [vmem:[%s2 + $0x590] sm:$0xff] %vm2646, %v2568
  %2826 = vst.msk [vmem:[%s2 + $0x598] sm:$0xff] %vm2646, %v2569
  %2827 = vst.msk [vmem:[%s2 + $0x5a0] sm:$0xff] %vm2646, %v2570
  %2828 = vst.msk [vmem:[%s2 + $0x5a8] sm:$0xff] %vm2646, %v2571
  %2829 = vst.msk [vmem:[%s2 + $0x5b0] sm:$0xff] %vm2646, %v2572
  %2830 = vst.msk [vmem:[%s2 + $0x5b8] sm:$0xff] %vm2646, %v2573
  %2831 = vst.msk [vmem:[%s2 + $0x5c0] sm:$0xff] %vm2646, %v2574
  %2832 = vst.msk [vmem:[%s2 + $0x5c8] sm:$0xff] %vm2646, %v2575
  %2833 = vst.msk [vmem:[%s2 + $0x5d0] sm:$0xff] %vm2646, %v2576
  %2834 = vst.msk [vmem:[%s2 + $0x5d8] sm:$0xff] %vm2646, %v2577
  %2835 = vst.msk [vmem:[%s2 + $0x5e0] sm:$0xff] %vm2646, %v2578
  %2836 = vst.msk [vmem:[%s2 + $0x5e8] sm:$0xff] %vm2646, %v2579
  %2837 = vst.msk [vmem:[%s2 + $0x5f0] sm:$0xff] %vm2646, %v2580
  %2838 = vst.msk [vmem:[%s2 + $0x5f8] sm:$0xff] %vm2646, %v2581
  %2839 = vst.msk [vmem:[%s2 + $0x600] sm:$0xff] %vm2646, %v2582
  %2840 = vst.msk [vmem:[%s2 + $0x608] sm:$0xff] %vm2646, %v2583
  %2841 = vst.msk [vmem:[%s2 + $0x610] sm:$0xff] %vm2646, %v2584
  %2842 = vst.msk [vmem:[%s2 + $0x618] sm:$0xff] %vm2646, %v2585
  %2843 = vst.msk [vmem:[%s2 + $0x620] sm:$0xff] %vm2646, %v2586
  %2844 = vst.msk [vmem:[%s2 + $0x628] sm:$0xff] %vm2646, %v2587
  %2845 = vst.msk [vmem:[%s2 + $0x630] sm:$0xff] %vm2646, %v2588
  %2846 = vst.msk [vmem:[%s2 + $0x638] sm:$0xff] %vm2646, %v2589
  %2847 = vst.msk [vmem:[%s2 + $0x640] sm:$0xff] %vm2646, %v2590
  %2848 = vst.msk [vmem:[%s2 + $0x648] sm:$0xff] %vm2646, %v2591
  %2849 = vst.msk [vmem:[%s2 + $0x650] sm:$0xff] %vm2646, %v2592
  %2850 = vst.msk [vmem:[%s2 + $0x658] sm:$0xff] %vm2646, %v2593
  %2851 = vst.msk [vmem:[%s2 + $0x660] sm:$0xff] %vm2646, %v2594
  %2852 = vst.msk [vmem:[%s2 + $0x668] sm:$0xff] %vm2646, %v2595
  %2853 = vst.msk [vmem:[%s2 + $0x670] sm:$0xff] %vm2646, %v2596
  %2854 = vst.msk [vmem:[%s2 + $0x678] sm:$0xff] %vm2646, %v2597
  %2855 = vst.msk [vmem:[%s2 + $0x680] sm:$0xff] %vm2646, %v2598
  %2856 = vst.msk [vmem:[%s2 + $0x688] sm:$0xff] %vm2646, %v2599
  %2857 = vst.msk [vmem:[%s2 + $0x690] sm:$0xff] %vm2646, %v2600
  %2858 = vst.msk [vmem:[%s2 + $0x698] sm:$0xff] %vm2646, %v2601
  %2859 = vst.msk [vmem:[%s2 + $0x6a0] sm:$0xff] %vm2646, %v2602
  %2860 = vst.msk [vmem:[%s2 + $0x6a8] sm:$0xff] %vm2646, %v2603
  %2861 = vst.msk [vmem:[%s2 + $0x6b0] sm:$0xff] %vm2646, %v2604
  %2862 = vst.msk [vmem:[%s2 + $0x6b8] sm:$0xff] %vm2646, %v2605
  %2863 = vst.msk [vmem:[%s2 + $0x6c0] sm:$0xff] %vm2646, %v2606
  %2864 = vst.msk [vmem:[%s2 + $0x6c8] sm:$0xff] %vm2646, %v2607
  %2865 = vst.msk [vmem:[%s2 + $0x6d0] sm:$0xff] %vm2646, %v2608
  %2866 = vst.msk [vmem:[%s2 + $0x6d8] sm:$0xff] %vm2646, %v2609
  %2867 = vst.msk [vmem:[%s2 + $0x6e0] sm:$0xff] %vm2646, %v2610
  %2868 = vst.msk [vmem:[%s2 + $0x6e8] sm:$0xff] %vm2646, %v2611
  %2869 = vst.msk [vmem:[%s2 + $0x6f0] sm:$0xff] %vm2646, %v2612
  %2870 = vst.msk [vmem:[%s2 + $0x6f8] sm:$0xff] %vm2646, %v2613
  %2871 = vst.msk [vmem:[%s2 + $0x700] sm:$0xff] %vm2646, %v2614
  %2872 = vst.msk [vmem:[%s2 + $0x708] sm:$0xff] %vm2646, %v2615
  %2873 = vst.msk [vmem:[%s2 + $0x710] sm:$0xff] %vm2646, %v2616
  %2874 = vst.msk [vmem:[%s2 + $0x718] sm:$0xff] %vm2646, %v2617
  %2875 = vst.msk [vmem:[%s2 + $0x720] sm:$0xff] %vm2646, %v2618
  %2876 = vst.msk [vmem:[%s2 + $0x728] sm:$0xff] %vm2646, %v2619
  %2877 = vst.msk [vmem:[%s2 + $0x730] sm:$0xff] %vm2646, %v2620
  %2878 = vst.msk [vmem:[%s2 + $0x738] sm:$0xff] %vm2646, %v2621
  %2879 = vst.msk [vmem:[%s2 + $0x740] sm:$0xff] %vm2646, %v2622
  %2880 = vst.msk [vmem:[%s2 + $0x748] sm:$0xff] %vm2646, %v2623
  %2881 = vst.msk [vmem:[%s2 + $0x750] sm:$0xff] %vm2646, %v2624
  %2882 = vst.msk [vmem:[%s2 + $0x758] sm:$0xff] %vm2646, %v2625
  %2883 = vst.msk [vmem:[%s2 + $0x760] sm:$0xff] %vm2646, %v2626
  %2884 = vst.msk [vmem:[%s2 + $0x768] sm:$0xff] %vm2646, %v2627
  %2885 = vst.msk [vmem:[%s2 + $0x770] sm:$0xff] %vm2646, %v2628
  %2886 = vst.msk [vmem:[%s2 + $0x778] sm:$0xff] %vm2646, %v2629
  %2887 = vst.msk [vmem:[%s2 + $0x780] sm:$0xff] %vm2646, %v2630
  %2888 = vst.msk [vmem:[%s2 + $0x788] sm:$0xff] %vm2646, %v2631
  %2889 = vst.msk [vmem:[%s2 + $0x790] sm:$0xff] %vm2646, %v2632
  %2890 = vst.msk [vmem:[%s2 + $0x798] sm:$0xff] %vm2646, %v2633
  %2891 = vst.msk [vmem:[%s2 + $0x7a0] sm:$0xff] %vm2646, %v2634
  %2892 = vst.msk [vmem:[%s2 + $0x7a8] sm:$0xff] %vm2646, %v2635
  %2893 = vst.msk [vmem:[%s2 + $0x7b0] sm:$0xff] %vm2646, %v2636
  %2894 = vst.msk [vmem:[%s2 + $0x7b8] sm:$0xff] %vm2646, %v2637
  %2895 = vst.msk [vmem:[%s2 + $0x7c0] sm:$0xff] %vm2646, %v2638
  %2896 = vst.msk [vmem:[%s2 + $0x7c8] sm:$0xff] %vm2646, %v2639
  %2897 = vst.msk [vmem:[%s2 + $0x7d0] sm:$0xff] %vm2646, %v2640
  %2898 = vst.msk [vmem:[%s2 + $0x7d8] sm:$0xff] %vm2646, %v2641
  %2899 = vst.msk [vmem:[%s2 + $0x7e0] sm:$0xff] %vm2646, %v2642
  %2900 = vst.msk [vmem:[%s2 + $0x7e8] sm:$0xff] %vm2646, %v2643
  %2901 = vst.msk [vmem:[%s2 + $0x7f0] sm:$0xff] %vm2646, %v2644
  %2902 = vst.msk [vmem:[%s2 + $0x7f8] sm:$0xff] %vm2646, %v2645
  // Predicated region
  $region10: #{forward.23} parent=0 // pred_check
    _
  $region11: #{forward.23} parent=0 // pred_check_branch
    %2904 = sbr.rel (0) target = $region13
  $region12: #{forward.23} parent=0 // pred_region
    _
  $region13: #{forward.23} parent=0 // pred_fallthru
    _
  // Predicated region
  $region14: #{forward.23} parent=0 // pred_check
    _
  $region15: #{forward.23} parent=0 // pred_check_branch
    %2906 = sbr.rel (0) target = $region17
  $region16: #{forward.23} parent=0 // pred_region
    _
  $region17: #{forward.23} parent=0 // pred_fallthru
    _

</llo_original>
